<compile_context>
chip_gen: v7x
topology: tpu7x:2x2x1
jax: 0.10.0
libtpu: 0.0.40
codegen_flags: <defaults>
</compile_context>

<pallas_src>
import functools

import jax
import jax.numpy as jnp
import numpy as np
from jax.experimental import pallas as pl
from jax.experimental.pallas import tpu as pltpu


def _round_up(x, m):
    return (x + m - 1) // m * m


# ---------------------------------------------------------------------------
# Pallas kernel: grid = (batch, key_tile).  Online softmax over key tiles.
# ---------------------------------------------------------------------------
def _ca_kernel(x_ref, kraw_ref, mask_ref, aux_ref, fg_ref, out_ref,
               m_ref, l_ref, acc_ref, *, H, W, C, Cp, patch_size,
               propagate_size):
    P = patch_size
    pc = P // 2
    rc = propagate_size // 2
    HW = H * W
    f32 = jnp.float32
    bf16 = jnp.bfloat16

    k_idx = pl.program_id(1)
    nk = pl.num_programs(1)

    # ---- init running-softmax state at the first key tile -------------------
    @pl.when(k_idx == 0)
    def _():
        m_ref[...] = jnp.full(m_ref.shape, -jnp.inf, dtype=f32)
        l_ref[...] = jnp.zeros(l_ref.shape, f32)
        acc_ref[...] = jnp.zeros(acc_ref.shape, f32)

    X = x_ref[0]                                      # (PPCp, HW)  bf16 patches

    # Normalized background patches for this key tile.  The 1e-7 eps is
    # already folded in by the wrapper (on real channels only); zero-padded
    # channel rows contribute nothing to the norm, matching torch.
    Kraw = kraw_ref[0].astype(f32)                    # (PPCp, TK)
    Kn = Kraw * jax.lax.rsqrt(jnp.sum(Kraw * Kraw, axis=0, keepdims=True))
    Kn = Kn.astype(bf16)

    # Similarity scores S[k, q] = <normalized bg patch k, fg patch q>.
    # Transposed-LHS contraction: no separately-DMAed (TK, PPC) copy needed.
    S = jax.lax.dot_general(Kn, X, (((0,), (0,)), ((), ())),
                            preferred_element_type=f32)          # (TK, HW)

    # Propagate (RxR box filter, zero padded) over the QUERY spatial dims.
    # Queries live on the lane axis -> masked lane rolls (XLU) with boundary
    # masks precomputed in the wrapper (aux_ref), nothing recomputed per tile.
    Sh = S
    for d in range(1, rc + 1):
        ml = aux_ref[2 * (d - 1):2 * (d - 1) + 1, :]
        mr = aux_ref[2 * (d - 1) + 1:2 * (d - 1) + 2, :]
        Sh = Sh + pltpu.roll(S, d % HW, axis=1) * ml \
                + pltpu.roll(S, (-d) % HW, axis=1) * mr
    Sb = Sh
    for d in range(1, rc + 1):
        mu = aux_ref[2 * rc + 2 * (d - 1):2 * rc + 2 * (d - 1) + 1, :]
        md = aux_ref[2 * rc + 2 * (d - 1) + 1:2 * rc + 2 * (d - 1) + 2, :]
        Sb = Sb + pltpu.roll(Sh, (d * W) % HW, axis=1) * mu \
                + pltpu.roll(Sh, (-d * W) % HW, axis=1) * md

    # ---- online softmax over the key (sublane) axis --------------------------
    m_prev = m_ref[...]                                           # (1, HW)
    m_new = jnp.maximum(m_prev, jnp.max(Sb, axis=0, keepdims=True))
    alpha = jnp.exp(m_prev - m_new)                               # (1, HW)
    Pexp = jnp.exp(Sb - m_new)                                    # (TK, HW) f32
    l_ref[...] = l_ref[...] * alpha + jnp.sum(Pexp, axis=0, keepdims=True)
    acc_ref[...] = acc_ref[...] * alpha + jnp.dot(
        Kn, Pexp.astype(bf16), preferred_element_type=f32)        # (PPCp, HW)
    m_ref[...] = m_new

    # ---- finalize at the last key tile ---------------------------------------
    @pl.when(k_idx == nk - 1)
    def _():
        # Softmax denominator (EUP) with the conv_transpose 1/(P*P) scale folded in.
        inv_l = pl.reciprocal(l_ref[...], approx=True) * (1.0 / float(P * P))
        Mmat = acc_ref[...] * inv_l                               # (PPCp, HW)

        # conv_transpose2d with the same patches == col2im fold:
        # one masked lane roll per (dy, dx) tap; tap masks precomputed in aux.
        rec = jnp.zeros((Cp, HW), f32)
        for j in range(P * P):
            dy, dx = j // P, j % P
            oy, ox = dy - pc, dx - pc
            sh = (oy * W + ox) % HW
            slab = Mmat[j * Cp:(j + 1) * Cp, :]                   # aligned view
            shifted = pltpu.roll(slab, sh, axis=1) if sh else slab
            rec = rec + shifted * aux_ref[4 * rc + j:4 * rc + j + 1, :]

        msk = mask_ref[0]                                         # (1, HW)
        fg = fg_ref[0]                                            # (C, HW) f32 exact
        out_ref[0] = (rec[:C, :] * (1.0 - msk) + fg * msk).astype(out_ref.dtype)


# ---------------------------------------------------------------------------
# Wrapper helpers
# ---------------------------------------------------------------------------
def _unfold_patches(x, patch_size, c_pad, eps=0.0):
    """stride-1 'same' im2col: (B, C, H, W) -> (B, P*P*c_pad, H*W).

    Row layout is (tap dy*P+dx, channel).  Channels are zero-padded up to
    c_pad so every per-tap slab starts on a sublane-aligned row.  `eps` is
    added to the real (unpadded) elements only, mirroring torch's
    `conv_kernels + 1e-7` (all-zero patches normalize identically).
    """
    B, C, H, W = x.shape
    pc = patch_size // 2
    xp = jnp.pad(x, ((0, 0), (0, 0), (pc, pc), (pc, pc)))
    slabs = [xp[:, :, dy:dy + H, dx:dx + W]
             for dy in range(patch_size) for dx in range(patch_size)]
    out = jnp.stack(slabs, axis=1)                 # (B, P*P, C, H, W)
    if eps:
        out = out + eps
    if c_pad > C:
        out = jnp.pad(out, ((0, 0), (0, 0), (0, c_pad - C), (0, 0), (0, 0)))
    return out.reshape(B, patch_size * patch_size * c_pad, H * W)


def _lane_masks(H, W, patch_size, propagate_size):
    """Grid-invariant boundary masks (one row each), queries on lanes."""
    P, pc, rc = patch_size, patch_size // 2, propagate_size // 2
    p = np.arange(H * W)
    xc, yc = p % W, p // W
    rows = []
    for d in range(1, rc + 1):                       # propagate, x direction
        rows.append(xc >= d)
        rows.append(xc <= W - 1 - d)
    for d in range(1, rc + 1):                       # propagate, y direction
        rows.append(yc >= d)
        rows.append(yc <= H - 1 - d)
    for dy in range(P):                              # fold (col2im) taps
        for dx in range(P):
            oy, ox = dy - pc, dx - pc
            rows.append((yc >= oy) & (yc <= H - 1 + oy)
                        & (xc >= ox) & (xc <= W - 1 + ox))
    return jnp.asarray(np.stack(rows).astype(np.float32))   # (NM, HW)


def _vmem_budget():
    """Generation-aware VMEM budget: 75% of physical capacity."""
    try:
        cap = int(pltpu.get_tpu_info().vmem_capacity_bytes)
    except Exception:
        cap = 64 * 1024 * 1024        # v7x-safe assumption if the query fails
    return int(cap * 0.75)            # headroom for compiler scratch


def _vmem_need(HW, ppcp, C, NM, block_k):
    """Approximate per-step VMEM demand including pipelining buffers."""
    b = ppcp * HW * 2                 # X (bf16, single-buffered)
    b += 2 * ppcp * block_k * 2       # K tile (bf16, double-buffered)
    b += (1 + NM + C) * HW * 4        # mask + lane masks + fg passthrough
    b += 2 * C * HW * 4               # output (double-buffered)
    b += (2 + ppcp) * HW * 4          # m / l / acc scratch
    return int(b * 1.15) + (2 << 20)  # (8,128) padding + slack


# ---------------------------------------------------------------------------
# Wrapper (NCHW in / NCHW out, like the PyTorch module).
# ---------------------------------------------------------------------------
def contextual_attention(foreground, masks, *, patch_size=3, propagate_size=3,
                         stride=1, block_k=None):
    assert stride == 1, "only stride=1 is supported"
    assert patch_size % 2 == 1 and propagate_size % 2 == 1
    B, C, H, W = foreground.shape
    HW = H * W
    # TODO(synk): torch's F.interpolate branch (mask spatial mismatch) is not
    # implemented; the mask must already match the foreground spatial size.
    assert masks.shape == (B, 1, H, W)

    Cp = _round_up(C, 8)                          # sublane-aligned per-tap slabs
    ppcp = patch_size * patch_size * Cp
    NM = 4 * (propagate_size // 2) + patch_size * patch_size
    budget = _vmem_budget()

    if block_k is None:
        max_bk = min(HW, 2048)
        cands = [k for k in range(max_bk - max_bk % 128, 127, -128)
                 if HW % k == 0] or [HW]
        block_k = cands[-1]
        for cand in cands:                        # largest key tile that fits
            if _vmem_need(HW, ppcp, C, NM, cand) <= budget:
                block_k = cand
                break
    assert HW % block_k == 0
    assert block_k % 128 == 0 or block_k == HW
    nk = HW // block_k
    # TODO(synk): for very large H*W (X + acc cannot stay fully resident,
    # especially on v7x's 64 MiB VMEM), add a "parallel" query-tile grid axis
    # with a +/- rc*W lane halo for the propagate filter.

    fg32 = foreground.astype(jnp.float32)
    m32 = masks.astype(jnp.float32)

    # bf16 in HBM halves the dominant X / K streams; MXU runs bf16 x bf16 -> f32.
    X = _unfold_patches(fg32, patch_size, Cp).astype(jnp.bfloat16)
    Kraw = _unfold_patches(fg32 * m32, patch_size, Cp,
                           eps=1e-7).astype(jnp.bfloat16)
    m_flat = m32.reshape(B, 1, HW)
    fg_flat = fg32.reshape(B, C, HW)
    aux = _lane_masks(H, W, patch_size, propagate_size)

    kernel = functools.partial(_ca_kernel, H=H, W=W, C=C, Cp=Cp,
                               patch_size=patch_size,
                               propagate_size=propagate_size)

    def build(use_buffered):
        def kinv(shape, index_map):
            # k-invariant blocks: single buffer (no pointless double-buffering).
            if use_buffered:
                return pl.BlockSpec(shape, index_map,
                                    pipeline_mode=pl.Buffered(1))
            return pl.BlockSpec(shape, index_map)

        return pl.pallas_call(
            kernel,
            out_shape=jax.ShapeDtypeStruct((B, C, HW), jnp.float32),
            grid_spec=pltpu.PrefetchScalarGridSpec(
                num_scalar_prefetch=0,
                grid=(B, nk),
                in_specs=[
                    kinv((1, ppcp, HW), lambda b, k: (b, 0, 0)),       # X patches
                    pl.BlockSpec((1, ppcp, block_k),
                                 lambda b, k: (b, 0, k)),              # K tile
                    kinv((1, 1, HW), lambda b, k: (b, 0, 0)),          # mask
                    kinv((NM, HW), lambda b, k: (0, 0)),               # lane masks
                    kinv((1, C, HW), lambda b, k: (b, 0, 0)),          # fg (f32)
                ],
                # Output is small (C*HW); keep default buffering for writeback overlap.
                out_specs=pl.BlockSpec((1, C, HW), lambda b, k: (b, 0, 0)),
                scratch_shapes=[
                    pltpu.VMEM((1, HW), jnp.float32),       # running max
                    pltpu.VMEM((1, HW), jnp.float32),       # running sum
                    pltpu.VMEM((ppcp, HW), jnp.float32),    # weighted-patch acc
                ],
            ),
            compiler_params=pltpu.CompilerParams(
                dimension_semantics=("parallel", "arbitrary"),
                vmem_limit_bytes=budget,
            ),
        )

    try:
        out_flat = build(use_buffered=True)(X, Kraw, m_flat, aux, fg_flat)
    except Exception:
        # pipeline_mode=pl.Buffered(1) unsupported on this jax version:
        # fall back to default double-buffering (same semantics, more VMEM).
        out_flat = build(use_buffered=False)(X, Kraw, m_flat, aux, fg_flat)

    return out_flat.reshape(B, C, H, W)


# ---------------------------------------------------------------------------
# Pure-JAX reference (mirrors the torch forward), for a sanity check.
# ---------------------------------------------------------------------------
def _reference(fg, masks, patch_size=3, propagate_size=3):
    B, C, H, W = fg.shape
    HW = H * W
    pc = patch_size // 2
    rc = propagate_size // 2
    hp = jax.lax.Precision.HIGHEST

    bg = fg * masks
    bg_pad = jnp.pad(bg, ((0, 0), (0, 0), (pc, pc), (pc, pc)))
    fg_pad = jnp.pad(fg, ((0, 0), (0, 0), (pc, pc), (pc, pc)))
    kpatch = jnp.stack([bg_pad[:, :, dy:dy + H, dx:dx + W]
                        for dy in range(patch_size)
                        for dx in range(patch_size)], axis=-1)   # (B,C,H,W,PP)
    fpatch = jnp.stack([fg_pad[:, :, dy:dy + H, dx:dx + W]
                        for dy in range(patch_size)
                        for dx in range(patch_size)], axis=-1)   # (B,C,H,W,PP)
    kern = kpatch.reshape(B, C, HW, patch_size * patch_size)
    kern = jnp.transpose(kern, (0, 2, 1, 3)) + 1e-7              # (B,HW,C,PP)
    norm = jnp.sqrt(jnp.sum(kern ** 2, axis=(2, 3), keepdims=True))
    kern = kern / norm
    # F.conv2d(feature_map, kernels, padding=pc)
    S = jnp.einsum('bchwj,bkcj->bkhw', fpatch, kern, precision=hp)
    # depthwise RxR ones conv, padding=rc
    Sp = jnp.pad(S, ((0, 0), (0, 0), (rc, rc), (rc, rc)))
    Sb = sum(Sp[:, :, dy:dy + H, dx:dx + W]
             for dy in range(propagate_size) for dx in range(propagate_size))
    A = jax.nn.softmax(Sb, axis=1)
    # F.conv_transpose2d(A, kernels, padding=pc)
    Ap = jnp.pad(A, ((0, 0), (0, 0), (pc, pc), (pc, pc)))
    rec = jnp.zeros_like(fg)
    for dy in range(patch_size):
        for dx in range(patch_size):
            j = dy * patch_size + dx
            Ash = Ap[:, :, 2 * pc - dy:2 * pc - dy + H,
                     2 * pc - dx:2 * pc - dx + W]
            rec = rec + jnp.einsum('bkhw,bkc->bchw', Ash, kern[:, :, :, j],
                                   precision=hp)
    rec = rec * (1.0 - masks) / float(patch_size ** 2)
    return rec + fg * masks


if __name__ == "__main__":
    B, C, H, W = 2, 4, 16, 16
    key = jax.random.PRNGKey(0)
    k_fg, k_m = jax.random.split(key)

    foreground = jax.random.normal(k_fg, (B, C, H, W), dtype=jnp.float32)
    masks = (jax.random.uniform(k_m, (B, 1, H, W)) > 0.5).astype(jnp.float32)

    ref = jax.block_until_ready(_reference(foreground, masks))

    # Auto block_k (single key tile) and an explicit 2-tile run that exercises
    # the online-softmax accumulation across key tiles.
    out_auto = jax.block_until_ready(contextual_attention(foreground, masks))
    out_tiled = jax.block_until_ready(
        contextual_attention(foreground, masks, block_k=128))

    # bf16 MXU operands vs. the all-f32 reference: slightly wider tolerance.
    np.testing.assert_allclose(np.asarray(out_auto), np.asarray(ref),
                               rtol=3e-2, atol=3e-2)
    np.testing.assert_allclose(np.asarray(out_tiled), np.asarray(ref),
                               rtol=3e-2, atol=3e-2)

    print("KERNEL_OK")
</pallas_src>

<mosaic_0001>
module attributes {stable_mosaic.version = 11 : i64} {
  func.func @_ca_kernel(%arg0: i32, %arg1: i32, %arg2: memref<1x72x256xbf16, #tpu.memory_space<vmem>>, %arg3: memref<1x72x256xbf16, #tpu.memory_space<vmem>>, %arg4: memref<1x1x256xf32, #tpu.memory_space<vmem>>, %arg5: memref<13x256xf32, #tpu.memory_space<vmem>>, %arg6: memref<1x4x256xf32, #tpu.memory_space<vmem>>, %arg7: memref<1x4x256xf32, #tpu.memory_space<vmem>>, %arg8: memref<1x256xf32, #tpu.memory_space<vmem>>, %arg9: memref<1x256xf32, #tpu.memory_space<vmem>>, %arg10: memref<72x256xf32, #tpu.memory_space<vmem>>) attributes {dimension_semantics = [#tpu.dimension_semantics<parallel>, #tpu.dimension_semantics<arbitrary>], iteration_bounds = array<i64: 2, 1>, scalar_prefetch = 0 : i64, scratch_operands = 3 : i64, tpu.core_type = #tpu.core_type<tc>, window_params = [{pipeline_mode = #tpu.pipeline_mode<synchronous>, transform_indices = @transform_0, window_bounds = array<i64: 1, 72, 256>}, {transform_indices = @transform_1, window_bounds = array<i64: 1, 72, 256>}, {pipeline_mode = #tpu.pipeline_mode<synchronous>, transform_indices = @transform_2, window_bounds = array<i64: 1, 1, 256>}, {pipeline_mode = #tpu.pipeline_mode<synchronous>, transform_indices = @transform_3, window_bounds = array<i64: 13, 256>}, {pipeline_mode = #tpu.pipeline_mode<synchronous>, transform_indices = @transform_4, window_bounds = array<i64: 1, 4, 256>}, {transform_indices = @transform_5, window_bounds = array<i64: 1, 4, 256>}]} {
    %c0_i32 = arith.constant 0 : i32
    %0 = arith.cmpi eq, %arg1, %c0_i32 : i32
    %1 = arith.extui %0 : i1 to i32
    %c0_i32_0 = arith.constant 0 : i32
    %2 = arith.cmpi ne, %1, %c0_i32_0 : i32
    scf.if %2 {
      %cst_29 = arith.constant 0xFF800000 : f32
      %62 = vector.broadcast %cst_29 : f32 to vector<1x256xf32>
      %c0_30 = arith.constant 0 : index
      %c0_31 = arith.constant 0 : index
      %63 = vector.load %arg8[%c0_30, %c0_31] : memref<1x256xf32, #tpu.memory_space<vmem>>, vector<1x256xf32>
      tpu.vector_store %arg8[%c0_30, %c0_31], %62 {strides = array<i32>} : memref<1x256xf32, #tpu.memory_space<vmem>>, vector<1x256xf32>,
      %cst_32 = arith.constant 0.000000e+00 : f32
      %64 = vector.broadcast %cst_32 : f32 to vector<1x256xf32>
      %c0_33 = arith.constant 0 : index
      %c0_34 = arith.constant 0 : index
      %65 = vector.load %arg9[%c0_33, %c0_34] : memref<1x256xf32, #tpu.memory_space<vmem>>, vector<1x256xf32>
      tpu.vector_store %arg9[%c0_33, %c0_34], %64 {strides = array<i32>} : memref<1x256xf32, #tpu.memory_space<vmem>>, vector<1x256xf32>,
      %cst_35 = arith.constant 0.000000e+00 : f32
      %66 = vector.broadcast %cst_35 : f32 to vector<72x256xf32>
      %c0_36 = arith.constant 0 : index
      %c0_37 = arith.constant 0 : index
      %67 = vector.load %arg10[%c0_36, %c0_37] : memref<72x256xf32, #tpu.memory_space<vmem>>, vector<72x256xf32>
      tpu.vector_store %arg10[%c0_36, %c0_37], %66 {strides = array<i32>} : memref<72x256xf32, #tpu.memory_space<vmem>>, vector<72x256xf32>,
    } else {
    }
    %c0 = arith.constant 0 : index
    %c0_1 = arith.constant 0 : index
    %c0_2 = arith.constant 0 : index
    %3 = vector.load %arg2[%c0, %c0_1, %c0_2] : memref<1x72x256xbf16, #tpu.memory_space<vmem>>, vector<1x72x256xbf16>
    %4 = vector.shape_cast %3 : vector<1x72x256xbf16> to vector<72x256xbf16>
    %c0_3 = arith.constant 0 : index
    %c0_4 = arith.constant 0 : index
    %c0_5 = arith.constant 0 : index
    %5 = vector.load %arg3[%c0_3, %c0_4, %c0_5] : memref<1x72x256xbf16, #tpu.memory_space<vmem>>, vector<1x72x256xbf16>
    %6 = vector.shape_cast %5 : vector<1x72x256xbf16> to vector<72x256xbf16>
    %7 = arith.extf %6 : vector<72x256xbf16> to vector<72x256xf32>
    %8 = arith.mulf %7, %7 : vector<72x256xf32>
    %cst = arith.constant dense<0.000000e+00> : vector<256xf32>
    %9 = vector.multi_reduction <add>, %8, %cst [0] : vector<72x256xf32> to vector<256xf32>
    %10 = vector.shape_cast %9 : vector<256xf32> to vector<1x256xf32>
    %11 = math.rsqrt %10 : vector<1x256xf32>
    %12 = vector.broadcast %11 : vector<1x256xf32> to vector<72x256xf32>
    %13 = arith.mulf %7, %12 : vector<72x256xf32>
    %14 = arith.truncf %13 : vector<72x256xf32> to vector<72x256xbf16>
    %cst_6 = arith.constant dense<0.000000e+00> : vector<256x256xf32>
    %15 = tpu.matmul %14, %4, %cst_6 {dimension_numbers = #tpu.dot_dimension_numbers<[0], [0], [1], [1], [0, 1, 1, 1], [], []>} : vector<72x256xbf16>, vector<72x256xbf16>, vector<256x256xf32> -> vector<256x256xf32>
    %c0_7 = arith.constant 0 : index
    %c0_8 = arith.constant 0 : index
    %16 = vector.load %arg5[%c0_7, %c0_8] : memref<13x256xf32, #tpu.memory_space<vmem>>, vector<1x256xf32>
    %c1 = arith.constant 1 : index
    %c0_9 = arith.constant 0 : index
    %17 = vector.load %arg5[%c1, %c0_9] : memref<13x256xf32, #tpu.memory_space<vmem>>, vector<1x256xf32>
    %c1_i32 = arith.constant 1 : i32
    %18 = tpu.dynamic_rotate %15 by %c1_i32 dim 1 : vector<256x256xf32>, i32 -> vector<256x256xf32>
    %19 = vector.broadcast %16 : vector<1x256xf32> to vector<256x256xf32>
    %20 = arith.mulf %18, %19 : vector<256x256xf32>
    %21 = arith.addf %15, %20 : vector<256x256xf32>
    %c255_i32 = arith.constant 255 : i32
    %22 = tpu.dynamic_rotate %15 by %c255_i32 dim 1 : vector<256x256xf32>, i32 -> vector<256x256xf32>
    %23 = vector.broadcast %17 : vector<1x256xf32> to vector<256x256xf32>
    %24 = arith.mulf %22, %23 : vector<256x256xf32>
    %25 = arith.addf %21, %24 : vector<256x256xf32>
    %c2 = arith.constant 2 : index
    %c0_10 = arith.constant 0 : index
    %26 = vector.load %arg5[%c2, %c0_10] : memref<13x256xf32, #tpu.memory_space<vmem>>, vector<1x256xf32>
    %c3 = arith.constant 3 : index
    %c0_11 = arith.constant 0 : index
    %27 = vector.load %arg5[%c3, %c0_11] : memref<13x256xf32, #tpu.memory_space<vmem>>, vector<1x256xf32>
    %c16_i32 = arith.constant 16 : i32
    %28 = tpu.dynamic_rotate %25 by %c16_i32 dim 1 : vector<256x256xf32>, i32 -> vector<256x256xf32>
    %29 = vector.broadcast %26 : vector<1x256xf32> to vector<256x256xf32>
    %30 = arith.mulf %28, %29 : vector<256x256xf32>
    %31 = arith.addf %25, %30 : vector<256x256xf32>
    %c240_i32 = arith.constant 240 : i32
    %32 = tpu.dynamic_rotate %25 by %c240_i32 dim 1 : vector<256x256xf32>, i32 -> vector<256x256xf32>
    %33 = vector.broadcast %27 : vector<1x256xf32> to vector<256x256xf32>
    %34 = arith.mulf %32, %33 : vector<256x256xf32>
    %35 = arith.addf %31, %34 : vector<256x256xf32>
    %c0_12 = arith.constant 0 : index
    %c0_13 = arith.constant 0 : index
    %36 = vector.load %arg8[%c0_12, %c0_13] : memref<1x256xf32, #tpu.memory_space<vmem>>, vector<1x256xf32>
    %cst_14 = arith.constant dense<0xFF800000> : vector<256xf32>
    %37 = vector.multi_reduction <maximumf>, %35, %cst_14 [0] : vector<256x256xf32> to vector<256xf32>
    %38 = vector.shape_cast %37 : vector<256xf32> to vector<1x256xf32>
    %39 = arith.maximumf %36, %38 : vector<1x256xf32>
    %40 = arith.subf %36, %39 : vector<1x256xf32>
    %41 = math.exp %40 : vector<1x256xf32>
    %42 = vector.broadcast %39 : vector<1x256xf32> to vector<256x256xf32>
    %43 = arith.subf %35, %42 : vector<256x256xf32>
    %44 = math.exp %43 : vector<256x256xf32>
    %c0_15 = arith.constant 0 : index
    %c0_16 = arith.constant 0 : index
    %45 = vector.load %arg9[%c0_15, %c0_16] : memref<1x256xf32, #tpu.memory_space<vmem>>, vector<1x256xf32>
    %46 = arith.mulf %45, %41 : vector<1x256xf32>
    %cst_17 = arith.constant dense<0.000000e+00> : vector<256xf32>
    %47 = vector.multi_reduction <add>, %44, %cst_17 [0] : vector<256x256xf32> to vector<256xf32>
    %48 = vector.shape_cast %47 : vector<256xf32> to vector<1x256xf32>
    %49 = arith.addf %46, %48 : vector<1x256xf32>
    %c0_18 = arith.constant 0 : index
    %c0_19 = arith.constant 0 : index
    %50 = vector.load %arg9[%c0_18, %c0_19] : memref<1x256xf32, #tpu.memory_space<vmem>>, vector<1x256xf32>
    tpu.vector_store %arg9[%c0_18, %c0_19], %49 {strides = array<i32>} : memref<1x256xf32, #tpu.memory_space<vmem>>, vector<1x256xf32>,
    %c0_20 = arith.constant 0 : index
    %c0_21 = arith.constant 0 : index
    %51 = vector.load %arg10[%c0_20, %c0_21] : memref<72x256xf32, #tpu.memory_space<vmem>>, vector<72x256xf32>
    %52 = vector.broadcast %41 : vector<1x256xf32> to vector<72x256xf32>
    %53 = arith.mulf %51, %52 : vector<72x256xf32>
    %54 = arith.truncf %44 : vector<256x256xf32> to vector<256x256xbf16>
    %cst_22 = arith.constant dense<0.000000e+00> : vector<72x256xf32>
    %55 = tpu.matmul %14, %54, %cst_22 {dimension_numbers = #tpu.dot_dimension_numbers<[1], [0], [0], [1], [0, 0, 1, 1], [], []>} : vector<72x256xbf16>, vector<256x256xbf16>, vector<72x256xf32> -> vector<72x256xf32>
    %56 = arith.addf %53, %55 : vector<72x256xf32>
    %c0_23 = arith.constant 0 : index
    %c0_24 = arith.constant 0 : index
    %57 = vector.load %arg10[%c0_23, %c0_24] : memref<72x256xf32, #tpu.memory_space<vmem>>, vector<72x256xf32>
    tpu.vector_store %arg10[%c0_23, %c0_24], %56 {strides = array<i32>} : memref<72x256xf32, #tpu.memory_space<vmem>>, vector<72x256xf32>,
    %c0_25 = arith.constant 0 : index
    %c0_26 = arith.constant 0 : index
    %58 = vector.load %arg8[%c0_25, %c0_26] : memref<1x256xf32, #tpu.memory_space<vmem>>, vector<1x256xf32>
    tpu.vector_store %arg8[%c0_25, %c0_26], %39 {strides = array<i32>} : memref<1x256xf32, #tpu.memory_space<vmem>>, vector<1x256xf32>,
    %c0_i32_27 = arith.constant 0 : i32
    %59 = arith.cmpi eq, %arg1, %c0_i32_27 : i32
    %60 = arith.extui %59 : i1 to i32
    %c0_i32_28 = arith.constant 0 : i32
    %61 = arith.cmpi ne, %60, %c0_i32_28 : i32
    scf.if %61 {
      %c0_29 = arith.constant 0 : index
      %c0_30 = arith.constant 0 : index
      %62 = vector.load %arg9[%c0_29, %c0_30] : memref<1x256xf32, #tpu.memory_space<vmem>>, vector<1x256xf32>
      %63 = tpu.reciprocal %62 {approx = true} : vector<1x256xf32> -> vector<1x256xf32>
      %cst_31 = arith.constant 0.111111112 : f32
      %64 = vector.broadcast %cst_31 : f32 to vector<1x256xf32>
      %65 = arith.mulf %63, %64 : vector<1x256xf32>
      %c0_32 = arith.constant 0 : index
      %c0_33 = arith.constant 0 : index
      %66 = vector.load %arg10[%c0_32, %c0_33] : memref<72x256xf32, #tpu.memory_space<vmem>>, vector<72x256xf32>
      %67 = vector.broadcast %65 : vector<1x256xf32> to vector<72x256xf32>
      %68 = arith.mulf %66, %67 : vector<72x256xf32>
      %cst_34 = arith.constant 0.000000e+00 : f32
      %69 = vector.broadcast %cst_34 : f32 to vector<8x256xf32>
      %70 = vector.extract_strided_slice %68 {offsets = [0, 0], sizes = [8, 256], strides = [1, 1]} : vector<72x256xf32> to vector<8x256xf32>
      %c239_i32 = arith.constant 239 : i32
      %71 = tpu.dynamic_rotate %70 by %c239_i32 dim 1 : vector<8x256xf32>, i32 -> vector<8x256xf32>
      %c4 = arith.constant 4 : index
      %c0_35 = arith.constant 0 : index
      %72 = vector.load %arg5[%c4, %c0_35] : memref<13x256xf32, #tpu.memory_space<vmem>>, vector<1x256xf32>
      %73 = vector.broadcast %72 : vector<1x256xf32> to vector<8x256xf32>
      %74 = arith.mulf %71, %73 : vector<8x256xf32>
      %75 = arith.addf %69, %74 : vector<8x256xf32>
      %76 = vector.extract_strided_slice %68 {offsets = [8, 0], sizes = [8, 256], strides = [1, 1]} : vector<72x256xf32> to vector<8x256xf32>
      %c240_i32_36 = arith.constant 240 : i32
      %77 = tpu.dynamic_rotate %76 by %c240_i32_36 dim 1 : vector<8x256xf32>, i32 -> vector<8x256xf32>
      %c5 = arith.constant 5 : index
      %c0_37 = arith.constant 0 : index
      %78 = vector.load %arg5[%c5, %c0_37] : memref<13x256xf32, #tpu.memory_space<vmem>>, vector<1x256xf32>
      %79 = vector.broadcast %78 : vector<1x256xf32> to vector<8x256xf32>
      %80 = arith.mulf %77, %79 : vector<8x256xf32>
      %81 = arith.addf %75, %80 : vector<8x256xf32>
      %82 = vector.extract_strided_slice %68 {offsets = [16, 0], sizes = [8, 256], strides = [1, 1]} : vector<72x256xf32> to vector<8x256xf32>
      %c241_i32 = arith.constant 241 : i32
      %83 = tpu.dynamic_rotate %82 by %c241_i32 dim 1 : vector<8x256xf32>, i32 -> vector<8x256xf32>
      %c6 = arith.constant 6 : index
      %c0_38 = arith.constant 0 : index
      %84 = vector.load %arg5[%c6, %c0_38] : memref<13x256xf32, #tpu.memory_space<vmem>>, vector<1x256xf32>
      %85 = vector.broadcast %84 : vector<1x256xf32> to vector<8x256xf32>
      %86 = arith.mulf %83, %85 : vector<8x256xf32>
      %87 = arith.addf %81, %86 : vector<8x256xf32>
      %88 = vector.extract_strided_slice %68 {offsets = [24, 0], sizes = [8, 256], strides = [1, 1]} : vector<72x256xf32> to vector<8x256xf32>
      %c255_i32_39 = arith.constant 255 : i32
      %89 = tpu.dynamic_rotate %88 by %c255_i32_39 dim 1 : vector<8x256xf32>, i32 -> vector<8x256xf32>
      %c7 = arith.constant 7 : index
      %c0_40 = arith.constant 0 : index
      %90 = vector.load %arg5[%c7, %c0_40] : memref<13x256xf32, #tpu.memory_space<vmem>>, vector<1x256xf32>
      %91 = vector.broadcast %90 : vector<1x256xf32> to vector<8x256xf32>
      %92 = arith.mulf %89, %91 : vector<8x256xf32>
      %93 = arith.addf %87, %92 : vector<8x256xf32>
      %94 = vector.extract_strided_slice %68 {offsets = [32, 0], sizes = [8, 256], strides = [1, 1]} : vector<72x256xf32> to vector<8x256xf32>
      %c8 = arith.constant 8 : index
      %c0_41 = arith.constant 0 : index
      %95 = vector.load %arg5[%c8, %c0_41] : memref<13x256xf32, #tpu.memory_space<vmem>>, vector<1x256xf32>
      %96 = vector.broadcast %95 : vector<1x256xf32> to vector<8x256xf32>
      %97 = arith.mulf %94, %96 : vector<8x256xf32>
      %98 = arith.addf %93, %97 : vector<8x256xf32>
      %99 = vector.extract_strided_slice %68 {offsets = [40, 0], sizes = [8, 256], strides = [1, 1]} : vector<72x256xf32> to vector<8x256xf32>
      %c1_i32_42 = arith.constant 1 : i32
      %100 = tpu.dynamic_rotate %99 by %c1_i32_42 dim 1 : vector<8x256xf32>, i32 -> vector<8x256xf32>
      %c9 = arith.constant 9 : index
      %c0_43 = arith.constant 0 : index
      %101 = vector.load %arg5[%c9, %c0_43] : memref<13x256xf32, #tpu.memory_space<vmem>>, vector<1x256xf32>
      %102 = vector.broadcast %101 : vector<1x256xf32> to vector<8x256xf32>
      %103 = arith.mulf %100, %102 : vector<8x256xf32>
      %104 = arith.addf %98, %103 : vector<8x256xf32>
      %105 = vector.extract_strided_slice %68 {offsets = [48, 0], sizes = [8, 256], strides = [1, 1]} : vector<72x256xf32> to vector<8x256xf32>
      %c15_i32 = arith.constant 15 : i32
      %106 = tpu.dynamic_rotate %105 by %c15_i32 dim 1 : vector<8x256xf32>, i32 -> vector<8x256xf32>
      %c10 = arith.constant 10 : index
      %c0_44 = arith.constant 0 : index
      %107 = vector.load %arg5[%c10, %c0_44] : memref<13x256xf32, #tpu.memory_space<vmem>>, vector<1x256xf32>
      %108 = vector.broadcast %107 : vector<1x256xf32> to vector<8x256xf32>
      %109 = arith.mulf %106, %108 : vector<8x256xf32>
      %110 = arith.addf %104, %109 : vector<8x256xf32>
      %111 = vector.extract_strided_slice %68 {offsets = [56, 0], sizes = [8, 256], strides = [1, 1]} : vector<72x256xf32> to vector<8x256xf32>
      %c16_i32_45 = arith.constant 16 : i32
      %112 = tpu.dynamic_rotate %111 by %c16_i32_45 dim 1 : vector<8x256xf32>, i32 -> vector<8x256xf32>
      %c11 = arith.constant 11 : index
      %c0_46 = arith.constant 0 : index
      %113 = vector.load %arg5[%c11, %c0_46] : memref<13x256xf32, #tpu.memory_space<vmem>>, vector<1x256xf32>
      %114 = vector.broadcast %113 : vector<1x256xf32> to vector<8x256xf32>
      %115 = arith.mulf %112, %114 : vector<8x256xf32>
      %116 = arith.addf %110, %115 : vector<8x256xf32>
      %117 = vector.extract_strided_slice %68 {offsets = [64, 0], sizes = [8, 256], strides = [1, 1]} : vector<72x256xf32> to vector<8x256xf32>
      %c17_i32 = arith.constant 17 : i32
      %118 = tpu.dynamic_rotate %117 by %c17_i32 dim 1 : vector<8x256xf32>, i32 -> vector<8x256xf32>
      %c12 = arith.constant 12 : index
      %c0_47 = arith.constant 0 : index
      %119 = vector.load %arg5[%c12, %c0_47] : memref<13x256xf32, #tpu.memory_space<vmem>>, vector<1x256xf32>
      %120 = vector.broadcast %119 : vector<1x256xf32> to vector<8x256xf32>
      %121 = arith.mulf %118, %120 : vector<8x256xf32>
      %122 = arith.addf %116, %121 : vector<8x256xf32>
      %c0_48 = arith.constant 0 : index
      %c0_49 = arith.constant 0 : index
      %c0_50 = arith.constant 0 : index
      %123 = vector.load %arg4[%c0_48, %c0_49, %c0_50] : memref<1x1x256xf32, #tpu.memory_space<vmem>>, vector<1x1x256xf32>
      %124 = vector.shape_cast %123 : vector<1x1x256xf32> to vector<1x256xf32>
      %c0_51 = arith.constant 0 : index
      %c0_52 = arith.constant 0 : index
      %c0_53 = arith.constant 0 : index
      %125 = vector.load %arg6[%c0_51, %c0_52, %c0_53] : memref<1x4x256xf32, #tpu.memory_space<vmem>>, vector<1x4x256xf32>
      %126 = vector.shape_cast %125 : vector<1x4x256xf32> to vector<4x256xf32>
      %127 = vector.extract_strided_slice %122 {offsets = [0, 0], sizes = [4, 256], strides = [1, 1]} : vector<8x256xf32> to vector<4x256xf32>
      %cst_54 = arith.constant 1.000000e+00 : f32
      %128 = vector.broadcast %cst_54 : f32 to vector<1x256xf32>
      %129 = arith.subf %128, %124 : vector<1x256xf32>
      %130 = vector.broadcast %129 : vector<1x256xf32> to vector<4x256xf32>
      %131 = arith.mulf %127, %130 : vector<4x256xf32>
      %132 = vector.broadcast %124 : vector<1x256xf32> to vector<4x256xf32>
      %133 = arith.mulf %126, %132 : vector<4x256xf32>
      %134 = arith.addf %131, %133 : vector<4x256xf32>
      %c0_55 = arith.constant 0 : index
      %c0_56 = arith.constant 0 : index
      %c0_57 = arith.constant 0 : index
      %135 = vector.load %arg7[%c0_55, %c0_56, %c0_57] : memref<1x4x256xf32, #tpu.memory_space<vmem>>, vector<1x4x256xf32>
      %136 = vector.shape_cast %135 : vector<1x4x256xf32> to vector<4x256xf32>
      %137 = vector.shape_cast %134 : vector<4x256xf32> to vector<1x4x256xf32>
      tpu.vector_store %arg7[%c0_55, %c0_56, %c0_57], %137 {strides = array<i32>} : memref<1x4x256xf32, #tpu.memory_space<vmem>>, vector<1x4x256xf32>,
    } else {
    }
    return
  }
  func.func @transform_0(%arg0: i32, %arg1: i32) -> (i32, i32, i32) {
    %c0_i32 = arith.constant 0 : i32
    %c0_i32_0 = arith.constant 0 : i32
    %c0_i32_1 = arith.constant 0 : i32
    return %arg0, %c0_i32, %c0_i32_0 : i32, i32, i32
  }
  func.func @transform_1(%arg0: i32, %arg1: i32) -> (i32, i32, i32) {
    %c0_i32 = arith.constant 0 : i32
    %c0_i32_0 = arith.constant 0 : i32
    return %arg0, %c0_i32, %arg1 : i32, i32, i32
  }
  func.func @transform_2(%arg0: i32, %arg1: i32) -> (i32, i32, i32) {
    %c0_i32 = arith.constant 0 : i32
    %c0_i32_0 = arith.constant 0 : i32
    %c0_i32_1 = arith.constant 0 : i32
    return %arg0, %c0_i32, %c0_i32_0 : i32, i32, i32
  }
  func.func @transform_3(%arg0: i32, %arg1: i32) -> (i32, i32) {
    %c0_i32 = arith.constant 0 : i32
    %c0_i32_0 = arith.constant 0 : i32
    %c0_i32_1 = arith.constant 0 : i32
    return %c0_i32, %c0_i32_0 : i32, i32
  }
  func.func @transform_4(%arg0: i32, %arg1: i32) -> (i32, i32, i32) {
    %c0_i32 = arith.constant 0 : i32
    %c0_i32_0 = arith.constant 0 : i32
    %c0_i32_1 = arith.constant 0 : i32
    return %arg0, %c0_i32, %c0_i32_0 : i32, i32, i32
  }
  func.func @transform_5(%arg0: i32, %arg1: i32) -> (i32, i32, i32) {
    %c0_i32 = arith.constant 0 : i32
    %c0_i32_0 = arith.constant 0 : i32
    %c0_i32_1 = arith.constant 0 : i32
    return %arg0, %c0_i32, %c0_i32_0 : i32, i32, i32
  }
}

module attributes {stable_mosaic.version = 11 : i64} {
  func.func @_ca_kernel(%arg0: i32, %arg1: i32, %arg2: memref<1x72x256xbf16, #tpu.memory_space<vmem>>, %arg3: memref<1x72x256xbf16, #tpu.memory_space<vmem>>, %arg4: memref<1x1x256xf32, #tpu.memory_space<vmem>>, %arg5: memref<13x256xf32, #tpu.memory_space<vmem>>, %arg6: memref<1x4x256xf32, #tpu.memory_space<vmem>>, %arg7: memref<1x4x256xf32, #tpu.memory_space<vmem>>, %arg8: memref<1x256xf32, #tpu.memory_space<vmem>>, %arg9: memref<1x256xf32, #tpu.memory_space<vmem>>, %arg10: memref<72x256xf32, #tpu.memory_space<vmem>>) attributes {dimension_semantics = [#tpu.dimension_semantics<parallel>, #tpu.dimension_semantics<arbitrary>], iteration_bounds = array<i64: 2, 1>, scalar_prefetch = 0 : i64, scratch_operands = 3 : i64, tpu.core_type = #tpu.core_type<tc>, window_params = [{transform_indices = @transform_0, window_bounds = array<i64: 1, 72, 256>}, {transform_indices = @transform_1, window_bounds = array<i64: 1, 72, 256>}, {transform_indices = @transform_2, window_bounds = array<i64: 1, 1, 256>}, {pipeline_mode = #tpu.pipeline_mode<synchronous>, transform_indices = @transform_3, window_bounds = array<i64: 13, 256>}, {transform_indices = @transform_4, window_bounds = array<i64: 1, 4, 256>}, {transform_indices = @transform_5, window_bounds = array<i64: 1, 4, 256>}]} {
    %c0_i32 = arith.constant 0 : i32
    %0 = arith.cmpi eq, %arg1, %c0_i32 : i32
    %1 = arith.extui %0 : i1 to i32
    %c0_i32_0 = arith.constant 0 : i32
    %2 = arith.cmpi ne, %1, %c0_i32_0 : i32
    scf.if %2 {
      %cst_29 = arith.constant 0xFF800000 : f32
      %62 = vector.broadcast %cst_29 : f32 to vector<1x256xf32>
      %c0_30 = arith.constant 0 : index
      %c0_31 = arith.constant 0 : index
      %63 = vector.load %arg8[%c0_30, %c0_31] : memref<1x256xf32, #tpu.memory_space<vmem>>, vector<1x256xf32>
      tpu.vector_store %arg8[%c0_30, %c0_31], %62 {strides = array<i32>} : memref<1x256xf32, #tpu.memory_space<vmem>>, vector<1x256xf32>,
      %cst_32 = arith.constant 0.000000e+00 : f32
      %64 = vector.broadcast %cst_32 : f32 to vector<1x256xf32>
      %c0_33 = arith.constant 0 : index
      %c0_34 = arith.constant 0 : index
      %65 = vector.load %arg9[%c0_33, %c0_34] : memref<1x256xf32, #tpu.memory_space<vmem>>, vector<1x256xf32>
      tpu.vector_store %arg9[%c0_33, %c0_34], %64 {strides = array<i32>} : memref<1x256xf32, #tpu.memory_space<vmem>>, vector<1x256xf32>,
      %cst_35 = arith.constant 0.000000e+00 : f32
      %66 = vector.broadcast %cst_35 : f32 to vector<72x256xf32>
      %c0_36 = arith.constant 0 : index
      %c0_37 = arith.constant 0 : index
      %67 = vector.load %arg10[%c0_36, %c0_37] : memref<72x256xf32, #tpu.memory_space<vmem>>, vector<72x256xf32>
      tpu.vector_store %arg10[%c0_36, %c0_37], %66 {strides = array<i32>} : memref<72x256xf32, #tpu.memory_space<vmem>>, vector<72x256xf32>,
    } else {
    }
    %c0 = arith.constant 0 : index
    %c0_1 = arith.constant 0 : index
    %c0_2 = arith.constant 0 : index
    %3 = vector.load %arg2[%c0, %c0_1, %c0_2] : memref<1x72x256xbf16, #tpu.memory_space<vmem>>, vector<1x72x256xbf16>
    %4 = vector.shape_cast %3 : vector<1x72x256xbf16> to vector<72x256xbf16>
    %c0_3 = arith.constant 0 : index
    %c0_4 = arith.constant 0 : index
    %c0_5 = arith.constant 0 : index
    %5 = vector.load %arg3[%c0_3, %c0_4, %c0_5] : memref<1x72x256xbf16, #tpu.memory_space<vmem>>, vector<1x72x256xbf16>
    %6 = vector.shape_cast %5 : vector<1x72x256xbf16> to vector<72x256xbf16>
    %7 = arith.extf %6 : vector<72x256xbf16> to vector<72x256xf32>
    %8 = arith.mulf %7, %7 : vector<72x256xf32>
    %cst = arith.constant dense<0.000000e+00> : vector<256xf32>
    %9 = vector.multi_reduction <add>, %8, %cst [0] : vector<72x256xf32> to vector<256xf32>
    %10 = vector.shape_cast %9 : vector<256xf32> to vector<1x256xf32>
    %11 = math.rsqrt %10 : vector<1x256xf32>
    %12 = vector.broadcast %11 : vector<1x256xf32> to vector<72x256xf32>
    %13 = arith.mulf %7, %12 : vector<72x256xf32>
    %14 = arith.truncf %13 : vector<72x256xf32> to vector<72x256xbf16>
    %cst_6 = arith.constant dense<0.000000e+00> : vector<256x256xf32>
    %15 = tpu.matmul %14, %4, %cst_6 {dimension_numbers = #tpu.dot_dimension_numbers<[0], [0], [1], [1], [0, 1, 1, 1], [], []>} : vector<72x256xbf16>, vector<72x256xbf16>, vector<256x256xf32> -> vector<256x256xf32>
    %c0_7 = arith.constant 0 : index
    %c0_8 = arith.constant 0 : index
    %16 = vector.load %arg5[%c0_7, %c0_8] : memref<13x256xf32, #tpu.memory_space<vmem>>, vector<1x256xf32>
    %c1 = arith.constant 1 : index
    %c0_9 = arith.constant 0 : index
    %17 = vector.load %arg5[%c1, %c0_9] : memref<13x256xf32, #tpu.memory_space<vmem>>, vector<1x256xf32>
    %c1_i32 = arith.constant 1 : i32
    %18 = tpu.dynamic_rotate %15 by %c1_i32 dim 1 : vector<256x256xf32>, i32 -> vector<256x256xf32>
    %19 = vector.broadcast %16 : vector<1x256xf32> to vector<256x256xf32>
    %20 = arith.mulf %18, %19 : vector<256x256xf32>
    %21 = arith.addf %15, %20 : vector<256x256xf32>
    %c255_i32 = arith.constant 255 : i32
    %22 = tpu.dynamic_rotate %15 by %c255_i32 dim 1 : vector<256x256xf32>, i32 -> vector<256x256xf32>
    %23 = vector.broadcast %17 : vector<1x256xf32> to vector<256x256xf32>
    %24 = arith.mulf %22, %23 : vector<256x256xf32>
    %25 = arith.addf %21, %24 : vector<256x256xf32>
    %c2 = arith.constant 2 : index
    %c0_10 = arith.constant 0 : index
    %26 = vector.load %arg5[%c2, %c0_10] : memref<13x256xf32, #tpu.memory_space<vmem>>, vector<1x256xf32>
    %c3 = arith.constant 3 : index
    %c0_11 = arith.constant 0 : index
    %27 = vector.load %arg5[%c3, %c0_11] : memref<13x256xf32, #tpu.memory_space<vmem>>, vector<1x256xf32>
    %c16_i32 = arith.constant 16 : i32
    %28 = tpu.dynamic_rotate %25 by %c16_i32 dim 1 : vector<256x256xf32>, i32 -> vector<256x256xf32>
    %29 = vector.broadcast %26 : vector<1x256xf32> to vector<256x256xf32>
    %30 = arith.mulf %28, %29 : vector<256x256xf32>
    %31 = arith.addf %25, %30 : vector<256x256xf32>
    %c240_i32 = arith.constant 240 : i32
    %32 = tpu.dynamic_rotate %25 by %c240_i32 dim 1 : vector<256x256xf32>, i32 -> vector<256x256xf32>
    %33 = vector.broadcast %27 : vector<1x256xf32> to vector<256x256xf32>
    %34 = arith.mulf %32, %33 : vector<256x256xf32>
    %35 = arith.addf %31, %34 : vector<256x256xf32>
    %c0_12 = arith.constant 0 : index
    %c0_13 = arith.constant 0 : index
    %36 = vector.load %arg8[%c0_12, %c0_13] : memref<1x256xf32, #tpu.memory_space<vmem>>, vector<1x256xf32>
    %cst_14 = arith.constant dense<0xFF800000> : vector<256xf32>
    %37 = vector.multi_reduction <maximumf>, %35, %cst_14 [0] : vector<256x256xf32> to vector<256xf32>
    %38 = vector.shape_cast %37 : vector<256xf32> to vector<1x256xf32>
    %39 = arith.maximumf %36, %38 : vector<1x256xf32>
    %40 = arith.subf %36, %39 : vector<1x256xf32>
    %41 = math.exp %40 : vector<1x256xf32>
    %42 = vector.broadcast %39 : vector<1x256xf32> to vector<256x256xf32>
    %43 = arith.subf %35, %42 : vector<256x256xf32>
    %44 = math.exp %43 : vector<256x256xf32>
    %c0_15 = arith.constant 0 : index
    %c0_16 = arith.constant 0 : index
    %45 = vector.load %arg9[%c0_15, %c0_16] : memref<1x256xf32, #tpu.memory_space<vmem>>, vector<1x256xf32>
    %46 = arith.mulf %45, %41 : vector<1x256xf32>
    %cst_17 = arith.constant dense<0.000000e+00> : vector<256xf32>
    %47 = vector.multi_reduction <add>, %44, %cst_17 [0] : vector<256x256xf32> to vector<256xf32>
    %48 = vector.shape_cast %47 : vector<256xf32> to vector<1x256xf32>
    %49 = arith.addf %46, %48 : vector<1x256xf32>
    %c0_18 = arith.constant 0 : index
    %c0_19 = arith.constant 0 : index
    %50 = vector.load %arg9[%c0_18, %c0_19] : memref<1x256xf32, #tpu.memory_space<vmem>>, vector<1x256xf32>
    tpu.vector_store %arg9[%c0_18, %c0_19], %49 {strides = array<i32>} : memref<1x256xf32, #tpu.memory_space<vmem>>, vector<1x256xf32>,
    %c0_20 = arith.constant 0 : index
    %c0_21 = arith.constant 0 : index
    %51 = vector.load %arg10[%c0_20, %c0_21] : memref<72x256xf32, #tpu.memory_space<vmem>>, vector<72x256xf32>
    %52 = vector.broadcast %41 : vector<1x256xf32> to vector<72x256xf32>
    %53 = arith.mulf %51, %52 : vector<72x256xf32>
    %54 = arith.truncf %44 : vector<256x256xf32> to vector<256x256xbf16>
    %cst_22 = arith.constant dense<0.000000e+00> : vector<72x256xf32>
    %55 = tpu.matmul %14, %54, %cst_22 {dimension_numbers = #tpu.dot_dimension_numbers<[1], [0], [0], [1], [0, 0, 1, 1], [], []>} : vector<72x256xbf16>, vector<256x256xbf16>, vector<72x256xf32> -> vector<72x256xf32>
    %56 = arith.addf %53, %55 : vector<72x256xf32>
    %c0_23 = arith.constant 0 : index
    %c0_24 = arith.constant 0 : index
    %57 = vector.load %arg10[%c0_23, %c0_24] : memref<72x256xf32, #tpu.memory_space<vmem>>, vector<72x256xf32>
    tpu.vector_store %arg10[%c0_23, %c0_24], %56 {strides = array<i32>} : memref<72x256xf32, #tpu.memory_space<vmem>>, vector<72x256xf32>,
    %c0_25 = arith.constant 0 : index
    %c0_26 = arith.constant 0 : index
    %58 = vector.load %arg8[%c0_25, %c0_26] : memref<1x256xf32, #tpu.memory_space<vmem>>, vector<1x256xf32>
    tpu.vector_store %arg8[%c0_25, %c0_26], %39 {strides = array<i32>} : memref<1x256xf32, #tpu.memory_space<vmem>>, vector<1x256xf32>,
    %c0_i32_27 = arith.constant 0 : i32
    %59 = arith.cmpi eq, %arg1, %c0_i32_27 : i32
    %60 = arith.extui %59 : i1 to i32
    %c0_i32_28 = arith.constant 0 : i32
    %61 = arith.cmpi ne, %60, %c0_i32_28 : i32
    scf.if %61 {
      %c0_29 = arith.constant 0 : index
      %c0_30 = arith.constant 0 : index
      %62 = vector.load %arg9[%c0_29, %c0_30] : memref<1x256xf32, #tpu.memory_space<vmem>>, vector<1x256xf32>
      %63 = tpu.reciprocal %62 {approx = true} : vector<1x256xf32> -> vector<1x256xf32>
      %cst_31 = arith.constant 0.111111112 : f32
      %64 = vector.broadcast %cst_31 : f32 to vector<1x256xf32>
      %65 = arith.mulf %63, %64 : vector<1x256xf32>
      %c0_32 = arith.constant 0 : index
      %c0_33 = arith.constant 0 : index
      %66 = vector.load %arg10[%c0_32, %c0_33] : memref<72x256xf32, #tpu.memory_space<vmem>>, vector<72x256xf32>
      %67 = vector.broadcast %65 : vector<1x256xf32> to vector<72x256xf32>
      %68 = arith.mulf %66, %67 : vector<72x256xf32>
      %cst_34 = arith.constant 0.000000e+00 : f32
      %69 = vector.broadcast %cst_34 : f32 to vector<8x256xf32>
      %70 = vector.extract_strided_slice %68 {offsets = [0, 0], sizes = [8, 256], strides = [1, 1]} : vector<72x256xf32> to vector<8x256xf32>
      %c239_i32 = arith.constant 239 : i32
      %71 = tpu.dynamic_rotate %70 by %c239_i32 dim 1 : vector<8x256xf32>, i32 -> vector<8x256xf32>
      %c4 = arith.constant 4 : index
      %c0_35 = arith.constant 0 : index
      %72 = vector.load %arg5[%c4, %c0_35] : memref<13x256xf32, #tpu.memory_space<vmem>>, vector<1x256xf32>
      %73 = vector.broadcast %72 : vector<1x256xf32> to vector<8x256xf32>
      %74 = arith.mulf %71, %73 : vector<8x256xf32>
      %75 = arith.addf %69, %74 : vector<8x256xf32>
      %76 = vector.extract_strided_slice %68 {offsets = [8, 0], sizes = [8, 256], strides = [1, 1]} : vector<72x256xf32> to vector<8x256xf32>
      %c240_i32_36 = arith.constant 240 : i32
      %77 = tpu.dynamic_rotate %76 by %c240_i32_36 dim 1 : vector<8x256xf32>, i32 -> vector<8x256xf32>
      %c5 = arith.constant 5 : index
      %c0_37 = arith.constant 0 : index
      %78 = vector.load %arg5[%c5, %c0_37] : memref<13x256xf32, #tpu.memory_space<vmem>>, vector<1x256xf32>
      %79 = vector.broadcast %78 : vector<1x256xf32> to vector<8x256xf32>
      %80 = arith.mulf %77, %79 : vector<8x256xf32>
      %81 = arith.addf %75, %80 : vector<8x256xf32>
      %82 = vector.extract_strided_slice %68 {offsets = [16, 0], sizes = [8, 256], strides = [1, 1]} : vector<72x256xf32> to vector<8x256xf32>
      %c241_i32 = arith.constant 241 : i32
      %83 = tpu.dynamic_rotate %82 by %c241_i32 dim 1 : vector<8x256xf32>, i32 -> vector<8x256xf32>
      %c6 = arith.constant 6 : index
      %c0_38 = arith.constant 0 : index
      %84 = vector.load %arg5[%c6, %c0_38] : memref<13x256xf32, #tpu.memory_space<vmem>>, vector<1x256xf32>
      %85 = vector.broadcast %84 : vector<1x256xf32> to vector<8x256xf32>
      %86 = arith.mulf %83, %85 : vector<8x256xf32>
      %87 = arith.addf %81, %86 : vector<8x256xf32>
      %88 = vector.extract_strided_slice %68 {offsets = [24, 0], sizes = [8, 256], strides = [1, 1]} : vector<72x256xf32> to vector<8x256xf32>
      %c255_i32_39 = arith.constant 255 : i32
      %89 = tpu.dynamic_rotate %88 by %c255_i32_39 dim 1 : vector<8x256xf32>, i32 -> vector<8x256xf32>
      %c7 = arith.constant 7 : index
      %c0_40 = arith.constant 0 : index
      %90 = vector.load %arg5[%c7, %c0_40] : memref<13x256xf32, #tpu.memory_space<vmem>>, vector<1x256xf32>
      %91 = vector.broadcast %90 : vector<1x256xf32> to vector<8x256xf32>
      %92 = arith.mulf %89, %91 : vector<8x256xf32>
      %93 = arith.addf %87, %92 : vector<8x256xf32>
      %94 = vector.extract_strided_slice %68 {offsets = [32, 0], sizes = [8, 256], strides = [1, 1]} : vector<72x256xf32> to vector<8x256xf32>
      %c8 = arith.constant 8 : index
      %c0_41 = arith.constant 0 : index
      %95 = vector.load %arg5[%c8, %c0_41] : memref<13x256xf32, #tpu.memory_space<vmem>>, vector<1x256xf32>
      %96 = vector.broadcast %95 : vector<1x256xf32> to vector<8x256xf32>
      %97 = arith.mulf %94, %96 : vector<8x256xf32>
      %98 = arith.addf %93, %97 : vector<8x256xf32>
      %99 = vector.extract_strided_slice %68 {offsets = [40, 0], sizes = [8, 256], strides = [1, 1]} : vector<72x256xf32> to vector<8x256xf32>
      %c1_i32_42 = arith.constant 1 : i32
      %100 = tpu.dynamic_rotate %99 by %c1_i32_42 dim 1 : vector<8x256xf32>, i32 -> vector<8x256xf32>
      %c9 = arith.constant 9 : index
      %c0_43 = arith.constant 0 : index
      %101 = vector.load %arg5[%c9, %c0_43] : memref<13x256xf32, #tpu.memory_space<vmem>>, vector<1x256xf32>
      %102 = vector.broadcast %101 : vector<1x256xf32> to vector<8x256xf32>
      %103 = arith.mulf %100, %102 : vector<8x256xf32>
      %104 = arith.addf %98, %103 : vector<8x256xf32>
      %105 = vector.extract_strided_slice %68 {offsets = [48, 0], sizes = [8, 256], strides = [1, 1]} : vector<72x256xf32> to vector<8x256xf32>
      %c15_i32 = arith.constant 15 : i32
      %106 = tpu.dynamic_rotate %105 by %c15_i32 dim 1 : vector<8x256xf32>, i32 -> vector<8x256xf32>
      %c10 = arith.constant 10 : index
      %c0_44 = arith.constant 0 : index
      %107 = vector.load %arg5[%c10, %c0_44] : memref<13x256xf32, #tpu.memory_space<vmem>>, vector<1x256xf32>
      %108 = vector.broadcast %107 : vector<1x256xf32> to vector<8x256xf32>
      %109 = arith.mulf %106, %108 : vector<8x256xf32>
      %110 = arith.addf %104, %109 : vector<8x256xf32>
      %111 = vector.extract_strided_slice %68 {offsets = [56, 0], sizes = [8, 256], strides = [1, 1]} : vector<72x256xf32> to vector<8x256xf32>
      %c16_i32_45 = arith.constant 16 : i32
      %112 = tpu.dynamic_rotate %111 by %c16_i32_45 dim 1 : vector<8x256xf32>, i32 -> vector<8x256xf32>
      %c11 = arith.constant 11 : index
      %c0_46 = arith.constant 0 : index
      %113 = vector.load %arg5[%c11, %c0_46] : memref<13x256xf32, #tpu.memory_space<vmem>>, vector<1x256xf32>
      %114 = vector.broadcast %113 : vector<1x256xf32> to vector<8x256xf32>
      %115 = arith.mulf %112, %114 : vector<8x256xf32>
      %116 = arith.addf %110, %115 : vector<8x256xf32>
      %117 = vector.extract_strided_slice %68 {offsets = [64, 0], sizes = [8, 256], strides = [1, 1]} : vector<72x256xf32> to vector<8x256xf32>
      %c17_i32 = arith.constant 17 : i32
      %118 = tpu.dynamic_rotate %117 by %c17_i32 dim 1 : vector<8x256xf32>, i32 -> vector<8x256xf32>
      %c12 = arith.constant 12 : index
      %c0_47 = arith.constant 0 : index
      %119 = vector.load %arg5[%c12, %c0_47] : memref<13x256xf32, #tpu.memory_space<vmem>>, vector<1x256xf32>
      %120 = vector.broadcast %119 : vector<1x256xf32> to vector<8x256xf32>
      %121 = arith.mulf %118, %120 : vector<8x256xf32>
      %122 = arith.addf %116, %121 : vector<8x256xf32>
      %c0_48 = arith.constant 0 : index
      %c0_49 = arith.constant 0 : index
      %c0_50 = arith.constant 0 : index
      %123 = vector.load %arg4[%c0_48, %c0_49, %c0_50] : memref<1x1x256xf32, #tpu.memory_space<vmem>>, vector<1x1x256xf32>
      %124 = vector.shape_cast %123 : vector<1x1x256xf32> to vector<1x256xf32>
      %c0_51 = arith.constant 0 : index
      %c0_52 = arith.constant 0 : index
      %c0_53 = arith.constant 0 : index
      %125 = vector.load %arg6[%c0_51, %c0_52, %c0_53] : memref<1x4x256xf32, #tpu.memory_space<vmem>>, vector<1x4x256xf32>
      %126 = vector.shape_cast %125 : vector<1x4x256xf32> to vector<4x256xf32>
      %127 = vector.extract_strided_slice %122 {offsets = [0, 0], sizes = [4, 256], strides = [1, 1]} : vector<8x256xf32> to vector<4x256xf32>
      %cst_54 = arith.constant 1.000000e+00 : f32
      %128 = vector.broadcast %cst_54 : f32 to vector<1x256xf32>
      %129 = arith.subf %128, %124 : vector<1x256xf32>
      %130 = vector.broadcast %129 : vector<1x256xf32> to vector<4x256xf32>
      %131 = arith.mulf %127, %130 : vector<4x256xf32>
      %132 = vector.broadcast %124 : vector<1x256xf32> to vector<4x256xf32>
      %133 = arith.mulf %126, %132 : vector<4x256xf32>
      %134 = arith.addf %131, %133 : vector<4x256xf32>
      %c0_55 = arith.constant 0 : index
      %c0_56 = arith.constant 0 : index
      %c0_57 = arith.constant 0 : index
      %135 = vector.load %arg7[%c0_55, %c0_56, %c0_57] : memref<1x4x256xf32, #tpu.memory_space<vmem>>, vector<1x4x256xf32>
      %136 = vector.shape_cast %135 : vector<1x4x256xf32> to vector<4x256xf32>
      %137 = vector.shape_cast %134 : vector<4x256xf32> to vector<1x4x256xf32>
      tpu.vector_store %arg7[%c0_55, %c0_56, %c0_57], %137 {strides = array<i32>} : memref<1x4x256xf32, #tpu.memory_space<vmem>>, vector<1x4x256xf32>,
    } else {
    }
    return
  }
  func.func @transform_0(%arg0: i32, %arg1: i32) -> (i32, i32, i32) {
    %c0_i32 = arith.constant 0 : i32
    %c0_i32_0 = arith.constant 0 : i32
    %c0_i32_1 = arith.constant 0 : i32
    return %arg0, %c0_i32, %c0_i32_0 : i32, i32, i32
  }
  func.func @transform_1(%arg0: i32, %arg1: i32) -> (i32, i32, i32) {
    %c0_i32 = arith.constant 0 : i32
    %c0_i32_0 = arith.constant 0 : i32
    return %arg0, %c0_i32, %arg1 : i32, i32, i32
  }
  func.func @transform_2(%arg0: i32, %arg1: i32) -> (i32, i32, i32) {
    %c0_i32 = arith.constant 0 : i32
    %c0_i32_0 = arith.constant 0 : i32
    %c0_i32_1 = arith.constant 0 : i32
    return %arg0, %c0_i32, %c0_i32_0 : i32, i32, i32
  }
  func.func @transform_3(%arg0: i32, %arg1: i32) -> (i32, i32) {
    %c0_i32 = arith.constant 0 : i32
    %c0_i32_0 = arith.constant 0 : i32
    %c0_i32_1 = arith.constant 0 : i32
    return %c0_i32, %c0_i32_0 : i32, i32
  }
  func.func @transform_4(%arg0: i32, %arg1: i32) -> (i32, i32, i32) {
    %c0_i32 = arith.constant 0 : i32
    %c0_i32_0 = arith.constant 0 : i32
    %c0_i32_1 = arith.constant 0 : i32
    return %arg0, %c0_i32, %c0_i32_0 : i32, i32, i32
  }
  func.func @transform_5(%arg0: i32, %arg1: i32) -> (i32, i32, i32) {
    %c0_i32 = arith.constant 0 : i32
    %c0_i32_0 = arith.constant 0 : i32
    %c0_i32_1 = arith.constant 0 : i32
    return %arg0, %c0_i32, %c0_i32_0 : i32, i32, i32
  }
}

</mosaic_0001>

<llo_original>
// kernel: tpu_custom_call.1
$region0: #{tpu_custom_call.1}
  #allocation0 [shape = 'u32[]', space=smem, size = 0x4, offset = 0x4, fixed_abs, tag = 'smem constant byte address 0x4 - core index']
  #allocation1 [shape = 'u32[144,128]{1,0:T(1,128)}', space=vmem, size = 0x12000, scoped, tag = 'internal scratch']
  #allocation2 [shape = 'f32[1,256]{1,0:T(1,128)}', space=vmem, size = 0x400, scoped, tag = 'scratch operand']
  #allocation3 [shape = 'f32[1,256]{1,0:T(1,128)}', space=vmem, size = 0x400, scoped, tag = 'scratch operand']
  #allocation4 [shape = 'f32[72,256]{1,0:T(8,128)}', space=vmem, size = 0x12000, scoped, tag = 'scratch operand']
  %s0 = inlined_call_operand.hbm [shape: bf16[2,72,256], index: 0, kind: input, shape index: {}]
  %s1 = inlined_call_operand.hbm [shape: bf16[2,72,256], index: 1, kind: input, shape index: {}]
  %s2 = inlined_call_operand.vmem [shape: f32[2,1,256], index: 2, kind: input, shape index: {}]
  %s3 = inlined_call_operand.hbm [shape: f32[13,256], index: 3, kind: input, shape index: {}]
  %s4 = inlined_call_operand.hbm [shape: f32[2,4,256], index: 4, kind: input, shape index: {}]
  %s5 = inlined_call_operand.hbm [shape: f32[2,4,256], index: 5, kind: output, shape index: {}]
  %s6 = sld [smem:[#allocation0]]
  $region77: #{tpu_custom_call.1} parent=0
    _
  %s8 = ssub.s32 1, %s6
  %s9 = scalar_select 0, %s8, %s6
  $region1: #{tpu_custom_call.1} parent=0
    #allocation5 [shape = 'u8[36864]{0}', space=vmem, size = 0x9000, scoped, tag = 'input window, operand 0, single buffered']
    #allocation6 [shape = 's32[2]{0}', space=sflag, size = 0x8, scoped, tag = 'scoped memory for tpu_custom_call.1']
    #allocation7 [shape = 's32[2]{0}', space=sflag, size = 0x8, scoped, tag = 'scoped memory for tpu_custom_call.1']
    #allocation8 [shape = 'u8[73728]{0}', space=vmem, size = 0x12000, scoped, tag = 'input window, operand 1']
    #allocation9 [shape = 's32[2]{0}', space=sflag, size = 0x8, scoped, tag = 'scoped memory for tpu_custom_call.1']
    #allocation10 [shape = 'u8[16384]{0}', space=vmem, size = 0x4000, scoped, tag = 'input window, operand 3, single buffered']
    #allocation11 [shape = 'u8[4096]{0}', space=vmem, size = 0x1000, scoped, tag = 'input window, operand 4, single buffered']
    #allocation12 [shape = 's32[1]{0}', space=sflag, size = 0x4, scoped, tag = 'scoped memory for tpu_custom_call.1']
    #allocation13 [shape = 'u8[8192]{0}', space=vmem, size = 0x2000, scoped, tag = 'output window, operand 0']
    %10 = vsyncpa [#allocation6], 0
    %11 = vsyncpa [#allocation9], 0
    %s12 = scalar_lea.sflag [#allocation9], 1
    %13 = vsyncpa %s12, 0
    %14 = vsyncpa [#allocation12], 0
    %15 = vsyncpa [#allocation7], 0
    %s16 = scalar_lea.sflag [#allocation7], 1
    %17 = vsyncpa %s16, 0
    loop: start=0, step=1, limit=4
    $region2: #{tpu_custom_call.1} parent=1 // loop_pre_header
      _
    $region3: #{tpu_custom_call.1} parent=1 // loop_header
      %s19 = sphi 0, %s23
      %p20 = scmp.ge.s32.totalorder %s19, 4
      %s26 = sphi 0, %s38
      %s27 = sphi 0, %s34
      %s28 = sphi 0, %s26
      %s29 = sphi 0, %s27
      %s30 = sphi 0, %s28
      %s31 = sphi 0, %s29
      %s41 = sphi 0, %s43
      %s44 = sphi 0, %s41
      %s45 = sphi 0, %s44
      %s61 = sphi 0, %s45
      %s69 = sphi 0, %s71
      %s72 = sphi 0, %s69
      %s73 = sphi 0, %s72
      %s89 = sphi 0, %s73
      %s95 = sphi 0, %s97
      %s98 = sphi 0, %s95
      %s99 = sphi 0, %s98
      %s115 = sphi 0, %s99
      %s119 = sphi 0, %s119
      %s121 = sphi 0, %s119
      %s122 = sphi 0, %s121
      %s136 = sphi 0, %s122
      %s142 = sphi 0, %s144
      %s145 = sphi 0, %s142
      %s146 = sphi 0, %s145
      %s162 = sphi 0, %s146
      %s168 = sphi 0, %s170
      %s171 = sphi 0, %s168
      %s172 = sphi 0, %s171
      %s188 = sphi 0, %s172
    $region4: #{tpu_custom_call.1} parent=1 // loop_header_branch
      %22 = sbr.rel (%p20) target = $region8
    $region5: #{tpu_custom_call.1} parent=1 // loop_body
      %s24 = ssub.s32 %s19, 1
      %s25 = ssub.s32 %s19, 2
      %s32 = sadd.s32 1, %s27
      %p33 = scmp.ge.s32.totalorder %s32, 1
      %s34 = scalar_select %p33, 0, %s32
      %s35 = sadd.s32 1, %s26
      %s36 = scalar_select %p33, %s35, %s26
      %p37 = scmp.ge.s32.totalorder %s36, 2
      %s38 = scalar_select %p37, 0, %s36
      %s39 = ssub.s32 %s26, %s38
      %p40 = scmp.eq.s32.totalorder %s39, 0
      %s42 = sadd.s32 %s41, 1
      %s43 = scalar_select %p40, %s41, %s42
      %p46 = pneg %p40
      %p47 = scmp.eq.s32.totalorder %s19, 1
      %p48 = por %p46, %p47
      %p49 = scmp.ne.s32.totalorder %s41, %s44
      %p50 = scmp.eq.s32.totalorder %s19, 0
      %p51 = por %p49, %p50
      %p52 = scmp.ne.s32.totalorder %s41, %s44
      %p53 = scmp.eq.s32.totalorder %s24, 1
      %p54 = por %p52, %p53
      %p55 = scmp.ne.s32.totalorder %s44, %s45
      %p56 = scmp.eq.s32.totalorder %s24, 0
      %p57 = por %p55, %p56
      %p58 = scmp.ne.s32.totalorder %s44, %s45
      %p59 = scmp.eq.s32.totalorder %s25, 1
      %p60 = por %p58, %p59
      %p62 = scmp.ne.s32.totalorder %s45, %s61
      %p63 = scmp.eq.s32.totalorder %s25, 0
      %p64 = por %p62, %p63
      %s65 = ssub.s32 %s26, %s38
      %s66 = ssub.s32 %s27, %s34
      %s67 = sor.u32 %s65, %s66
      %p68 = scmp.eq.s32.totalorder %s67, 0
      %s70 = sadd.s32 %s69, 1
      %s71 = scalar_select %p68, %s69, %s70
      %p74 = pneg %p68
      %p75 = scmp.eq.s32.totalorder %s19, 1
      %p76 = por %p74, %p75
      %p77 = scmp.ne.s32.totalorder %s69, %s72
      %p78 = scmp.eq.s32.totalorder %s19, 0
      %p79 = por %p77, %p78
      %p80 = scmp.ne.s32.totalorder %s69, %s72
      %p81 = scmp.eq.s32.totalorder %s24, 1
      %p82 = por %p80, %p81
      %p83 = scmp.ne.s32.totalorder %s72, %s73
      %p84 = scmp.eq.s32.totalorder %s24, 0
      %p85 = por %p83, %p84
      %p86 = scmp.ne.s32.totalorder %s72, %s73
      %p87 = scmp.eq.s32.totalorder %s25, 1
      %p88 = por %p86, %p87
      %p90 = scmp.ne.s32.totalorder %s73, %s89
      %p91 = scmp.eq.s32.totalorder %s25, 0
      %p92 = por %p90, %p91
      %s93 = ssub.s32 %s26, %s38
      %p94 = scmp.eq.s32.totalorder %s93, 0
      %s96 = sadd.s32 %s95, 1
      %s97 = scalar_select %p94, %s95, %s96
      %p100 = pneg %p94
      %p101 = scmp.eq.s32.totalorder %s19, 1
      %p102 = por %p100, %p101
      %p103 = scmp.ne.s32.totalorder %s95, %s98
      %p104 = scmp.eq.s32.totalorder %s19, 0
      %p105 = por %p103, %p104
      %p106 = scmp.ne.s32.totalorder %s95, %s98
      %p107 = scmp.eq.s32.totalorder %s24, 1
      %p108 = por %p106, %p107
      %p109 = scmp.ne.s32.totalorder %s98, %s99
      %p110 = scmp.eq.s32.totalorder %s24, 0
      %p111 = por %p109, %p110
      %p112 = scmp.ne.s32.totalorder %s98, %s99
      %p113 = scmp.eq.s32.totalorder %s25, 1
      %p114 = por %p112, %p113
      %p116 = scmp.ne.s32.totalorder %s99, %s115
      %p117 = scmp.eq.s32.totalorder %s25, 0
      %p118 = por %p116, %p117
      %s120 = sadd.s32 %s119, 1
      %p123 = scmp.eq.s32.totalorder %s19, 1
      %p124 = scmp.ne.s32.totalorder %s119, %s121
      %p125 = scmp.eq.s32.totalorder %s19, 0
      %p126 = por %p124, %p125
      %p127 = scmp.ne.s32.totalorder %s119, %s121
      %p128 = scmp.eq.s32.totalorder %s24, 1
      %p129 = por %p127, %p128
      %p130 = scmp.ne.s32.totalorder %s121, %s122
      %p131 = scmp.eq.s32.totalorder %s24, 0
      %p132 = por %p130, %p131
      %p133 = scmp.ne.s32.totalorder %s121, %s122
      %p134 = scmp.eq.s32.totalorder %s25, 1
      %p135 = por %p133, %p134
      %p137 = scmp.ne.s32.totalorder %s122, %s136
      %p138 = scmp.eq.s32.totalorder %s25, 0
      %p139 = por %p137, %p138
      %s140 = ssub.s32 %s26, %s38
      %p141 = scmp.eq.s32.totalorder %s140, 0
      %s143 = sadd.s32 %s142, 1
      %s144 = scalar_select %p141, %s142, %s143
      %p147 = pneg %p141
      %p148 = scmp.eq.s32.totalorder %s19, 1
      %p149 = por %p147, %p148
      %p150 = scmp.ne.s32.totalorder %s142, %s145
      %p151 = scmp.eq.s32.totalorder %s19, 0
      %p152 = por %p150, %p151
      %p153 = scmp.ne.s32.totalorder %s142, %s145
      %p154 = scmp.eq.s32.totalorder %s24, 1
      %p155 = por %p153, %p154
      %p156 = scmp.ne.s32.totalorder %s145, %s146
      %p157 = scmp.eq.s32.totalorder %s24, 0
      %p158 = por %p156, %p157
      %p159 = scmp.ne.s32.totalorder %s145, %s146
      %p160 = scmp.eq.s32.totalorder %s25, 1
      %p161 = por %p159, %p160
      %p163 = scmp.ne.s32.totalorder %s146, %s162
      %p164 = scmp.eq.s32.totalorder %s25, 0
      %p165 = por %p163, %p164
      %s166 = ssub.s32 %s26, %s38
      %p167 = scmp.eq.s32.totalorder %s166, 0
      %s169 = sadd.s32 %s168, 1
      %s170 = scalar_select %p167, %s168, %s169
      %p173 = pneg %p167
      %p174 = scmp.eq.s32.totalorder %s19, 1
      %p175 = por %p173, %p174
      %p176 = scmp.ne.s32.totalorder %s168, %s171
      %p177 = scmp.eq.s32.totalorder %s19, 0
      %p178 = por %p176, %p177
      %p179 = scmp.ne.s32.totalorder %s168, %s171
      %p180 = scmp.eq.s32.totalorder %s24, 1
      %p181 = por %p179, %p180
      %p182 = scmp.ne.s32.totalorder %s171, %s172
      %p183 = scmp.eq.s32.totalorder %s24, 0
      %p184 = por %p182, %p183
      %p185 = scmp.ne.s32.totalorder %s171, %s172
      %p186 = scmp.eq.s32.totalorder %s25, 1
      %p187 = por %p185, %p186
      %p189 = scmp.ne.s32.totalorder %s172, %s188
      %p190 = scmp.eq.s32.totalorder %s25, 0
      %p191 = por %p189, %p190
      %p192 = scmp.le.s32.totalorder 1, %s19
      %p193 = scmp.lt.s32.totalorder %s19, 3
      %p194 = pnand %p192, %p193
      %p195 = pneg %p194
      // Predicated region
      $region9: #{tpu_custom_call.1} parent=5 // pred_check
        _
      $region10: #{tpu_custom_call.1} parent=5 // pred_check_branch
        %197 = sbr.rel (%p194) target = $region12
      $region11: #{tpu_custom_call.1} parent=5 // pred_region
        %s198 = ssub.s32 %s19, 1
        // Predicated region
        $region13: #{tpu_custom_call.1} parent=11 // pred_check
          %p199 = pneg %p57
        $region14: #{tpu_custom_call.1} parent=11 // pred_check_branch
          %201 = sbr.rel (%p199) target = $region16
        $region15: #{tpu_custom_call.1} parent=11 // pred_region
          %s203 = ssub.s32 1152, 1152
          %204 = vsyncadd [#allocation6], %s203
          %s205 = smul.addr %s28, 18
          %s206 = smul.addr %s205, 64
          %s207 = scalar_lea.hbm %s0, %s206
          %s208 = sshll.u32 [#allocation5], 4
          %s209 = int_to_ptr.vmem [resolvable:$true] %s208
          %214 = dma.hbm_to_vmem [thread:$0]  %s207, 1152, %s209, [#allocation6], 128, 128, 8
        $region16: #{tpu_custom_call.1} parent=11 // pred_fallthru
          _
        // Predicated region
        $region17: #{tpu_custom_call.1} parent=11 // pred_check
          %p215 = pneg %p111
        $region18: #{tpu_custom_call.1} parent=11 // pred_check_branch
          %217 = sbr.rel (%p215) target = $region20
        $region19: #{tpu_custom_call.1} parent=11 // pred_region
          %p218 = scmp.lt.s32.totalorder %s28, 1
          %s219 = scalar_select %p218, %s28, 1
          %s220 = smul.addr %s219, 2
          %s221 = scalar_lea.vmem %s2, %s220
        $region20: #{tpu_custom_call.1} parent=11 // pred_fallthru
          _
        // Predicated region
        $region21: #{tpu_custom_call.1} parent=11 // pred_check
          %p222 = pneg %p132
        $region22: #{tpu_custom_call.1} parent=11 // pred_check_branch
          %224 = sbr.rel (%p222) target = $region24
        $region23: #{tpu_custom_call.1} parent=11 // pred_region
          %s226 = ssub.s32 512, 512
          %227 = vsyncadd [#allocation9], %s226
          %s228 = sshll.u32 [#allocation10], 4
          %s229 = int_to_ptr.vmem [resolvable:$true] %s228
          %234 = dma.hbm_to_vmem [thread:$0]  %s3, 512, %s229, [#allocation9], 256, 256, 16
        $region24: #{tpu_custom_call.1} parent=11 // pred_fallthru
          _
        // Predicated region
        $region25: #{tpu_custom_call.1} parent=11 // pred_check
          %p235 = pneg %p158
        $region26: #{tpu_custom_call.1} parent=11 // pred_check_branch
          %237 = sbr.rel (%p235) target = $region28
        $region27: #{tpu_custom_call.1} parent=11 // pred_region
          %s239 = ssub.s32 128, 128
          %240 = vsyncadd [#allocation12], %s239
          %s241 = smul.addr %s28, 2
          %s242 = smul.addr %s241, 64
          %s243 = scalar_lea.hbm %s4, %s242
          %s245 = sshll.u32 [#allocation11], 4
          %s246 = int_to_ptr.vmem [resolvable:$true] %s245
          %248 = dma.hbm_to_vmem [thread:$0]  %s243, 128, %s246, [#allocation12]
        $region28: #{tpu_custom_call.1} parent=11 // pred_fallthru
          _
      $region12: #{tpu_custom_call.1} parent=5 // pred_fallthru
        _
      %p249 = scmp.lt.s32.totalorder %s19, 2
      // Predicated region
      $region29: #{tpu_custom_call.1} parent=5 // pred_check
        %p250 = pneg %p249
      $region30: #{tpu_custom_call.1} parent=5 // pred_check_branch
        %252 = sbr.rel (%p250) target = $region32
      $region31: #{tpu_custom_call.1} parent=5 // pred_region
        // Predicated region
        $region33: #{tpu_custom_call.1} parent=31 // pred_check
          %p253 = pneg %p79
        $region34: #{tpu_custom_call.1} parent=31 // pred_check_branch
          %255 = sbr.rel (%p253) target = $region36
        $region35: #{tpu_custom_call.1} parent=31 // pred_region
          %s256 = sand.u32 %s19, 1
          %s257 = scalar_lea.sflag [#allocation9], %s256
          %s258 = sand.u32 %s69, 1
          %s259 = smul.addr %s258, 72
          %s260 = scalar_lea.vmem [#allocation8], %s259
          %s261 = smul.u32 2, %s27
          %s263 = ssub.s32 1152, 1152
          %264 = vsyncadd %s257, %s263
          %s265 = smul.addr %s26, 18
          %s266 = sadd.s32 %s261, %s265
          %s267 = smul.addr %s266, 64
          %s268 = scalar_lea.hbm %s1, %s267
          %s269 = sshll.u32 %s260, 4
          %s270 = int_to_ptr.vmem [resolvable:$true] %s269
          %275 = dma.hbm_to_vmem [thread:$0]  %s268, 1152, %s270, %s257, 128, 128, 8
        $region36: #{tpu_custom_call.1} parent=31 // pred_fallthru
          _
      $region32: #{tpu_custom_call.1} parent=5 // pred_fallthru
        _
      %p276 = scmp.le.s32.totalorder 1, %s19
      %p277 = scmp.lt.s32.totalorder %s19, 3
      %p278 = pnand %p276, %p277
      %p279 = pneg %p278
      // Predicated region
      $region37: #{tpu_custom_call.1} parent=5 // pred_check
        _
      $region38: #{tpu_custom_call.1} parent=5 // pred_check_branch
        %281 = sbr.rel (%p278) target = $region40
      $region39: #{tpu_custom_call.1} parent=5 // pred_region
        %s282 = ssub.s32 %s19, 1
        // Predicated region
        $region41: #{tpu_custom_call.1} parent=39 // pred_check
          %p283 = pneg %p57
        $region42: #{tpu_custom_call.1} parent=39 // pred_check_branch
          %285 = sbr.rel (%p283) target = $region44
        $region43: #{tpu_custom_call.1} parent=39 // pred_region
          %286 = dma.done [#allocation6], 1152
        $region44: #{tpu_custom_call.1} parent=39 // pred_fallthru
          _
        %s287 = sand.u32 %s24, 1
        %s288 = scalar_lea.sflag [#allocation9], %s287
        %s289 = sand.u32 %s72, 1
        %s290 = smul.addr %s289, 72
        %s291 = scalar_lea.vmem [#allocation8], %s290
        // Predicated region
        $region45: #{tpu_custom_call.1} parent=39 // pred_check
          %p292 = pneg %p85
        $region46: #{tpu_custom_call.1} parent=39 // pred_check_branch
          %294 = sbr.rel (%p292) target = $region48
        $region47: #{tpu_custom_call.1} parent=39 // pred_region
          %295 = dma.done %s288, 1152
        $region48: #{tpu_custom_call.1} parent=39 // pred_fallthru
          _
        // Predicated region
        $region49: #{tpu_custom_call.1} parent=39 // pred_check
          %p296 = pneg %p132
        $region50: #{tpu_custom_call.1} parent=39 // pred_check_branch
          %298 = sbr.rel (%p296) target = $region52
        $region51: #{tpu_custom_call.1} parent=39 // pred_region
          %299 = dma.done [#allocation9], 512
        $region52: #{tpu_custom_call.1} parent=39 // pred_fallthru
          _
        // Predicated region
        $region53: #{tpu_custom_call.1} parent=39 // pred_check
          %p300 = pneg %p158
        $region54: #{tpu_custom_call.1} parent=39 // pred_check_branch
          %302 = sbr.rel (%p300) target = $region56
        $region55: #{tpu_custom_call.1} parent=39 // pred_region
          %303 = dma.done [#allocation12], 128
        $region56: #{tpu_custom_call.1} parent=39 // pred_fallthru
          _
        %p304 = pneg %p57
        %p305 = pneg %p54
        %s306 = sand.u32 %s24, 1
        %s307 = scalar_lea.sflag [#allocation9], %s306
        %s308 = sand.u32 %s72, 1
        %s309 = smul.addr %s308, 72
        %s310 = scalar_lea.vmem [#allocation8], %s309
        %p311 = pneg %p85
        %p312 = pneg %p82
        %p313 = scmp.lt.s32.totalorder %s28, 1
        %s314 = scalar_select %p313, %s28, 1
        %s315 = smul.addr %s314, 2
        %s316 = scalar_lea.vmem %s2, %s315
        %p317 = pneg %p111
        %p318 = pneg %p108
        %p319 = pneg %p132
        %p320 = pneg %p129
        %p321 = pneg %p158
        %p322 = pneg %p155
        %p323 = pneg %p184
        %p324 = pneg %p181
        %s325 = sand.u32 %s171, 1
        %s326 = scalar_lea.sflag [#allocation7], %s325
        %s327 = sand.u32 %s171, 1
        %s328 = smul.addr %s327, 8
        %s329 = scalar_lea.vmem [#allocation13], %s328
        %s330 = smul.u32 2, %s29
        %p331 = scmp.lt.s32.totalorder %s28, 1
        %s332 = scalar_select %p331, %s28, 1
        %s333 = smul.addr %s332, 2
        %s334 = scalar_lea.vmem %s2, %s333
        %p336 = scmp.eq.s32.totalorder %s29, 0
        // Predicated region
        $region57: #{tpu_custom_call.1} parent=39 // pred_check
          %p337 = pneg %p336
        $region58: #{tpu_custom_call.1} parent=39 // pred_check_branch
          %339 = sbr.rel (%p337) target = $region60
        $region59: #{tpu_custom_call.1} parent=39 // pred_region
          %v340 = vlaneseq
          %vm341 = vcmp.ge.s32.totalorder %v340, 0
          %vm342 = vcmp.lt.s32.totalorder %v340, 256
          %vm343 = vmand %vm341, %vm342
          %344 = vst.msk [vmem:[#allocation2] sm:$0x3] %vm343, -inf
          %345 = vst.msk [vmem:[#allocation3] sm:$0x3] %vm343, 0.0
          %346 = vst [vmem:[#allocation4] sm:$0xff] 0.0
          %347 = vst [vmem:[#allocation4 + $0x8] sm:$0xff] 0.0
          %348 = vst [vmem:[#allocation4 + $0x10] sm:$0xff] 0.0
          %349 = vst [vmem:[#allocation4 + $0x18] sm:$0xff] 0.0
          %350 = vst [vmem:[#allocation4 + $0x20] sm:$0xff] 0.0
          %351 = vst [vmem:[#allocation4 + $0x28] sm:$0xff] 0.0
          %352 = vst [vmem:[#allocation4 + $0x30] sm:$0xff] 0.0
          %353 = vst [vmem:[#allocation4 + $0x38] sm:$0xff] 0.0
          %354 = vst [vmem:[#allocation4 + $0x40] sm:$0xff] 0.0
          %355 = vst [vmem:[#allocation4 + $0x48] sm:$0xff] 0.0
          %356 = vst [vmem:[#allocation4 + $0x50] sm:$0xff] 0.0
          %357 = vst [vmem:[#allocation4 + $0x58] sm:$0xff] 0.0
          %358 = vst [vmem:[#allocation4 + $0x60] sm:$0xff] 0.0
          %359 = vst [vmem:[#allocation4 + $0x68] sm:$0xff] 0.0
          %360 = vst [vmem:[#allocation4 + $0x70] sm:$0xff] 0.0
          %361 = vst [vmem:[#allocation4 + $0x78] sm:$0xff] 0.0
          %362 = vst [vmem:[#allocation4 + $0x80] sm:$0xff] 0.0
          %363 = vst [vmem:[#allocation4 + $0x88] sm:$0xff] 0.0
        $region60: #{tpu_custom_call.1} parent=39 // pred_fallthru
          _
        %v364 = vld [vmem:[#allocation5] sm:$0xff]
        %v365 = vld [vmem:[#allocation5 + $0x8] sm:$0xff]
        %v366 = vld [vmem:[#allocation5 + $0x10] sm:$0xff]
        %v367 = vld [vmem:[#allocation5 + $0x18] sm:$0xff]
        %v368 = vld [vmem:[#allocation5 + $0x20] sm:$0xff]
        %v369 = vld [vmem:[#allocation5 + $0x28] sm:$0xff]
        %v370 = vld [vmem:[#allocation5 + $0x30] sm:$0xff]
        %v371 = vld [vmem:[#allocation5 + $0x38] sm:$0xff]
        %v372 = vld [vmem:[#allocation5 + $0x40] sm:$0xff]
        %v373 = vld [vmem:[%s291] sm:$0xff]
        %v374 = vld [vmem:[%s291 + $0x8] sm:$0xff]
        %v375 = vld [vmem:[%s291 + $0x10] sm:$0xff]
        %v376 = vld [vmem:[%s291 + $0x18] sm:$0xff]
        %v377 = vld [vmem:[%s291 + $0x20] sm:$0xff]
        %v378 = vld [vmem:[%s291 + $0x28] sm:$0xff]
        %v379 = vld [vmem:[%s291 + $0x30] sm:$0xff]
        %v380 = vld [vmem:[%s291 + $0x38] sm:$0xff]
        %v381 = vld [vmem:[%s291 + $0x40] sm:$0xff]
        %v382 = vunpack.c.l.bf16 %v373
        %v383 = vunpack.c.h.bf16 %v373
        %v384 = vunpack.c.l.bf16 %v374
        %v385 = vunpack.c.h.bf16 %v374
        %v386 = vunpack.c.l.bf16 %v375
        %v387 = vunpack.c.h.bf16 %v375
        %v388 = vunpack.c.l.bf16 %v376
        %v389 = vunpack.c.h.bf16 %v376
        %v390 = vunpack.c.l.bf16 %v377
        %v391 = vunpack.c.h.bf16 %v377
        %v392 = vunpack.c.l.bf16 %v378
        %v393 = vunpack.c.h.bf16 %v378
        %v394 = vunpack.c.l.bf16 %v379
        %v395 = vunpack.c.h.bf16 %v379
        %v396 = vunpack.c.l.bf16 %v380
        %v397 = vunpack.c.h.bf16 %v380
        %v398 = vunpack.c.l.bf16 %v381
        %v399 = vunpack.c.h.bf16 %v381
        %v400 = vmul.f32 %v382, %v382
        %v401 = vmul.f32 %v383, %v383
        %v402 = vmul.f32 %v384, %v384
        %v403 = vmul.f32 %v385, %v385
        %v404 = vmul.f32 %v386, %v386
        %v405 = vmul.f32 %v387, %v387
        %v406 = vmul.f32 %v388, %v388
        %v407 = vmul.f32 %v389, %v389
        %v408 = vmul.f32 %v390, %v390
        %v409 = vmul.f32 %v391, %v391
        %v410 = vmul.f32 %v392, %v392
        %v411 = vmul.f32 %v393, %v393
        %v412 = vmul.f32 %v394, %v394
        %v413 = vmul.f32 %v395, %v395
        %v414 = vmul.f32 %v396, %v396
        %v415 = vmul.f32 %v397, %v397
        %v416 = vmul.f32 %v398, %v398
        %v417 = vmul.f32 %v399, %v399
        %v418 = vadd.f32 %v400, %v402
        %v419 = vadd.f32 %v418, %v404
        %v420 = vadd.f32 %v419, %v406
        %v421 = vadd.f32 %v420, %v408
        %v422 = vadd.f32 %v421, %v410
        %v423 = vadd.f32 %v422, %v412
        %v424 = vadd.f32 %v423, %v414
        %v425 = vadd.f32 %v424, %v416
        %v426 = vrot.slane %v425, 4
        %v427 = vadd.f32 %v425, %v426
        %v428 = vrot.slane %v427, 2
        %v429 = vadd.f32 %v427, %v428
        %v430 = vrot.slane %v429, 1
        %v431 = vadd.f32 %v429, %v430
        %v432 = vadd.f32 %v401, %v403
        %v433 = vadd.f32 %v432, %v405
        %v434 = vadd.f32 %v433, %v407
        %v435 = vadd.f32 %v434, %v409
        %v436 = vadd.f32 %v435, %v411
        %v437 = vadd.f32 %v436, %v413
        %v438 = vadd.f32 %v437, %v415
        %v439 = vadd.f32 %v438, %v417
        %v440 = vrot.slane %v439, 4
        %v441 = vadd.f32 %v439, %v440
        %v442 = vrot.slane %v441, 2
        %v443 = vadd.f32 %v441, %v442
        %v444 = vrot.slane %v443, 1
        %v445 = vadd.f32 %v443, %v444
        %v446 = vrsqrt.pop %v431
        %v447 = vrsqrt.pop %v445
        %v448 = vmul.f32 %v382, %v446
        %v449 = vmul.f32 %v383, %v447
        %v450 = vmul.f32 %v384, %v446
        %v451 = vmul.f32 %v385, %v447
        %v452 = vmul.f32 %v386, %v446
        %v453 = vmul.f32 %v387, %v447
        %v454 = vmul.f32 %v388, %v446
        %v455 = vmul.f32 %v389, %v447
        %v456 = vmul.f32 %v390, %v446
        %v457 = vmul.f32 %v391, %v447
        %v458 = vmul.f32 %v392, %v446
        %v459 = vmul.f32 %v393, %v447
        %v460 = vmul.f32 %v394, %v446
        %v461 = vmul.f32 %v395, %v447
        %v462 = vmul.f32 %v396, %v446
        %v463 = vmul.f32 %v397, %v447
        %v464 = vmul.f32 %v398, %v446
        %v465 = vmul.f32 %v399, %v447
        %v466 = vpack.c.bf16 %v450, %v448
        %v467 = vpack.c.bf16 %v451, %v449
        %v468 = vpack.c.bf16 %v454, %v452
        %v469 = vpack.c.bf16 %v455, %v453
        %v470 = vpack.c.bf16 %v458, %v456
        %v471 = vpack.c.bf16 %v459, %v457
        %v472 = vpack.c.bf16 %v462, %v460
        %v473 = vpack.c.bf16 %v463, %v461
        %v474 = vpack.c.bf16 %v464, %v464
        %v475 = vpack.c.bf16 %v465, %v465
        %476 = vxpose.xlu0.c.b16.start [1/8] %v466, 128
        %477 = vxpose.xlu0.c.b16.cont [2/8] %v468, 128
        %478 = vxpose.xlu0.c.b16.cont [3/8] %v470, 128
        %479 = vxpose.xlu0.c.b16.cont [4/8] %v472, 128
        %480 = vxpose.xlu0.c.b16.cont [5/8] %v474, 128
        %481 = vxpose.xlu0.c.b16.cont [6/8] 0, 128
        %482 = vxpose.xlu0.c.b16.cont [7/8] 0, 128
        %483 = vxpose.xlu0.c.b16.end [8/8] 0, 128
        %v484 = vpop.trf.xlu0
        %v485 = vpop.trf.xlu0
        %v486 = vpop.trf.xlu0
        %v487 = vpop.trf.xlu0
        %v488 = vpop.trf.xlu0
        %v489 = vpop.trf.xlu0
        %v490 = vpop.trf.xlu0
        %v491 = vpop.trf.xlu0
        %492 = vxpose.xlu0.c.b16.start [1/8] %v467, 128
        %493 = vxpose.xlu0.c.b16.cont [2/8] %v469, 128
        %494 = vxpose.xlu0.c.b16.cont [3/8] %v471, 128
        %495 = vxpose.xlu0.c.b16.cont [4/8] %v473, 128
        %496 = vxpose.xlu0.c.b16.cont [5/8] %v475, 128
        %497 = vxpose.xlu0.c.b16.cont [6/8] 0, 128
        %498 = vxpose.xlu0.c.b16.cont [7/8] 0, 128
        %499 = vxpose.xlu0.c.b16.end [8/8] 0, 128
        %v500 = vpop.trf.xlu0
        %v501 = vpop.trf.xlu0
        %v502 = vpop.trf.xlu0
        %v503 = vpop.trf.xlu0
        %v504 = vpop.trf.xlu0
        %v505 = vpop.trf.xlu0
        %v506 = vpop.trf.xlu0
        %v507 = vpop.trf.xlu0
        %v517 = vunpack.c.l.b16 %v364
        %v518 = vunpack.c.h.b16 %v364
        %v519 = vunpack.c.l.b16 %v365
        %v520 = vunpack.c.h.b16 %v365
        %v521 = vunpack.c.l.b16 %v366
        %v522 = vunpack.c.h.b16 %v366
        %v523 = vunpack.c.l.b16 %v367
        %v524 = vunpack.c.h.b16 %v367
        %v525 = vunpack.c.l.b16 %v368
        %v526 = vunpack.c.h.b16 %v368
        %v527 = vunpack.c.l.b16 %v369
        %v528 = vunpack.c.h.b16 %v369
        %v529 = vunpack.c.l.b16 %v370
        %v530 = vunpack.c.h.b16 %v370
        %v531 = vunpack.c.l.b16 %v371
        %v532 = vunpack.c.h.b16 %v371
        %v533 = vunpack.c.l.b16 %v372
        %v534 = vunpack.c.h.b16 %v372
        %v535 = vpack.c.b16 %v519, %v517
        %v536 = vpack.c.b16 %v520, %v518
        %v537 = vpack.c.b16 %v523, %v521
        %v538 = vpack.c.b16 %v524, %v522
        %v539 = vpack.c.b16 %v527, %v525
        %v540 = vpack.c.b16 %v528, %v526
        %v541 = vpack.c.b16 %v531, %v529
        %v542 = vpack.c.b16 %v532, %v530
        %v543 = vpack.c.b16 %v533, %v533
        %v544 = vpack.c.b16 %v534, %v534
        %vm553 = vcmask 588800
        %v555 = vsel %vm553, %v484, 0
        %v558 = vsel %vm553, %v485, 0
        %v561 = vsel %vm553, %v486, 0
        %v564 = vsel %vm553, %v487, 0
        %v567 = vsel %vm553, %v488, 0
        %v570 = vsel %vm553, %v489, 0
        %v573 = vsel %vm553, %v490, 0
        %v576 = vsel %vm553, %v491, 0
        %v579 = vsel %vm553, %v500, 0
        %v582 = vsel %vm553, %v501, 0
        %v585 = vsel %vm553, %v502, 0
        %v588 = vsel %vm553, %v503, 0
        %v591 = vsel %vm553, %v504, 0
        %v594 = vsel %vm553, %v505, 0
        %v597 = vsel %vm553, %v506, 0
        %v600 = vsel %vm553, %v507, 0
        %vm602 = vcmask 1043456
        %v604 = vsel %vm602, %v543, 0
        %v607 = vsel %vm602, %v544, 0
        %609 = vmatprep.subr.bf16.mxu0 %v536
        %610 = vmatpush1.bf16.msra.mxu0 %v535
        %611 = vmatprep.subr.bf16.mxu0 %v538
        %612 = vmatpush1.bf16.msra.mxu0 %v537
        %613 = vmatprep.subr.bf16.mxu0 %v540
        %614 = vmatpush1.bf16.msra.mxu0 %v539
        %615 = vmatprep.subr.bf16.mxu0 %v542
        %616 = vmatpush1.bf16.msra.mxu0 %v541
        %617 = vmatprep.subr.bf16.mxu0 %v607
        %618 = vmatpush1.bf16.msra.mxu0 %v604
        %619 = vmatprep.subr.bf16.mxu0 0
        %620 = vmatpush1.bf16.msra.mxu0 0
        %621 = vmatprep.subr.bf16.mxu0 0
        %622 = vmatpush1.bf16.msra.mxu0 0
        %623 = vmatprep.subr.bf16.mxu0 0
        %624 = vmatpush1.bf16.msra.mxu0 0
        %625 = vmatprep.subr.bf16.mxu0 0
        %626 = vmatpush1.bf16.msra.mxu0 0
        %627 = vmatprep.subr.bf16.mxu0 0
        %628 = vmatpush1.bf16.msra.mxu0 0
        %629 = vmatprep.subr.bf16.mxu0 0
        %630 = vmatpush1.bf16.msra.mxu0 0
        %631 = vmatprep.subr.bf16.mxu0 0
        %632 = vmatpush1.bf16.msra.mxu0 0
        %633 = vmatprep.subr.bf16.mxu0 0
        %634 = vmatpush1.bf16.msra.mxu0 0
        %635 = vmatprep.subr.bf16.mxu0 0
        %636 = vmatpush1.bf16.msra.mxu0 0
        %637 = vmatprep.subr.bf16.mxu0 0
        %638 = vmatpush1.bf16.msra.mxu0 0
        %639 = vmatprep.subr.bf16.mxu0 0
        %640 = vmatpush1.bf16.msra.mxu0 0
        %641 = vmatprep.mubr.bf16.mxu0 0
        %642 = vmatmul.mubr.bf16.gmra.mrb[0].mxu0 %v555
        %v643 = vpop.f32.mrb[0].mxu0
        %v644 = vadd.f32 0.0, %v643
        %v645 = vpop.f32.mrb[0].mxu0
        %v646 = vadd.f32 0.0, %v645
        %v647 = vpop.f32.mrb[0].mxu0
        %v648 = vadd.f32 0.0, %v647
        %v649 = vpop.f32.mrb[0].mxu0
        %v650 = vadd.f32 0.0, %v649
        %651 = vmatprep.mubr.bf16.mxu0 0
        %652 = vmatmul.mubr.bf16.gmra.mrb[0].mxu0 %v558
        %v653 = vpop.f32.mrb[0].mxu0
        %v654 = vadd.f32 0.0, %v653
        %v655 = vpop.f32.mrb[0].mxu0
        %v656 = vadd.f32 0.0, %v655
        %v657 = vpop.f32.mrb[0].mxu0
        %v658 = vadd.f32 0.0, %v657
        %v659 = vpop.f32.mrb[0].mxu0
        %v660 = vadd.f32 0.0, %v659
        %661 = vmatprep.mubr.bf16.mxu0 0
        %662 = vmatmul.mubr.bf16.gmra.mrb[0].mxu0 %v561
        %v663 = vpop.f32.mrb[0].mxu0
        %v664 = vadd.f32 0.0, %v663
        %v665 = vpop.f32.mrb[0].mxu0
        %v666 = vadd.f32 0.0, %v665
        %v667 = vpop.f32.mrb[0].mxu0
        %v668 = vadd.f32 0.0, %v667
        %v669 = vpop.f32.mrb[0].mxu0
        %v670 = vadd.f32 0.0, %v669
        %671 = vmatprep.mubr.bf16.mxu0 0
        %672 = vmatmul.mubr.bf16.gmra.mrb[0].mxu0 %v564
        %v673 = vpop.f32.mrb[0].mxu0
        %v674 = vadd.f32 0.0, %v673
        %v675 = vpop.f32.mrb[0].mxu0
        %v676 = vadd.f32 0.0, %v675
        %v677 = vpop.f32.mrb[0].mxu0
        %v678 = vadd.f32 0.0, %v677
        %v679 = vpop.f32.mrb[0].mxu0
        %v680 = vadd.f32 0.0, %v679
        %681 = vmatprep.mubr.bf16.mxu0 0
        %682 = vmatmul.mubr.bf16.gmra.mrb[0].mxu0 %v567
        %v683 = vpop.f32.mrb[0].mxu0
        %v684 = vadd.f32 0.0, %v683
        %v685 = vpop.f32.mrb[0].mxu0
        %v686 = vadd.f32 0.0, %v685
        %v687 = vpop.f32.mrb[0].mxu0
        %v688 = vadd.f32 0.0, %v687
        %v689 = vpop.f32.mrb[0].mxu0
        %v690 = vadd.f32 0.0, %v689
        %691 = vmatprep.mubr.bf16.mxu0 0
        %692 = vmatmul.mubr.bf16.gmra.mrb[0].mxu0 %v570
        %v693 = vpop.f32.mrb[0].mxu0
        %v694 = vadd.f32 0.0, %v693
        %v695 = vpop.f32.mrb[0].mxu0
        %v696 = vadd.f32 0.0, %v695
        %v697 = vpop.f32.mrb[0].mxu0
        %v698 = vadd.f32 0.0, %v697
        %v699 = vpop.f32.mrb[0].mxu0
        %v700 = vadd.f32 0.0, %v699
        %701 = vmatprep.mubr.bf16.mxu0 0
        %702 = vmatmul.mubr.bf16.gmra.mrb[0].mxu0 %v573
        %v703 = vpop.f32.mrb[0].mxu0
        %v704 = vadd.f32 0.0, %v703
        %v705 = vpop.f32.mrb[0].mxu0
        %v706 = vadd.f32 0.0, %v705
        %v707 = vpop.f32.mrb[0].mxu0
        %v708 = vadd.f32 0.0, %v707
        %v709 = vpop.f32.mrb[0].mxu0
        %v710 = vadd.f32 0.0, %v709
        %711 = vmatprep.mubr.bf16.mxu0 0
        %712 = vmatmul.mubr.bf16.gmra.mrb[0].mxu0 %v576
        %v713 = vpop.f32.mrb[0].mxu0
        %v714 = vadd.f32 0.0, %v713
        %v715 = vpop.f32.mrb[0].mxu0
        %v716 = vadd.f32 0.0, %v715
        %v717 = vpop.f32.mrb[0].mxu0
        %v718 = vadd.f32 0.0, %v717
        %v719 = vpop.f32.mrb[0].mxu0
        %v720 = vadd.f32 0.0, %v719
        %721 = vmatprep.mubr.bf16.mxu0 0
        %722 = vmatmul.mubr.bf16.gmra.mrb[0].mxu0 %v579
        %v723 = vpop.f32.mrb[0].mxu0
        %v724 = vadd.f32 0.0, %v723
        %v725 = vpop.f32.mrb[0].mxu0
        %v726 = vadd.f32 0.0, %v725
        %v727 = vpop.f32.mrb[0].mxu0
        %v728 = vadd.f32 0.0, %v727
        %v729 = vpop.f32.mrb[0].mxu0
        %v730 = vadd.f32 0.0, %v729
        %731 = vmatprep.mubr.bf16.mxu0 0
        %732 = vmatmul.mubr.bf16.gmra.mrb[0].mxu0 %v582
        %v733 = vpop.f32.mrb[0].mxu0
        %v734 = vadd.f32 0.0, %v733
        %v735 = vpop.f32.mrb[0].mxu0
        %v736 = vadd.f32 0.0, %v735
        %v737 = vpop.f32.mrb[0].mxu0
        %v738 = vadd.f32 0.0, %v737
        %v739 = vpop.f32.mrb[0].mxu0
        %v740 = vadd.f32 0.0, %v739
        %741 = vmatprep.mubr.bf16.mxu0 0
        %742 = vmatmul.mubr.bf16.gmra.mrb[0].mxu0 %v585
        %v743 = vpop.f32.mrb[0].mxu0
        %v744 = vadd.f32 0.0, %v743
        %v745 = vpop.f32.mrb[0].mxu0
        %v746 = vadd.f32 0.0, %v745
        %v747 = vpop.f32.mrb[0].mxu0
        %v748 = vadd.f32 0.0, %v747
        %v749 = vpop.f32.mrb[0].mxu0
        %v750 = vadd.f32 0.0, %v749
        %751 = vmatprep.mubr.bf16.mxu0 0
        %752 = vmatmul.mubr.bf16.gmra.mrb[0].mxu0 %v588
        %v753 = vpop.f32.mrb[0].mxu0
        %v754 = vadd.f32 0.0, %v753
        %v755 = vpop.f32.mrb[0].mxu0
        %v756 = vadd.f32 0.0, %v755
        %v757 = vpop.f32.mrb[0].mxu0
        %v758 = vadd.f32 0.0, %v757
        %v759 = vpop.f32.mrb[0].mxu0
        %v760 = vadd.f32 0.0, %v759
        %761 = vmatprep.mubr.bf16.mxu0 0
        %762 = vmatmul.mubr.bf16.gmra.mrb[0].mxu0 %v591
        %v763 = vpop.f32.mrb[0].mxu0
        %v764 = vadd.f32 0.0, %v763
        %v765 = vpop.f32.mrb[0].mxu0
        %v766 = vadd.f32 0.0, %v765
        %v767 = vpop.f32.mrb[0].mxu0
        %v768 = vadd.f32 0.0, %v767
        %v769 = vpop.f32.mrb[0].mxu0
        %v770 = vadd.f32 0.0, %v769
        %771 = vmatprep.mubr.bf16.mxu0 0
        %772 = vmatmul.mubr.bf16.gmra.mrb[0].mxu0 %v594
        %v773 = vpop.f32.mrb[0].mxu0
        %v774 = vadd.f32 0.0, %v773
        %v775 = vpop.f32.mrb[0].mxu0
        %v776 = vadd.f32 0.0, %v775
        %v777 = vpop.f32.mrb[0].mxu0
        %v778 = vadd.f32 0.0, %v777
        %v779 = vpop.f32.mrb[0].mxu0
        %v780 = vadd.f32 0.0, %v779
        %781 = vmatprep.mubr.bf16.mxu0 0
        %782 = vmatmul.mubr.bf16.gmra.mrb[0].mxu0 %v597
        %v783 = vpop.f32.mrb[0].mxu0
        %v784 = vadd.f32 0.0, %v783
        %v785 = vpop.f32.mrb[0].mxu0
        %v786 = vadd.f32 0.0, %v785
        %v787 = vpop.f32.mrb[0].mxu0
        %v788 = vadd.f32 0.0, %v787
        %v789 = vpop.f32.mrb[0].mxu0
        %v790 = vadd.f32 0.0, %v789
        %791 = vmatprep.mubr.bf16.mxu0 0
        %792 = vmatmul.mubr.bf16.gmra.mrb[0].mxu0 %v600
        %v793 = vpop.f32.mrb[0].mxu0
        %v794 = vadd.f32 0.0, %v793
        %v795 = vpop.f32.mrb[0].mxu0
        %v796 = vadd.f32 0.0, %v795
        %v797 = vpop.f32.mrb[0].mxu0
        %v798 = vadd.f32 0.0, %v797
        %v799 = vpop.f32.mrb[0].mxu0
        %v800 = vadd.f32 0.0, %v799
        %801 = vdwg.mxu0
        %v802 = vld [vmem:[#allocation10] ss:$8 sm:$0x3]
        %s803 = scalar_lea.vmem [#allocation10], 1
        %v804 = vld [vmem:[%s803] ss:$8 sm:$0x3]
        %805 = vrot.lane.b32.xlu0 %v644, 1
        %v806 = vpop.permute.xlu0 %805
        %807 = vrot.lane.b32.xlu0 %v648, 1
        %v808 = vpop.permute.xlu0 %807
        %809 = vrot.lane.b32.xlu0 %v654, 1
        %v810 = vpop.permute.xlu0 %809
        %811 = vrot.lane.b32.xlu0 %v658, 1
        %v812 = vpop.permute.xlu0 %811
        %813 = vrot.lane.b32.xlu0 %v664, 1
        %v814 = vpop.permute.xlu0 %813
        %815 = vrot.lane.b32.xlu0 %v668, 1
        %v816 = vpop.permute.xlu0 %815
        %817 = vrot.lane.b32.xlu0 %v674, 1
        %v818 = vpop.permute.xlu0 %817
        %819 = vrot.lane.b32.xlu0 %v678, 1
        %v820 = vpop.permute.xlu0 %819
        %821 = vrot.lane.b32.xlu0 %v684, 1
        %v822 = vpop.permute.xlu0 %821
        %823 = vrot.lane.b32.xlu0 %v688, 1
        %v824 = vpop.permute.xlu0 %823
        %825 = vrot.lane.b32.xlu0 %v694, 1
        %v826 = vpop.permute.xlu0 %825
        %827 = vrot.lane.b32.xlu0 %v698, 1
        %v828 = vpop.permute.xlu0 %827
        %829 = vrot.lane.b32.xlu0 %v704, 1
        %v830 = vpop.permute.xlu0 %829
        %831 = vrot.lane.b32.xlu0 %v708, 1
        %v832 = vpop.permute.xlu0 %831
        %833 = vrot.lane.b32.xlu0 %v714, 1
        %v834 = vpop.permute.xlu0 %833
        %835 = vrot.lane.b32.xlu0 %v718, 1
        %v836 = vpop.permute.xlu0 %835
        %837 = vrot.lane.b32.xlu0 %v724, 1
        %v838 = vpop.permute.xlu0 %837
        %839 = vrot.lane.b32.xlu0 %v728, 1
        %v840 = vpop.permute.xlu0 %839
        %841 = vrot.lane.b32.xlu0 %v734, 1
        %v842 = vpop.permute.xlu0 %841
        %843 = vrot.lane.b32.xlu0 %v738, 1
        %v844 = vpop.permute.xlu0 %843
        %845 = vrot.lane.b32.xlu0 %v744, 1
        %v846 = vpop.permute.xlu0 %845
        %847 = vrot.lane.b32.xlu0 %v748, 1
        %v848 = vpop.permute.xlu0 %847
        %849 = vrot.lane.b32.xlu0 %v754, 1
        %v850 = vpop.permute.xlu0 %849
        %851 = vrot.lane.b32.xlu0 %v758, 1
        %v852 = vpop.permute.xlu0 %851
        %853 = vrot.lane.b32.xlu0 %v764, 1
        %v854 = vpop.permute.xlu0 %853
        %855 = vrot.lane.b32.xlu0 %v768, 1
        %v856 = vpop.permute.xlu0 %855
        %857 = vrot.lane.b32.xlu0 %v774, 1
        %v858 = vpop.permute.xlu0 %857
        %859 = vrot.lane.b32.xlu0 %v778, 1
        %v860 = vpop.permute.xlu0 %859
        %861 = vrot.lane.b32.xlu0 %v784, 1
        %v862 = vpop.permute.xlu0 %861
        %863 = vrot.lane.b32.xlu0 %v788, 1
        %v864 = vpop.permute.xlu0 %863
        %865 = vrot.lane.b32.xlu0 %v794, 1
        %v866 = vpop.permute.xlu0 %865
        %867 = vrot.lane.b32.xlu0 %v798, 1
        %v868 = vpop.permute.xlu0 %867
        %869 = vrot.lane.b32.xlu0 %v646, 1
        %v870 = vpop.permute.xlu0 %869
        %871 = vrot.lane.b32.xlu0 %v650, 1
        %v872 = vpop.permute.xlu0 %871
        %873 = vrot.lane.b32.xlu0 %v656, 1
        %v874 = vpop.permute.xlu0 %873
        %875 = vrot.lane.b32.xlu0 %v660, 1
        %v876 = vpop.permute.xlu0 %875
        %877 = vrot.lane.b32.xlu0 %v666, 1
        %v878 = vpop.permute.xlu0 %877
        %879 = vrot.lane.b32.xlu0 %v670, 1
        %v880 = vpop.permute.xlu0 %879
        %881 = vrot.lane.b32.xlu0 %v676, 1
        %v882 = vpop.permute.xlu0 %881
        %883 = vrot.lane.b32.xlu0 %v680, 1
        %v884 = vpop.permute.xlu0 %883
        %885 = vrot.lane.b32.xlu0 %v686, 1
        %v886 = vpop.permute.xlu0 %885
        %887 = vrot.lane.b32.xlu0 %v690, 1
        %v888 = vpop.permute.xlu0 %887
        %889 = vrot.lane.b32.xlu0 %v696, 1
        %v890 = vpop.permute.xlu0 %889
        %891 = vrot.lane.b32.xlu0 %v700, 1
        %v892 = vpop.permute.xlu0 %891
        %893 = vrot.lane.b32.xlu0 %v706, 1
        %v894 = vpop.permute.xlu0 %893
        %895 = vrot.lane.b32.xlu0 %v710, 1
        %v896 = vpop.permute.xlu0 %895
        %897 = vrot.lane.b32.xlu0 %v716, 1
        %v898 = vpop.permute.xlu0 %897
        %899 = vrot.lane.b32.xlu0 %v720, 1
        %v900 = vpop.permute.xlu0 %899
        %901 = vrot.lane.b32.xlu0 %v726, 1
        %v902 = vpop.permute.xlu0 %901
        %903 = vrot.lane.b32.xlu0 %v730, 1
        %v904 = vpop.permute.xlu0 %903
        %905 = vrot.lane.b32.xlu0 %v736, 1
        %v906 = vpop.permute.xlu0 %905
        %907 = vrot.lane.b32.xlu0 %v740, 1
        %v908 = vpop.permute.xlu0 %907
        %909 = vrot.lane.b32.xlu0 %v746, 1
        %v910 = vpop.permute.xlu0 %909
        %911 = vrot.lane.b32.xlu0 %v750, 1
        %v912 = vpop.permute.xlu0 %911
        %913 = vrot.lane.b32.xlu0 %v756, 1
        %v914 = vpop.permute.xlu0 %913
        %915 = vrot.lane.b32.xlu0 %v760, 1
        %v916 = vpop.permute.xlu0 %915
        %917 = vrot.lane.b32.xlu0 %v766, 1
        %v918 = vpop.permute.xlu0 %917
        %919 = vrot.lane.b32.xlu0 %v770, 1
        %v920 = vpop.permute.xlu0 %919
        %921 = vrot.lane.b32.xlu0 %v776, 1
        %v922 = vpop.permute.xlu0 %921
        %923 = vrot.lane.b32.xlu0 %v780, 1
        %v924 = vpop.permute.xlu0 %923
        %925 = vrot.lane.b32.xlu0 %v786, 1
        %v926 = vpop.permute.xlu0 %925
        %927 = vrot.lane.b32.xlu0 %v790, 1
        %v928 = vpop.permute.xlu0 %927
        %929 = vrot.lane.b32.xlu0 %v796, 1
        %v930 = vpop.permute.xlu0 %929
        %931 = vrot.lane.b32.xlu0 %v800, 1
        %v932 = vpop.permute.xlu0 %931
        %v933 = vlaneseq
        %v934 = vand.u32 %v933, 127
        %vm935 = vcmp.lt.s32.totalorder %v934, 1
        %v936 = vsel %vm935, %v806, %v870
        %v937 = vsel %vm935, %v808, %v872
        %v938 = vsel %vm935, %v810, %v874
        %v939 = vsel %vm935, %v812, %v876
        %v940 = vsel %vm935, %v814, %v878
        %v941 = vsel %vm935, %v816, %v880
        %v942 = vsel %vm935, %v818, %v882
        %v943 = vsel %vm935, %v820, %v884
        %v944 = vsel %vm935, %v822, %v886
        %v945 = vsel %vm935, %v824, %v888
        %v946 = vsel %vm935, %v826, %v890
        %v947 = vsel %vm935, %v828, %v892
        %v948 = vsel %vm935, %v830, %v894
        %v949 = vsel %vm935, %v832, %v896
        %v950 = vsel %vm935, %v834, %v898
        %v951 = vsel %vm935, %v836, %v900
        %v952 = vsel %vm935, %v838, %v902
        %v953 = vsel %vm935, %v840, %v904
        %v954 = vsel %vm935, %v842, %v906
        %v955 = vsel %vm935, %v844, %v908
        %v956 = vsel %vm935, %v846, %v910
        %v957 = vsel %vm935, %v848, %v912
        %v958 = vsel %vm935, %v850, %v914
        %v959 = vsel %vm935, %v852, %v916
        %v960 = vsel %vm935, %v854, %v918
        %v961 = vsel %vm935, %v856, %v920
        %v962 = vsel %vm935, %v858, %v922
        %v963 = vsel %vm935, %v860, %v924
        %v964 = vsel %vm935, %v862, %v926
        %v965 = vsel %vm935, %v864, %v928
        %v966 = vsel %vm935, %v866, %v930
        %v967 = vsel %vm935, %v868, %v932
        %v968 = vsel %vm935, %v870, %v806
        %v969 = vsel %vm935, %v872, %v808
        %v970 = vsel %vm935, %v874, %v810
        %v971 = vsel %vm935, %v876, %v812
        %v972 = vsel %vm935, %v878, %v814
        %v973 = vsel %vm935, %v880, %v816
        %v974 = vsel %vm935, %v882, %v818
        %v975 = vsel %vm935, %v884, %v820
        %v976 = vsel %vm935, %v886, %v822
        %v977 = vsel %vm935, %v888, %v824
        %v978 = vsel %vm935, %v890, %v826
        %v979 = vsel %vm935, %v892, %v828
        %v980 = vsel %vm935, %v894, %v830
        %v981 = vsel %vm935, %v896, %v832
        %v982 = vsel %vm935, %v898, %v834
        %v983 = vsel %vm935, %v900, %v836
        %v984 = vsel %vm935, %v902, %v838
        %v985 = vsel %vm935, %v904, %v840
        %v986 = vsel %vm935, %v906, %v842
        %v987 = vsel %vm935, %v908, %v844
        %v988 = vsel %vm935, %v910, %v846
        %v989 = vsel %vm935, %v912, %v848
        %v990 = vsel %vm935, %v914, %v850
        %v991 = vsel %vm935, %v916, %v852
        %v992 = vsel %vm935, %v918, %v854
        %v993 = vsel %vm935, %v920, %v856
        %v994 = vsel %vm935, %v922, %v858
        %v995 = vsel %vm935, %v924, %v860
        %v996 = vsel %vm935, %v926, %v862
        %v997 = vsel %vm935, %v928, %v864
        %v998 = vsel %vm935, %v930, %v866
        %v999 = vsel %vm935, %v932, %v868
        %v1001 = vlaneseq
        %v1002 = vshrl.u32 %v1001, 7
        %v1003 = vsub.s32 0, %v1002
        %v1004 = vrot.slane %v802, %v1003
        %v1005 = vlaneseq
        %v1006 = vshrl.u32 %v1005, 7
        %v1007 = vsub.s32 1, %v1006
        %v1008 = vrot.slane %v802, %v1007
        %v1011 = vmul.f32 %v968, %v1004
        %v1012 = vmul.f32 %v936, %v1008
        %v1013 = vmul.f32 %v969, %v1004
        %v1014 = vmul.f32 %v937, %v1008
        %v1015 = vmul.f32 %v970, %v1004
        %v1016 = vmul.f32 %v938, %v1008
        %v1017 = vmul.f32 %v971, %v1004
        %v1018 = vmul.f32 %v939, %v1008
        %v1019 = vmul.f32 %v972, %v1004
        %v1020 = vmul.f32 %v940, %v1008
        %v1021 = vmul.f32 %v973, %v1004
        %v1022 = vmul.f32 %v941, %v1008
        %v1023 = vmul.f32 %v974, %v1004
        %v1024 = vmul.f32 %v942, %v1008
        %v1025 = vmul.f32 %v975, %v1004
        %v1026 = vmul.f32 %v943, %v1008
        %v1027 = vmul.f32 %v976, %v1004
        %v1028 = vmul.f32 %v944, %v1008
        %v1029 = vmul.f32 %v977, %v1004
        %v1030 = vmul.f32 %v945, %v1008
        %v1031 = vmul.f32 %v978, %v1004
        %v1032 = vmul.f32 %v946, %v1008
        %v1033 = vmul.f32 %v979, %v1004
        %v1034 = vmul.f32 %v947, %v1008
        %v1035 = vmul.f32 %v980, %v1004
        %v1036 = vmul.f32 %v948, %v1008
        %v1037 = vmul.f32 %v981, %v1004
        %v1038 = vmul.f32 %v949, %v1008
        %v1039 = vmul.f32 %v982, %v1004
        %v1040 = vmul.f32 %v950, %v1008
        %v1041 = vmul.f32 %v983, %v1004
        %v1042 = vmul.f32 %v951, %v1008
        %v1043 = vmul.f32 %v984, %v1004
        %v1044 = vmul.f32 %v952, %v1008
        %v1045 = vmul.f32 %v985, %v1004
        %v1046 = vmul.f32 %v953, %v1008
        %v1047 = vmul.f32 %v986, %v1004
        %v1048 = vmul.f32 %v954, %v1008
        %v1049 = vmul.f32 %v987, %v1004
        %v1050 = vmul.f32 %v955, %v1008
        %v1051 = vmul.f32 %v988, %v1004
        %v1052 = vmul.f32 %v956, %v1008
        %v1053 = vmul.f32 %v989, %v1004
        %v1054 = vmul.f32 %v957, %v1008
        %v1055 = vmul.f32 %v990, %v1004
        %v1056 = vmul.f32 %v958, %v1008
        %v1057 = vmul.f32 %v991, %v1004
        %v1058 = vmul.f32 %v959, %v1008
        %v1059 = vmul.f32 %v992, %v1004
        %v1060 = vmul.f32 %v960, %v1008
        %v1061 = vmul.f32 %v993, %v1004
        %v1062 = vmul.f32 %v961, %v1008
        %v1063 = vmul.f32 %v994, %v1004
        %v1064 = vmul.f32 %v962, %v1008
        %v1065 = vmul.f32 %v995, %v1004
        %v1066 = vmul.f32 %v963, %v1008
        %v1067 = vmul.f32 %v996, %v1004
        %v1068 = vmul.f32 %v964, %v1008
        %v1069 = vmul.f32 %v997, %v1004
        %v1070 = vmul.f32 %v965, %v1008
        %v1071 = vmul.f32 %v998, %v1004
        %v1072 = vmul.f32 %v966, %v1008
        %v1073 = vmul.f32 %v999, %v1004
        %v1074 = vmul.f32 %v967, %v1008
        %v1075 = vadd.f32 %v644, %v1011
        %v1076 = vadd.f32 %v646, %v1012
        %v1077 = vadd.f32 %v648, %v1013
        %v1078 = vadd.f32 %v650, %v1014
        %v1079 = vadd.f32 %v654, %v1015
        %v1080 = vadd.f32 %v656, %v1016
        %v1081 = vadd.f32 %v658, %v1017
        %v1082 = vadd.f32 %v660, %v1018
        %v1083 = vadd.f32 %v664, %v1019
        %v1084 = vadd.f32 %v666, %v1020
        %v1085 = vadd.f32 %v668, %v1021
        %v1086 = vadd.f32 %v670, %v1022
        %v1087 = vadd.f32 %v674, %v1023
        %v1088 = vadd.f32 %v676, %v1024
        %v1089 = vadd.f32 %v678, %v1025
        %v1090 = vadd.f32 %v680, %v1026
        %v1091 = vadd.f32 %v684, %v1027
        %v1092 = vadd.f32 %v686, %v1028
        %v1093 = vadd.f32 %v688, %v1029
        %v1094 = vadd.f32 %v690, %v1030
        %v1095 = vadd.f32 %v694, %v1031
        %v1096 = vadd.f32 %v696, %v1032
        %v1097 = vadd.f32 %v698, %v1033
        %v1098 = vadd.f32 %v700, %v1034
        %v1099 = vadd.f32 %v704, %v1035
        %v1100 = vadd.f32 %v706, %v1036
        %v1101 = vadd.f32 %v708, %v1037
        %v1102 = vadd.f32 %v710, %v1038
        %v1103 = vadd.f32 %v714, %v1039
        %v1104 = vadd.f32 %v716, %v1040
        %v1105 = vadd.f32 %v718, %v1041
        %v1106 = vadd.f32 %v720, %v1042
        %v1107 = vadd.f32 %v724, %v1043
        %v1108 = vadd.f32 %v726, %v1044
        %v1109 = vadd.f32 %v728, %v1045
        %v1110 = vadd.f32 %v730, %v1046
        %v1111 = vadd.f32 %v734, %v1047
        %v1112 = vadd.f32 %v736, %v1048
        %v1113 = vadd.f32 %v738, %v1049
        %v1114 = vadd.f32 %v740, %v1050
        %v1115 = vadd.f32 %v744, %v1051
        %v1116 = vadd.f32 %v746, %v1052
        %v1117 = vadd.f32 %v748, %v1053
        %v1118 = vadd.f32 %v750, %v1054
        %v1119 = vadd.f32 %v754, %v1055
        %v1120 = vadd.f32 %v756, %v1056
        %v1121 = vadd.f32 %v758, %v1057
        %v1122 = vadd.f32 %v760, %v1058
        %v1123 = vadd.f32 %v764, %v1059
        %v1124 = vadd.f32 %v766, %v1060
        %v1125 = vadd.f32 %v768, %v1061
        %v1126 = vadd.f32 %v770, %v1062
        %v1127 = vadd.f32 %v774, %v1063
        %v1128 = vadd.f32 %v776, %v1064
        %v1129 = vadd.f32 %v778, %v1065
        %v1130 = vadd.f32 %v780, %v1066
        %v1131 = vadd.f32 %v784, %v1067
        %v1132 = vadd.f32 %v786, %v1068
        %v1133 = vadd.f32 %v788, %v1069
        %v1134 = vadd.f32 %v790, %v1070
        %v1135 = vadd.f32 %v794, %v1071
        %v1136 = vadd.f32 %v796, %v1072
        %v1137 = vadd.f32 %v798, %v1073
        %v1138 = vadd.f32 %v800, %v1074
        %1139 = vrot.lane.b32.xlu0 %v644, 127
        %v1140 = vpop.permute.xlu0 %1139
        %1141 = vrot.lane.b32.xlu0 %v648, 127
        %v1142 = vpop.permute.xlu0 %1141
        %1143 = vrot.lane.b32.xlu0 %v654, 127
        %v1144 = vpop.permute.xlu0 %1143
        %1145 = vrot.lane.b32.xlu0 %v658, 127
        %v1146 = vpop.permute.xlu0 %1145
        %1147 = vrot.lane.b32.xlu0 %v664, 127
        %v1148 = vpop.permute.xlu0 %1147
        %1149 = vrot.lane.b32.xlu0 %v668, 127
        %v1150 = vpop.permute.xlu0 %1149
        %1151 = vrot.lane.b32.xlu0 %v674, 127
        %v1152 = vpop.permute.xlu0 %1151
        %1153 = vrot.lane.b32.xlu0 %v678, 127
        %v1154 = vpop.permute.xlu0 %1153
        %1155 = vrot.lane.b32.xlu0 %v684, 127
        %v1156 = vpop.permute.xlu0 %1155
        %1157 = vrot.lane.b32.xlu0 %v688, 127
        %v1158 = vpop.permute.xlu0 %1157
        %1159 = vrot.lane.b32.xlu0 %v694, 127
        %v1160 = vpop.permute.xlu0 %1159
        %1161 = vrot.lane.b32.xlu0 %v698, 127
        %v1162 = vpop.permute.xlu0 %1161
        %1163 = vrot.lane.b32.xlu0 %v704, 127
        %v1164 = vpop.permute.xlu0 %1163
        %1165 = vrot.lane.b32.xlu0 %v708, 127
        %v1166 = vpop.permute.xlu0 %1165
        %1167 = vrot.lane.b32.xlu0 %v714, 127
        %v1168 = vpop.permute.xlu0 %1167
        %1169 = vrot.lane.b32.xlu0 %v718, 127
        %v1170 = vpop.permute.xlu0 %1169
        %1171 = vrot.lane.b32.xlu0 %v724, 127
        %v1172 = vpop.permute.xlu0 %1171
        %1173 = vrot.lane.b32.xlu0 %v728, 127
        %v1174 = vpop.permute.xlu0 %1173
        %1175 = vrot.lane.b32.xlu0 %v734, 127
        %v1176 = vpop.permute.xlu0 %1175
        %1177 = vrot.lane.b32.xlu0 %v738, 127
        %v1178 = vpop.permute.xlu0 %1177
        %1179 = vrot.lane.b32.xlu0 %v744, 127
        %v1180 = vpop.permute.xlu0 %1179
        %1181 = vrot.lane.b32.xlu0 %v748, 127
        %v1182 = vpop.permute.xlu0 %1181
        %1183 = vrot.lane.b32.xlu0 %v754, 127
        %v1184 = vpop.permute.xlu0 %1183
        %1185 = vrot.lane.b32.xlu0 %v758, 127
        %v1186 = vpop.permute.xlu0 %1185
        %1187 = vrot.lane.b32.xlu0 %v764, 127
        %v1188 = vpop.permute.xlu0 %1187
        %1189 = vrot.lane.b32.xlu0 %v768, 127
        %v1190 = vpop.permute.xlu0 %1189
        %1191 = vrot.lane.b32.xlu0 %v774, 127
        %v1192 = vpop.permute.xlu0 %1191
        %1193 = vrot.lane.b32.xlu0 %v778, 127
        %v1194 = vpop.permute.xlu0 %1193
        %1195 = vrot.lane.b32.xlu0 %v784, 127
        %v1196 = vpop.permute.xlu0 %1195
        %1197 = vrot.lane.b32.xlu0 %v788, 127
        %v1198 = vpop.permute.xlu0 %1197
        %1199 = vrot.lane.b32.xlu0 %v794, 127
        %v1200 = vpop.permute.xlu0 %1199
        %1201 = vrot.lane.b32.xlu0 %v798, 127
        %v1202 = vpop.permute.xlu0 %1201
        %1203 = vrot.lane.b32.xlu0 %v646, 127
        %v1204 = vpop.permute.xlu0 %1203
        %1205 = vrot.lane.b32.xlu0 %v650, 127
        %v1206 = vpop.permute.xlu0 %1205
        %1207 = vrot.lane.b32.xlu0 %v656, 127
        %v1208 = vpop.permute.xlu0 %1207
        %1209 = vrot.lane.b32.xlu0 %v660, 127
        %v1210 = vpop.permute.xlu0 %1209
        %1211 = vrot.lane.b32.xlu0 %v666, 127
        %v1212 = vpop.permute.xlu0 %1211
        %1213 = vrot.lane.b32.xlu0 %v670, 127
        %v1214 = vpop.permute.xlu0 %1213
        %1215 = vrot.lane.b32.xlu0 %v676, 127
        %v1216 = vpop.permute.xlu0 %1215
        %1217 = vrot.lane.b32.xlu0 %v680, 127
        %v1218 = vpop.permute.xlu0 %1217
        %1219 = vrot.lane.b32.xlu0 %v686, 127
        %v1220 = vpop.permute.xlu0 %1219
        %1221 = vrot.lane.b32.xlu0 %v690, 127
        %v1222 = vpop.permute.xlu0 %1221
        %1223 = vrot.lane.b32.xlu0 %v696, 127
        %v1224 = vpop.permute.xlu0 %1223
        %1225 = vrot.lane.b32.xlu0 %v700, 127
        %v1226 = vpop.permute.xlu0 %1225
        %1227 = vrot.lane.b32.xlu0 %v706, 127
        %v1228 = vpop.permute.xlu0 %1227
        %1229 = vrot.lane.b32.xlu0 %v710, 127
        %v1230 = vpop.permute.xlu0 %1229
        %1231 = vrot.lane.b32.xlu0 %v716, 127
        %v1232 = vpop.permute.xlu0 %1231
        %1233 = vrot.lane.b32.xlu0 %v720, 127
        %v1234 = vpop.permute.xlu0 %1233
        %1235 = vrot.lane.b32.xlu0 %v726, 127
        %v1236 = vpop.permute.xlu0 %1235
        %1237 = vrot.lane.b32.xlu0 %v730, 127
        %v1238 = vpop.permute.xlu0 %1237
        %1239 = vrot.lane.b32.xlu0 %v736, 127
        %v1240 = vpop.permute.xlu0 %1239
        %1241 = vrot.lane.b32.xlu0 %v740, 127
        %v1242 = vpop.permute.xlu0 %1241
        %1243 = vrot.lane.b32.xlu0 %v746, 127
        %v1244 = vpop.permute.xlu0 %1243
        %1245 = vrot.lane.b32.xlu0 %v750, 127
        %v1246 = vpop.permute.xlu0 %1245
        %1247 = vrot.lane.b32.xlu0 %v756, 127
        %v1248 = vpop.permute.xlu0 %1247
        %1249 = vrot.lane.b32.xlu0 %v760, 127
        %v1250 = vpop.permute.xlu0 %1249
        %1251 = vrot.lane.b32.xlu0 %v766, 127
        %v1252 = vpop.permute.xlu0 %1251
        %1253 = vrot.lane.b32.xlu0 %v770, 127
        %v1254 = vpop.permute.xlu0 %1253
        %1255 = vrot.lane.b32.xlu0 %v776, 127
        %v1256 = vpop.permute.xlu0 %1255
        %1257 = vrot.lane.b32.xlu0 %v780, 127
        %v1258 = vpop.permute.xlu0 %1257
        %1259 = vrot.lane.b32.xlu0 %v786, 127
        %v1260 = vpop.permute.xlu0 %1259
        %1261 = vrot.lane.b32.xlu0 %v790, 127
        %v1262 = vpop.permute.xlu0 %1261
        %1263 = vrot.lane.b32.xlu0 %v796, 127
        %v1264 = vpop.permute.xlu0 %1263
        %1265 = vrot.lane.b32.xlu0 %v800, 127
        %v1266 = vpop.permute.xlu0 %1265
        %vm1267 = vcmp.lt.s32.totalorder %v934, 127
        %v1268 = vsel %vm1267, %v1140, %v1204
        %v1269 = vsel %vm1267, %v1142, %v1206
        %v1270 = vsel %vm1267, %v1144, %v1208
        %v1271 = vsel %vm1267, %v1146, %v1210
        %v1272 = vsel %vm1267, %v1148, %v1212
        %v1273 = vsel %vm1267, %v1150, %v1214
        %v1274 = vsel %vm1267, %v1152, %v1216
        %v1275 = vsel %vm1267, %v1154, %v1218
        %v1276 = vsel %vm1267, %v1156, %v1220
        %v1277 = vsel %vm1267, %v1158, %v1222
        %v1278 = vsel %vm1267, %v1160, %v1224
        %v1279 = vsel %vm1267, %v1162, %v1226
        %v1280 = vsel %vm1267, %v1164, %v1228
        %v1281 = vsel %vm1267, %v1166, %v1230
        %v1282 = vsel %vm1267, %v1168, %v1232
        %v1283 = vsel %vm1267, %v1170, %v1234
        %v1284 = vsel %vm1267, %v1172, %v1236
        %v1285 = vsel %vm1267, %v1174, %v1238
        %v1286 = vsel %vm1267, %v1176, %v1240
        %v1287 = vsel %vm1267, %v1178, %v1242
        %v1288 = vsel %vm1267, %v1180, %v1244
        %v1289 = vsel %vm1267, %v1182, %v1246
        %v1290 = vsel %vm1267, %v1184, %v1248
        %v1291 = vsel %vm1267, %v1186, %v1250
        %v1292 = vsel %vm1267, %v1188, %v1252
        %v1293 = vsel %vm1267, %v1190, %v1254
        %v1294 = vsel %vm1267, %v1192, %v1256
        %v1295 = vsel %vm1267, %v1194, %v1258
        %v1296 = vsel %vm1267, %v1196, %v1260
        %v1297 = vsel %vm1267, %v1198, %v1262
        %v1298 = vsel %vm1267, %v1200, %v1264
        %v1299 = vsel %vm1267, %v1202, %v1266
        %v1300 = vsel %vm1267, %v1204, %v1140
        %v1301 = vsel %vm1267, %v1206, %v1142
        %v1302 = vsel %vm1267, %v1208, %v1144
        %v1303 = vsel %vm1267, %v1210, %v1146
        %v1304 = vsel %vm1267, %v1212, %v1148
        %v1305 = vsel %vm1267, %v1214, %v1150
        %v1306 = vsel %vm1267, %v1216, %v1152
        %v1307 = vsel %vm1267, %v1218, %v1154
        %v1308 = vsel %vm1267, %v1220, %v1156
        %v1309 = vsel %vm1267, %v1222, %v1158
        %v1310 = vsel %vm1267, %v1224, %v1160
        %v1311 = vsel %vm1267, %v1226, %v1162
        %v1312 = vsel %vm1267, %v1228, %v1164
        %v1313 = vsel %vm1267, %v1230, %v1166
        %v1314 = vsel %vm1267, %v1232, %v1168
        %v1315 = vsel %vm1267, %v1234, %v1170
        %v1316 = vsel %vm1267, %v1236, %v1172
        %v1317 = vsel %vm1267, %v1238, %v1174
        %v1318 = vsel %vm1267, %v1240, %v1176
        %v1319 = vsel %vm1267, %v1242, %v1178
        %v1320 = vsel %vm1267, %v1244, %v1180
        %v1321 = vsel %vm1267, %v1246, %v1182
        %v1322 = vsel %vm1267, %v1248, %v1184
        %v1323 = vsel %vm1267, %v1250, %v1186
        %v1324 = vsel %vm1267, %v1252, %v1188
        %v1325 = vsel %vm1267, %v1254, %v1190
        %v1326 = vsel %vm1267, %v1256, %v1192
        %v1327 = vsel %vm1267, %v1258, %v1194
        %v1328 = vsel %vm1267, %v1260, %v1196
        %v1329 = vsel %vm1267, %v1262, %v1198
        %v1330 = vsel %vm1267, %v1264, %v1200
        %v1331 = vsel %vm1267, %v1266, %v1202
        %v1333 = vlaneseq
        %v1334 = vshrl.u32 %v1333, 7
        %v1335 = vsub.s32 0, %v1334
        %v1336 = vrot.slane %v804, %v1335
        %v1337 = vlaneseq
        %v1338 = vshrl.u32 %v1337, 7
        %v1339 = vsub.s32 1, %v1338
        %v1340 = vrot.slane %v804, %v1339
        %v1343 = vmul.f32 %v1268, %v1336
        %v1344 = vmul.f32 %v1300, %v1340
        %v1345 = vmul.f32 %v1269, %v1336
        %v1346 = vmul.f32 %v1301, %v1340
        %v1347 = vmul.f32 %v1270, %v1336
        %v1348 = vmul.f32 %v1302, %v1340
        %v1349 = vmul.f32 %v1271, %v1336
        %v1350 = vmul.f32 %v1303, %v1340
        %v1351 = vmul.f32 %v1272, %v1336
        %v1352 = vmul.f32 %v1304, %v1340
        %v1353 = vmul.f32 %v1273, %v1336
        %v1354 = vmul.f32 %v1305, %v1340
        %v1355 = vmul.f32 %v1274, %v1336
        %v1356 = vmul.f32 %v1306, %v1340
        %v1357 = vmul.f32 %v1275, %v1336
        %v1358 = vmul.f32 %v1307, %v1340
        %v1359 = vmul.f32 %v1276, %v1336
        %v1360 = vmul.f32 %v1308, %v1340
        %v1361 = vmul.f32 %v1277, %v1336
        %v1362 = vmul.f32 %v1309, %v1340
        %v1363 = vmul.f32 %v1278, %v1336
        %v1364 = vmul.f32 %v1310, %v1340
        %v1365 = vmul.f32 %v1279, %v1336
        %v1366 = vmul.f32 %v1311, %v1340
        %v1367 = vmul.f32 %v1280, %v1336
        %v1368 = vmul.f32 %v1312, %v1340
        %v1369 = vmul.f32 %v1281, %v1336
        %v1370 = vmul.f32 %v1313, %v1340
        %v1371 = vmul.f32 %v1282, %v1336
        %v1372 = vmul.f32 %v1314, %v1340
        %v1373 = vmul.f32 %v1283, %v1336
        %v1374 = vmul.f32 %v1315, %v1340
        %v1375 = vmul.f32 %v1284, %v1336
        %v1376 = vmul.f32 %v1316, %v1340
        %v1377 = vmul.f32 %v1285, %v1336
        %v1378 = vmul.f32 %v1317, %v1340
        %v1379 = vmul.f32 %v1286, %v1336
        %v1380 = vmul.f32 %v1318, %v1340
        %v1381 = vmul.f32 %v1287, %v1336
        %v1382 = vmul.f32 %v1319, %v1340
        %v1383 = vmul.f32 %v1288, %v1336
        %v1384 = vmul.f32 %v1320, %v1340
        %v1385 = vmul.f32 %v1289, %v1336
        %v1386 = vmul.f32 %v1321, %v1340
        %v1387 = vmul.f32 %v1290, %v1336
        %v1388 = vmul.f32 %v1322, %v1340
        %v1389 = vmul.f32 %v1291, %v1336
        %v1390 = vmul.f32 %v1323, %v1340
        %v1391 = vmul.f32 %v1292, %v1336
        %v1392 = vmul.f32 %v1324, %v1340
        %v1393 = vmul.f32 %v1293, %v1336
        %v1394 = vmul.f32 %v1325, %v1340
        %v1395 = vmul.f32 %v1294, %v1336
        %v1396 = vmul.f32 %v1326, %v1340
        %v1397 = vmul.f32 %v1295, %v1336
        %v1398 = vmul.f32 %v1327, %v1340
        %v1399 = vmul.f32 %v1296, %v1336
        %v1400 = vmul.f32 %v1328, %v1340
        %v1401 = vmul.f32 %v1297, %v1336
        %v1402 = vmul.f32 %v1329, %v1340
        %v1403 = vmul.f32 %v1298, %v1336
        %v1404 = vmul.f32 %v1330, %v1340
        %v1405 = vmul.f32 %v1299, %v1336
        %v1406 = vmul.f32 %v1331, %v1340
        %v1407 = vadd.f32 %v1075, %v1343
        %v1408 = vadd.f32 %v1076, %v1344
        %v1409 = vadd.f32 %v1077, %v1345
        %v1410 = vadd.f32 %v1078, %v1346
        %v1411 = vadd.f32 %v1079, %v1347
        %v1412 = vadd.f32 %v1080, %v1348
        %v1413 = vadd.f32 %v1081, %v1349
        %v1414 = vadd.f32 %v1082, %v1350
        %v1415 = vadd.f32 %v1083, %v1351
        %v1416 = vadd.f32 %v1084, %v1352
        %v1417 = vadd.f32 %v1085, %v1353
        %v1418 = vadd.f32 %v1086, %v1354
        %v1419 = vadd.f32 %v1087, %v1355
        %v1420 = vadd.f32 %v1088, %v1356
        %v1421 = vadd.f32 %v1089, %v1357
        %v1422 = vadd.f32 %v1090, %v1358
        %v1423 = vadd.f32 %v1091, %v1359
        %v1424 = vadd.f32 %v1092, %v1360
        %v1425 = vadd.f32 %v1093, %v1361
        %v1426 = vadd.f32 %v1094, %v1362
        %v1427 = vadd.f32 %v1095, %v1363
        %v1428 = vadd.f32 %v1096, %v1364
        %v1429 = vadd.f32 %v1097, %v1365
        %v1430 = vadd.f32 %v1098, %v1366
        %v1431 = vadd.f32 %v1099, %v1367
        %v1432 = vadd.f32 %v1100, %v1368
        %v1433 = vadd.f32 %v1101, %v1369
        %v1434 = vadd.f32 %v1102, %v1370
        %v1435 = vadd.f32 %v1103, %v1371
        %v1436 = vadd.f32 %v1104, %v1372
        %v1437 = vadd.f32 %v1105, %v1373
        %v1438 = vadd.f32 %v1106, %v1374
        %v1439 = vadd.f32 %v1107, %v1375
        %v1440 = vadd.f32 %v1108, %v1376
        %v1441 = vadd.f32 %v1109, %v1377
        %v1442 = vadd.f32 %v1110, %v1378
        %v1443 = vadd.f32 %v1111, %v1379
        %v1444 = vadd.f32 %v1112, %v1380
        %v1445 = vadd.f32 %v1113, %v1381
        %v1446 = vadd.f32 %v1114, %v1382
        %v1447 = vadd.f32 %v1115, %v1383
        %v1448 = vadd.f32 %v1116, %v1384
        %v1449 = vadd.f32 %v1117, %v1385
        %v1450 = vadd.f32 %v1118, %v1386
        %v1451 = vadd.f32 %v1119, %v1387
        %v1452 = vadd.f32 %v1120, %v1388
        %v1453 = vadd.f32 %v1121, %v1389
        %v1454 = vadd.f32 %v1122, %v1390
        %v1455 = vadd.f32 %v1123, %v1391
        %v1456 = vadd.f32 %v1124, %v1392
        %v1457 = vadd.f32 %v1125, %v1393
        %v1458 = vadd.f32 %v1126, %v1394
        %v1459 = vadd.f32 %v1127, %v1395
        %v1460 = vadd.f32 %v1128, %v1396
        %v1461 = vadd.f32 %v1129, %v1397
        %v1462 = vadd.f32 %v1130, %v1398
        %v1463 = vadd.f32 %v1131, %v1399
        %v1464 = vadd.f32 %v1132, %v1400
        %v1465 = vadd.f32 %v1133, %v1401
        %v1466 = vadd.f32 %v1134, %v1402
        %v1467 = vadd.f32 %v1135, %v1403
        %v1468 = vadd.f32 %v1136, %v1404
        %v1469 = vadd.f32 %v1137, %v1405
        %v1470 = vadd.f32 %v1138, %v1406
        %s1471 = scalar_lea.vmem [#allocation10], 2
        %v1472 = vld [vmem:[%s1471] ss:$8 sm:$0x3]
        %s1473 = scalar_lea.vmem [#allocation10], 3
        %v1474 = vld [vmem:[%s1473] ss:$8 sm:$0x3]
        %1475 = vrot.lane.b32.xlu0 %v1407, 16
        %v1476 = vpop.permute.xlu0 %1475
        %1477 = vrot.lane.b32.xlu0 %v1409, 16
        %v1478 = vpop.permute.xlu0 %1477
        %1479 = vrot.lane.b32.xlu0 %v1411, 16
        %v1480 = vpop.permute.xlu0 %1479
        %1481 = vrot.lane.b32.xlu0 %v1413, 16
        %v1482 = vpop.permute.xlu0 %1481
        %1483 = vrot.lane.b32.xlu0 %v1415, 16
        %v1484 = vpop.permute.xlu0 %1483
        %1485 = vrot.lane.b32.xlu0 %v1417, 16
        %v1486 = vpop.permute.xlu0 %1485
        %1487 = vrot.lane.b32.xlu0 %v1419, 16
        %v1488 = vpop.permute.xlu0 %1487
        %1489 = vrot.lane.b32.xlu0 %v1421, 16
        %v1490 = vpop.permute.xlu0 %1489
        %1491 = vrot.lane.b32.xlu0 %v1423, 16
        %v1492 = vpop.permute.xlu0 %1491
        %1493 = vrot.lane.b32.xlu0 %v1425, 16
        %v1494 = vpop.permute.xlu0 %1493
        %1495 = vrot.lane.b32.xlu0 %v1427, 16
        %v1496 = vpop.permute.xlu0 %1495
        %1497 = vrot.lane.b32.xlu0 %v1429, 16
        %v1498 = vpop.permute.xlu0 %1497
        %1499 = vrot.lane.b32.xlu0 %v1431, 16
        %v1500 = vpop.permute.xlu0 %1499
        %1501 = vrot.lane.b32.xlu0 %v1433, 16
        %v1502 = vpop.permute.xlu0 %1501
        %1503 = vrot.lane.b32.xlu0 %v1435, 16
        %v1504 = vpop.permute.xlu0 %1503
        %1505 = vrot.lane.b32.xlu0 %v1437, 16
        %v1506 = vpop.permute.xlu0 %1505
        %1507 = vrot.lane.b32.xlu0 %v1439, 16
        %v1508 = vpop.permute.xlu0 %1507
        %1509 = vrot.lane.b32.xlu0 %v1441, 16
        %v1510 = vpop.permute.xlu0 %1509
        %1511 = vrot.lane.b32.xlu0 %v1443, 16
        %v1512 = vpop.permute.xlu0 %1511
        %1513 = vrot.lane.b32.xlu0 %v1445, 16
        %v1514 = vpop.permute.xlu0 %1513
        %1515 = vrot.lane.b32.xlu0 %v1447, 16
        %v1516 = vpop.permute.xlu0 %1515
        %1517 = vrot.lane.b32.xlu0 %v1449, 16
        %v1518 = vpop.permute.xlu0 %1517
        %1519 = vrot.lane.b32.xlu0 %v1451, 16
        %v1520 = vpop.permute.xlu0 %1519
        %1521 = vrot.lane.b32.xlu0 %v1453, 16
        %v1522 = vpop.permute.xlu0 %1521
        %1523 = vrot.lane.b32.xlu0 %v1455, 16
        %v1524 = vpop.permute.xlu0 %1523
        %1525 = vrot.lane.b32.xlu0 %v1457, 16
        %v1526 = vpop.permute.xlu0 %1525
        %1527 = vrot.lane.b32.xlu0 %v1459, 16
        %v1528 = vpop.permute.xlu0 %1527
        %1529 = vrot.lane.b32.xlu0 %v1461, 16
        %v1530 = vpop.permute.xlu0 %1529
        %1531 = vrot.lane.b32.xlu0 %v1463, 16
        %v1532 = vpop.permute.xlu0 %1531
        %1533 = vrot.lane.b32.xlu0 %v1465, 16
        %v1534 = vpop.permute.xlu0 %1533
        %1535 = vrot.lane.b32.xlu0 %v1467, 16
        %v1536 = vpop.permute.xlu0 %1535
        %1537 = vrot.lane.b32.xlu0 %v1469, 16
        %v1538 = vpop.permute.xlu0 %1537
        %1539 = vrot.lane.b32.xlu0 %v1408, 16
        %v1540 = vpop.permute.xlu0 %1539
        %1541 = vrot.lane.b32.xlu0 %v1410, 16
        %v1542 = vpop.permute.xlu0 %1541
        %1543 = vrot.lane.b32.xlu0 %v1412, 16
        %v1544 = vpop.permute.xlu0 %1543
        %1545 = vrot.lane.b32.xlu0 %v1414, 16
        %v1546 = vpop.permute.xlu0 %1545
        %1547 = vrot.lane.b32.xlu0 %v1416, 16
        %v1548 = vpop.permute.xlu0 %1547
        %1549 = vrot.lane.b32.xlu0 %v1418, 16
        %v1550 = vpop.permute.xlu0 %1549
        %1551 = vrot.lane.b32.xlu0 %v1420, 16
        %v1552 = vpop.permute.xlu0 %1551
        %1553 = vrot.lane.b32.xlu0 %v1422, 16
        %v1554 = vpop.permute.xlu0 %1553
        %1555 = vrot.lane.b32.xlu0 %v1424, 16
        %v1556 = vpop.permute.xlu0 %1555
        %1557 = vrot.lane.b32.xlu0 %v1426, 16
        %v1558 = vpop.permute.xlu0 %1557
        %1559 = vrot.lane.b32.xlu0 %v1428, 16
        %v1560 = vpop.permute.xlu0 %1559
        %1561 = vrot.lane.b32.xlu0 %v1430, 16
        %v1562 = vpop.permute.xlu0 %1561
        %1563 = vrot.lane.b32.xlu0 %v1432, 16
        %v1564 = vpop.permute.xlu0 %1563
        %1565 = vrot.lane.b32.xlu0 %v1434, 16
        %v1566 = vpop.permute.xlu0 %1565
        %1567 = vrot.lane.b32.xlu0 %v1436, 16
        %v1568 = vpop.permute.xlu0 %1567
        %1569 = vrot.lane.b32.xlu0 %v1438, 16
        %v1570 = vpop.permute.xlu0 %1569
        %1571 = vrot.lane.b32.xlu0 %v1440, 16
        %v1572 = vpop.permute.xlu0 %1571
        %1573 = vrot.lane.b32.xlu0 %v1442, 16
        %v1574 = vpop.permute.xlu0 %1573
        %1575 = vrot.lane.b32.xlu0 %v1444, 16
        %v1576 = vpop.permute.xlu0 %1575
        %1577 = vrot.lane.b32.xlu0 %v1446, 16
        %v1578 = vpop.permute.xlu0 %1577
        %1579 = vrot.lane.b32.xlu0 %v1448, 16
        %v1580 = vpop.permute.xlu0 %1579
        %1581 = vrot.lane.b32.xlu0 %v1450, 16
        %v1582 = vpop.permute.xlu0 %1581
        %1583 = vrot.lane.b32.xlu0 %v1452, 16
        %v1584 = vpop.permute.xlu0 %1583
        %1585 = vrot.lane.b32.xlu0 %v1454, 16
        %v1586 = vpop.permute.xlu0 %1585
        %1587 = vrot.lane.b32.xlu0 %v1456, 16
        %v1588 = vpop.permute.xlu0 %1587
        %1589 = vrot.lane.b32.xlu0 %v1458, 16
        %v1590 = vpop.permute.xlu0 %1589
        %1591 = vrot.lane.b32.xlu0 %v1460, 16
        %v1592 = vpop.permute.xlu0 %1591
        %1593 = vrot.lane.b32.xlu0 %v1462, 16
        %v1594 = vpop.permute.xlu0 %1593
        %1595 = vrot.lane.b32.xlu0 %v1464, 16
        %v1596 = vpop.permute.xlu0 %1595
        %1597 = vrot.lane.b32.xlu0 %v1466, 16
        %v1598 = vpop.permute.xlu0 %1597
        %1599 = vrot.lane.b32.xlu0 %v1468, 16
        %v1600 = vpop.permute.xlu0 %1599
        %1601 = vrot.lane.b32.xlu0 %v1470, 16
        %v1602 = vpop.permute.xlu0 %1601
        %vm1603 = vcmp.lt.s32.totalorder %v934, 16
        %v1604 = vsel %vm1603, %v1476, %v1540
        %v1605 = vsel %vm1603, %v1478, %v1542
        %v1606 = vsel %vm1603, %v1480, %v1544
        %v1607 = vsel %vm1603, %v1482, %v1546
        %v1608 = vsel %vm1603, %v1484, %v1548
        %v1609 = vsel %vm1603, %v1486, %v1550
        %v1610 = vsel %vm1603, %v1488, %v1552
        %v1611 = vsel %vm1603, %v1490, %v1554
        %v1612 = vsel %vm1603, %v1492, %v1556
        %v1613 = vsel %vm1603, %v1494, %v1558
        %v1614 = vsel %vm1603, %v1496, %v1560
        %v1615 = vsel %vm1603, %v1498, %v1562
        %v1616 = vsel %vm1603, %v1500, %v1564
        %v1617 = vsel %vm1603, %v1502, %v1566
        %v1618 = vsel %vm1603, %v1504, %v1568
        %v1619 = vsel %vm1603, %v1506, %v1570
        %v1620 = vsel %vm1603, %v1508, %v1572
        %v1621 = vsel %vm1603, %v1510, %v1574
        %v1622 = vsel %vm1603, %v1512, %v1576
        %v1623 = vsel %vm1603, %v1514, %v1578
        %v1624 = vsel %vm1603, %v1516, %v1580
        %v1625 = vsel %vm1603, %v1518, %v1582
        %v1626 = vsel %vm1603, %v1520, %v1584
        %v1627 = vsel %vm1603, %v1522, %v1586
        %v1628 = vsel %vm1603, %v1524, %v1588
        %v1629 = vsel %vm1603, %v1526, %v1590
        %v1630 = vsel %vm1603, %v1528, %v1592
        %v1631 = vsel %vm1603, %v1530, %v1594
        %v1632 = vsel %vm1603, %v1532, %v1596
        %v1633 = vsel %vm1603, %v1534, %v1598
        %v1634 = vsel %vm1603, %v1536, %v1600
        %v1635 = vsel %vm1603, %v1538, %v1602
        %v1636 = vsel %vm1603, %v1540, %v1476
        %v1637 = vsel %vm1603, %v1542, %v1478
        %v1638 = vsel %vm1603, %v1544, %v1480
        %v1639 = vsel %vm1603, %v1546, %v1482
        %v1640 = vsel %vm1603, %v1548, %v1484
        %v1641 = vsel %vm1603, %v1550, %v1486
        %v1642 = vsel %vm1603, %v1552, %v1488
        %v1643 = vsel %vm1603, %v1554, %v1490
        %v1644 = vsel %vm1603, %v1556, %v1492
        %v1645 = vsel %vm1603, %v1558, %v1494
        %v1646 = vsel %vm1603, %v1560, %v1496
        %v1647 = vsel %vm1603, %v1562, %v1498
        %v1648 = vsel %vm1603, %v1564, %v1500
        %v1649 = vsel %vm1603, %v1566, %v1502
        %v1650 = vsel %vm1603, %v1568, %v1504
        %v1651 = vsel %vm1603, %v1570, %v1506
        %v1652 = vsel %vm1603, %v1572, %v1508
        %v1653 = vsel %vm1603, %v1574, %v1510
        %v1654 = vsel %vm1603, %v1576, %v1512
        %v1655 = vsel %vm1603, %v1578, %v1514
        %v1656 = vsel %vm1603, %v1580, %v1516
        %v1657 = vsel %vm1603, %v1582, %v1518
        %v1658 = vsel %vm1603, %v1584, %v1520
        %v1659 = vsel %vm1603, %v1586, %v1522
        %v1660 = vsel %vm1603, %v1588, %v1524
        %v1661 = vsel %vm1603, %v1590, %v1526
        %v1662 = vsel %vm1603, %v1592, %v1528
        %v1663 = vsel %vm1603, %v1594, %v1530
        %v1664 = vsel %vm1603, %v1596, %v1532
        %v1665 = vsel %vm1603, %v1598, %v1534
        %v1666 = vsel %vm1603, %v1600, %v1536
        %v1667 = vsel %vm1603, %v1602, %v1538
        %v1669 = vlaneseq
        %v1670 = vshrl.u32 %v1669, 7
        %v1671 = vsub.s32 0, %v1670
        %v1672 = vrot.slane %v1472, %v1671
        %v1673 = vlaneseq
        %v1674 = vshrl.u32 %v1673, 7
        %v1675 = vsub.s32 1, %v1674
        %v1676 = vrot.slane %v1472, %v1675
        %v1679 = vmul.f32 %v1636, %v1672
        %v1680 = vmul.f32 %v1604, %v1676
        %v1681 = vmul.f32 %v1637, %v1672
        %v1682 = vmul.f32 %v1605, %v1676
        %v1683 = vmul.f32 %v1638, %v1672
        %v1684 = vmul.f32 %v1606, %v1676
        %v1685 = vmul.f32 %v1639, %v1672
        %v1686 = vmul.f32 %v1607, %v1676
        %v1687 = vmul.f32 %v1640, %v1672
        %v1688 = vmul.f32 %v1608, %v1676
        %v1689 = vmul.f32 %v1641, %v1672
        %v1690 = vmul.f32 %v1609, %v1676
        %v1691 = vmul.f32 %v1642, %v1672
        %v1692 = vmul.f32 %v1610, %v1676
        %v1693 = vmul.f32 %v1643, %v1672
        %v1694 = vmul.f32 %v1611, %v1676
        %v1695 = vmul.f32 %v1644, %v1672
        %v1696 = vmul.f32 %v1612, %v1676
        %v1697 = vmul.f32 %v1645, %v1672
        %v1698 = vmul.f32 %v1613, %v1676
        %v1699 = vmul.f32 %v1646, %v1672
        %v1700 = vmul.f32 %v1614, %v1676
        %v1701 = vmul.f32 %v1647, %v1672
        %v1702 = vmul.f32 %v1615, %v1676
        %v1703 = vmul.f32 %v1648, %v1672
        %v1704 = vmul.f32 %v1616, %v1676
        %v1705 = vmul.f32 %v1649, %v1672
        %v1706 = vmul.f32 %v1617, %v1676
        %v1707 = vmul.f32 %v1650, %v1672
        %v1708 = vmul.f32 %v1618, %v1676
        %v1709 = vmul.f32 %v1651, %v1672
        %v1710 = vmul.f32 %v1619, %v1676
        %v1711 = vmul.f32 %v1652, %v1672
        %v1712 = vmul.f32 %v1620, %v1676
        %v1713 = vmul.f32 %v1653, %v1672
        %v1714 = vmul.f32 %v1621, %v1676
        %v1715 = vmul.f32 %v1654, %v1672
        %v1716 = vmul.f32 %v1622, %v1676
        %v1717 = vmul.f32 %v1655, %v1672
        %v1718 = vmul.f32 %v1623, %v1676
        %v1719 = vmul.f32 %v1656, %v1672
        %v1720 = vmul.f32 %v1624, %v1676
        %v1721 = vmul.f32 %v1657, %v1672
        %v1722 = vmul.f32 %v1625, %v1676
        %v1723 = vmul.f32 %v1658, %v1672
        %v1724 = vmul.f32 %v1626, %v1676
        %v1725 = vmul.f32 %v1659, %v1672
        %v1726 = vmul.f32 %v1627, %v1676
        %v1727 = vmul.f32 %v1660, %v1672
        %v1728 = vmul.f32 %v1628, %v1676
        %v1729 = vmul.f32 %v1661, %v1672
        %v1730 = vmul.f32 %v1629, %v1676
        %v1731 = vmul.f32 %v1662, %v1672
        %v1732 = vmul.f32 %v1630, %v1676
        %v1733 = vmul.f32 %v1663, %v1672
        %v1734 = vmul.f32 %v1631, %v1676
        %v1735 = vmul.f32 %v1664, %v1672
        %v1736 = vmul.f32 %v1632, %v1676
        %v1737 = vmul.f32 %v1665, %v1672
        %v1738 = vmul.f32 %v1633, %v1676
        %v1739 = vmul.f32 %v1666, %v1672
        %v1740 = vmul.f32 %v1634, %v1676
        %v1741 = vmul.f32 %v1667, %v1672
        %v1742 = vmul.f32 %v1635, %v1676
        %v1743 = vadd.f32 %v1407, %v1679
        %v1744 = vadd.f32 %v1408, %v1680
        %v1745 = vadd.f32 %v1409, %v1681
        %v1746 = vadd.f32 %v1410, %v1682
        %v1747 = vadd.f32 %v1411, %v1683
        %v1748 = vadd.f32 %v1412, %v1684
        %v1749 = vadd.f32 %v1413, %v1685
        %v1750 = vadd.f32 %v1414, %v1686
        %v1751 = vadd.f32 %v1415, %v1687
        %v1752 = vadd.f32 %v1416, %v1688
        %v1753 = vadd.f32 %v1417, %v1689
        %v1754 = vadd.f32 %v1418, %v1690
        %v1755 = vadd.f32 %v1419, %v1691
        %v1756 = vadd.f32 %v1420, %v1692
        %v1757 = vadd.f32 %v1421, %v1693
        %v1758 = vadd.f32 %v1422, %v1694
        %v1759 = vadd.f32 %v1423, %v1695
        %v1760 = vadd.f32 %v1424, %v1696
        %v1761 = vadd.f32 %v1425, %v1697
        %v1762 = vadd.f32 %v1426, %v1698
        %v1763 = vadd.f32 %v1427, %v1699
        %v1764 = vadd.f32 %v1428, %v1700
        %v1765 = vadd.f32 %v1429, %v1701
        %v1766 = vadd.f32 %v1430, %v1702
        %v1767 = vadd.f32 %v1431, %v1703
        %v1768 = vadd.f32 %v1432, %v1704
        %v1769 = vadd.f32 %v1433, %v1705
        %v1770 = vadd.f32 %v1434, %v1706
        %v1771 = vadd.f32 %v1435, %v1707
        %v1772 = vadd.f32 %v1436, %v1708
        %v1773 = vadd.f32 %v1437, %v1709
        %v1774 = vadd.f32 %v1438, %v1710
        %v1775 = vadd.f32 %v1439, %v1711
        %v1776 = vadd.f32 %v1440, %v1712
        %v1777 = vadd.f32 %v1441, %v1713
        %v1778 = vadd.f32 %v1442, %v1714
        %v1779 = vadd.f32 %v1443, %v1715
        %v1780 = vadd.f32 %v1444, %v1716
        %v1781 = vadd.f32 %v1445, %v1717
        %v1782 = vadd.f32 %v1446, %v1718
        %v1783 = vadd.f32 %v1447, %v1719
        %v1784 = vadd.f32 %v1448, %v1720
        %v1785 = vadd.f32 %v1449, %v1721
        %v1786 = vadd.f32 %v1450, %v1722
        %v1787 = vadd.f32 %v1451, %v1723
        %v1788 = vadd.f32 %v1452, %v1724
        %v1789 = vadd.f32 %v1453, %v1725
        %v1790 = vadd.f32 %v1454, %v1726
        %v1791 = vadd.f32 %v1455, %v1727
        %v1792 = vadd.f32 %v1456, %v1728
        %v1793 = vadd.f32 %v1457, %v1729
        %v1794 = vadd.f32 %v1458, %v1730
        %v1795 = vadd.f32 %v1459, %v1731
        %v1796 = vadd.f32 %v1460, %v1732
        %v1797 = vadd.f32 %v1461, %v1733
        %v1798 = vadd.f32 %v1462, %v1734
        %v1799 = vadd.f32 %v1463, %v1735
        %v1800 = vadd.f32 %v1464, %v1736
        %v1801 = vadd.f32 %v1465, %v1737
        %v1802 = vadd.f32 %v1466, %v1738
        %v1803 = vadd.f32 %v1467, %v1739
        %v1804 = vadd.f32 %v1468, %v1740
        %v1805 = vadd.f32 %v1469, %v1741
        %v1806 = vadd.f32 %v1470, %v1742
        %1807 = vrot.lane.b32.xlu0 %v1407, 112
        %v1808 = vpop.permute.xlu0 %1807
        %1809 = vrot.lane.b32.xlu0 %v1409, 112
        %v1810 = vpop.permute.xlu0 %1809
        %1811 = vrot.lane.b32.xlu0 %v1411, 112
        %v1812 = vpop.permute.xlu0 %1811
        %1813 = vrot.lane.b32.xlu0 %v1413, 112
        %v1814 = vpop.permute.xlu0 %1813
        %1815 = vrot.lane.b32.xlu0 %v1415, 112
        %v1816 = vpop.permute.xlu0 %1815
        %1817 = vrot.lane.b32.xlu0 %v1417, 112
        %v1818 = vpop.permute.xlu0 %1817
        %1819 = vrot.lane.b32.xlu0 %v1419, 112
        %v1820 = vpop.permute.xlu0 %1819
        %1821 = vrot.lane.b32.xlu0 %v1421, 112
        %v1822 = vpop.permute.xlu0 %1821
        %1823 = vrot.lane.b32.xlu0 %v1423, 112
        %v1824 = vpop.permute.xlu0 %1823
        %1825 = vrot.lane.b32.xlu0 %v1425, 112
        %v1826 = vpop.permute.xlu0 %1825
        %1827 = vrot.lane.b32.xlu0 %v1427, 112
        %v1828 = vpop.permute.xlu0 %1827
        %1829 = vrot.lane.b32.xlu0 %v1429, 112
        %v1830 = vpop.permute.xlu0 %1829
        %1831 = vrot.lane.b32.xlu0 %v1431, 112
        %v1832 = vpop.permute.xlu0 %1831
        %1833 = vrot.lane.b32.xlu0 %v1433, 112
        %v1834 = vpop.permute.xlu0 %1833
        %1835 = vrot.lane.b32.xlu0 %v1435, 112
        %v1836 = vpop.permute.xlu0 %1835
        %1837 = vrot.lane.b32.xlu0 %v1437, 112
        %v1838 = vpop.permute.xlu0 %1837
        %1839 = vrot.lane.b32.xlu0 %v1439, 112
        %v1840 = vpop.permute.xlu0 %1839
        %1841 = vrot.lane.b32.xlu0 %v1441, 112
        %v1842 = vpop.permute.xlu0 %1841
        %1843 = vrot.lane.b32.xlu0 %v1443, 112
        %v1844 = vpop.permute.xlu0 %1843
        %1845 = vrot.lane.b32.xlu0 %v1445, 112
        %v1846 = vpop.permute.xlu0 %1845
        %1847 = vrot.lane.b32.xlu0 %v1447, 112
        %v1848 = vpop.permute.xlu0 %1847
        %1849 = vrot.lane.b32.xlu0 %v1449, 112
        %v1850 = vpop.permute.xlu0 %1849
        %1851 = vrot.lane.b32.xlu0 %v1451, 112
        %v1852 = vpop.permute.xlu0 %1851
        %1853 = vrot.lane.b32.xlu0 %v1453, 112
        %v1854 = vpop.permute.xlu0 %1853
        %1855 = vrot.lane.b32.xlu0 %v1455, 112
        %v1856 = vpop.permute.xlu0 %1855
        %1857 = vrot.lane.b32.xlu0 %v1457, 112
        %v1858 = vpop.permute.xlu0 %1857
        %1859 = vrot.lane.b32.xlu0 %v1459, 112
        %v1860 = vpop.permute.xlu0 %1859
        %1861 = vrot.lane.b32.xlu0 %v1461, 112
        %v1862 = vpop.permute.xlu0 %1861
        %1863 = vrot.lane.b32.xlu0 %v1463, 112
        %v1864 = vpop.permute.xlu0 %1863
        %1865 = vrot.lane.b32.xlu0 %v1465, 112
        %v1866 = vpop.permute.xlu0 %1865
        %1867 = vrot.lane.b32.xlu0 %v1467, 112
        %v1868 = vpop.permute.xlu0 %1867
        %1869 = vrot.lane.b32.xlu0 %v1469, 112
        %v1870 = vpop.permute.xlu0 %1869
        %1871 = vrot.lane.b32.xlu0 %v1408, 112
        %v1872 = vpop.permute.xlu0 %1871
        %1873 = vrot.lane.b32.xlu0 %v1410, 112
        %v1874 = vpop.permute.xlu0 %1873
        %1875 = vrot.lane.b32.xlu0 %v1412, 112
        %v1876 = vpop.permute.xlu0 %1875
        %1877 = vrot.lane.b32.xlu0 %v1414, 112
        %v1878 = vpop.permute.xlu0 %1877
        %1879 = vrot.lane.b32.xlu0 %v1416, 112
        %v1880 = vpop.permute.xlu0 %1879
        %1881 = vrot.lane.b32.xlu0 %v1418, 112
        %v1882 = vpop.permute.xlu0 %1881
        %1883 = vrot.lane.b32.xlu0 %v1420, 112
        %v1884 = vpop.permute.xlu0 %1883
        %1885 = vrot.lane.b32.xlu0 %v1422, 112
        %v1886 = vpop.permute.xlu0 %1885
        %1887 = vrot.lane.b32.xlu0 %v1424, 112
        %v1888 = vpop.permute.xlu0 %1887
        %1889 = vrot.lane.b32.xlu0 %v1426, 112
        %v1890 = vpop.permute.xlu0 %1889
        %1891 = vrot.lane.b32.xlu0 %v1428, 112
        %v1892 = vpop.permute.xlu0 %1891
        %1893 = vrot.lane.b32.xlu0 %v1430, 112
        %v1894 = vpop.permute.xlu0 %1893
        %1895 = vrot.lane.b32.xlu0 %v1432, 112
        %v1896 = vpop.permute.xlu0 %1895
        %1897 = vrot.lane.b32.xlu0 %v1434, 112
        %v1898 = vpop.permute.xlu0 %1897
        %1899 = vrot.lane.b32.xlu0 %v1436, 112
        %v1900 = vpop.permute.xlu0 %1899
        %1901 = vrot.lane.b32.xlu0 %v1438, 112
        %v1902 = vpop.permute.xlu0 %1901
        %1903 = vrot.lane.b32.xlu0 %v1440, 112
        %v1904 = vpop.permute.xlu0 %1903
        %1905 = vrot.lane.b32.xlu0 %v1442, 112
        %v1906 = vpop.permute.xlu0 %1905
        %1907 = vrot.lane.b32.xlu0 %v1444, 112
        %v1908 = vpop.permute.xlu0 %1907
        %1909 = vrot.lane.b32.xlu0 %v1446, 112
        %v1910 = vpop.permute.xlu0 %1909
        %1911 = vrot.lane.b32.xlu0 %v1448, 112
        %v1912 = vpop.permute.xlu0 %1911
        %1913 = vrot.lane.b32.xlu0 %v1450, 112
        %v1914 = vpop.permute.xlu0 %1913
        %1915 = vrot.lane.b32.xlu0 %v1452, 112
        %v1916 = vpop.permute.xlu0 %1915
        %1917 = vrot.lane.b32.xlu0 %v1454, 112
        %v1918 = vpop.permute.xlu0 %1917
        %1919 = vrot.lane.b32.xlu0 %v1456, 112
        %v1920 = vpop.permute.xlu0 %1919
        %1921 = vrot.lane.b32.xlu0 %v1458, 112
        %v1922 = vpop.permute.xlu0 %1921
        %1923 = vrot.lane.b32.xlu0 %v1460, 112
        %v1924 = vpop.permute.xlu0 %1923
        %1925 = vrot.lane.b32.xlu0 %v1462, 112
        %v1926 = vpop.permute.xlu0 %1925
        %1927 = vrot.lane.b32.xlu0 %v1464, 112
        %v1928 = vpop.permute.xlu0 %1927
        %1929 = vrot.lane.b32.xlu0 %v1466, 112
        %v1930 = vpop.permute.xlu0 %1929
        %1931 = vrot.lane.b32.xlu0 %v1468, 112
        %v1932 = vpop.permute.xlu0 %1931
        %1933 = vrot.lane.b32.xlu0 %v1470, 112
        %v1934 = vpop.permute.xlu0 %1933
        %vm1935 = vcmp.lt.s32.totalorder %v934, 112
        %v1936 = vsel %vm1935, %v1808, %v1872
        %v1937 = vsel %vm1935, %v1810, %v1874
        %v1938 = vsel %vm1935, %v1812, %v1876
        %v1939 = vsel %vm1935, %v1814, %v1878
        %v1940 = vsel %vm1935, %v1816, %v1880
        %v1941 = vsel %vm1935, %v1818, %v1882
        %v1942 = vsel %vm1935, %v1820, %v1884
        %v1943 = vsel %vm1935, %v1822, %v1886
        %v1944 = vsel %vm1935, %v1824, %v1888
        %v1945 = vsel %vm1935, %v1826, %v1890
        %v1946 = vsel %vm1935, %v1828, %v1892
        %v1947 = vsel %vm1935, %v1830, %v1894
        %v1948 = vsel %vm1935, %v1832, %v1896
        %v1949 = vsel %vm1935, %v1834, %v1898
        %v1950 = vsel %vm1935, %v1836, %v1900
        %v1951 = vsel %vm1935, %v1838, %v1902
        %v1952 = vsel %vm1935, %v1840, %v1904
        %v1953 = vsel %vm1935, %v1842, %v1906
        %v1954 = vsel %vm1935, %v1844, %v1908
        %v1955 = vsel %vm1935, %v1846, %v1910
        %v1956 = vsel %vm1935, %v1848, %v1912
        %v1957 = vsel %vm1935, %v1850, %v1914
        %v1958 = vsel %vm1935, %v1852, %v1916
        %v1959 = vsel %vm1935, %v1854, %v1918
        %v1960 = vsel %vm1935, %v1856, %v1920
        %v1961 = vsel %vm1935, %v1858, %v1922
        %v1962 = vsel %vm1935, %v1860, %v1924
        %v1963 = vsel %vm1935, %v1862, %v1926
        %v1964 = vsel %vm1935, %v1864, %v1928
        %v1965 = vsel %vm1935, %v1866, %v1930
        %v1966 = vsel %vm1935, %v1868, %v1932
        %v1967 = vsel %vm1935, %v1870, %v1934
        %v1968 = vsel %vm1935, %v1872, %v1808
        %v1969 = vsel %vm1935, %v1874, %v1810
        %v1970 = vsel %vm1935, %v1876, %v1812
        %v1971 = vsel %vm1935, %v1878, %v1814
        %v1972 = vsel %vm1935, %v1880, %v1816
        %v1973 = vsel %vm1935, %v1882, %v1818
        %v1974 = vsel %vm1935, %v1884, %v1820
        %v1975 = vsel %vm1935, %v1886, %v1822
        %v1976 = vsel %vm1935, %v1888, %v1824
        %v1977 = vsel %vm1935, %v1890, %v1826
        %v1978 = vsel %vm1935, %v1892, %v1828
        %v1979 = vsel %vm1935, %v1894, %v1830
        %v1980 = vsel %vm1935, %v1896, %v1832
        %v1981 = vsel %vm1935, %v1898, %v1834
        %v1982 = vsel %vm1935, %v1900, %v1836
        %v1983 = vsel %vm1935, %v1902, %v1838
        %v1984 = vsel %vm1935, %v1904, %v1840
        %v1985 = vsel %vm1935, %v1906, %v1842
        %v1986 = vsel %vm1935, %v1908, %v1844
        %v1987 = vsel %vm1935, %v1910, %v1846
        %v1988 = vsel %vm1935, %v1912, %v1848
        %v1989 = vsel %vm1935, %v1914, %v1850
        %v1990 = vsel %vm1935, %v1916, %v1852
        %v1991 = vsel %vm1935, %v1918, %v1854
        %v1992 = vsel %vm1935, %v1920, %v1856
        %v1993 = vsel %vm1935, %v1922, %v1858
        %v1994 = vsel %vm1935, %v1924, %v1860
        %v1995 = vsel %vm1935, %v1926, %v1862
        %v1996 = vsel %vm1935, %v1928, %v1864
        %v1997 = vsel %vm1935, %v1930, %v1866
        %v1998 = vsel %vm1935, %v1932, %v1868
        %v1999 = vsel %vm1935, %v1934, %v1870
        %v2001 = vlaneseq
        %v2002 = vshrl.u32 %v2001, 7
        %v2003 = vsub.s32 0, %v2002
        %v2004 = vrot.slane %v1474, %v2003
        %v2005 = vlaneseq
        %v2006 = vshrl.u32 %v2005, 7
        %v2007 = vsub.s32 1, %v2006
        %v2008 = vrot.slane %v1474, %v2007
        %v2011 = vmul.f32 %v1936, %v2004
        %v2012 = vmul.f32 %v1968, %v2008
        %v2013 = vmul.f32 %v1937, %v2004
        %v2014 = vmul.f32 %v1969, %v2008
        %v2015 = vmul.f32 %v1938, %v2004
        %v2016 = vmul.f32 %v1970, %v2008
        %v2017 = vmul.f32 %v1939, %v2004
        %v2018 = vmul.f32 %v1971, %v2008
        %v2019 = vmul.f32 %v1940, %v2004
        %v2020 = vmul.f32 %v1972, %v2008
        %v2021 = vmul.f32 %v1941, %v2004
        %v2022 = vmul.f32 %v1973, %v2008
        %v2023 = vmul.f32 %v1942, %v2004
        %v2024 = vmul.f32 %v1974, %v2008
        %v2025 = vmul.f32 %v1943, %v2004
        %v2026 = vmul.f32 %v1975, %v2008
        %v2027 = vmul.f32 %v1944, %v2004
        %v2028 = vmul.f32 %v1976, %v2008
        %v2029 = vmul.f32 %v1945, %v2004
        %v2030 = vmul.f32 %v1977, %v2008
        %v2031 = vmul.f32 %v1946, %v2004
        %v2032 = vmul.f32 %v1978, %v2008
        %v2033 = vmul.f32 %v1947, %v2004
        %v2034 = vmul.f32 %v1979, %v2008
        %v2035 = vmul.f32 %v1948, %v2004
        %v2036 = vmul.f32 %v1980, %v2008
        %v2037 = vmul.f32 %v1949, %v2004
        %v2038 = vmul.f32 %v1981, %v2008
        %v2039 = vmul.f32 %v1950, %v2004
        %v2040 = vmul.f32 %v1982, %v2008
        %v2041 = vmul.f32 %v1951, %v2004
        %v2042 = vmul.f32 %v1983, %v2008
        %v2043 = vmul.f32 %v1952, %v2004
        %v2044 = vmul.f32 %v1984, %v2008
        %v2045 = vmul.f32 %v1953, %v2004
        %v2046 = vmul.f32 %v1985, %v2008
        %v2047 = vmul.f32 %v1954, %v2004
        %v2048 = vmul.f32 %v1986, %v2008
        %v2049 = vmul.f32 %v1955, %v2004
        %v2050 = vmul.f32 %v1987, %v2008
        %v2051 = vmul.f32 %v1956, %v2004
        %v2052 = vmul.f32 %v1988, %v2008
        %v2053 = vmul.f32 %v1957, %v2004
        %v2054 = vmul.f32 %v1989, %v2008
        %v2055 = vmul.f32 %v1958, %v2004
        %v2056 = vmul.f32 %v1990, %v2008
        %v2057 = vmul.f32 %v1959, %v2004
        %v2058 = vmul.f32 %v1991, %v2008
        %v2059 = vmul.f32 %v1960, %v2004
        %v2060 = vmul.f32 %v1992, %v2008
        %v2061 = vmul.f32 %v1961, %v2004
        %v2062 = vmul.f32 %v1993, %v2008
        %v2063 = vmul.f32 %v1962, %v2004
        %v2064 = vmul.f32 %v1994, %v2008
        %v2065 = vmul.f32 %v1963, %v2004
        %v2066 = vmul.f32 %v1995, %v2008
        %v2067 = vmul.f32 %v1964, %v2004
        %v2068 = vmul.f32 %v1996, %v2008
        %v2069 = vmul.f32 %v1965, %v2004
        %v2070 = vmul.f32 %v1997, %v2008
        %v2071 = vmul.f32 %v1966, %v2004
        %v2072 = vmul.f32 %v1998, %v2008
        %v2073 = vmul.f32 %v1967, %v2004
        %v2074 = vmul.f32 %v1999, %v2008
        %v2075 = vadd.f32 %v1743, %v2011
        %v2076 = vadd.f32 %v1744, %v2012
        %v2077 = vadd.f32 %v1745, %v2013
        %v2078 = vadd.f32 %v1746, %v2014
        %v2079 = vadd.f32 %v1747, %v2015
        %v2080 = vadd.f32 %v1748, %v2016
        %v2081 = vadd.f32 %v1749, %v2017
        %v2082 = vadd.f32 %v1750, %v2018
        %v2083 = vadd.f32 %v1751, %v2019
        %v2084 = vadd.f32 %v1752, %v2020
        %v2085 = vadd.f32 %v1753, %v2021
        %v2086 = vadd.f32 %v1754, %v2022
        %v2087 = vadd.f32 %v1755, %v2023
        %v2088 = vadd.f32 %v1756, %v2024
        %v2089 = vadd.f32 %v1757, %v2025
        %v2090 = vadd.f32 %v1758, %v2026
        %v2091 = vadd.f32 %v1759, %v2027
        %v2092 = vadd.f32 %v1760, %v2028
        %v2093 = vadd.f32 %v1761, %v2029
        %v2094 = vadd.f32 %v1762, %v2030
        %v2095 = vadd.f32 %v1763, %v2031
        %v2096 = vadd.f32 %v1764, %v2032
        %v2097 = vadd.f32 %v1765, %v2033
        %v2098 = vadd.f32 %v1766, %v2034
        %v2099 = vadd.f32 %v1767, %v2035
        %v2100 = vadd.f32 %v1768, %v2036
        %v2101 = vadd.f32 %v1769, %v2037
        %v2102 = vadd.f32 %v1770, %v2038
        %v2103 = vadd.f32 %v1771, %v2039
        %v2104 = vadd.f32 %v1772, %v2040
        %v2105 = vadd.f32 %v1773, %v2041
        %v2106 = vadd.f32 %v1774, %v2042
        %v2107 = vadd.f32 %v1775, %v2043
        %v2108 = vadd.f32 %v1776, %v2044
        %v2109 = vadd.f32 %v1777, %v2045
        %v2110 = vadd.f32 %v1778, %v2046
        %v2111 = vadd.f32 %v1779, %v2047
        %v2112 = vadd.f32 %v1780, %v2048
        %v2113 = vadd.f32 %v1781, %v2049
        %v2114 = vadd.f32 %v1782, %v2050
        %v2115 = vadd.f32 %v1783, %v2051
        %v2116 = vadd.f32 %v1784, %v2052
        %v2117 = vadd.f32 %v1785, %v2053
        %v2118 = vadd.f32 %v1786, %v2054
        %v2119 = vadd.f32 %v1787, %v2055
        %v2120 = vadd.f32 %v1788, %v2056
        %v2121 = vadd.f32 %v1789, %v2057
        %v2122 = vadd.f32 %v1790, %v2058
        %v2123 = vadd.f32 %v1791, %v2059
        %v2124 = vadd.f32 %v1792, %v2060
        %v2125 = vadd.f32 %v1793, %v2061
        %v2126 = vadd.f32 %v1794, %v2062
        %v2127 = vadd.f32 %v1795, %v2063
        %v2128 = vadd.f32 %v1796, %v2064
        %v2129 = vadd.f32 %v1797, %v2065
        %v2130 = vadd.f32 %v1798, %v2066
        %v2131 = vadd.f32 %v1799, %v2067
        %v2132 = vadd.f32 %v1800, %v2068
        %v2133 = vadd.f32 %v1801, %v2069
        %v2134 = vadd.f32 %v1802, %v2070
        %v2135 = vadd.f32 %v1803, %v2071
        %v2136 = vadd.f32 %v1804, %v2072
        %v2137 = vadd.f32 %v1805, %v2073
        %v2138 = vadd.f32 %v1806, %v2074
        %v2139 = vld [vmem:[#allocation2] sm:$0x3]
        %v2140 = vmax.f32 %v2075, %v2079
        %v2141 = vmax.f32 %v2077, %v2081
        %v2142 = vmax.f32 %v2140, %v2083
        %v2143 = vmax.f32 %v2141, %v2085
        %v2144 = vmax.f32 %v2142, %v2087
        %v2145 = vmax.f32 %v2143, %v2089
        %v2146 = vmax.f32 %v2144, %v2091
        %v2147 = vmax.f32 %v2145, %v2093
        %v2148 = vmax.f32 %v2146, %v2095
        %v2149 = vmax.f32 %v2147, %v2097
        %v2150 = vmax.f32 %v2148, %v2099
        %v2151 = vmax.f32 %v2149, %v2101
        %v2152 = vmax.f32 %v2150, %v2103
        %v2153 = vmax.f32 %v2151, %v2105
        %v2154 = vmax.f32 %v2152, %v2107
        %v2155 = vmax.f32 %v2153, %v2109
        %v2156 = vmax.f32 %v2154, %v2111
        %v2157 = vmax.f32 %v2155, %v2113
        %v2158 = vmax.f32 %v2156, %v2115
        %v2159 = vmax.f32 %v2157, %v2117
        %v2160 = vmax.f32 %v2158, %v2119
        %v2161 = vmax.f32 %v2159, %v2121
        %v2162 = vmax.f32 %v2160, %v2123
        %v2163 = vmax.f32 %v2161, %v2125
        %v2164 = vmax.f32 %v2162, %v2127
        %v2165 = vmax.f32 %v2163, %v2129
        %v2166 = vmax.f32 %v2164, %v2131
        %v2167 = vmax.f32 %v2165, %v2133
        %v2168 = vmax.f32 %v2166, %v2135
        %v2169 = vmax.f32 %v2167, %v2137
        %v2170 = vmax.f32 %v2168, %v2169
        %v2171 = vrot.slane %v2170, 4
        %v2172 = vmax.f32 %v2170, %v2171
        %v2173 = vrot.slane %v2172, 2
        %v2174 = vmax.f32 %v2172, %v2173
        %v2175 = vrot.slane %v2174, 1
        %v2176 = vmax.f32 %v2174, %v2175
        %v2177 = vmax.f32 %v2076, %v2080
        %v2178 = vmax.f32 %v2078, %v2082
        %v2179 = vmax.f32 %v2177, %v2084
        %v2180 = vmax.f32 %v2178, %v2086
        %v2181 = vmax.f32 %v2179, %v2088
        %v2182 = vmax.f32 %v2180, %v2090
        %v2183 = vmax.f32 %v2181, %v2092
        %v2184 = vmax.f32 %v2182, %v2094
        %v2185 = vmax.f32 %v2183, %v2096
        %v2186 = vmax.f32 %v2184, %v2098
        %v2187 = vmax.f32 %v2185, %v2100
        %v2188 = vmax.f32 %v2186, %v2102
        %v2189 = vmax.f32 %v2187, %v2104
        %v2190 = vmax.f32 %v2188, %v2106
        %v2191 = vmax.f32 %v2189, %v2108
        %v2192 = vmax.f32 %v2190, %v2110
        %v2193 = vmax.f32 %v2191, %v2112
        %v2194 = vmax.f32 %v2192, %v2114
        %v2195 = vmax.f32 %v2193, %v2116
        %v2196 = vmax.f32 %v2194, %v2118
        %v2197 = vmax.f32 %v2195, %v2120
        %v2198 = vmax.f32 %v2196, %v2122
        %v2199 = vmax.f32 %v2197, %v2124
        %v2200 = vmax.f32 %v2198, %v2126
        %v2201 = vmax.f32 %v2199, %v2128
        %v2202 = vmax.f32 %v2200, %v2130
        %v2203 = vmax.f32 %v2201, %v2132
        %v2204 = vmax.f32 %v2202, %v2134
        %v2205 = vmax.f32 %v2203, %v2136
        %v2206 = vmax.f32 %v2204, %v2138
        %v2207 = vmax.f32 %v2205, %v2206
        %v2208 = vrot.slane %v2207, 4
        %v2209 = vmax.f32 %v2207, %v2208
        %v2210 = vrot.slane %v2209, 2
        %v2211 = vmax.f32 %v2209, %v2210
        %v2212 = vrot.slane %v2211, 1
        %v2213 = vmax.f32 %v2211, %v2212
        %v2216 = vcombine.low %v2176, %v2213
        %v2218 = vunpack.c.l.s4 1966171168
        %v2219 = vunpack.c.0.s8 %v2218
        %v2220 = vlaneseq
        %v2221 = vshrl.u32 %v2220, 7
        %v2222 = vsub.s32 %v2219, %v2221
        %v2223 = vrot.slane %v2216, %v2222
        %v2225 = vunpack.c.l.s4 1966171168
        %v2226 = vunpack.c.0.s8 %v2225
        %v2227 = vlaneseq
        %v2228 = vshrl.u32 %v2227, 7
        %v2229 = vsub.s32 %v2226, %v2228
        %v2230 = vrot.slane %v2223, %v2229
        %v2232 = vmax.f32 %v2139, %v2230
        %v2233 = vsub.f32 %v2139, %v2232
        %v2234 = vmul.f32 %v2233, 1.442695
        %v2235 = vpow.pop %v2234
        %v2237 = vlaneseq
        %v2238 = vshrl.u32 %v2237, 7
        %v2239 = vsub.s32 0, %v2238
        %v2240 = vrot.slane %v2232, %v2239
        %v2241 = vlaneseq
        %v2242 = vshrl.u32 %v2241, 7
        %v2243 = vsub.s32 1, %v2242
        %v2244 = vrot.slane %v2232, %v2243
        %v2247 = vsub.f32 %v2075, %v2240
        %v2248 = vsub.f32 %v2076, %v2244
        %v2249 = vsub.f32 %v2077, %v2240
        %v2250 = vsub.f32 %v2078, %v2244
        %v2251 = vsub.f32 %v2079, %v2240
        %v2252 = vsub.f32 %v2080, %v2244
        %v2253 = vsub.f32 %v2081, %v2240
        %v2254 = vsub.f32 %v2082, %v2244
        %v2255 = vsub.f32 %v2083, %v2240
        %v2256 = vsub.f32 %v2084, %v2244
        %v2257 = vsub.f32 %v2085, %v2240
        %v2258 = vsub.f32 %v2086, %v2244
        %v2259 = vsub.f32 %v2087, %v2240
        %v2260 = vsub.f32 %v2088, %v2244
        %v2261 = vsub.f32 %v2089, %v2240
        %v2262 = vsub.f32 %v2090, %v2244
        %v2263 = vsub.f32 %v2091, %v2240
        %v2264 = vsub.f32 %v2092, %v2244
        %v2265 = vsub.f32 %v2093, %v2240
        %v2266 = vsub.f32 %v2094, %v2244
        %v2267 = vsub.f32 %v2095, %v2240
        %v2268 = vsub.f32 %v2096, %v2244
        %v2269 = vsub.f32 %v2097, %v2240
        %v2270 = vsub.f32 %v2098, %v2244
        %v2271 = vsub.f32 %v2099, %v2240
        %v2272 = vsub.f32 %v2100, %v2244
        %v2273 = vsub.f32 %v2101, %v2240
        %v2274 = vsub.f32 %v2102, %v2244
        %v2275 = vsub.f32 %v2103, %v2240
        %v2276 = vsub.f32 %v2104, %v2244
        %v2277 = vsub.f32 %v2105, %v2240
        %v2278 = vsub.f32 %v2106, %v2244
        %v2279 = vsub.f32 %v2107, %v2240
        %v2280 = vsub.f32 %v2108, %v2244
        %v2281 = vsub.f32 %v2109, %v2240
        %v2282 = vsub.f32 %v2110, %v2244
        %v2283 = vsub.f32 %v2111, %v2240
        %v2284 = vsub.f32 %v2112, %v2244
        %v2285 = vsub.f32 %v2113, %v2240
        %v2286 = vsub.f32 %v2114, %v2244
        %v2287 = vsub.f32 %v2115, %v2240
        %v2288 = vsub.f32 %v2116, %v2244
        %v2289 = vsub.f32 %v2117, %v2240
        %v2290 = vsub.f32 %v2118, %v2244
        %v2291 = vsub.f32 %v2119, %v2240
        %v2292 = vsub.f32 %v2120, %v2244
        %v2293 = vsub.f32 %v2121, %v2240
        %v2294 = vsub.f32 %v2122, %v2244
        %v2295 = vsub.f32 %v2123, %v2240
        %v2296 = vsub.f32 %v2124, %v2244
        %v2297 = vsub.f32 %v2125, %v2240
        %v2298 = vsub.f32 %v2126, %v2244
        %v2299 = vsub.f32 %v2127, %v2240
        %v2300 = vsub.f32 %v2128, %v2244
        %v2301 = vsub.f32 %v2129, %v2240
        %v2302 = vsub.f32 %v2130, %v2244
        %v2303 = vsub.f32 %v2131, %v2240
        %v2304 = vsub.f32 %v2132, %v2244
        %v2305 = vsub.f32 %v2133, %v2240
        %v2306 = vsub.f32 %v2134, %v2244
        %v2307 = vsub.f32 %v2135, %v2240
        %v2308 = vsub.f32 %v2136, %v2244
        %v2309 = vsub.f32 %v2137, %v2240
        %v2310 = vsub.f32 %v2138, %v2244
        %v2311 = vmul.f32 %v2247, 1.442695
        %v2312 = vpow.pop %v2311
        %v2313 = vmul.f32 %v2248, 1.442695
        %v2314 = vpow.pop %v2313
        %v2315 = vmul.f32 %v2249, 1.442695
        %v2316 = vpow.pop %v2315
        %v2317 = vmul.f32 %v2250, 1.442695
        %v2318 = vpow.pop %v2317
        %v2319 = vmul.f32 %v2251, 1.442695
        %v2320 = vpow.pop %v2319
        %v2321 = vmul.f32 %v2252, 1.442695
        %v2322 = vpow.pop %v2321
        %v2323 = vmul.f32 %v2253, 1.442695
        %v2324 = vpow.pop %v2323
        %v2325 = vmul.f32 %v2254, 1.442695
        %v2326 = vpow.pop %v2325
        %v2327 = vmul.f32 %v2255, 1.442695
        %v2328 = vpow.pop %v2327
        %v2329 = vmul.f32 %v2256, 1.442695
        %v2330 = vpow.pop %v2329
        %v2331 = vmul.f32 %v2257, 1.442695
        %v2332 = vpow.pop %v2331
        %v2333 = vmul.f32 %v2258, 1.442695
        %v2334 = vpow.pop %v2333
        %v2335 = vmul.f32 %v2259, 1.442695
        %v2336 = vpow.pop %v2335
        %v2337 = vmul.f32 %v2260, 1.442695
        %v2338 = vpow.pop %v2337
        %v2339 = vmul.f32 %v2261, 1.442695
        %v2340 = vpow.pop %v2339
        %v2341 = vmul.f32 %v2262, 1.442695
        %v2342 = vpow.pop %v2341
        %v2343 = vmul.f32 %v2263, 1.442695
        %v2344 = vpow.pop %v2343
        %v2345 = vmul.f32 %v2264, 1.442695
        %v2346 = vpow.pop %v2345
        %v2347 = vmul.f32 %v2265, 1.442695
        %v2348 = vpow.pop %v2347
        %v2349 = vmul.f32 %v2266, 1.442695
        %v2350 = vpow.pop %v2349
        %v2351 = vmul.f32 %v2267, 1.442695
        %v2352 = vpow.pop %v2351
        %v2353 = vmul.f32 %v2268, 1.442695
        %v2354 = vpow.pop %v2353
        %v2355 = vmul.f32 %v2269, 1.442695
        %v2356 = vpow.pop %v2355
        %v2357 = vmul.f32 %v2270, 1.442695
        %v2358 = vpow.pop %v2357
        %v2359 = vmul.f32 %v2271, 1.442695
        %v2360 = vpow.pop %v2359
        %v2361 = vmul.f32 %v2272, 1.442695
        %v2362 = vpow.pop %v2361
        %v2363 = vmul.f32 %v2273, 1.442695
        %v2364 = vpow.pop %v2363
        %v2365 = vmul.f32 %v2274, 1.442695
        %v2366 = vpow.pop %v2365
        %v2367 = vmul.f32 %v2275, 1.442695
        %v2368 = vpow.pop %v2367
        %v2369 = vmul.f32 %v2276, 1.442695
        %v2370 = vpow.pop %v2369
        %v2371 = vmul.f32 %v2277, 1.442695
        %v2372 = vpow.pop %v2371
        %v2373 = vmul.f32 %v2278, 1.442695
        %v2374 = vpow.pop %v2373
        %v2375 = vmul.f32 %v2279, 1.442695
        %v2376 = vpow.pop %v2375
        %v2377 = vmul.f32 %v2280, 1.442695
        %v2378 = vpow.pop %v2377
        %v2379 = vmul.f32 %v2281, 1.442695
        %v2380 = vpow.pop %v2379
        %v2381 = vmul.f32 %v2282, 1.442695
        %v2382 = vpow.pop %v2381
        %v2383 = vmul.f32 %v2283, 1.442695
        %v2384 = vpow.pop %v2383
        %v2385 = vmul.f32 %v2284, 1.442695
        %v2386 = vpow.pop %v2385
        %v2387 = vmul.f32 %v2285, 1.442695
        %v2388 = vpow.pop %v2387
        %v2389 = vmul.f32 %v2286, 1.442695
        %v2390 = vpow.pop %v2389
        %v2391 = vmul.f32 %v2287, 1.442695
        %v2392 = vpow.pop %v2391
        %v2393 = vmul.f32 %v2288, 1.442695
        %v2394 = vpow.pop %v2393
        %v2395 = vmul.f32 %v2289, 1.442695
        %v2396 = vpow.pop %v2395
        %v2397 = vmul.f32 %v2290, 1.442695
        %v2398 = vpow.pop %v2397
        %v2399 = vmul.f32 %v2291, 1.442695
        %v2400 = vpow.pop %v2399
        %v2401 = vmul.f32 %v2292, 1.442695
        %v2402 = vpow.pop %v2401
        %v2403 = vmul.f32 %v2293, 1.442695
        %v2404 = vpow.pop %v2403
        %v2405 = vmul.f32 %v2294, 1.442695
        %v2406 = vpow.pop %v2405
        %v2407 = vmul.f32 %v2295, 1.442695
        %v2408 = vpow.pop %v2407
        %v2409 = vmul.f32 %v2296, 1.442695
        %v2410 = vpow.pop %v2409
        %v2411 = vmul.f32 %v2297, 1.442695
        %v2412 = vpow.pop %v2411
        %v2413 = vmul.f32 %v2298, 1.442695
        %v2414 = vpow.pop %v2413
        %v2415 = vmul.f32 %v2299, 1.442695
        %v2416 = vpow.pop %v2415
        %v2417 = vmul.f32 %v2300, 1.442695
        %v2418 = vpow.pop %v2417
        %v2419 = vmul.f32 %v2301, 1.442695
        %v2420 = vpow.pop %v2419
        %v2421 = vmul.f32 %v2302, 1.442695
        %v2422 = vpow.pop %v2421
        %v2423 = vmul.f32 %v2303, 1.442695
        %v2424 = vpow.pop %v2423
        %v2425 = vmul.f32 %v2304, 1.442695
        %v2426 = vpow.pop %v2425
        %v2427 = vmul.f32 %v2305, 1.442695
        %v2428 = vpow.pop %v2427
        %v2429 = vmul.f32 %v2306, 1.442695
        %v2430 = vpow.pop %v2429
        %v2431 = vmul.f32 %v2307, 1.442695
        %v2432 = vpow.pop %v2431
        %v2433 = vmul.f32 %v2308, 1.442695
        %v2434 = vpow.pop %v2433
        %v2435 = vmul.f32 %v2309, 1.442695
        %v2436 = vpow.pop %v2435
        %v2437 = vmul.f32 %v2310, 1.442695
        %v2438 = vpow.pop %v2437
        %v2439 = vld [vmem:[#allocation3] sm:$0x3]
        %v2440 = vmul.f32 %v2439, %v2235
        %v2441 = vadd.f32 %v2312, %v2316
        %v2442 = vadd.f32 %v2441, %v2320
        %v2443 = vadd.f32 %v2442, %v2324
        %v2444 = vadd.f32 %v2443, %v2328
        %v2445 = vadd.f32 %v2444, %v2332
        %v2446 = vadd.f32 %v2445, %v2336
        %v2447 = vadd.f32 %v2446, %v2340
        %v2448 = vadd.f32 %v2447, %v2344
        %v2449 = vadd.f32 %v2448, %v2348
        %v2450 = vadd.f32 %v2449, %v2352
        %v2451 = vadd.f32 %v2450, %v2356
        %v2452 = vadd.f32 %v2451, %v2360
        %v2453 = vadd.f32 %v2452, %v2364
        %v2454 = vadd.f32 %v2453, %v2368
        %v2455 = vadd.f32 %v2454, %v2372
        %v2456 = vadd.f32 %v2455, %v2376
        %v2457 = vadd.f32 %v2456, %v2380
        %v2458 = vadd.f32 %v2457, %v2384
        %v2459 = vadd.f32 %v2458, %v2388
        %v2460 = vadd.f32 %v2459, %v2392
        %v2461 = vadd.f32 %v2460, %v2396
        %v2462 = vadd.f32 %v2461, %v2400
        %v2463 = vadd.f32 %v2462, %v2404
        %v2464 = vadd.f32 %v2463, %v2408
        %v2465 = vadd.f32 %v2464, %v2412
        %v2466 = vadd.f32 %v2465, %v2416
        %v2467 = vadd.f32 %v2466, %v2420
        %v2468 = vadd.f32 %v2467, %v2424
        %v2469 = vadd.f32 %v2468, %v2428
        %v2470 = vadd.f32 %v2469, %v2432
        %v2471 = vadd.f32 %v2470, %v2436
        %v2472 = vrot.slane %v2471, 4
        %v2473 = vadd.f32 %v2471, %v2472
        %v2474 = vrot.slane %v2473, 2
        %v2475 = vadd.f32 %v2473, %v2474
        %v2476 = vrot.slane %v2475, 1
        %v2477 = vadd.f32 %v2475, %v2476
        %v2478 = vadd.f32 %v2314, %v2318
        %v2479 = vadd.f32 %v2478, %v2322
        %v2480 = vadd.f32 %v2479, %v2326
        %v2481 = vadd.f32 %v2480, %v2330
        %v2482 = vadd.f32 %v2481, %v2334
        %v2483 = vadd.f32 %v2482, %v2338
        %v2484 = vadd.f32 %v2483, %v2342
        %v2485 = vadd.f32 %v2484, %v2346
        %v2486 = vadd.f32 %v2485, %v2350
        %v2487 = vadd.f32 %v2486, %v2354
        %v2488 = vadd.f32 %v2487, %v2358
        %v2489 = vadd.f32 %v2488, %v2362
        %v2490 = vadd.f32 %v2489, %v2366
        %v2491 = vadd.f32 %v2490, %v2370
        %v2492 = vadd.f32 %v2491, %v2374
        %v2493 = vadd.f32 %v2492, %v2378
        %v2494 = vadd.f32 %v2493, %v2382
        %v2495 = vadd.f32 %v2494, %v2386
        %v2496 = vadd.f32 %v2495, %v2390
        %v2497 = vadd.f32 %v2496, %v2394
        %v2498 = vadd.f32 %v2497, %v2398
        %v2499 = vadd.f32 %v2498, %v2402
        %v2500 = vadd.f32 %v2499, %v2406
        %v2501 = vadd.f32 %v2500, %v2410
        %v2502 = vadd.f32 %v2501, %v2414
        %v2503 = vadd.f32 %v2502, %v2418
        %v2504 = vadd.f32 %v2503, %v2422
        %v2505 = vadd.f32 %v2504, %v2426
        %v2506 = vadd.f32 %v2505, %v2430
        %v2507 = vadd.f32 %v2506, %v2434
        %v2508 = vadd.f32 %v2507, %v2438
        %v2509 = vrot.slane %v2508, 4
        %v2510 = vadd.f32 %v2508, %v2509
        %v2511 = vrot.slane %v2510, 2
        %v2512 = vadd.f32 %v2510, %v2511
        %v2513 = vrot.slane %v2512, 1
        %v2514 = vadd.f32 %v2512, %v2513
        %v2517 = vcombine.low %v2477, %v2514
        %v2519 = vunpack.c.l.s4 1966171168
        %v2520 = vunpack.c.0.s8 %v2519
        %v2521 = vlaneseq
        %v2522 = vshrl.u32 %v2521, 7
        %v2523 = vsub.s32 %v2520, %v2522
        %v2524 = vrot.slane %v2517, %v2523
        %v2526 = vunpack.c.l.s4 1966171168
        %v2527 = vunpack.c.0.s8 %v2526
        %v2528 = vlaneseq
        %v2529 = vshrl.u32 %v2528, 7
        %v2530 = vsub.s32 %v2527, %v2529
        %v2531 = vrot.slane %v2524, %v2530
        %v2533 = vadd.f32 %v2440, %v2531
        %v2534 = vlaneseq
        %vm2535 = vcmp.ge.s32.totalorder %v2534, 0
        %vm2536 = vcmp.lt.s32.totalorder %v2534, 256
        %vm2537 = vmand %vm2535, %vm2536
        %2538 = vst.msk [vmem:[#allocation3] sm:$0x3] %vm2537, %v2533
        %v2539 = vld [vmem:[#allocation4] sm:$0xff]
        %v2540 = vld [vmem:[#allocation4 + $0x8] sm:$0xff]
        %v2541 = vld [vmem:[#allocation4 + $0x10] sm:$0xff]
        %v2542 = vld [vmem:[#allocation4 + $0x18] sm:$0xff]
        %v2543 = vld [vmem:[#allocation4 + $0x20] sm:$0xff]
        %v2544 = vld [vmem:[#allocation4 + $0x28] sm:$0xff]
        %v2545 = vld [vmem:[#allocation4 + $0x30] sm:$0xff]
        %v2546 = vld [vmem:[#allocation4 + $0x38] sm:$0xff]
        %v2547 = vld [vmem:[#allocation4 + $0x40] sm:$0xff]
        %v2548 = vld [vmem:[#allocation4 + $0x48] sm:$0xff]
        %v2549 = vld [vmem:[#allocation4 + $0x50] sm:$0xff]
        %v2550 = vld [vmem:[#allocation4 + $0x58] sm:$0xff]
        %v2551 = vld [vmem:[#allocation4 + $0x60] sm:$0xff]
        %v2552 = vld [vmem:[#allocation4 + $0x68] sm:$0xff]
        %v2553 = vld [vmem:[#allocation4 + $0x70] sm:$0xff]
        %v2554 = vld [vmem:[#allocation4 + $0x78] sm:$0xff]
        %v2555 = vld [vmem:[#allocation4 + $0x80] sm:$0xff]
        %v2556 = vld [vmem:[#allocation4 + $0x88] sm:$0xff]
        %v2558 = vlaneseq
        %v2559 = vshrl.u32 %v2558, 7
        %v2560 = vsub.s32 0, %v2559
        %v2561 = vrot.slane %v2235, %v2560
        %v2562 = vlaneseq
        %v2563 = vshrl.u32 %v2562, 7
        %v2564 = vsub.s32 1, %v2563
        %v2565 = vrot.slane %v2235, %v2564
        %v2568 = vmul.f32 %v2539, %v2561
        %v2569 = vmul.f32 %v2540, %v2565
        %v2570 = vmul.f32 %v2541, %v2561
        %v2571 = vmul.f32 %v2542, %v2565
        %v2572 = vmul.f32 %v2543, %v2561
        %v2573 = vmul.f32 %v2544, %v2565
        %v2574 = vmul.f32 %v2545, %v2561
        %v2575 = vmul.f32 %v2546, %v2565
        %v2576 = vmul.f32 %v2547, %v2561
        %v2577 = vmul.f32 %v2548, %v2565
        %v2578 = vmul.f32 %v2549, %v2561
        %v2579 = vmul.f32 %v2550, %v2565
        %v2580 = vmul.f32 %v2551, %v2561
        %v2581 = vmul.f32 %v2552, %v2565
        %v2582 = vmul.f32 %v2553, %v2561
        %v2583 = vmul.f32 %v2554, %v2565
        %v2584 = vmul.f32 %v2555, %v2561
        %v2585 = vmul.f32 %v2556, %v2565
        %v2586 = vpack.c.bf16 %v2316, %v2312
        %v2587 = vpack.c.bf16 %v2318, %v2314
        %v2588 = vpack.c.bf16 %v2324, %v2320
        %v2589 = vpack.c.bf16 %v2326, %v2322
        %v2590 = vpack.c.bf16 %v2332, %v2328
        %v2591 = vpack.c.bf16 %v2334, %v2330
        %v2592 = vpack.c.bf16 %v2340, %v2336
        %v2593 = vpack.c.bf16 %v2342, %v2338
        %v2594 = vpack.c.bf16 %v2348, %v2344
        %v2595 = vpack.c.bf16 %v2350, %v2346
        %v2596 = vpack.c.bf16 %v2356, %v2352
        %v2597 = vpack.c.bf16 %v2358, %v2354
        %v2598 = vpack.c.bf16 %v2364, %v2360
        %v2599 = vpack.c.bf16 %v2366, %v2362
        %v2600 = vpack.c.bf16 %v2372, %v2368
        %v2601 = vpack.c.bf16 %v2374, %v2370
        %v2602 = vpack.c.bf16 %v2380, %v2376
        %v2603 = vpack.c.bf16 %v2382, %v2378
        %v2604 = vpack.c.bf16 %v2388, %v2384
        %v2605 = vpack.c.bf16 %v2390, %v2386
        %v2606 = vpack.c.bf16 %v2396, %v2392
        %v2607 = vpack.c.bf16 %v2398, %v2394
        %v2608 = vpack.c.bf16 %v2404, %v2400
        %v2609 = vpack.c.bf16 %v2406, %v2402
        %v2610 = vpack.c.bf16 %v2412, %v2408
        %v2611 = vpack.c.bf16 %v2414, %v2410
        %v2612 = vpack.c.bf16 %v2420, %v2416
        %v2613 = vpack.c.bf16 %v2422, %v2418
        %v2614 = vpack.c.bf16 %v2428, %v2424
        %v2615 = vpack.c.bf16 %v2430, %v2426
        %v2616 = vpack.c.bf16 %v2436, %v2432
        %v2617 = vpack.c.bf16 %v2438, %v2434
        %2618 = vmatprep.subr.bf16.mxu0 %v2587
        %2619 = vmatpush1.bf16.msra.mxu0 %v2586
        %2620 = vmatprep.subr.bf16.mxu0 %v2589
        %2621 = vmatpush1.bf16.msra.mxu0 %v2588
        %2622 = vmatprep.subr.bf16.mxu0 %v2591
        %2623 = vmatpush1.bf16.msra.mxu0 %v2590
        %2624 = vmatprep.subr.bf16.mxu0 %v2593
        %2625 = vmatpush1.bf16.msra.mxu0 %v2592
        %2626 = vmatprep.subr.bf16.mxu0 %v2595
        %2627 = vmatpush1.bf16.msra.mxu0 %v2594
        %2628 = vmatprep.subr.bf16.mxu0 %v2597
        %2629 = vmatpush1.bf16.msra.mxu0 %v2596
        %2630 = vmatprep.subr.bf16.mxu0 %v2599
        %2631 = vmatpush1.bf16.msra.mxu0 %v2598
        %2632 = vmatprep.subr.bf16.mxu0 %v2601
        %2633 = vmatpush1.bf16.msra.mxu0 %v2600
        %2634 = vmatprep.subr.bf16.mxu0 %v2603
        %2635 = vmatpush1.bf16.msra.mxu0 %v2602
        %2636 = vmatprep.subr.bf16.mxu0 %v2605
        %2637 = vmatpush1.bf16.msra.mxu0 %v2604
        %2638 = vmatprep.subr.bf16.mxu0 %v2607
        %2639 = vmatpush1.bf16.msra.mxu0 %v2606
        %2640 = vmatprep.subr.bf16.mxu0 %v2609
        %2641 = vmatpush1.bf16.msra.mxu0 %v2608
        %2642 = vmatprep.subr.bf16.mxu0 %v2611
        %2643 = vmatpush1.bf16.msra.mxu0 %v2610
        %2644 = vmatprep.subr.bf16.mxu0 %v2613
        %2645 = vmatpush1.bf16.msra.mxu0 %v2612
        %2646 = vmatprep.subr.bf16.mxu0 %v2615
        %2647 = vmatpush1.bf16.msra.mxu0 %v2614
        %2648 = vmatprep.subr.bf16.mxu0 %v2617
        %2649 = vmatpush1.bf16.msra.mxu0 %v2616
        %2650 = vmatprep.mubr.bf16.mxu0 %v467
        %2651 = vmatmul.mubr.bf16.gmra.mrb[0].mxu0 %v466
        %v2652 = vpop.f32.mrb[0].mxu0
        %v2653 = vadd.f32 0.0, %v2652
        %v2654 = vpop.f32.mrb[0].mxu0
        %v2655 = vadd.f32 0.0, %v2654
        %v2656 = vpop.f32.mrb[0].mxu0
        %v2657 = vadd.f32 0.0, %v2656
        %v2658 = vpop.f32.mrb[0].mxu0
        %v2659 = vadd.f32 0.0, %v2658
        %2660 = vmatprep.mubr.bf16.mxu0 %v469
        %2661 = vmatmul.mubr.bf16.gmra.mrb[0].mxu0 %v468
        %v2662 = vpop.f32.mrb[0].mxu0
        %v2663 = vadd.f32 0.0, %v2662
        %v2664 = vpop.f32.mrb[0].mxu0
        %v2665 = vadd.f32 0.0, %v2664
        %v2666 = vpop.f32.mrb[0].mxu0
        %v2667 = vadd.f32 0.0, %v2666
        %v2668 = vpop.f32.mrb[0].mxu0
        %v2669 = vadd.f32 0.0, %v2668
        %2670 = vmatprep.mubr.bf16.mxu0 %v471
        %2671 = vmatmul.mubr.bf16.gmra.mrb[0].mxu0 %v470
        %v2672 = vpop.f32.mrb[0].mxu0
        %v2673 = vadd.f32 0.0, %v2672
        %v2674 = vpop.f32.mrb[0].mxu0
        %v2675 = vadd.f32 0.0, %v2674
        %v2676 = vpop.f32.mrb[0].mxu0
        %v2677 = vadd.f32 0.0, %v2676
        %v2678 = vpop.f32.mrb[0].mxu0
        %v2679 = vadd.f32 0.0, %v2678
        %2680 = vmatprep.mubr.bf16.mxu0 %v473
        %2681 = vmatmul.mubr.bf16.gmra.mrb[0].mxu0 %v472
        %v2682 = vpop.f32.mrb[0].mxu0
        %v2683 = vadd.f32 0.0, %v2682
        %v2684 = vpop.f32.mrb[0].mxu0
        %v2685 = vadd.f32 0.0, %v2684
        %v2686 = vpop.f32.mrb[0].mxu0
        %v2687 = vadd.f32 0.0, %v2686
        %v2688 = vpop.f32.mrb[0].mxu0
        %v2689 = vadd.f32 0.0, %v2688
        %2690 = vmatprep.mubr.bf16.mxu0 %v475
        %2691 = vmatmul.mubr.bf16.gmra.mrb[0].mxu0 %v474
        %v2692 = vpop.f32.mrb[0].mxu0
        %v2693 = vadd.f32 0.0, %v2692
        %v2694 = vpop.f32.mrb[0].mxu0
        %v2695 = vadd.f32 0.0, %v2694
        %v2696 = vpop.f32.mrb[0].mxu0
        %v2697 = vpop.f32.mrb[0].mxu0
        %2698 = vdwg.mxu0
        %v2699 = vadd.f32 %v2568, %v2653
        %v2700 = vadd.f32 %v2569, %v2655
        %v2701 = vadd.f32 %v2570, %v2657
        %v2702 = vadd.f32 %v2571, %v2659
        %v2703 = vadd.f32 %v2572, %v2663
        %v2704 = vadd.f32 %v2573, %v2665
        %v2705 = vadd.f32 %v2574, %v2667
        %v2706 = vadd.f32 %v2575, %v2669
        %v2707 = vadd.f32 %v2576, %v2673
        %v2708 = vadd.f32 %v2577, %v2675
        %v2709 = vadd.f32 %v2578, %v2677
        %v2710 = vadd.f32 %v2579, %v2679
        %v2711 = vadd.f32 %v2580, %v2683
        %v2712 = vadd.f32 %v2581, %v2685
        %v2713 = vadd.f32 %v2582, %v2687
        %v2714 = vadd.f32 %v2583, %v2689
        %v2715 = vadd.f32 %v2584, %v2693
        %v2716 = vadd.f32 %v2585, %v2695
        %2717 = vst [vmem:[#allocation4] sm:$0xff] %v2699
        %2718 = vst [vmem:[#allocation4 + $0x8] sm:$0xff] %v2700
        %2719 = vst [vmem:[#allocation4 + $0x10] sm:$0xff] %v2701
        %2720 = vst [vmem:[#allocation4 + $0x18] sm:$0xff] %v2702
        %2721 = vst [vmem:[#allocation4 + $0x20] sm:$0xff] %v2703
        %2722 = vst [vmem:[#allocation4 + $0x28] sm:$0xff] %v2704
        %2723 = vst [vmem:[#allocation4 + $0x30] sm:$0xff] %v2705
        %2724 = vst [vmem:[#allocation4 + $0x38] sm:$0xff] %v2706
        %2725 = vst [vmem:[#allocation4 + $0x40] sm:$0xff] %v2707
        %2726 = vst [vmem:[#allocation4 + $0x48] sm:$0xff] %v2708
        %2727 = vst [vmem:[#allocation4 + $0x50] sm:$0xff] %v2709
        %2728 = vst [vmem:[#allocation4 + $0x58] sm:$0xff] %v2710
        %2729 = vst [vmem:[#allocation4 + $0x60] sm:$0xff] %v2711
        %2730 = vst [vmem:[#allocation4 + $0x68] sm:$0xff] %v2712
        %2731 = vst [vmem:[#allocation4 + $0x70] sm:$0xff] %v2713
        %2732 = vst [vmem:[#allocation4 + $0x78] sm:$0xff] %v2714
        %2733 = vst [vmem:[#allocation4 + $0x80] sm:$0xff] %v2715
        %2734 = vst [vmem:[#allocation4 + $0x88] sm:$0xff] %v2716
        %2735 = vst.msk [vmem:[#allocation2] sm:$0x3] %vm2537, %v2232
        // Predicated region
        $region61: #{tpu_custom_call.1} parent=39 // pred_check
          %p2736 = pneg %p336
        $region62: #{tpu_custom_call.1} parent=39 // pred_check_branch
          %2738 = sbr.rel (%p2736) target = $region64
        $region63: #{tpu_custom_call.1} parent=39 // pred_region
          %v2739 = vld [vmem:[#allocation3] sm:$0x3]
          %v2740 = vrcp.pop %v2739
          %v2741 = vmul.f32 %v2740, 0.11111111
          %v2742 = vld [vmem:[#allocation4] sm:$0xff]
          %v2743 = vld [vmem:[#allocation4 + $0x8] sm:$0xff]
          %v2744 = vld [vmem:[#allocation4 + $0x10] sm:$0xff]
          %v2745 = vld [vmem:[#allocation4 + $0x18] sm:$0xff]
          %v2746 = vld [vmem:[#allocation4 + $0x20] sm:$0xff]
          %v2747 = vld [vmem:[#allocation4 + $0x28] sm:$0xff]
          %v2748 = vld [vmem:[#allocation4 + $0x30] sm:$0xff]
          %v2749 = vld [vmem:[#allocation4 + $0x38] sm:$0xff]
          %v2750 = vld [vmem:[#allocation4 + $0x40] sm:$0xff]
          %v2751 = vld [vmem:[#allocation4 + $0x48] sm:$0xff]
          %v2752 = vld [vmem:[#allocation4 + $0x50] sm:$0xff]
          %v2753 = vld [vmem:[#allocation4 + $0x58] sm:$0xff]
          %v2754 = vld [vmem:[#allocation4 + $0x60] sm:$0xff]
          %v2755 = vld [vmem:[#allocation4 + $0x68] sm:$0xff]
          %v2756 = vld [vmem:[#allocation4 + $0x70] sm:$0xff]
          %v2757 = vld [vmem:[#allocation4 + $0x78] sm:$0xff]
          %v2758 = vld [vmem:[#allocation4 + $0x80] sm:$0xff]
          %v2759 = vld [vmem:[#allocation4 + $0x88] sm:$0xff]
          %v2761 = vlaneseq
          %v2762 = vshrl.u32 %v2761, 7
          %v2763 = vsub.s32 0, %v2762
          %v2764 = vrot.slane %v2741, %v2763
          %v2765 = vlaneseq
          %v2766 = vshrl.u32 %v2765, 7
          %v2767 = vsub.s32 1, %v2766
          %v2768 = vrot.slane %v2741, %v2767
          %v2771 = vmul.f32 %v2742, %v2764
          %v2772 = vmul.f32 %v2743, %v2768
          %v2773 = vmul.f32 %v2744, %v2764
          %v2774 = vmul.f32 %v2745, %v2768
          %v2775 = vmul.f32 %v2746, %v2764
          %v2776 = vmul.f32 %v2747, %v2768
          %v2777 = vmul.f32 %v2748, %v2764
          %v2778 = vmul.f32 %v2749, %v2768
          %v2779 = vmul.f32 %v2750, %v2764
          %v2780 = vmul.f32 %v2751, %v2768
          %v2781 = vmul.f32 %v2752, %v2764
          %v2782 = vmul.f32 %v2753, %v2768
          %v2783 = vmul.f32 %v2754, %v2764
          %v2784 = vmul.f32 %v2755, %v2768
          %v2785 = vmul.f32 %v2756, %v2764
          %v2786 = vmul.f32 %v2757, %v2768
          %v2787 = vmul.f32 %v2758, %v2764
          %v2788 = vmul.f32 %v2759, %v2768
          %2789 = vrot.lane.b32.xlu0 %v2771, 111
          %v2790 = vpop.permute.xlu0 %2789
          %2791 = vrot.lane.b32.xlu0 %v2772, 111
          %v2792 = vpop.permute.xlu0 %2791
          %vm2793 = vcmp.lt.s32.totalorder %v934, 111
          %v2794 = vsel %vm2793, %v2790, %v2792
          %v2795 = vsel %vm2793, %v2792, %v2790
          %s2796 = scalar_lea.vmem [#allocation10], 4
          %v2797 = vld [vmem:[%s2796] ss:$8 sm:$0x3]
          %v2799 = vlaneseq
          %v2800 = vshrl.u32 %v2799, 7
          %v2801 = vsub.s32 0, %v2800
          %v2802 = vrot.slane %v2797, %v2801
          %v2803 = vlaneseq
          %v2804 = vshrl.u32 %v2803, 7
          %v2805 = vsub.s32 1, %v2804
          %v2806 = vrot.slane %v2797, %v2805
          %v2809 = vmul.f32 %v2794, %v2802
          %v2810 = vmul.f32 %v2795, %v2806
          %v2811 = vadd.f32 %v2809, 0.0
          %v2812 = vadd.f32 %v2810, 0.0
          %2813 = vrot.lane.b32.xlu0 %v2773, 112
          %v2814 = vpop.permute.xlu0 %2813
          %2815 = vrot.lane.b32.xlu0 %v2774, 112
          %v2816 = vpop.permute.xlu0 %2815
          %v2817 = vsel %vm1935, %v2814, %v2816
          %v2818 = vsel %vm1935, %v2816, %v2814
          %s2819 = scalar_lea.vmem [#allocation10], 5
          %v2820 = vld [vmem:[%s2819] ss:$8 sm:$0x3]
          %v2822 = vlaneseq
          %v2823 = vshrl.u32 %v2822, 7
          %v2824 = vsub.s32 0, %v2823
          %v2825 = vrot.slane %v2820, %v2824
          %v2826 = vlaneseq
          %v2827 = vshrl.u32 %v2826, 7
          %v2828 = vsub.s32 1, %v2827
          %v2829 = vrot.slane %v2820, %v2828
          %v2832 = vmul.f32 %v2817, %v2825
          %v2833 = vmul.f32 %v2818, %v2829
          %v2834 = vadd.f32 %v2811, %v2832
          %v2835 = vadd.f32 %v2812, %v2833
          %2836 = vrot.lane.b32.xlu0 %v2775, 113
          %v2837 = vpop.permute.xlu0 %2836
          %2838 = vrot.lane.b32.xlu0 %v2776, 113
          %v2839 = vpop.permute.xlu0 %2838
          %vm2840 = vcmp.lt.s32.totalorder %v934, 113
          %v2841 = vsel %vm2840, %v2837, %v2839
          %v2842 = vsel %vm2840, %v2839, %v2837
          %s2843 = scalar_lea.vmem [#allocation10], 6
          %v2844 = vld [vmem:[%s2843] ss:$8 sm:$0x3]
          %v2846 = vlaneseq
          %v2847 = vshrl.u32 %v2846, 7
          %v2848 = vsub.s32 0, %v2847
          %v2849 = vrot.slane %v2844, %v2848
          %v2850 = vlaneseq
          %v2851 = vshrl.u32 %v2850, 7
          %v2852 = vsub.s32 1, %v2851
          %v2853 = vrot.slane %v2844, %v2852
          %v2856 = vmul.f32 %v2841, %v2849
          %v2857 = vmul.f32 %v2842, %v2853
          %v2858 = vadd.f32 %v2834, %v2856
          %v2859 = vadd.f32 %v2835, %v2857
          %2860 = vrot.lane.b32.xlu0 %v2777, 127
          %v2861 = vpop.permute.xlu0 %2860
          %2862 = vrot.lane.b32.xlu0 %v2778, 127
          %v2863 = vpop.permute.xlu0 %2862
          %v2864 = vsel %vm1267, %v2861, %v2863
          %v2865 = vsel %vm1267, %v2863, %v2861
          %s2866 = scalar_lea.vmem [#allocation10], 7
          %v2867 = vld [vmem:[%s2866] ss:$8 sm:$0x3]
          %v2869 = vlaneseq
          %v2870 = vshrl.u32 %v2869, 7
          %v2871 = vsub.s32 0, %v2870
          %v2872 = vrot.slane %v2867, %v2871
          %v2873 = vlaneseq
          %v2874 = vshrl.u32 %v2873, 7
          %v2875 = vsub.s32 1, %v2874
          %v2876 = vrot.slane %v2867, %v2875
          %v2879 = vmul.f32 %v2864, %v2872
          %v2880 = vmul.f32 %v2865, %v2876
          %v2881 = vadd.f32 %v2858, %v2879
          %v2882 = vadd.f32 %v2859, %v2880
          %s2883 = scalar_lea.vmem [#allocation10], 16
          %v2884 = vld [vmem:[%s2883] ss:$8 sm:$0x3]
          %v2886 = vlaneseq
          %v2887 = vshrl.u32 %v2886, 7
          %v2888 = vsub.s32 0, %v2887
          %v2889 = vrot.slane %v2884, %v2888
          %v2890 = vlaneseq
          %v2891 = vshrl.u32 %v2890, 7
          %v2892 = vsub.s32 1, %v2891
          %v2893 = vrot.slane %v2884, %v2892
          %v2896 = vmul.f32 %v2779, %v2889
          %v2897 = vmul.f32 %v2780, %v2893
          %v2898 = vadd.f32 %v2881, %v2896
          %v2899 = vadd.f32 %v2882, %v2897
          %2900 = vrot.lane.b32.xlu0 %v2781, 1
          %v2901 = vpop.permute.xlu0 %2900
          %2902 = vrot.lane.b32.xlu0 %v2782, 1
          %v2903 = vpop.permute.xlu0 %2902
          %v2904 = vsel %vm935, %v2901, %v2903
          %v2905 = vsel %vm935, %v2903, %v2901
          %s2906 = scalar_lea.vmem [#allocation10], 17
          %v2907 = vld [vmem:[%s2906] ss:$8 sm:$0x3]
          %v2909 = vlaneseq
          %v2910 = vshrl.u32 %v2909, 7
          %v2911 = vsub.s32 0, %v2910
          %v2912 = vrot.slane %v2907, %v2911
          %v2913 = vlaneseq
          %v2914 = vshrl.u32 %v2913, 7
          %v2915 = vsub.s32 1, %v2914
          %v2916 = vrot.slane %v2907, %v2915
          %v2919 = vmul.f32 %v2905, %v2912
          %v2920 = vmul.f32 %v2904, %v2916
          %v2921 = vadd.f32 %v2898, %v2919
          %v2922 = vadd.f32 %v2899, %v2920
          %2923 = vrot.lane.b32.xlu0 %v2783, 15
          %v2924 = vpop.permute.xlu0 %2923
          %2925 = vrot.lane.b32.xlu0 %v2784, 15
          %v2926 = vpop.permute.xlu0 %2925
          %vm2927 = vcmp.lt.s32.totalorder %v934, 15
          %v2928 = vsel %vm2927, %v2924, %v2926
          %v2929 = vsel %vm2927, %v2926, %v2924
          %s2930 = scalar_lea.vmem [#allocation10], 18
          %v2931 = vld [vmem:[%s2930] ss:$8 sm:$0x3]
          %v2933 = vlaneseq
          %v2934 = vshrl.u32 %v2933, 7
          %v2935 = vsub.s32 0, %v2934
          %v2936 = vrot.slane %v2931, %v2935
          %v2937 = vlaneseq
          %v2938 = vshrl.u32 %v2937, 7
          %v2939 = vsub.s32 1, %v2938
          %v2940 = vrot.slane %v2931, %v2939
          %v2943 = vmul.f32 %v2929, %v2936
          %v2944 = vmul.f32 %v2928, %v2940
          %v2945 = vadd.f32 %v2921, %v2943
          %v2946 = vadd.f32 %v2922, %v2944
          %2947 = vrot.lane.b32.xlu0 %v2785, 16
          %v2948 = vpop.permute.xlu0 %2947
          %2949 = vrot.lane.b32.xlu0 %v2786, 16
          %v2950 = vpop.permute.xlu0 %2949
          %v2951 = vsel %vm1603, %v2948, %v2950
          %v2952 = vsel %vm1603, %v2950, %v2948
          %s2953 = scalar_lea.vmem [#allocation10], 19
          %v2954 = vld [vmem:[%s2953] ss:$8 sm:$0x3]
          %v2956 = vlaneseq
          %v2957 = vshrl.u32 %v2956, 7
          %v2958 = vsub.s32 0, %v2957
          %v2959 = vrot.slane %v2954, %v2958
          %v2960 = vlaneseq
          %v2961 = vshrl.u32 %v2960, 7
          %v2962 = vsub.s32 1, %v2961
          %v2963 = vrot.slane %v2954, %v2962
          %v2966 = vmul.f32 %v2952, %v2959
          %v2967 = vmul.f32 %v2951, %v2963
          %v2968 = vadd.f32 %v2945, %v2966
          %v2969 = vadd.f32 %v2946, %v2967
          %2970 = vrot.lane.b32.xlu0 %v2787, 17
          %v2971 = vpop.permute.xlu0 %2970
          %2972 = vrot.lane.b32.xlu0 %v2788, 17
          %v2973 = vpop.permute.xlu0 %2972
          %vm2974 = vcmp.lt.s32.totalorder %v934, 17
          %v2975 = vsel %vm2974, %v2971, %v2973
          %v2976 = vsel %vm2974, %v2973, %v2971
          %s2977 = scalar_lea.vmem [#allocation10], 20
          %v2978 = vld [vmem:[%s2977] ss:$8 sm:$0x3]
          %v2980 = vlaneseq
          %v2981 = vshrl.u32 %v2980, 7
          %v2982 = vsub.s32 0, %v2981
          %v2983 = vrot.slane %v2978, %v2982
          %v2984 = vlaneseq
          %v2985 = vshrl.u32 %v2984, 7
          %v2986 = vsub.s32 1, %v2985
          %v2987 = vrot.slane %v2978, %v2986
          %v2990 = vmul.f32 %v2976, %v2983
          %v2991 = vmul.f32 %v2975, %v2987
          %v2992 = vadd.f32 %v2968, %v2990
          %v2993 = vadd.f32 %v2969, %v2991
          %v2994 = vld [vmem:[%s334] sm:$0x3]
          %v2995 = vld [vmem:[#allocation11] sm:$0xff]
          %v2996 = vsub.f32 1.0, %v2994
          %v2998 = vlaneseq
          %v2999 = vshrl.u32 %v2998, 7
          %v3000 = vsub.s32 0, %v2999
          %v3001 = vrot.slane %v2996, %v3000
          %v3002 = vlaneseq
          %v3003 = vshrl.u32 %v3002, 7
          %v3004 = vsub.s32 1, %v3003
          %v3005 = vrot.slane %v2996, %v3004
          %v3008 = vmul.f32 %v2992, %v3001
          %v3009 = vmul.f32 %v2993, %v3005
          %v3011 = vlaneseq
          %v3012 = vshrl.u32 %v3011, 7
          %v3013 = vsub.s32 0, %v3012
          %v3014 = vrot.slane %v2994, %v3013
          %v3015 = vlaneseq
          %v3016 = vshrl.u32 %v3015, 7
          %v3017 = vsub.s32 1, %v3016
          %v3018 = vrot.slane %v2994, %v3017
          %v3019 = vcombine.low %v3014, %v3018
          %v3021 = vmul.f32 %v2995, %v3019
          %v3023 = vcombine.high %v3021, %v3021
          %v3025 = vadd.f32 %v3008, %v3021
          %v3026 = vadd.f32 %v3009, %v3023
          %v3029 = vcombine.low %v3025, %v3026
          %3031 = vst [vmem:[%s329] sm:$0xff] %v3029
        $region64: #{tpu_custom_call.1} parent=39 // pred_fallthru
          _
        %s3032 = sand.u32 %s171, 1
        %s3033 = scalar_lea.sflag [#allocation7], %s3032
        %s3034 = sand.u32 %s171, 1
        %s3035 = smul.addr %s3034, 8
        %s3036 = scalar_lea.vmem [#allocation13], %s3035
        // Predicated region
        $region65: #{tpu_custom_call.1} parent=39 // pred_check
          %p3037 = pneg %p181
        $region66: #{tpu_custom_call.1} parent=39 // pred_check_branch
          %3039 = sbr.rel (%p3037) target = $region68
        $region67: #{tpu_custom_call.1} parent=39 // pred_region
          %s3041 = ssub.s32 128, 128
          %3042 = vsyncadd %s3033, %s3041
          %s3043 = smul.addr %s28, 2
          %s3044 = smul.addr %s3043, 64
          %s3045 = scalar_lea.hbm %s5, %s3044
          %s3047 = sshll.u32 %s3036, 4
          %s3048 = int_to_ptr.vmem [resolvable:$true] %s3047
          %3050 = dma.vmem_to_hbm [thread:$0]  %s3048, 128, %s3045, %s3033
        $region68: #{tpu_custom_call.1} parent=39 // pred_fallthru
          _
      $region40: #{tpu_custom_call.1} parent=5 // pred_fallthru
        _
      %p3051 = scmp.le.s32.totalorder 2, %s19
      // Predicated region
      $region69: #{tpu_custom_call.1} parent=5 // pred_check
        %p3052 = pneg %p3051
      $region70: #{tpu_custom_call.1} parent=5 // pred_check_branch
        %3054 = sbr.rel (%p3052) target = $region72
      $region71: #{tpu_custom_call.1} parent=5 // pred_region
        %s3055 = ssub.s32 %s19, 2
        // Predicated region
        $region73: #{tpu_custom_call.1} parent=71 // pred_check
          %p3056 = pneg %p187
        $region74: #{tpu_custom_call.1} parent=71 // pred_check_branch
          %3058 = sbr.rel (%p3056) target = $region76
        $region75: #{tpu_custom_call.1} parent=71 // pred_region
          %s3059 = sand.u32 %s172, 1
          %s3060 = scalar_lea.sflag [#allocation7], %s3059
          %s3061 = sand.u32 %s172, 1
          %s3062 = smul.addr %s3061, 8
          %s3063 = scalar_lea.vmem [#allocation13], %s3062
          %3064 = dma.done %s3060, 128
        $region76: #{tpu_custom_call.1} parent=71 // pred_fallthru
          _
      $region72: #{tpu_custom_call.1} parent=5 // pred_fallthru
        _
    $region6: #{tpu_custom_call.1} parent=1 // loop_footer
      %s23 = sadd.s32 1, %s19
    $region7: #{tpu_custom_call.1} parent=1 // loop_footer_branch
      %18 = sbr.rel target = $region3
    $region8: #{tpu_custom_call.1} parent=1 // loop_exit
      _
    %3065 = vsyncpa [#allocation6], 1
    %s3066 = scalar_lea.sflag [#allocation6], 1
    %3067 = vsyncpa %s3066, 1
    %3068 = vsyncpa [#allocation9], 1
    %s3069 = scalar_lea.sflag [#allocation9], 1
    %3070 = vsyncpa %s3069, 1
    %3071 = vsyncpa [#allocation12], 1
    %3072 = vsyncpa [#allocation7], 1
    %s3073 = scalar_lea.sflag [#allocation7], 1
    %3074 = vsyncpa %s3073, 1

// kernel: tpu_custom_call.1
$region0: #{tpu_custom_call.1}
  #allocation0 [shape = 'u32[]', space=smem, size = 0x4, offset = 0x4, fixed_abs, tag = 'smem constant byte address 0x4 - core index']
  #allocation1 [shape = 'u32[144,128]{1,0:T(1,128)}', space=vmem, size = 0x12000, scoped, tag = 'internal scratch']
  #allocation2 [shape = 'f32[1,256]{1,0:T(1,128)}', space=vmem, size = 0x400, scoped, tag = 'scratch operand']
  #allocation3 [shape = 'f32[1,256]{1,0:T(1,128)}', space=vmem, size = 0x400, scoped, tag = 'scratch operand']
  #allocation4 [shape = 'f32[72,256]{1,0:T(8,128)}', space=vmem, size = 0x12000, scoped, tag = 'scratch operand']
  %s0 = inlined_call_operand.hbm [shape: bf16[2,72,256], index: 0, kind: input, shape index: {}]
  %s1 = inlined_call_operand.hbm [shape: bf16[2,72,256], index: 1, kind: input, shape index: {}]
  %s2 = inlined_call_operand.vmem [shape: f32[2,1,256], index: 2, kind: input, shape index: {}]
  %s3 = inlined_call_operand.hbm [shape: f32[13,256], index: 3, kind: input, shape index: {}]
  %s4 = inlined_call_operand.hbm [shape: f32[2,4,256], index: 4, kind: input, shape index: {}]
  %s5 = inlined_call_operand.hbm [shape: f32[2,4,256], index: 5, kind: output, shape index: {}]
  %s6 = sld [smem:[#allocation0]]
  $region77: #{tpu_custom_call.1} parent=0
    _
  %s8 = ssub.s32 1, %s6
  %s9 = scalar_select 0, %s8, %s6
  $region1: #{tpu_custom_call.1} parent=0
    #allocation5 [shape = 'u8[73728]{0}', space=vmem, size = 0x12000, scoped, tag = 'input window, operand 0']
    #allocation6 [shape = 's32[2]{0}', space=sflag, size = 0x8, scoped, tag = 'scoped memory for tpu_custom_call.1']
    #allocation7 [shape = 's32[2]{0}', space=sflag, size = 0x8, scoped, tag = 'scoped memory for tpu_custom_call.1']
    #allocation8 [shape = 'u8[73728]{0}', space=vmem, size = 0x12000, scoped, tag = 'input window, operand 1']
    #allocation9 [shape = 's32[2]{0}', space=sflag, size = 0x8, scoped, tag = 'scoped memory for tpu_custom_call.1']
    #allocation10 [shape = 'u8[16384]{0}', space=vmem, size = 0x4000, scoped, tag = 'input window, operand 3, single buffered']
    #allocation11 [shape = 'u8[8192]{0}', space=vmem, size = 0x2000, scoped, tag = 'input window, operand 4']
    #allocation12 [shape = 's32[2]{0}', space=sflag, size = 0x8, scoped, tag = 'scoped memory for tpu_custom_call.1']
    #allocation13 [shape = 'u8[8192]{0}', space=vmem, size = 0x2000, scoped, tag = 'output window, operand 0']
    %10 = vsyncpa [#allocation6], 0
    %s11 = scalar_lea.sflag [#allocation6], 1
    %12 = vsyncpa %s11, 0
    %13 = vsyncpa [#allocation9], 0
    %s14 = scalar_lea.sflag [#allocation9], 1
    %15 = vsyncpa %s14, 0
    %16 = vsyncpa [#allocation12], 0
    %s17 = scalar_lea.sflag [#allocation12], 1
    %18 = vsyncpa %s17, 0
    %19 = vsyncpa [#allocation7], 0
    %s20 = scalar_lea.sflag [#allocation7], 1
    %21 = vsyncpa %s20, 0
    loop: start=0, step=1, limit=4
    $region2: #{tpu_custom_call.1} parent=1 // loop_pre_header
      _
    $region3: #{tpu_custom_call.1} parent=1 // loop_header
      %s23 = sphi 0, %s27
      %p24 = scmp.ge.s32.totalorder %s23, 4
      %s30 = sphi 0, %s42
      %s31 = sphi 0, %s38
      %s32 = sphi 0, %s30
      %s33 = sphi 0, %s31
      %s34 = sphi 0, %s32
      %s35 = sphi 0, %s33
      %s45 = sphi 0, %s47
      %s48 = sphi 0, %s45
      %s49 = sphi 0, %s48
      %s65 = sphi 0, %s49
      %s73 = sphi 0, %s75
      %s76 = sphi 0, %s73
      %s77 = sphi 0, %s76
      %s93 = sphi 0, %s77
      %s99 = sphi 0, %s101
      %s102 = sphi 0, %s99
      %s103 = sphi 0, %s102
      %s119 = sphi 0, %s103
      %s123 = sphi 0, %s123
      %s125 = sphi 0, %s123
      %s126 = sphi 0, %s125
      %s140 = sphi 0, %s126
      %s146 = sphi 0, %s148
      %s149 = sphi 0, %s146
      %s150 = sphi 0, %s149
      %s166 = sphi 0, %s150
      %s172 = sphi 0, %s174
      %s175 = sphi 0, %s172
      %s176 = sphi 0, %s175
      %s192 = sphi 0, %s176
    $region4: #{tpu_custom_call.1} parent=1 // loop_header_branch
      %26 = sbr.rel (%p24) target = $region8
    $region5: #{tpu_custom_call.1} parent=1 // loop_body
      %s28 = ssub.s32 %s23, 1
      %s29 = ssub.s32 %s23, 2
      %s36 = sadd.s32 1, %s31
      %p37 = scmp.ge.s32.totalorder %s36, 1
      %s38 = scalar_select %p37, 0, %s36
      %s39 = sadd.s32 1, %s30
      %s40 = scalar_select %p37, %s39, %s30
      %p41 = scmp.ge.s32.totalorder %s40, 2
      %s42 = scalar_select %p41, 0, %s40
      %s43 = ssub.s32 %s30, %s42
      %p44 = scmp.eq.s32.totalorder %s43, 0
      %s46 = sadd.s32 %s45, 1
      %s47 = scalar_select %p44, %s45, %s46
      %p50 = pneg %p44
      %p51 = scmp.eq.s32.totalorder %s23, 1
      %p52 = por %p50, %p51
      %p53 = scmp.ne.s32.totalorder %s45, %s48
      %p54 = scmp.eq.s32.totalorder %s23, 0
      %p55 = por %p53, %p54
      %p56 = scmp.ne.s32.totalorder %s45, %s48
      %p57 = scmp.eq.s32.totalorder %s28, 1
      %p58 = por %p56, %p57
      %p59 = scmp.ne.s32.totalorder %s48, %s49
      %p60 = scmp.eq.s32.totalorder %s28, 0
      %p61 = por %p59, %p60
      %p62 = scmp.ne.s32.totalorder %s48, %s49
      %p63 = scmp.eq.s32.totalorder %s29, 1
      %p64 = por %p62, %p63
      %p66 = scmp.ne.s32.totalorder %s49, %s65
      %p67 = scmp.eq.s32.totalorder %s29, 0
      %p68 = por %p66, %p67
      %s69 = ssub.s32 %s30, %s42
      %s70 = ssub.s32 %s31, %s38
      %s71 = sor.u32 %s69, %s70
      %p72 = scmp.eq.s32.totalorder %s71, 0
      %s74 = sadd.s32 %s73, 1
      %s75 = scalar_select %p72, %s73, %s74
      %p78 = pneg %p72
      %p79 = scmp.eq.s32.totalorder %s23, 1
      %p80 = por %p78, %p79
      %p81 = scmp.ne.s32.totalorder %s73, %s76
      %p82 = scmp.eq.s32.totalorder %s23, 0
      %p83 = por %p81, %p82
      %p84 = scmp.ne.s32.totalorder %s73, %s76
      %p85 = scmp.eq.s32.totalorder %s28, 1
      %p86 = por %p84, %p85
      %p87 = scmp.ne.s32.totalorder %s76, %s77
      %p88 = scmp.eq.s32.totalorder %s28, 0
      %p89 = por %p87, %p88
      %p90 = scmp.ne.s32.totalorder %s76, %s77
      %p91 = scmp.eq.s32.totalorder %s29, 1
      %p92 = por %p90, %p91
      %p94 = scmp.ne.s32.totalorder %s77, %s93
      %p95 = scmp.eq.s32.totalorder %s29, 0
      %p96 = por %p94, %p95
      %s97 = ssub.s32 %s30, %s42
      %p98 = scmp.eq.s32.totalorder %s97, 0
      %s100 = sadd.s32 %s99, 1
      %s101 = scalar_select %p98, %s99, %s100
      %p104 = pneg %p98
      %p105 = scmp.eq.s32.totalorder %s23, 1
      %p106 = por %p104, %p105
      %p107 = scmp.ne.s32.totalorder %s99, %s102
      %p108 = scmp.eq.s32.totalorder %s23, 0
      %p109 = por %p107, %p108
      %p110 = scmp.ne.s32.totalorder %s99, %s102
      %p111 = scmp.eq.s32.totalorder %s28, 1
      %p112 = por %p110, %p111
      %p113 = scmp.ne.s32.totalorder %s102, %s103
      %p114 = scmp.eq.s32.totalorder %s28, 0
      %p115 = por %p113, %p114
      %p116 = scmp.ne.s32.totalorder %s102, %s103
      %p117 = scmp.eq.s32.totalorder %s29, 1
      %p118 = por %p116, %p117
      %p120 = scmp.ne.s32.totalorder %s103, %s119
      %p121 = scmp.eq.s32.totalorder %s29, 0
      %p122 = por %p120, %p121
      %s124 = sadd.s32 %s123, 1
      %p127 = scmp.eq.s32.totalorder %s23, 1
      %p128 = scmp.ne.s32.totalorder %s123, %s125
      %p129 = scmp.eq.s32.totalorder %s23, 0
      %p130 = por %p128, %p129
      %p131 = scmp.ne.s32.totalorder %s123, %s125
      %p132 = scmp.eq.s32.totalorder %s28, 1
      %p133 = por %p131, %p132
      %p134 = scmp.ne.s32.totalorder %s125, %s126
      %p135 = scmp.eq.s32.totalorder %s28, 0
      %p136 = por %p134, %p135
      %p137 = scmp.ne.s32.totalorder %s125, %s126
      %p138 = scmp.eq.s32.totalorder %s29, 1
      %p139 = por %p137, %p138
      %p141 = scmp.ne.s32.totalorder %s126, %s140
      %p142 = scmp.eq.s32.totalorder %s29, 0
      %p143 = por %p141, %p142
      %s144 = ssub.s32 %s30, %s42
      %p145 = scmp.eq.s32.totalorder %s144, 0
      %s147 = sadd.s32 %s146, 1
      %s148 = scalar_select %p145, %s146, %s147
      %p151 = pneg %p145
      %p152 = scmp.eq.s32.totalorder %s23, 1
      %p153 = por %p151, %p152
      %p154 = scmp.ne.s32.totalorder %s146, %s149
      %p155 = scmp.eq.s32.totalorder %s23, 0
      %p156 = por %p154, %p155
      %p157 = scmp.ne.s32.totalorder %s146, %s149
      %p158 = scmp.eq.s32.totalorder %s28, 1
      %p159 = por %p157, %p158
      %p160 = scmp.ne.s32.totalorder %s149, %s150
      %p161 = scmp.eq.s32.totalorder %s28, 0
      %p162 = por %p160, %p161
      %p163 = scmp.ne.s32.totalorder %s149, %s150
      %p164 = scmp.eq.s32.totalorder %s29, 1
      %p165 = por %p163, %p164
      %p167 = scmp.ne.s32.totalorder %s150, %s166
      %p168 = scmp.eq.s32.totalorder %s29, 0
      %p169 = por %p167, %p168
      %s170 = ssub.s32 %s30, %s42
      %p171 = scmp.eq.s32.totalorder %s170, 0
      %s173 = sadd.s32 %s172, 1
      %s174 = scalar_select %p171, %s172, %s173
      %p177 = pneg %p171
      %p178 = scmp.eq.s32.totalorder %s23, 1
      %p179 = por %p177, %p178
      %p180 = scmp.ne.s32.totalorder %s172, %s175
      %p181 = scmp.eq.s32.totalorder %s23, 0
      %p182 = por %p180, %p181
      %p183 = scmp.ne.s32.totalorder %s172, %s175
      %p184 = scmp.eq.s32.totalorder %s28, 1
      %p185 = por %p183, %p184
      %p186 = scmp.ne.s32.totalorder %s175, %s176
      %p187 = scmp.eq.s32.totalorder %s28, 0
      %p188 = por %p186, %p187
      %p189 = scmp.ne.s32.totalorder %s175, %s176
      %p190 = scmp.eq.s32.totalorder %s29, 1
      %p191 = por %p189, %p190
      %p193 = scmp.ne.s32.totalorder %s176, %s192
      %p194 = scmp.eq.s32.totalorder %s29, 0
      %p195 = por %p193, %p194
      %p196 = scmp.le.s32.totalorder 1, %s23
      %p197 = scmp.lt.s32.totalorder %s23, 3
      %p198 = pnand %p196, %p197
      %p199 = pneg %p198
      // Predicated region
      $region9: #{tpu_custom_call.1} parent=5 // pred_check
        _
      $region10: #{tpu_custom_call.1} parent=5 // pred_check_branch
        %201 = sbr.rel (%p198) target = $region12
      $region11: #{tpu_custom_call.1} parent=5 // pred_region
        %s202 = ssub.s32 %s23, 1
        // Predicated region
        $region13: #{tpu_custom_call.1} parent=11 // pred_check
          %p203 = pneg %p136
        $region14: #{tpu_custom_call.1} parent=11 // pred_check_branch
          %205 = sbr.rel (%p203) target = $region16
        $region15: #{tpu_custom_call.1} parent=11 // pred_region
          %s207 = ssub.s32 512, 512
          %208 = vsyncadd [#allocation9], %s207
          %s209 = sshll.u32 [#allocation10], 4
          %s210 = int_to_ptr.vmem [resolvable:$true] %s209
          %215 = dma.hbm_to_vmem [thread:$0]  %s3, 512, %s210, [#allocation9], 256, 256, 16
        $region16: #{tpu_custom_call.1} parent=11 // pred_fallthru
          _
      $region12: #{tpu_custom_call.1} parent=5 // pred_fallthru
        _
      %p216 = scmp.lt.s32.totalorder %s23, 2
      // Predicated region
      $region17: #{tpu_custom_call.1} parent=5 // pred_check
        %p217 = pneg %p216
      $region18: #{tpu_custom_call.1} parent=5 // pred_check_branch
        %219 = sbr.rel (%p217) target = $region20
      $region19: #{tpu_custom_call.1} parent=5 // pred_region
        // Predicated region
        $region21: #{tpu_custom_call.1} parent=19 // pred_check
          %p220 = pneg %p55
        $region22: #{tpu_custom_call.1} parent=19 // pred_check_branch
          %222 = sbr.rel (%p220) target = $region24
        $region23: #{tpu_custom_call.1} parent=19 // pred_region
          %s223 = sand.u32 %s45, 1
          %s224 = scalar_lea.sflag [#allocation6], %s223
          %s225 = sand.u32 %s45, 1
          %s226 = smul.addr %s225, 72
          %s227 = scalar_lea.vmem [#allocation5], %s226
          %s229 = ssub.s32 1152, 1152
          %230 = vsyncadd %s224, %s229
          %s231 = smul.addr %s30, 18
          %s232 = smul.addr %s231, 64
          %s233 = scalar_lea.hbm %s0, %s232
          %s234 = sshll.u32 %s227, 4
          %s235 = int_to_ptr.vmem [resolvable:$true] %s234
          %240 = dma.hbm_to_vmem [thread:$0]  %s233, 1152, %s235, %s224, 128, 128, 8
        $region24: #{tpu_custom_call.1} parent=19 // pred_fallthru
          _
        // Predicated region
        $region25: #{tpu_custom_call.1} parent=19 // pred_check
          %p241 = pneg %p83
        $region26: #{tpu_custom_call.1} parent=19 // pred_check_branch
          %243 = sbr.rel (%p241) target = $region28
        $region27: #{tpu_custom_call.1} parent=19 // pred_region
          %s244 = sand.u32 %s23, 1
          %s245 = scalar_lea.sflag [#allocation9], %s244
          %s246 = sand.u32 %s73, 1
          %s247 = smul.addr %s246, 72
          %s248 = scalar_lea.vmem [#allocation8], %s247
          %s249 = smul.u32 2, %s31
          %s251 = ssub.s32 1152, 1152
          %252 = vsyncadd %s245, %s251
          %s253 = smul.addr %s30, 18
          %s254 = sadd.s32 %s249, %s253
          %s255 = smul.addr %s254, 64
          %s256 = scalar_lea.hbm %s1, %s255
          %s257 = sshll.u32 %s248, 4
          %s258 = int_to_ptr.vmem [resolvable:$true] %s257
          %263 = dma.hbm_to_vmem [thread:$0]  %s256, 1152, %s258, %s245, 128, 128, 8
        $region28: #{tpu_custom_call.1} parent=19 // pred_fallthru
          _
        // Predicated region
        $region29: #{tpu_custom_call.1} parent=19 // pred_check
          %p264 = pneg %p109
        $region30: #{tpu_custom_call.1} parent=19 // pred_check_branch
          %266 = sbr.rel (%p264) target = $region32
        $region31: #{tpu_custom_call.1} parent=19 // pred_region
          %p267 = scmp.lt.s32.totalorder %s30, 1
          %s268 = scalar_select %p267, %s30, 1
          %s269 = smul.addr %s268, 2
          %s270 = scalar_lea.vmem %s2, %s269
        $region32: #{tpu_custom_call.1} parent=19 // pred_fallthru
          _
        // Predicated region
        $region33: #{tpu_custom_call.1} parent=19 // pred_check
          %p271 = pneg %p156
        $region34: #{tpu_custom_call.1} parent=19 // pred_check_branch
          %273 = sbr.rel (%p271) target = $region36
        $region35: #{tpu_custom_call.1} parent=19 // pred_region
          %s274 = sand.u32 %s146, 1
          %s275 = scalar_lea.sflag [#allocation12], %s274
          %s276 = sand.u32 %s146, 1
          %s277 = smul.addr %s276, 8
          %s278 = scalar_lea.vmem [#allocation11], %s277
          %s280 = ssub.s32 128, 128
          %281 = vsyncadd %s275, %s280
          %s282 = smul.addr %s30, 2
          %s283 = smul.addr %s282, 64
          %s284 = scalar_lea.hbm %s4, %s283
          %s286 = sshll.u32 %s278, 4
          %s287 = int_to_ptr.vmem [resolvable:$true] %s286
          %289 = dma.hbm_to_vmem [thread:$0]  %s284, 128, %s287, %s275
        $region36: #{tpu_custom_call.1} parent=19 // pred_fallthru
          _
      $region20: #{tpu_custom_call.1} parent=5 // pred_fallthru
        _
      %p290 = scmp.le.s32.totalorder 1, %s23
      %p291 = scmp.lt.s32.totalorder %s23, 3
      %p292 = pnand %p290, %p291
      %p293 = pneg %p292
      // Predicated region
      $region37: #{tpu_custom_call.1} parent=5 // pred_check
        _
      $region38: #{tpu_custom_call.1} parent=5 // pred_check_branch
        %295 = sbr.rel (%p292) target = $region40
      $region39: #{tpu_custom_call.1} parent=5 // pred_region
        %s296 = ssub.s32 %s23, 1
        %s297 = sand.u32 %s48, 1
        %s298 = scalar_lea.sflag [#allocation6], %s297
        %s299 = sand.u32 %s48, 1
        %s300 = smul.addr %s299, 72
        %s301 = scalar_lea.vmem [#allocation5], %s300
        // Predicated region
        $region41: #{tpu_custom_call.1} parent=39 // pred_check
          %p302 = pneg %p61
        $region42: #{tpu_custom_call.1} parent=39 // pred_check_branch
          %304 = sbr.rel (%p302) target = $region44
        $region43: #{tpu_custom_call.1} parent=39 // pred_region
          %305 = dma.done %s298, 1152
        $region44: #{tpu_custom_call.1} parent=39 // pred_fallthru
          _
        %s306 = sand.u32 %s28, 1
        %s307 = scalar_lea.sflag [#allocation9], %s306
        %s308 = sand.u32 %s76, 1
        %s309 = smul.addr %s308, 72
        %s310 = scalar_lea.vmem [#allocation8], %s309
        // Predicated region
        $region45: #{tpu_custom_call.1} parent=39 // pred_check
          %p311 = pneg %p89
        $region46: #{tpu_custom_call.1} parent=39 // pred_check_branch
          %313 = sbr.rel (%p311) target = $region48
        $region47: #{tpu_custom_call.1} parent=39 // pred_region
          %314 = dma.done %s307, 1152
        $region48: #{tpu_custom_call.1} parent=39 // pred_fallthru
          _
        // Predicated region
        $region49: #{tpu_custom_call.1} parent=39 // pred_check
          %p315 = pneg %p136
        $region50: #{tpu_custom_call.1} parent=39 // pred_check_branch
          %317 = sbr.rel (%p315) target = $region52
        $region51: #{tpu_custom_call.1} parent=39 // pred_region
          %318 = dma.done [#allocation9], 512
        $region52: #{tpu_custom_call.1} parent=39 // pred_fallthru
          _
        %s319 = sand.u32 %s149, 1
        %s320 = scalar_lea.sflag [#allocation12], %s319
        %s321 = sand.u32 %s149, 1
        %s322 = smul.addr %s321, 8
        %s323 = scalar_lea.vmem [#allocation11], %s322
        // Predicated region
        $region53: #{tpu_custom_call.1} parent=39 // pred_check
          %p324 = pneg %p162
        $region54: #{tpu_custom_call.1} parent=39 // pred_check_branch
          %326 = sbr.rel (%p324) target = $region56
        $region55: #{tpu_custom_call.1} parent=39 // pred_region
          %327 = dma.done %s320, 128
        $region56: #{tpu_custom_call.1} parent=39 // pred_fallthru
          _
        %s328 = sand.u32 %s48, 1
        %s329 = scalar_lea.sflag [#allocation6], %s328
        %s330 = sand.u32 %s48, 1
        %s331 = smul.addr %s330, 72
        %s332 = scalar_lea.vmem [#allocation5], %s331
        %p333 = pneg %p61
        %p334 = pneg %p58
        %s335 = sand.u32 %s28, 1
        %s336 = scalar_lea.sflag [#allocation9], %s335
        %s337 = sand.u32 %s76, 1
        %s338 = smul.addr %s337, 72
        %s339 = scalar_lea.vmem [#allocation8], %s338
        %p340 = pneg %p89
        %p341 = pneg %p86
        %p342 = scmp.lt.s32.totalorder %s32, 1
        %s343 = scalar_select %p342, %s32, 1
        %s344 = smul.addr %s343, 2
        %s345 = scalar_lea.vmem %s2, %s344
        %p346 = pneg %p115
        %p347 = pneg %p112
        %p348 = pneg %p136
        %p349 = pneg %p133
        %s350 = sand.u32 %s149, 1
        %s351 = scalar_lea.sflag [#allocation12], %s350
        %s352 = sand.u32 %s149, 1
        %s353 = smul.addr %s352, 8
        %s354 = scalar_lea.vmem [#allocation11], %s353
        %p355 = pneg %p162
        %p356 = pneg %p159
        %p357 = pneg %p188
        %p358 = pneg %p185
        %s359 = sand.u32 %s175, 1
        %s360 = scalar_lea.sflag [#allocation7], %s359
        %s361 = sand.u32 %s175, 1
        %s362 = smul.addr %s361, 8
        %s363 = scalar_lea.vmem [#allocation13], %s362
        %s364 = smul.u32 2, %s33
        %p365 = scmp.lt.s32.totalorder %s32, 1
        %s366 = scalar_select %p365, %s32, 1
        %s367 = smul.addr %s366, 2
        %s368 = scalar_lea.vmem %s2, %s367
        %p370 = scmp.eq.s32.totalorder %s33, 0
        // Predicated region
        $region57: #{tpu_custom_call.1} parent=39 // pred_check
          %p371 = pneg %p370
        $region58: #{tpu_custom_call.1} parent=39 // pred_check_branch
          %373 = sbr.rel (%p371) target = $region60
        $region59: #{tpu_custom_call.1} parent=39 // pred_region
          %v374 = vlaneseq
          %vm375 = vcmp.ge.s32.totalorder %v374, 0
          %vm376 = vcmp.lt.s32.totalorder %v374, 256
          %vm377 = vmand %vm375, %vm376
          %378 = vst.msk [vmem:[#allocation2] sm:$0x3] %vm377, -inf
          %379 = vst.msk [vmem:[#allocation3] sm:$0x3] %vm377, 0.0
          %380 = vst [vmem:[#allocation4] sm:$0xff] 0.0
          %381 = vst [vmem:[#allocation4 + $0x8] sm:$0xff] 0.0
          %382 = vst [vmem:[#allocation4 + $0x10] sm:$0xff] 0.0
          %383 = vst [vmem:[#allocation4 + $0x18] sm:$0xff] 0.0
          %384 = vst [vmem:[#allocation4 + $0x20] sm:$0xff] 0.0
          %385 = vst [vmem:[#allocation4 + $0x28] sm:$0xff] 0.0
          %386 = vst [vmem:[#allocation4 + $0x30] sm:$0xff] 0.0
          %387 = vst [vmem:[#allocation4 + $0x38] sm:$0xff] 0.0
          %388 = vst [vmem:[#allocation4 + $0x40] sm:$0xff] 0.0
          %389 = vst [vmem:[#allocation4 + $0x48] sm:$0xff] 0.0
          %390 = vst [vmem:[#allocation4 + $0x50] sm:$0xff] 0.0
          %391 = vst [vmem:[#allocation4 + $0x58] sm:$0xff] 0.0
          %392 = vst [vmem:[#allocation4 + $0x60] sm:$0xff] 0.0
          %393 = vst [vmem:[#allocation4 + $0x68] sm:$0xff] 0.0
          %394 = vst [vmem:[#allocation4 + $0x70] sm:$0xff] 0.0
          %395 = vst [vmem:[#allocation4 + $0x78] sm:$0xff] 0.0
          %396 = vst [vmem:[#allocation4 + $0x80] sm:$0xff] 0.0
          %397 = vst [vmem:[#allocation4 + $0x88] sm:$0xff] 0.0
        $region60: #{tpu_custom_call.1} parent=39 // pred_fallthru
          _
        %v398 = vld [vmem:[%s301] sm:$0xff]
        %v399 = vld [vmem:[%s301 + $0x8] sm:$0xff]
        %v400 = vld [vmem:[%s301 + $0x10] sm:$0xff]
        %v401 = vld [vmem:[%s301 + $0x18] sm:$0xff]
        %v402 = vld [vmem:[%s301 + $0x20] sm:$0xff]
        %v403 = vld [vmem:[%s301 + $0x28] sm:$0xff]
        %v404 = vld [vmem:[%s301 + $0x30] sm:$0xff]
        %v405 = vld [vmem:[%s301 + $0x38] sm:$0xff]
        %v406 = vld [vmem:[%s301 + $0x40] sm:$0xff]
        %v407 = vld [vmem:[%s310] sm:$0xff]
        %v408 = vld [vmem:[%s310 + $0x8] sm:$0xff]
        %v409 = vld [vmem:[%s310 + $0x10] sm:$0xff]
        %v410 = vld [vmem:[%s310 + $0x18] sm:$0xff]
        %v411 = vld [vmem:[%s310 + $0x20] sm:$0xff]
        %v412 = vld [vmem:[%s310 + $0x28] sm:$0xff]
        %v413 = vld [vmem:[%s310 + $0x30] sm:$0xff]
        %v414 = vld [vmem:[%s310 + $0x38] sm:$0xff]
        %v415 = vld [vmem:[%s310 + $0x40] sm:$0xff]
        %v416 = vunpack.c.l.bf16 %v407
        %v417 = vunpack.c.h.bf16 %v407
        %v418 = vunpack.c.l.bf16 %v408
        %v419 = vunpack.c.h.bf16 %v408
        %v420 = vunpack.c.l.bf16 %v409
        %v421 = vunpack.c.h.bf16 %v409
        %v422 = vunpack.c.l.bf16 %v410
        %v423 = vunpack.c.h.bf16 %v410
        %v424 = vunpack.c.l.bf16 %v411
        %v425 = vunpack.c.h.bf16 %v411
        %v426 = vunpack.c.l.bf16 %v412
        %v427 = vunpack.c.h.bf16 %v412
        %v428 = vunpack.c.l.bf16 %v413
        %v429 = vunpack.c.h.bf16 %v413
        %v430 = vunpack.c.l.bf16 %v414
        %v431 = vunpack.c.h.bf16 %v414
        %v432 = vunpack.c.l.bf16 %v415
        %v433 = vunpack.c.h.bf16 %v415
        %v434 = vmul.f32 %v416, %v416
        %v435 = vmul.f32 %v417, %v417
        %v436 = vmul.f32 %v418, %v418
        %v437 = vmul.f32 %v419, %v419
        %v438 = vmul.f32 %v420, %v420
        %v439 = vmul.f32 %v421, %v421
        %v440 = vmul.f32 %v422, %v422
        %v441 = vmul.f32 %v423, %v423
        %v442 = vmul.f32 %v424, %v424
        %v443 = vmul.f32 %v425, %v425
        %v444 = vmul.f32 %v426, %v426
        %v445 = vmul.f32 %v427, %v427
        %v446 = vmul.f32 %v428, %v428
        %v447 = vmul.f32 %v429, %v429
        %v448 = vmul.f32 %v430, %v430
        %v449 = vmul.f32 %v431, %v431
        %v450 = vmul.f32 %v432, %v432
        %v451 = vmul.f32 %v433, %v433
        %v452 = vadd.f32 %v434, %v436
        %v453 = vadd.f32 %v452, %v438
        %v454 = vadd.f32 %v453, %v440
        %v455 = vadd.f32 %v454, %v442
        %v456 = vadd.f32 %v455, %v444
        %v457 = vadd.f32 %v456, %v446
        %v458 = vadd.f32 %v457, %v448
        %v459 = vadd.f32 %v458, %v450
        %v460 = vrot.slane %v459, 4
        %v461 = vadd.f32 %v459, %v460
        %v462 = vrot.slane %v461, 2
        %v463 = vadd.f32 %v461, %v462
        %v464 = vrot.slane %v463, 1
        %v465 = vadd.f32 %v463, %v464
        %v466 = vadd.f32 %v435, %v437
        %v467 = vadd.f32 %v466, %v439
        %v468 = vadd.f32 %v467, %v441
        %v469 = vadd.f32 %v468, %v443
        %v470 = vadd.f32 %v469, %v445
        %v471 = vadd.f32 %v470, %v447
        %v472 = vadd.f32 %v471, %v449
        %v473 = vadd.f32 %v472, %v451
        %v474 = vrot.slane %v473, 4
        %v475 = vadd.f32 %v473, %v474
        %v476 = vrot.slane %v475, 2
        %v477 = vadd.f32 %v475, %v476
        %v478 = vrot.slane %v477, 1
        %v479 = vadd.f32 %v477, %v478
        %v480 = vrsqrt.pop %v465
        %v481 = vrsqrt.pop %v479
        %v482 = vmul.f32 %v416, %v480
        %v483 = vmul.f32 %v417, %v481
        %v484 = vmul.f32 %v418, %v480
        %v485 = vmul.f32 %v419, %v481
        %v486 = vmul.f32 %v420, %v480
        %v487 = vmul.f32 %v421, %v481
        %v488 = vmul.f32 %v422, %v480
        %v489 = vmul.f32 %v423, %v481
        %v490 = vmul.f32 %v424, %v480
        %v491 = vmul.f32 %v425, %v481
        %v492 = vmul.f32 %v426, %v480
        %v493 = vmul.f32 %v427, %v481
        %v494 = vmul.f32 %v428, %v480
        %v495 = vmul.f32 %v429, %v481
        %v496 = vmul.f32 %v430, %v480
        %v497 = vmul.f32 %v431, %v481
        %v498 = vmul.f32 %v432, %v480
        %v499 = vmul.f32 %v433, %v481
        %v500 = vpack.c.bf16 %v484, %v482
        %v501 = vpack.c.bf16 %v485, %v483
        %v502 = vpack.c.bf16 %v488, %v486
        %v503 = vpack.c.bf16 %v489, %v487
        %v504 = vpack.c.bf16 %v492, %v490
        %v505 = vpack.c.bf16 %v493, %v491
        %v506 = vpack.c.bf16 %v496, %v494
        %v507 = vpack.c.bf16 %v497, %v495
        %v508 = vpack.c.bf16 %v498, %v498
        %v509 = vpack.c.bf16 %v499, %v499
        %510 = vxpose.xlu0.c.b16.start [1/8] %v500, 128
        %511 = vxpose.xlu0.c.b16.cont [2/8] %v502, 128
        %512 = vxpose.xlu0.c.b16.cont [3/8] %v504, 128
        %513 = vxpose.xlu0.c.b16.cont [4/8] %v506, 128
        %514 = vxpose.xlu0.c.b16.cont [5/8] %v508, 128
        %515 = vxpose.xlu0.c.b16.cont [6/8] 0, 128
        %516 = vxpose.xlu0.c.b16.cont [7/8] 0, 128
        %517 = vxpose.xlu0.c.b16.end [8/8] 0, 128
        %v518 = vpop.trf.xlu0
        %v519 = vpop.trf.xlu0
        %v520 = vpop.trf.xlu0
        %v521 = vpop.trf.xlu0
        %v522 = vpop.trf.xlu0
        %v523 = vpop.trf.xlu0
        %v524 = vpop.trf.xlu0
        %v525 = vpop.trf.xlu0
        %526 = vxpose.xlu0.c.b16.start [1/8] %v501, 128
        %527 = vxpose.xlu0.c.b16.cont [2/8] %v503, 128
        %528 = vxpose.xlu0.c.b16.cont [3/8] %v505, 128
        %529 = vxpose.xlu0.c.b16.cont [4/8] %v507, 128
        %530 = vxpose.xlu0.c.b16.cont [5/8] %v509, 128
        %531 = vxpose.xlu0.c.b16.cont [6/8] 0, 128
        %532 = vxpose.xlu0.c.b16.cont [7/8] 0, 128
        %533 = vxpose.xlu0.c.b16.end [8/8] 0, 128
        %v534 = vpop.trf.xlu0
        %v535 = vpop.trf.xlu0
        %v536 = vpop.trf.xlu0
        %v537 = vpop.trf.xlu0
        %v538 = vpop.trf.xlu0
        %v539 = vpop.trf.xlu0
        %v540 = vpop.trf.xlu0
        %v541 = vpop.trf.xlu0
        %v551 = vunpack.c.l.b16 %v398
        %v552 = vunpack.c.h.b16 %v398
        %v553 = vunpack.c.l.b16 %v399
        %v554 = vunpack.c.h.b16 %v399
        %v555 = vunpack.c.l.b16 %v400
        %v556 = vunpack.c.h.b16 %v400
        %v557 = vunpack.c.l.b16 %v401
        %v558 = vunpack.c.h.b16 %v401
        %v559 = vunpack.c.l.b16 %v402
        %v560 = vunpack.c.h.b16 %v402
        %v561 = vunpack.c.l.b16 %v403
        %v562 = vunpack.c.h.b16 %v403
        %v563 = vunpack.c.l.b16 %v404
        %v564 = vunpack.c.h.b16 %v404
        %v565 = vunpack.c.l.b16 %v405
        %v566 = vunpack.c.h.b16 %v405
        %v567 = vunpack.c.l.b16 %v406
        %v568 = vunpack.c.h.b16 %v406
        %v569 = vpack.c.b16 %v553, %v551
        %v570 = vpack.c.b16 %v554, %v552
        %v571 = vpack.c.b16 %v557, %v555
        %v572 = vpack.c.b16 %v558, %v556
        %v573 = vpack.c.b16 %v561, %v559
        %v574 = vpack.c.b16 %v562, %v560
        %v575 = vpack.c.b16 %v565, %v563
        %v576 = vpack.c.b16 %v566, %v564
        %v577 = vpack.c.b16 %v567, %v567
        %v578 = vpack.c.b16 %v568, %v568
        %vm587 = vcmask 588800
        %v589 = vsel %vm587, %v518, 0
        %v592 = vsel %vm587, %v519, 0
        %v595 = vsel %vm587, %v520, 0
        %v598 = vsel %vm587, %v521, 0
        %v601 = vsel %vm587, %v522, 0
        %v604 = vsel %vm587, %v523, 0
        %v607 = vsel %vm587, %v524, 0
        %v610 = vsel %vm587, %v525, 0
        %v613 = vsel %vm587, %v534, 0
        %v616 = vsel %vm587, %v535, 0
        %v619 = vsel %vm587, %v536, 0
        %v622 = vsel %vm587, %v537, 0
        %v625 = vsel %vm587, %v538, 0
        %v628 = vsel %vm587, %v539, 0
        %v631 = vsel %vm587, %v540, 0
        %v634 = vsel %vm587, %v541, 0
        %vm636 = vcmask 1043456
        %v638 = vsel %vm636, %v577, 0
        %v641 = vsel %vm636, %v578, 0
        %643 = vmatprep.subr.bf16.mxu0 %v570
        %644 = vmatpush1.bf16.msra.mxu0 %v569
        %645 = vmatprep.subr.bf16.mxu0 %v572
        %646 = vmatpush1.bf16.msra.mxu0 %v571
        %647 = vmatprep.subr.bf16.mxu0 %v574
        %648 = vmatpush1.bf16.msra.mxu0 %v573
        %649 = vmatprep.subr.bf16.mxu0 %v576
        %650 = vmatpush1.bf16.msra.mxu0 %v575
        %651 = vmatprep.subr.bf16.mxu0 %v641
        %652 = vmatpush1.bf16.msra.mxu0 %v638
        %653 = vmatprep.subr.bf16.mxu0 0
        %654 = vmatpush1.bf16.msra.mxu0 0
        %655 = vmatprep.subr.bf16.mxu0 0
        %656 = vmatpush1.bf16.msra.mxu0 0
        %657 = vmatprep.subr.bf16.mxu0 0
        %658 = vmatpush1.bf16.msra.mxu0 0
        %659 = vmatprep.subr.bf16.mxu0 0
        %660 = vmatpush1.bf16.msra.mxu0 0
        %661 = vmatprep.subr.bf16.mxu0 0
        %662 = vmatpush1.bf16.msra.mxu0 0
        %663 = vmatprep.subr.bf16.mxu0 0
        %664 = vmatpush1.bf16.msra.mxu0 0
        %665 = vmatprep.subr.bf16.mxu0 0
        %666 = vmatpush1.bf16.msra.mxu0 0
        %667 = vmatprep.subr.bf16.mxu0 0
        %668 = vmatpush1.bf16.msra.mxu0 0
        %669 = vmatprep.subr.bf16.mxu0 0
        %670 = vmatpush1.bf16.msra.mxu0 0
        %671 = vmatprep.subr.bf16.mxu0 0
        %672 = vmatpush1.bf16.msra.mxu0 0
        %673 = vmatprep.subr.bf16.mxu0 0
        %674 = vmatpush1.bf16.msra.mxu0 0
        %675 = vmatprep.mubr.bf16.mxu0 0
        %676 = vmatmul.mubr.bf16.gmra.mrb[0].mxu0 %v589
        %v677 = vpop.f32.mrb[0].mxu0
        %v678 = vadd.f32 0.0, %v677
        %v679 = vpop.f32.mrb[0].mxu0
        %v680 = vadd.f32 0.0, %v679
        %v681 = vpop.f32.mrb[0].mxu0
        %v682 = vadd.f32 0.0, %v681
        %v683 = vpop.f32.mrb[0].mxu0
        %v684 = vadd.f32 0.0, %v683
        %685 = vmatprep.mubr.bf16.mxu0 0
        %686 = vmatmul.mubr.bf16.gmra.mrb[0].mxu0 %v592
        %v687 = vpop.f32.mrb[0].mxu0
        %v688 = vadd.f32 0.0, %v687
        %v689 = vpop.f32.mrb[0].mxu0
        %v690 = vadd.f32 0.0, %v689
        %v691 = vpop.f32.mrb[0].mxu0
        %v692 = vadd.f32 0.0, %v691
        %v693 = vpop.f32.mrb[0].mxu0
        %v694 = vadd.f32 0.0, %v693
        %695 = vmatprep.mubr.bf16.mxu0 0
        %696 = vmatmul.mubr.bf16.gmra.mrb[0].mxu0 %v595
        %v697 = vpop.f32.mrb[0].mxu0
        %v698 = vadd.f32 0.0, %v697
        %v699 = vpop.f32.mrb[0].mxu0
        %v700 = vadd.f32 0.0, %v699
        %v701 = vpop.f32.mrb[0].mxu0
        %v702 = vadd.f32 0.0, %v701
        %v703 = vpop.f32.mrb[0].mxu0
        %v704 = vadd.f32 0.0, %v703
        %705 = vmatprep.mubr.bf16.mxu0 0
        %706 = vmatmul.mubr.bf16.gmra.mrb[0].mxu0 %v598
        %v707 = vpop.f32.mrb[0].mxu0
        %v708 = vadd.f32 0.0, %v707
        %v709 = vpop.f32.mrb[0].mxu0
        %v710 = vadd.f32 0.0, %v709
        %v711 = vpop.f32.mrb[0].mxu0
        %v712 = vadd.f32 0.0, %v711
        %v713 = vpop.f32.mrb[0].mxu0
        %v714 = vadd.f32 0.0, %v713
        %715 = vmatprep.mubr.bf16.mxu0 0
        %716 = vmatmul.mubr.bf16.gmra.mrb[0].mxu0 %v601
        %v717 = vpop.f32.mrb[0].mxu0
        %v718 = vadd.f32 0.0, %v717
        %v719 = vpop.f32.mrb[0].mxu0
        %v720 = vadd.f32 0.0, %v719
        %v721 = vpop.f32.mrb[0].mxu0
        %v722 = vadd.f32 0.0, %v721
        %v723 = vpop.f32.mrb[0].mxu0
        %v724 = vadd.f32 0.0, %v723
        %725 = vmatprep.mubr.bf16.mxu0 0
        %726 = vmatmul.mubr.bf16.gmra.mrb[0].mxu0 %v604
        %v727 = vpop.f32.mrb[0].mxu0
        %v728 = vadd.f32 0.0, %v727
        %v729 = vpop.f32.mrb[0].mxu0
        %v730 = vadd.f32 0.0, %v729
        %v731 = vpop.f32.mrb[0].mxu0
        %v732 = vadd.f32 0.0, %v731
        %v733 = vpop.f32.mrb[0].mxu0
        %v734 = vadd.f32 0.0, %v733
        %735 = vmatprep.mubr.bf16.mxu0 0
        %736 = vmatmul.mubr.bf16.gmra.mrb[0].mxu0 %v607
        %v737 = vpop.f32.mrb[0].mxu0
        %v738 = vadd.f32 0.0, %v737
        %v739 = vpop.f32.mrb[0].mxu0
        %v740 = vadd.f32 0.0, %v739
        %v741 = vpop.f32.mrb[0].mxu0
        %v742 = vadd.f32 0.0, %v741
        %v743 = vpop.f32.mrb[0].mxu0
        %v744 = vadd.f32 0.0, %v743
        %745 = vmatprep.mubr.bf16.mxu0 0
        %746 = vmatmul.mubr.bf16.gmra.mrb[0].mxu0 %v610
        %v747 = vpop.f32.mrb[0].mxu0
        %v748 = vadd.f32 0.0, %v747
        %v749 = vpop.f32.mrb[0].mxu0
        %v750 = vadd.f32 0.0, %v749
        %v751 = vpop.f32.mrb[0].mxu0
        %v752 = vadd.f32 0.0, %v751
        %v753 = vpop.f32.mrb[0].mxu0
        %v754 = vadd.f32 0.0, %v753
        %755 = vmatprep.mubr.bf16.mxu0 0
        %756 = vmatmul.mubr.bf16.gmra.mrb[0].mxu0 %v613
        %v757 = vpop.f32.mrb[0].mxu0
        %v758 = vadd.f32 0.0, %v757
        %v759 = vpop.f32.mrb[0].mxu0
        %v760 = vadd.f32 0.0, %v759
        %v761 = vpop.f32.mrb[0].mxu0
        %v762 = vadd.f32 0.0, %v761
        %v763 = vpop.f32.mrb[0].mxu0
        %v764 = vadd.f32 0.0, %v763
        %765 = vmatprep.mubr.bf16.mxu0 0
        %766 = vmatmul.mubr.bf16.gmra.mrb[0].mxu0 %v616
        %v767 = vpop.f32.mrb[0].mxu0
        %v768 = vadd.f32 0.0, %v767
        %v769 = vpop.f32.mrb[0].mxu0
        %v770 = vadd.f32 0.0, %v769
        %v771 = vpop.f32.mrb[0].mxu0
        %v772 = vadd.f32 0.0, %v771
        %v773 = vpop.f32.mrb[0].mxu0
        %v774 = vadd.f32 0.0, %v773
        %775 = vmatprep.mubr.bf16.mxu0 0
        %776 = vmatmul.mubr.bf16.gmra.mrb[0].mxu0 %v619
        %v777 = vpop.f32.mrb[0].mxu0
        %v778 = vadd.f32 0.0, %v777
        %v779 = vpop.f32.mrb[0].mxu0
        %v780 = vadd.f32 0.0, %v779
        %v781 = vpop.f32.mrb[0].mxu0
        %v782 = vadd.f32 0.0, %v781
        %v783 = vpop.f32.mrb[0].mxu0
        %v784 = vadd.f32 0.0, %v783
        %785 = vmatprep.mubr.bf16.mxu0 0
        %786 = vmatmul.mubr.bf16.gmra.mrb[0].mxu0 %v622
        %v787 = vpop.f32.mrb[0].mxu0
        %v788 = vadd.f32 0.0, %v787
        %v789 = vpop.f32.mrb[0].mxu0
        %v790 = vadd.f32 0.0, %v789
        %v791 = vpop.f32.mrb[0].mxu0
        %v792 = vadd.f32 0.0, %v791
        %v793 = vpop.f32.mrb[0].mxu0
        %v794 = vadd.f32 0.0, %v793
        %795 = vmatprep.mubr.bf16.mxu0 0
        %796 = vmatmul.mubr.bf16.gmra.mrb[0].mxu0 %v625
        %v797 = vpop.f32.mrb[0].mxu0
        %v798 = vadd.f32 0.0, %v797
        %v799 = vpop.f32.mrb[0].mxu0
        %v800 = vadd.f32 0.0, %v799
        %v801 = vpop.f32.mrb[0].mxu0
        %v802 = vadd.f32 0.0, %v801
        %v803 = vpop.f32.mrb[0].mxu0
        %v804 = vadd.f32 0.0, %v803
        %805 = vmatprep.mubr.bf16.mxu0 0
        %806 = vmatmul.mubr.bf16.gmra.mrb[0].mxu0 %v628
        %v807 = vpop.f32.mrb[0].mxu0
        %v808 = vadd.f32 0.0, %v807
        %v809 = vpop.f32.mrb[0].mxu0
        %v810 = vadd.f32 0.0, %v809
        %v811 = vpop.f32.mrb[0].mxu0
        %v812 = vadd.f32 0.0, %v811
        %v813 = vpop.f32.mrb[0].mxu0
        %v814 = vadd.f32 0.0, %v813
        %815 = vmatprep.mubr.bf16.mxu0 0
        %816 = vmatmul.mubr.bf16.gmra.mrb[0].mxu0 %v631
        %v817 = vpop.f32.mrb[0].mxu0
        %v818 = vadd.f32 0.0, %v817
        %v819 = vpop.f32.mrb[0].mxu0
        %v820 = vadd.f32 0.0, %v819
        %v821 = vpop.f32.mrb[0].mxu0
        %v822 = vadd.f32 0.0, %v821
        %v823 = vpop.f32.mrb[0].mxu0
        %v824 = vadd.f32 0.0, %v823
        %825 = vmatprep.mubr.bf16.mxu0 0
        %826 = vmatmul.mubr.bf16.gmra.mrb[0].mxu0 %v634
        %v827 = vpop.f32.mrb[0].mxu0
        %v828 = vadd.f32 0.0, %v827
        %v829 = vpop.f32.mrb[0].mxu0
        %v830 = vadd.f32 0.0, %v829
        %v831 = vpop.f32.mrb[0].mxu0
        %v832 = vadd.f32 0.0, %v831
        %v833 = vpop.f32.mrb[0].mxu0
        %v834 = vadd.f32 0.0, %v833
        %835 = vdwg.mxu0
        %v836 = vld [vmem:[#allocation10] ss:$8 sm:$0x3]
        %s837 = scalar_lea.vmem [#allocation10], 1
        %v838 = vld [vmem:[%s837] ss:$8 sm:$0x3]
        %839 = vrot.lane.b32.xlu0 %v678, 1
        %v840 = vpop.permute.xlu0 %839
        %841 = vrot.lane.b32.xlu0 %v682, 1
        %v842 = vpop.permute.xlu0 %841
        %843 = vrot.lane.b32.xlu0 %v688, 1
        %v844 = vpop.permute.xlu0 %843
        %845 = vrot.lane.b32.xlu0 %v692, 1
        %v846 = vpop.permute.xlu0 %845
        %847 = vrot.lane.b32.xlu0 %v698, 1
        %v848 = vpop.permute.xlu0 %847
        %849 = vrot.lane.b32.xlu0 %v702, 1
        %v850 = vpop.permute.xlu0 %849
        %851 = vrot.lane.b32.xlu0 %v708, 1
        %v852 = vpop.permute.xlu0 %851
        %853 = vrot.lane.b32.xlu0 %v712, 1
        %v854 = vpop.permute.xlu0 %853
        %855 = vrot.lane.b32.xlu0 %v718, 1
        %v856 = vpop.permute.xlu0 %855
        %857 = vrot.lane.b32.xlu0 %v722, 1
        %v858 = vpop.permute.xlu0 %857
        %859 = vrot.lane.b32.xlu0 %v728, 1
        %v860 = vpop.permute.xlu0 %859
        %861 = vrot.lane.b32.xlu0 %v732, 1
        %v862 = vpop.permute.xlu0 %861
        %863 = vrot.lane.b32.xlu0 %v738, 1
        %v864 = vpop.permute.xlu0 %863
        %865 = vrot.lane.b32.xlu0 %v742, 1
        %v866 = vpop.permute.xlu0 %865
        %867 = vrot.lane.b32.xlu0 %v748, 1
        %v868 = vpop.permute.xlu0 %867
        %869 = vrot.lane.b32.xlu0 %v752, 1
        %v870 = vpop.permute.xlu0 %869
        %871 = vrot.lane.b32.xlu0 %v758, 1
        %v872 = vpop.permute.xlu0 %871
        %873 = vrot.lane.b32.xlu0 %v762, 1
        %v874 = vpop.permute.xlu0 %873
        %875 = vrot.lane.b32.xlu0 %v768, 1
        %v876 = vpop.permute.xlu0 %875
        %877 = vrot.lane.b32.xlu0 %v772, 1
        %v878 = vpop.permute.xlu0 %877
        %879 = vrot.lane.b32.xlu0 %v778, 1
        %v880 = vpop.permute.xlu0 %879
        %881 = vrot.lane.b32.xlu0 %v782, 1
        %v882 = vpop.permute.xlu0 %881
        %883 = vrot.lane.b32.xlu0 %v788, 1
        %v884 = vpop.permute.xlu0 %883
        %885 = vrot.lane.b32.xlu0 %v792, 1
        %v886 = vpop.permute.xlu0 %885
        %887 = vrot.lane.b32.xlu0 %v798, 1
        %v888 = vpop.permute.xlu0 %887
        %889 = vrot.lane.b32.xlu0 %v802, 1
        %v890 = vpop.permute.xlu0 %889
        %891 = vrot.lane.b32.xlu0 %v808, 1
        %v892 = vpop.permute.xlu0 %891
        %893 = vrot.lane.b32.xlu0 %v812, 1
        %v894 = vpop.permute.xlu0 %893
        %895 = vrot.lane.b32.xlu0 %v818, 1
        %v896 = vpop.permute.xlu0 %895
        %897 = vrot.lane.b32.xlu0 %v822, 1
        %v898 = vpop.permute.xlu0 %897
        %899 = vrot.lane.b32.xlu0 %v828, 1
        %v900 = vpop.permute.xlu0 %899
        %901 = vrot.lane.b32.xlu0 %v832, 1
        %v902 = vpop.permute.xlu0 %901
        %903 = vrot.lane.b32.xlu0 %v680, 1
        %v904 = vpop.permute.xlu0 %903
        %905 = vrot.lane.b32.xlu0 %v684, 1
        %v906 = vpop.permute.xlu0 %905
        %907 = vrot.lane.b32.xlu0 %v690, 1
        %v908 = vpop.permute.xlu0 %907
        %909 = vrot.lane.b32.xlu0 %v694, 1
        %v910 = vpop.permute.xlu0 %909
        %911 = vrot.lane.b32.xlu0 %v700, 1
        %v912 = vpop.permute.xlu0 %911
        %913 = vrot.lane.b32.xlu0 %v704, 1
        %v914 = vpop.permute.xlu0 %913
        %915 = vrot.lane.b32.xlu0 %v710, 1
        %v916 = vpop.permute.xlu0 %915
        %917 = vrot.lane.b32.xlu0 %v714, 1
        %v918 = vpop.permute.xlu0 %917
        %919 = vrot.lane.b32.xlu0 %v720, 1
        %v920 = vpop.permute.xlu0 %919
        %921 = vrot.lane.b32.xlu0 %v724, 1
        %v922 = vpop.permute.xlu0 %921
        %923 = vrot.lane.b32.xlu0 %v730, 1
        %v924 = vpop.permute.xlu0 %923
        %925 = vrot.lane.b32.xlu0 %v734, 1
        %v926 = vpop.permute.xlu0 %925
        %927 = vrot.lane.b32.xlu0 %v740, 1
        %v928 = vpop.permute.xlu0 %927
        %929 = vrot.lane.b32.xlu0 %v744, 1
        %v930 = vpop.permute.xlu0 %929
        %931 = vrot.lane.b32.xlu0 %v750, 1
        %v932 = vpop.permute.xlu0 %931
        %933 = vrot.lane.b32.xlu0 %v754, 1
        %v934 = vpop.permute.xlu0 %933
        %935 = vrot.lane.b32.xlu0 %v760, 1
        %v936 = vpop.permute.xlu0 %935
        %937 = vrot.lane.b32.xlu0 %v764, 1
        %v938 = vpop.permute.xlu0 %937
        %939 = vrot.lane.b32.xlu0 %v770, 1
        %v940 = vpop.permute.xlu0 %939
        %941 = vrot.lane.b32.xlu0 %v774, 1
        %v942 = vpop.permute.xlu0 %941
        %943 = vrot.lane.b32.xlu0 %v780, 1
        %v944 = vpop.permute.xlu0 %943
        %945 = vrot.lane.b32.xlu0 %v784, 1
        %v946 = vpop.permute.xlu0 %945
        %947 = vrot.lane.b32.xlu0 %v790, 1
        %v948 = vpop.permute.xlu0 %947
        %949 = vrot.lane.b32.xlu0 %v794, 1
        %v950 = vpop.permute.xlu0 %949
        %951 = vrot.lane.b32.xlu0 %v800, 1
        %v952 = vpop.permute.xlu0 %951
        %953 = vrot.lane.b32.xlu0 %v804, 1
        %v954 = vpop.permute.xlu0 %953
        %955 = vrot.lane.b32.xlu0 %v810, 1
        %v956 = vpop.permute.xlu0 %955
        %957 = vrot.lane.b32.xlu0 %v814, 1
        %v958 = vpop.permute.xlu0 %957
        %959 = vrot.lane.b32.xlu0 %v820, 1
        %v960 = vpop.permute.xlu0 %959
        %961 = vrot.lane.b32.xlu0 %v824, 1
        %v962 = vpop.permute.xlu0 %961
        %963 = vrot.lane.b32.xlu0 %v830, 1
        %v964 = vpop.permute.xlu0 %963
        %965 = vrot.lane.b32.xlu0 %v834, 1
        %v966 = vpop.permute.xlu0 %965
        %v967 = vlaneseq
        %v968 = vand.u32 %v967, 127
        %vm969 = vcmp.lt.s32.totalorder %v968, 1
        %v970 = vsel %vm969, %v840, %v904
        %v971 = vsel %vm969, %v842, %v906
        %v972 = vsel %vm969, %v844, %v908
        %v973 = vsel %vm969, %v846, %v910
        %v974 = vsel %vm969, %v848, %v912
        %v975 = vsel %vm969, %v850, %v914
        %v976 = vsel %vm969, %v852, %v916
        %v977 = vsel %vm969, %v854, %v918
        %v978 = vsel %vm969, %v856, %v920
        %v979 = vsel %vm969, %v858, %v922
        %v980 = vsel %vm969, %v860, %v924
        %v981 = vsel %vm969, %v862, %v926
        %v982 = vsel %vm969, %v864, %v928
        %v983 = vsel %vm969, %v866, %v930
        %v984 = vsel %vm969, %v868, %v932
        %v985 = vsel %vm969, %v870, %v934
        %v986 = vsel %vm969, %v872, %v936
        %v987 = vsel %vm969, %v874, %v938
        %v988 = vsel %vm969, %v876, %v940
        %v989 = vsel %vm969, %v878, %v942
        %v990 = vsel %vm969, %v880, %v944
        %v991 = vsel %vm969, %v882, %v946
        %v992 = vsel %vm969, %v884, %v948
        %v993 = vsel %vm969, %v886, %v950
        %v994 = vsel %vm969, %v888, %v952
        %v995 = vsel %vm969, %v890, %v954
        %v996 = vsel %vm969, %v892, %v956
        %v997 = vsel %vm969, %v894, %v958
        %v998 = vsel %vm969, %v896, %v960
        %v999 = vsel %vm969, %v898, %v962
        %v1000 = vsel %vm969, %v900, %v964
        %v1001 = vsel %vm969, %v902, %v966
        %v1002 = vsel %vm969, %v904, %v840
        %v1003 = vsel %vm969, %v906, %v842
        %v1004 = vsel %vm969, %v908, %v844
        %v1005 = vsel %vm969, %v910, %v846
        %v1006 = vsel %vm969, %v912, %v848
        %v1007 = vsel %vm969, %v914, %v850
        %v1008 = vsel %vm969, %v916, %v852
        %v1009 = vsel %vm969, %v918, %v854
        %v1010 = vsel %vm969, %v920, %v856
        %v1011 = vsel %vm969, %v922, %v858
        %v1012 = vsel %vm969, %v924, %v860
        %v1013 = vsel %vm969, %v926, %v862
        %v1014 = vsel %vm969, %v928, %v864
        %v1015 = vsel %vm969, %v930, %v866
        %v1016 = vsel %vm969, %v932, %v868
        %v1017 = vsel %vm969, %v934, %v870
        %v1018 = vsel %vm969, %v936, %v872
        %v1019 = vsel %vm969, %v938, %v874
        %v1020 = vsel %vm969, %v940, %v876
        %v1021 = vsel %vm969, %v942, %v878
        %v1022 = vsel %vm969, %v944, %v880
        %v1023 = vsel %vm969, %v946, %v882
        %v1024 = vsel %vm969, %v948, %v884
        %v1025 = vsel %vm969, %v950, %v886
        %v1026 = vsel %vm969, %v952, %v888
        %v1027 = vsel %vm969, %v954, %v890
        %v1028 = vsel %vm969, %v956, %v892
        %v1029 = vsel %vm969, %v958, %v894
        %v1030 = vsel %vm969, %v960, %v896
        %v1031 = vsel %vm969, %v962, %v898
        %v1032 = vsel %vm969, %v964, %v900
        %v1033 = vsel %vm969, %v966, %v902
        %v1035 = vlaneseq
        %v1036 = vshrl.u32 %v1035, 7
        %v1037 = vsub.s32 0, %v1036
        %v1038 = vrot.slane %v836, %v1037
        %v1039 = vlaneseq
        %v1040 = vshrl.u32 %v1039, 7
        %v1041 = vsub.s32 1, %v1040
        %v1042 = vrot.slane %v836, %v1041
        %v1045 = vmul.f32 %v1002, %v1038
        %v1046 = vmul.f32 %v970, %v1042
        %v1047 = vmul.f32 %v1003, %v1038
        %v1048 = vmul.f32 %v971, %v1042
        %v1049 = vmul.f32 %v1004, %v1038
        %v1050 = vmul.f32 %v972, %v1042
        %v1051 = vmul.f32 %v1005, %v1038
        %v1052 = vmul.f32 %v973, %v1042
        %v1053 = vmul.f32 %v1006, %v1038
        %v1054 = vmul.f32 %v974, %v1042
        %v1055 = vmul.f32 %v1007, %v1038
        %v1056 = vmul.f32 %v975, %v1042
        %v1057 = vmul.f32 %v1008, %v1038
        %v1058 = vmul.f32 %v976, %v1042
        %v1059 = vmul.f32 %v1009, %v1038
        %v1060 = vmul.f32 %v977, %v1042
        %v1061 = vmul.f32 %v1010, %v1038
        %v1062 = vmul.f32 %v978, %v1042
        %v1063 = vmul.f32 %v1011, %v1038
        %v1064 = vmul.f32 %v979, %v1042
        %v1065 = vmul.f32 %v1012, %v1038
        %v1066 = vmul.f32 %v980, %v1042
        %v1067 = vmul.f32 %v1013, %v1038
        %v1068 = vmul.f32 %v981, %v1042
        %v1069 = vmul.f32 %v1014, %v1038
        %v1070 = vmul.f32 %v982, %v1042
        %v1071 = vmul.f32 %v1015, %v1038
        %v1072 = vmul.f32 %v983, %v1042
        %v1073 = vmul.f32 %v1016, %v1038
        %v1074 = vmul.f32 %v984, %v1042
        %v1075 = vmul.f32 %v1017, %v1038
        %v1076 = vmul.f32 %v985, %v1042
        %v1077 = vmul.f32 %v1018, %v1038
        %v1078 = vmul.f32 %v986, %v1042
        %v1079 = vmul.f32 %v1019, %v1038
        %v1080 = vmul.f32 %v987, %v1042
        %v1081 = vmul.f32 %v1020, %v1038
        %v1082 = vmul.f32 %v988, %v1042
        %v1083 = vmul.f32 %v1021, %v1038
        %v1084 = vmul.f32 %v989, %v1042
        %v1085 = vmul.f32 %v1022, %v1038
        %v1086 = vmul.f32 %v990, %v1042
        %v1087 = vmul.f32 %v1023, %v1038
        %v1088 = vmul.f32 %v991, %v1042
        %v1089 = vmul.f32 %v1024, %v1038
        %v1090 = vmul.f32 %v992, %v1042
        %v1091 = vmul.f32 %v1025, %v1038
        %v1092 = vmul.f32 %v993, %v1042
        %v1093 = vmul.f32 %v1026, %v1038
        %v1094 = vmul.f32 %v994, %v1042
        %v1095 = vmul.f32 %v1027, %v1038
        %v1096 = vmul.f32 %v995, %v1042
        %v1097 = vmul.f32 %v1028, %v1038
        %v1098 = vmul.f32 %v996, %v1042
        %v1099 = vmul.f32 %v1029, %v1038
        %v1100 = vmul.f32 %v997, %v1042
        %v1101 = vmul.f32 %v1030, %v1038
        %v1102 = vmul.f32 %v998, %v1042
        %v1103 = vmul.f32 %v1031, %v1038
        %v1104 = vmul.f32 %v999, %v1042
        %v1105 = vmul.f32 %v1032, %v1038
        %v1106 = vmul.f32 %v1000, %v1042
        %v1107 = vmul.f32 %v1033, %v1038
        %v1108 = vmul.f32 %v1001, %v1042
        %v1109 = vadd.f32 %v678, %v1045
        %v1110 = vadd.f32 %v680, %v1046
        %v1111 = vadd.f32 %v682, %v1047
        %v1112 = vadd.f32 %v684, %v1048
        %v1113 = vadd.f32 %v688, %v1049
        %v1114 = vadd.f32 %v690, %v1050
        %v1115 = vadd.f32 %v692, %v1051
        %v1116 = vadd.f32 %v694, %v1052
        %v1117 = vadd.f32 %v698, %v1053
        %v1118 = vadd.f32 %v700, %v1054
        %v1119 = vadd.f32 %v702, %v1055
        %v1120 = vadd.f32 %v704, %v1056
        %v1121 = vadd.f32 %v708, %v1057
        %v1122 = vadd.f32 %v710, %v1058
        %v1123 = vadd.f32 %v712, %v1059
        %v1124 = vadd.f32 %v714, %v1060
        %v1125 = vadd.f32 %v718, %v1061
        %v1126 = vadd.f32 %v720, %v1062
        %v1127 = vadd.f32 %v722, %v1063
        %v1128 = vadd.f32 %v724, %v1064
        %v1129 = vadd.f32 %v728, %v1065
        %v1130 = vadd.f32 %v730, %v1066
        %v1131 = vadd.f32 %v732, %v1067
        %v1132 = vadd.f32 %v734, %v1068
        %v1133 = vadd.f32 %v738, %v1069
        %v1134 = vadd.f32 %v740, %v1070
        %v1135 = vadd.f32 %v742, %v1071
        %v1136 = vadd.f32 %v744, %v1072
        %v1137 = vadd.f32 %v748, %v1073
        %v1138 = vadd.f32 %v750, %v1074
        %v1139 = vadd.f32 %v752, %v1075
        %v1140 = vadd.f32 %v754, %v1076
        %v1141 = vadd.f32 %v758, %v1077
        %v1142 = vadd.f32 %v760, %v1078
        %v1143 = vadd.f32 %v762, %v1079
        %v1144 = vadd.f32 %v764, %v1080
        %v1145 = vadd.f32 %v768, %v1081
        %v1146 = vadd.f32 %v770, %v1082
        %v1147 = vadd.f32 %v772, %v1083
        %v1148 = vadd.f32 %v774, %v1084
        %v1149 = vadd.f32 %v778, %v1085
        %v1150 = vadd.f32 %v780, %v1086
        %v1151 = vadd.f32 %v782, %v1087
        %v1152 = vadd.f32 %v784, %v1088
        %v1153 = vadd.f32 %v788, %v1089
        %v1154 = vadd.f32 %v790, %v1090
        %v1155 = vadd.f32 %v792, %v1091
        %v1156 = vadd.f32 %v794, %v1092
        %v1157 = vadd.f32 %v798, %v1093
        %v1158 = vadd.f32 %v800, %v1094
        %v1159 = vadd.f32 %v802, %v1095
        %v1160 = vadd.f32 %v804, %v1096
        %v1161 = vadd.f32 %v808, %v1097
        %v1162 = vadd.f32 %v810, %v1098
        %v1163 = vadd.f32 %v812, %v1099
        %v1164 = vadd.f32 %v814, %v1100
        %v1165 = vadd.f32 %v818, %v1101
        %v1166 = vadd.f32 %v820, %v1102
        %v1167 = vadd.f32 %v822, %v1103
        %v1168 = vadd.f32 %v824, %v1104
        %v1169 = vadd.f32 %v828, %v1105
        %v1170 = vadd.f32 %v830, %v1106
        %v1171 = vadd.f32 %v832, %v1107
        %v1172 = vadd.f32 %v834, %v1108
        %1173 = vrot.lane.b32.xlu0 %v678, 127
        %v1174 = vpop.permute.xlu0 %1173
        %1175 = vrot.lane.b32.xlu0 %v682, 127
        %v1176 = vpop.permute.xlu0 %1175
        %1177 = vrot.lane.b32.xlu0 %v688, 127
        %v1178 = vpop.permute.xlu0 %1177
        %1179 = vrot.lane.b32.xlu0 %v692, 127
        %v1180 = vpop.permute.xlu0 %1179
        %1181 = vrot.lane.b32.xlu0 %v698, 127
        %v1182 = vpop.permute.xlu0 %1181
        %1183 = vrot.lane.b32.xlu0 %v702, 127
        %v1184 = vpop.permute.xlu0 %1183
        %1185 = vrot.lane.b32.xlu0 %v708, 127
        %v1186 = vpop.permute.xlu0 %1185
        %1187 = vrot.lane.b32.xlu0 %v712, 127
        %v1188 = vpop.permute.xlu0 %1187
        %1189 = vrot.lane.b32.xlu0 %v718, 127
        %v1190 = vpop.permute.xlu0 %1189
        %1191 = vrot.lane.b32.xlu0 %v722, 127
        %v1192 = vpop.permute.xlu0 %1191
        %1193 = vrot.lane.b32.xlu0 %v728, 127
        %v1194 = vpop.permute.xlu0 %1193
        %1195 = vrot.lane.b32.xlu0 %v732, 127
        %v1196 = vpop.permute.xlu0 %1195
        %1197 = vrot.lane.b32.xlu0 %v738, 127
        %v1198 = vpop.permute.xlu0 %1197
        %1199 = vrot.lane.b32.xlu0 %v742, 127
        %v1200 = vpop.permute.xlu0 %1199
        %1201 = vrot.lane.b32.xlu0 %v748, 127
        %v1202 = vpop.permute.xlu0 %1201
        %1203 = vrot.lane.b32.xlu0 %v752, 127
        %v1204 = vpop.permute.xlu0 %1203
        %1205 = vrot.lane.b32.xlu0 %v758, 127
        %v1206 = vpop.permute.xlu0 %1205
        %1207 = vrot.lane.b32.xlu0 %v762, 127
        %v1208 = vpop.permute.xlu0 %1207
        %1209 = vrot.lane.b32.xlu0 %v768, 127
        %v1210 = vpop.permute.xlu0 %1209
        %1211 = vrot.lane.b32.xlu0 %v772, 127
        %v1212 = vpop.permute.xlu0 %1211
        %1213 = vrot.lane.b32.xlu0 %v778, 127
        %v1214 = vpop.permute.xlu0 %1213
        %1215 = vrot.lane.b32.xlu0 %v782, 127
        %v1216 = vpop.permute.xlu0 %1215
        %1217 = vrot.lane.b32.xlu0 %v788, 127
        %v1218 = vpop.permute.xlu0 %1217
        %1219 = vrot.lane.b32.xlu0 %v792, 127
        %v1220 = vpop.permute.xlu0 %1219
        %1221 = vrot.lane.b32.xlu0 %v798, 127
        %v1222 = vpop.permute.xlu0 %1221
        %1223 = vrot.lane.b32.xlu0 %v802, 127
        %v1224 = vpop.permute.xlu0 %1223
        %1225 = vrot.lane.b32.xlu0 %v808, 127
        %v1226 = vpop.permute.xlu0 %1225
        %1227 = vrot.lane.b32.xlu0 %v812, 127
        %v1228 = vpop.permute.xlu0 %1227
        %1229 = vrot.lane.b32.xlu0 %v818, 127
        %v1230 = vpop.permute.xlu0 %1229
        %1231 = vrot.lane.b32.xlu0 %v822, 127
        %v1232 = vpop.permute.xlu0 %1231
        %1233 = vrot.lane.b32.xlu0 %v828, 127
        %v1234 = vpop.permute.xlu0 %1233
        %1235 = vrot.lane.b32.xlu0 %v832, 127
        %v1236 = vpop.permute.xlu0 %1235
        %1237 = vrot.lane.b32.xlu0 %v680, 127
        %v1238 = vpop.permute.xlu0 %1237
        %1239 = vrot.lane.b32.xlu0 %v684, 127
        %v1240 = vpop.permute.xlu0 %1239
        %1241 = vrot.lane.b32.xlu0 %v690, 127
        %v1242 = vpop.permute.xlu0 %1241
        %1243 = vrot.lane.b32.xlu0 %v694, 127
        %v1244 = vpop.permute.xlu0 %1243
        %1245 = vrot.lane.b32.xlu0 %v700, 127
        %v1246 = vpop.permute.xlu0 %1245
        %1247 = vrot.lane.b32.xlu0 %v704, 127
        %v1248 = vpop.permute.xlu0 %1247
        %1249 = vrot.lane.b32.xlu0 %v710, 127
        %v1250 = vpop.permute.xlu0 %1249
        %1251 = vrot.lane.b32.xlu0 %v714, 127
        %v1252 = vpop.permute.xlu0 %1251
        %1253 = vrot.lane.b32.xlu0 %v720, 127
        %v1254 = vpop.permute.xlu0 %1253
        %1255 = vrot.lane.b32.xlu0 %v724, 127
        %v1256 = vpop.permute.xlu0 %1255
        %1257 = vrot.lane.b32.xlu0 %v730, 127
        %v1258 = vpop.permute.xlu0 %1257
        %1259 = vrot.lane.b32.xlu0 %v734, 127
        %v1260 = vpop.permute.xlu0 %1259
        %1261 = vrot.lane.b32.xlu0 %v740, 127
        %v1262 = vpop.permute.xlu0 %1261
        %1263 = vrot.lane.b32.xlu0 %v744, 127
        %v1264 = vpop.permute.xlu0 %1263
        %1265 = vrot.lane.b32.xlu0 %v750, 127
        %v1266 = vpop.permute.xlu0 %1265
        %1267 = vrot.lane.b32.xlu0 %v754, 127
        %v1268 = vpop.permute.xlu0 %1267
        %1269 = vrot.lane.b32.xlu0 %v760, 127
        %v1270 = vpop.permute.xlu0 %1269
        %1271 = vrot.lane.b32.xlu0 %v764, 127
        %v1272 = vpop.permute.xlu0 %1271
        %1273 = vrot.lane.b32.xlu0 %v770, 127
        %v1274 = vpop.permute.xlu0 %1273
        %1275 = vrot.lane.b32.xlu0 %v774, 127
        %v1276 = vpop.permute.xlu0 %1275
        %1277 = vrot.lane.b32.xlu0 %v780, 127
        %v1278 = vpop.permute.xlu0 %1277
        %1279 = vrot.lane.b32.xlu0 %v784, 127
        %v1280 = vpop.permute.xlu0 %1279
        %1281 = vrot.lane.b32.xlu0 %v790, 127
        %v1282 = vpop.permute.xlu0 %1281
        %1283 = vrot.lane.b32.xlu0 %v794, 127
        %v1284 = vpop.permute.xlu0 %1283
        %1285 = vrot.lane.b32.xlu0 %v800, 127
        %v1286 = vpop.permute.xlu0 %1285
        %1287 = vrot.lane.b32.xlu0 %v804, 127
        %v1288 = vpop.permute.xlu0 %1287
        %1289 = vrot.lane.b32.xlu0 %v810, 127
        %v1290 = vpop.permute.xlu0 %1289
        %1291 = vrot.lane.b32.xlu0 %v814, 127
        %v1292 = vpop.permute.xlu0 %1291
        %1293 = vrot.lane.b32.xlu0 %v820, 127
        %v1294 = vpop.permute.xlu0 %1293
        %1295 = vrot.lane.b32.xlu0 %v824, 127
        %v1296 = vpop.permute.xlu0 %1295
        %1297 = vrot.lane.b32.xlu0 %v830, 127
        %v1298 = vpop.permute.xlu0 %1297
        %1299 = vrot.lane.b32.xlu0 %v834, 127
        %v1300 = vpop.permute.xlu0 %1299
        %vm1301 = vcmp.lt.s32.totalorder %v968, 127
        %v1302 = vsel %vm1301, %v1174, %v1238
        %v1303 = vsel %vm1301, %v1176, %v1240
        %v1304 = vsel %vm1301, %v1178, %v1242
        %v1305 = vsel %vm1301, %v1180, %v1244
        %v1306 = vsel %vm1301, %v1182, %v1246
        %v1307 = vsel %vm1301, %v1184, %v1248
        %v1308 = vsel %vm1301, %v1186, %v1250
        %v1309 = vsel %vm1301, %v1188, %v1252
        %v1310 = vsel %vm1301, %v1190, %v1254
        %v1311 = vsel %vm1301, %v1192, %v1256
        %v1312 = vsel %vm1301, %v1194, %v1258
        %v1313 = vsel %vm1301, %v1196, %v1260
        %v1314 = vsel %vm1301, %v1198, %v1262
        %v1315 = vsel %vm1301, %v1200, %v1264
        %v1316 = vsel %vm1301, %v1202, %v1266
        %v1317 = vsel %vm1301, %v1204, %v1268
        %v1318 = vsel %vm1301, %v1206, %v1270
        %v1319 = vsel %vm1301, %v1208, %v1272
        %v1320 = vsel %vm1301, %v1210, %v1274
        %v1321 = vsel %vm1301, %v1212, %v1276
        %v1322 = vsel %vm1301, %v1214, %v1278
        %v1323 = vsel %vm1301, %v1216, %v1280
        %v1324 = vsel %vm1301, %v1218, %v1282
        %v1325 = vsel %vm1301, %v1220, %v1284
        %v1326 = vsel %vm1301, %v1222, %v1286
        %v1327 = vsel %vm1301, %v1224, %v1288
        %v1328 = vsel %vm1301, %v1226, %v1290
        %v1329 = vsel %vm1301, %v1228, %v1292
        %v1330 = vsel %vm1301, %v1230, %v1294
        %v1331 = vsel %vm1301, %v1232, %v1296
        %v1332 = vsel %vm1301, %v1234, %v1298
        %v1333 = vsel %vm1301, %v1236, %v1300
        %v1334 = vsel %vm1301, %v1238, %v1174
        %v1335 = vsel %vm1301, %v1240, %v1176
        %v1336 = vsel %vm1301, %v1242, %v1178
        %v1337 = vsel %vm1301, %v1244, %v1180
        %v1338 = vsel %vm1301, %v1246, %v1182
        %v1339 = vsel %vm1301, %v1248, %v1184
        %v1340 = vsel %vm1301, %v1250, %v1186
        %v1341 = vsel %vm1301, %v1252, %v1188
        %v1342 = vsel %vm1301, %v1254, %v1190
        %v1343 = vsel %vm1301, %v1256, %v1192
        %v1344 = vsel %vm1301, %v1258, %v1194
        %v1345 = vsel %vm1301, %v1260, %v1196
        %v1346 = vsel %vm1301, %v1262, %v1198
        %v1347 = vsel %vm1301, %v1264, %v1200
        %v1348 = vsel %vm1301, %v1266, %v1202
        %v1349 = vsel %vm1301, %v1268, %v1204
        %v1350 = vsel %vm1301, %v1270, %v1206
        %v1351 = vsel %vm1301, %v1272, %v1208
        %v1352 = vsel %vm1301, %v1274, %v1210
        %v1353 = vsel %vm1301, %v1276, %v1212
        %v1354 = vsel %vm1301, %v1278, %v1214
        %v1355 = vsel %vm1301, %v1280, %v1216
        %v1356 = vsel %vm1301, %v1282, %v1218
        %v1357 = vsel %vm1301, %v1284, %v1220
        %v1358 = vsel %vm1301, %v1286, %v1222
        %v1359 = vsel %vm1301, %v1288, %v1224
        %v1360 = vsel %vm1301, %v1290, %v1226
        %v1361 = vsel %vm1301, %v1292, %v1228
        %v1362 = vsel %vm1301, %v1294, %v1230
        %v1363 = vsel %vm1301, %v1296, %v1232
        %v1364 = vsel %vm1301, %v1298, %v1234
        %v1365 = vsel %vm1301, %v1300, %v1236
        %v1367 = vlaneseq
        %v1368 = vshrl.u32 %v1367, 7
        %v1369 = vsub.s32 0, %v1368
        %v1370 = vrot.slane %v838, %v1369
        %v1371 = vlaneseq
        %v1372 = vshrl.u32 %v1371, 7
        %v1373 = vsub.s32 1, %v1372
        %v1374 = vrot.slane %v838, %v1373
        %v1377 = vmul.f32 %v1302, %v1370
        %v1378 = vmul.f32 %v1334, %v1374
        %v1379 = vmul.f32 %v1303, %v1370
        %v1380 = vmul.f32 %v1335, %v1374
        %v1381 = vmul.f32 %v1304, %v1370
        %v1382 = vmul.f32 %v1336, %v1374
        %v1383 = vmul.f32 %v1305, %v1370
        %v1384 = vmul.f32 %v1337, %v1374
        %v1385 = vmul.f32 %v1306, %v1370
        %v1386 = vmul.f32 %v1338, %v1374
        %v1387 = vmul.f32 %v1307, %v1370
        %v1388 = vmul.f32 %v1339, %v1374
        %v1389 = vmul.f32 %v1308, %v1370
        %v1390 = vmul.f32 %v1340, %v1374
        %v1391 = vmul.f32 %v1309, %v1370
        %v1392 = vmul.f32 %v1341, %v1374
        %v1393 = vmul.f32 %v1310, %v1370
        %v1394 = vmul.f32 %v1342, %v1374
        %v1395 = vmul.f32 %v1311, %v1370
        %v1396 = vmul.f32 %v1343, %v1374
        %v1397 = vmul.f32 %v1312, %v1370
        %v1398 = vmul.f32 %v1344, %v1374
        %v1399 = vmul.f32 %v1313, %v1370
        %v1400 = vmul.f32 %v1345, %v1374
        %v1401 = vmul.f32 %v1314, %v1370
        %v1402 = vmul.f32 %v1346, %v1374
        %v1403 = vmul.f32 %v1315, %v1370
        %v1404 = vmul.f32 %v1347, %v1374
        %v1405 = vmul.f32 %v1316, %v1370
        %v1406 = vmul.f32 %v1348, %v1374
        %v1407 = vmul.f32 %v1317, %v1370
        %v1408 = vmul.f32 %v1349, %v1374
        %v1409 = vmul.f32 %v1318, %v1370
        %v1410 = vmul.f32 %v1350, %v1374
        %v1411 = vmul.f32 %v1319, %v1370
        %v1412 = vmul.f32 %v1351, %v1374
        %v1413 = vmul.f32 %v1320, %v1370
        %v1414 = vmul.f32 %v1352, %v1374
        %v1415 = vmul.f32 %v1321, %v1370
        %v1416 = vmul.f32 %v1353, %v1374
        %v1417 = vmul.f32 %v1322, %v1370
        %v1418 = vmul.f32 %v1354, %v1374
        %v1419 = vmul.f32 %v1323, %v1370
        %v1420 = vmul.f32 %v1355, %v1374
        %v1421 = vmul.f32 %v1324, %v1370
        %v1422 = vmul.f32 %v1356, %v1374
        %v1423 = vmul.f32 %v1325, %v1370
        %v1424 = vmul.f32 %v1357, %v1374
        %v1425 = vmul.f32 %v1326, %v1370
        %v1426 = vmul.f32 %v1358, %v1374
        %v1427 = vmul.f32 %v1327, %v1370
        %v1428 = vmul.f32 %v1359, %v1374
        %v1429 = vmul.f32 %v1328, %v1370
        %v1430 = vmul.f32 %v1360, %v1374
        %v1431 = vmul.f32 %v1329, %v1370
        %v1432 = vmul.f32 %v1361, %v1374
        %v1433 = vmul.f32 %v1330, %v1370
        %v1434 = vmul.f32 %v1362, %v1374
        %v1435 = vmul.f32 %v1331, %v1370
        %v1436 = vmul.f32 %v1363, %v1374
        %v1437 = vmul.f32 %v1332, %v1370
        %v1438 = vmul.f32 %v1364, %v1374
        %v1439 = vmul.f32 %v1333, %v1370
        %v1440 = vmul.f32 %v1365, %v1374
        %v1441 = vadd.f32 %v1109, %v1377
        %v1442 = vadd.f32 %v1110, %v1378
        %v1443 = vadd.f32 %v1111, %v1379
        %v1444 = vadd.f32 %v1112, %v1380
        %v1445 = vadd.f32 %v1113, %v1381
        %v1446 = vadd.f32 %v1114, %v1382
        %v1447 = vadd.f32 %v1115, %v1383
        %v1448 = vadd.f32 %v1116, %v1384
        %v1449 = vadd.f32 %v1117, %v1385
        %v1450 = vadd.f32 %v1118, %v1386
        %v1451 = vadd.f32 %v1119, %v1387
        %v1452 = vadd.f32 %v1120, %v1388
        %v1453 = vadd.f32 %v1121, %v1389
        %v1454 = vadd.f32 %v1122, %v1390
        %v1455 = vadd.f32 %v1123, %v1391
        %v1456 = vadd.f32 %v1124, %v1392
        %v1457 = vadd.f32 %v1125, %v1393
        %v1458 = vadd.f32 %v1126, %v1394
        %v1459 = vadd.f32 %v1127, %v1395
        %v1460 = vadd.f32 %v1128, %v1396
        %v1461 = vadd.f32 %v1129, %v1397
        %v1462 = vadd.f32 %v1130, %v1398
        %v1463 = vadd.f32 %v1131, %v1399
        %v1464 = vadd.f32 %v1132, %v1400
        %v1465 = vadd.f32 %v1133, %v1401
        %v1466 = vadd.f32 %v1134, %v1402
        %v1467 = vadd.f32 %v1135, %v1403
        %v1468 = vadd.f32 %v1136, %v1404
        %v1469 = vadd.f32 %v1137, %v1405
        %v1470 = vadd.f32 %v1138, %v1406
        %v1471 = vadd.f32 %v1139, %v1407
        %v1472 = vadd.f32 %v1140, %v1408
        %v1473 = vadd.f32 %v1141, %v1409
        %v1474 = vadd.f32 %v1142, %v1410
        %v1475 = vadd.f32 %v1143, %v1411
        %v1476 = vadd.f32 %v1144, %v1412
        %v1477 = vadd.f32 %v1145, %v1413
        %v1478 = vadd.f32 %v1146, %v1414
        %v1479 = vadd.f32 %v1147, %v1415
        %v1480 = vadd.f32 %v1148, %v1416
        %v1481 = vadd.f32 %v1149, %v1417
        %v1482 = vadd.f32 %v1150, %v1418
        %v1483 = vadd.f32 %v1151, %v1419
        %v1484 = vadd.f32 %v1152, %v1420
        %v1485 = vadd.f32 %v1153, %v1421
        %v1486 = vadd.f32 %v1154, %v1422
        %v1487 = vadd.f32 %v1155, %v1423
        %v1488 = vadd.f32 %v1156, %v1424
        %v1489 = vadd.f32 %v1157, %v1425
        %v1490 = vadd.f32 %v1158, %v1426
        %v1491 = vadd.f32 %v1159, %v1427
        %v1492 = vadd.f32 %v1160, %v1428
        %v1493 = vadd.f32 %v1161, %v1429
        %v1494 = vadd.f32 %v1162, %v1430
        %v1495 = vadd.f32 %v1163, %v1431
        %v1496 = vadd.f32 %v1164, %v1432
        %v1497 = vadd.f32 %v1165, %v1433
        %v1498 = vadd.f32 %v1166, %v1434
        %v1499 = vadd.f32 %v1167, %v1435
        %v1500 = vadd.f32 %v1168, %v1436
        %v1501 = vadd.f32 %v1169, %v1437
        %v1502 = vadd.f32 %v1170, %v1438
        %v1503 = vadd.f32 %v1171, %v1439
        %v1504 = vadd.f32 %v1172, %v1440
        %s1505 = scalar_lea.vmem [#allocation10], 2
        %v1506 = vld [vmem:[%s1505] ss:$8 sm:$0x3]
        %s1507 = scalar_lea.vmem [#allocation10], 3
        %v1508 = vld [vmem:[%s1507] ss:$8 sm:$0x3]
        %1509 = vrot.lane.b32.xlu0 %v1441, 16
        %v1510 = vpop.permute.xlu0 %1509
        %1511 = vrot.lane.b32.xlu0 %v1443, 16
        %v1512 = vpop.permute.xlu0 %1511
        %1513 = vrot.lane.b32.xlu0 %v1445, 16
        %v1514 = vpop.permute.xlu0 %1513
        %1515 = vrot.lane.b32.xlu0 %v1447, 16
        %v1516 = vpop.permute.xlu0 %1515
        %1517 = vrot.lane.b32.xlu0 %v1449, 16
        %v1518 = vpop.permute.xlu0 %1517
        %1519 = vrot.lane.b32.xlu0 %v1451, 16
        %v1520 = vpop.permute.xlu0 %1519
        %1521 = vrot.lane.b32.xlu0 %v1453, 16
        %v1522 = vpop.permute.xlu0 %1521
        %1523 = vrot.lane.b32.xlu0 %v1455, 16
        %v1524 = vpop.permute.xlu0 %1523
        %1525 = vrot.lane.b32.xlu0 %v1457, 16
        %v1526 = vpop.permute.xlu0 %1525
        %1527 = vrot.lane.b32.xlu0 %v1459, 16
        %v1528 = vpop.permute.xlu0 %1527
        %1529 = vrot.lane.b32.xlu0 %v1461, 16
        %v1530 = vpop.permute.xlu0 %1529
        %1531 = vrot.lane.b32.xlu0 %v1463, 16
        %v1532 = vpop.permute.xlu0 %1531
        %1533 = vrot.lane.b32.xlu0 %v1465, 16
        %v1534 = vpop.permute.xlu0 %1533
        %1535 = vrot.lane.b32.xlu0 %v1467, 16
        %v1536 = vpop.permute.xlu0 %1535
        %1537 = vrot.lane.b32.xlu0 %v1469, 16
        %v1538 = vpop.permute.xlu0 %1537
        %1539 = vrot.lane.b32.xlu0 %v1471, 16
        %v1540 = vpop.permute.xlu0 %1539
        %1541 = vrot.lane.b32.xlu0 %v1473, 16
        %v1542 = vpop.permute.xlu0 %1541
        %1543 = vrot.lane.b32.xlu0 %v1475, 16
        %v1544 = vpop.permute.xlu0 %1543
        %1545 = vrot.lane.b32.xlu0 %v1477, 16
        %v1546 = vpop.permute.xlu0 %1545
        %1547 = vrot.lane.b32.xlu0 %v1479, 16
        %v1548 = vpop.permute.xlu0 %1547
        %1549 = vrot.lane.b32.xlu0 %v1481, 16
        %v1550 = vpop.permute.xlu0 %1549
        %1551 = vrot.lane.b32.xlu0 %v1483, 16
        %v1552 = vpop.permute.xlu0 %1551
        %1553 = vrot.lane.b32.xlu0 %v1485, 16
        %v1554 = vpop.permute.xlu0 %1553
        %1555 = vrot.lane.b32.xlu0 %v1487, 16
        %v1556 = vpop.permute.xlu0 %1555
        %1557 = vrot.lane.b32.xlu0 %v1489, 16
        %v1558 = vpop.permute.xlu0 %1557
        %1559 = vrot.lane.b32.xlu0 %v1491, 16
        %v1560 = vpop.permute.xlu0 %1559
        %1561 = vrot.lane.b32.xlu0 %v1493, 16
        %v1562 = vpop.permute.xlu0 %1561
        %1563 = vrot.lane.b32.xlu0 %v1495, 16
        %v1564 = vpop.permute.xlu0 %1563
        %1565 = vrot.lane.b32.xlu0 %v1497, 16
        %v1566 = vpop.permute.xlu0 %1565
        %1567 = vrot.lane.b32.xlu0 %v1499, 16
        %v1568 = vpop.permute.xlu0 %1567
        %1569 = vrot.lane.b32.xlu0 %v1501, 16
        %v1570 = vpop.permute.xlu0 %1569
        %1571 = vrot.lane.b32.xlu0 %v1503, 16
        %v1572 = vpop.permute.xlu0 %1571
        %1573 = vrot.lane.b32.xlu0 %v1442, 16
        %v1574 = vpop.permute.xlu0 %1573
        %1575 = vrot.lane.b32.xlu0 %v1444, 16
        %v1576 = vpop.permute.xlu0 %1575
        %1577 = vrot.lane.b32.xlu0 %v1446, 16
        %v1578 = vpop.permute.xlu0 %1577
        %1579 = vrot.lane.b32.xlu0 %v1448, 16
        %v1580 = vpop.permute.xlu0 %1579
        %1581 = vrot.lane.b32.xlu0 %v1450, 16
        %v1582 = vpop.permute.xlu0 %1581
        %1583 = vrot.lane.b32.xlu0 %v1452, 16
        %v1584 = vpop.permute.xlu0 %1583
        %1585 = vrot.lane.b32.xlu0 %v1454, 16
        %v1586 = vpop.permute.xlu0 %1585
        %1587 = vrot.lane.b32.xlu0 %v1456, 16
        %v1588 = vpop.permute.xlu0 %1587
        %1589 = vrot.lane.b32.xlu0 %v1458, 16
        %v1590 = vpop.permute.xlu0 %1589
        %1591 = vrot.lane.b32.xlu0 %v1460, 16
        %v1592 = vpop.permute.xlu0 %1591
        %1593 = vrot.lane.b32.xlu0 %v1462, 16
        %v1594 = vpop.permute.xlu0 %1593
        %1595 = vrot.lane.b32.xlu0 %v1464, 16
        %v1596 = vpop.permute.xlu0 %1595
        %1597 = vrot.lane.b32.xlu0 %v1466, 16
        %v1598 = vpop.permute.xlu0 %1597
        %1599 = vrot.lane.b32.xlu0 %v1468, 16
        %v1600 = vpop.permute.xlu0 %1599
        %1601 = vrot.lane.b32.xlu0 %v1470, 16
        %v1602 = vpop.permute.xlu0 %1601
        %1603 = vrot.lane.b32.xlu0 %v1472, 16
        %v1604 = vpop.permute.xlu0 %1603
        %1605 = vrot.lane.b32.xlu0 %v1474, 16
        %v1606 = vpop.permute.xlu0 %1605
        %1607 = vrot.lane.b32.xlu0 %v1476, 16
        %v1608 = vpop.permute.xlu0 %1607
        %1609 = vrot.lane.b32.xlu0 %v1478, 16
        %v1610 = vpop.permute.xlu0 %1609
        %1611 = vrot.lane.b32.xlu0 %v1480, 16
        %v1612 = vpop.permute.xlu0 %1611
        %1613 = vrot.lane.b32.xlu0 %v1482, 16
        %v1614 = vpop.permute.xlu0 %1613
        %1615 = vrot.lane.b32.xlu0 %v1484, 16
        %v1616 = vpop.permute.xlu0 %1615
        %1617 = vrot.lane.b32.xlu0 %v1486, 16
        %v1618 = vpop.permute.xlu0 %1617
        %1619 = vrot.lane.b32.xlu0 %v1488, 16
        %v1620 = vpop.permute.xlu0 %1619
        %1621 = vrot.lane.b32.xlu0 %v1490, 16
        %v1622 = vpop.permute.xlu0 %1621
        %1623 = vrot.lane.b32.xlu0 %v1492, 16
        %v1624 = vpop.permute.xlu0 %1623
        %1625 = vrot.lane.b32.xlu0 %v1494, 16
        %v1626 = vpop.permute.xlu0 %1625
        %1627 = vrot.lane.b32.xlu0 %v1496, 16
        %v1628 = vpop.permute.xlu0 %1627
        %1629 = vrot.lane.b32.xlu0 %v1498, 16
        %v1630 = vpop.permute.xlu0 %1629
        %1631 = vrot.lane.b32.xlu0 %v1500, 16
        %v1632 = vpop.permute.xlu0 %1631
        %1633 = vrot.lane.b32.xlu0 %v1502, 16
        %v1634 = vpop.permute.xlu0 %1633
        %1635 = vrot.lane.b32.xlu0 %v1504, 16
        %v1636 = vpop.permute.xlu0 %1635
        %vm1637 = vcmp.lt.s32.totalorder %v968, 16
        %v1638 = vsel %vm1637, %v1510, %v1574
        %v1639 = vsel %vm1637, %v1512, %v1576
        %v1640 = vsel %vm1637, %v1514, %v1578
        %v1641 = vsel %vm1637, %v1516, %v1580
        %v1642 = vsel %vm1637, %v1518, %v1582
        %v1643 = vsel %vm1637, %v1520, %v1584
        %v1644 = vsel %vm1637, %v1522, %v1586
        %v1645 = vsel %vm1637, %v1524, %v1588
        %v1646 = vsel %vm1637, %v1526, %v1590
        %v1647 = vsel %vm1637, %v1528, %v1592
        %v1648 = vsel %vm1637, %v1530, %v1594
        %v1649 = vsel %vm1637, %v1532, %v1596
        %v1650 = vsel %vm1637, %v1534, %v1598
        %v1651 = vsel %vm1637, %v1536, %v1600
        %v1652 = vsel %vm1637, %v1538, %v1602
        %v1653 = vsel %vm1637, %v1540, %v1604
        %v1654 = vsel %vm1637, %v1542, %v1606
        %v1655 = vsel %vm1637, %v1544, %v1608
        %v1656 = vsel %vm1637, %v1546, %v1610
        %v1657 = vsel %vm1637, %v1548, %v1612
        %v1658 = vsel %vm1637, %v1550, %v1614
        %v1659 = vsel %vm1637, %v1552, %v1616
        %v1660 = vsel %vm1637, %v1554, %v1618
        %v1661 = vsel %vm1637, %v1556, %v1620
        %v1662 = vsel %vm1637, %v1558, %v1622
        %v1663 = vsel %vm1637, %v1560, %v1624
        %v1664 = vsel %vm1637, %v1562, %v1626
        %v1665 = vsel %vm1637, %v1564, %v1628
        %v1666 = vsel %vm1637, %v1566, %v1630
        %v1667 = vsel %vm1637, %v1568, %v1632
        %v1668 = vsel %vm1637, %v1570, %v1634
        %v1669 = vsel %vm1637, %v1572, %v1636
        %v1670 = vsel %vm1637, %v1574, %v1510
        %v1671 = vsel %vm1637, %v1576, %v1512
        %v1672 = vsel %vm1637, %v1578, %v1514
        %v1673 = vsel %vm1637, %v1580, %v1516
        %v1674 = vsel %vm1637, %v1582, %v1518
        %v1675 = vsel %vm1637, %v1584, %v1520
        %v1676 = vsel %vm1637, %v1586, %v1522
        %v1677 = vsel %vm1637, %v1588, %v1524
        %v1678 = vsel %vm1637, %v1590, %v1526
        %v1679 = vsel %vm1637, %v1592, %v1528
        %v1680 = vsel %vm1637, %v1594, %v1530
        %v1681 = vsel %vm1637, %v1596, %v1532
        %v1682 = vsel %vm1637, %v1598, %v1534
        %v1683 = vsel %vm1637, %v1600, %v1536
        %v1684 = vsel %vm1637, %v1602, %v1538
        %v1685 = vsel %vm1637, %v1604, %v1540
        %v1686 = vsel %vm1637, %v1606, %v1542
        %v1687 = vsel %vm1637, %v1608, %v1544
        %v1688 = vsel %vm1637, %v1610, %v1546
        %v1689 = vsel %vm1637, %v1612, %v1548
        %v1690 = vsel %vm1637, %v1614, %v1550
        %v1691 = vsel %vm1637, %v1616, %v1552
        %v1692 = vsel %vm1637, %v1618, %v1554
        %v1693 = vsel %vm1637, %v1620, %v1556
        %v1694 = vsel %vm1637, %v1622, %v1558
        %v1695 = vsel %vm1637, %v1624, %v1560
        %v1696 = vsel %vm1637, %v1626, %v1562
        %v1697 = vsel %vm1637, %v1628, %v1564
        %v1698 = vsel %vm1637, %v1630, %v1566
        %v1699 = vsel %vm1637, %v1632, %v1568
        %v1700 = vsel %vm1637, %v1634, %v1570
        %v1701 = vsel %vm1637, %v1636, %v1572
        %v1703 = vlaneseq
        %v1704 = vshrl.u32 %v1703, 7
        %v1705 = vsub.s32 0, %v1704
        %v1706 = vrot.slane %v1506, %v1705
        %v1707 = vlaneseq
        %v1708 = vshrl.u32 %v1707, 7
        %v1709 = vsub.s32 1, %v1708
        %v1710 = vrot.slane %v1506, %v1709
        %v1713 = vmul.f32 %v1670, %v1706
        %v1714 = vmul.f32 %v1638, %v1710
        %v1715 = vmul.f32 %v1671, %v1706
        %v1716 = vmul.f32 %v1639, %v1710
        %v1717 = vmul.f32 %v1672, %v1706
        %v1718 = vmul.f32 %v1640, %v1710
        %v1719 = vmul.f32 %v1673, %v1706
        %v1720 = vmul.f32 %v1641, %v1710
        %v1721 = vmul.f32 %v1674, %v1706
        %v1722 = vmul.f32 %v1642, %v1710
        %v1723 = vmul.f32 %v1675, %v1706
        %v1724 = vmul.f32 %v1643, %v1710
        %v1725 = vmul.f32 %v1676, %v1706
        %v1726 = vmul.f32 %v1644, %v1710
        %v1727 = vmul.f32 %v1677, %v1706
        %v1728 = vmul.f32 %v1645, %v1710
        %v1729 = vmul.f32 %v1678, %v1706
        %v1730 = vmul.f32 %v1646, %v1710
        %v1731 = vmul.f32 %v1679, %v1706
        %v1732 = vmul.f32 %v1647, %v1710
        %v1733 = vmul.f32 %v1680, %v1706
        %v1734 = vmul.f32 %v1648, %v1710
        %v1735 = vmul.f32 %v1681, %v1706
        %v1736 = vmul.f32 %v1649, %v1710
        %v1737 = vmul.f32 %v1682, %v1706
        %v1738 = vmul.f32 %v1650, %v1710
        %v1739 = vmul.f32 %v1683, %v1706
        %v1740 = vmul.f32 %v1651, %v1710
        %v1741 = vmul.f32 %v1684, %v1706
        %v1742 = vmul.f32 %v1652, %v1710
        %v1743 = vmul.f32 %v1685, %v1706
        %v1744 = vmul.f32 %v1653, %v1710
        %v1745 = vmul.f32 %v1686, %v1706
        %v1746 = vmul.f32 %v1654, %v1710
        %v1747 = vmul.f32 %v1687, %v1706
        %v1748 = vmul.f32 %v1655, %v1710
        %v1749 = vmul.f32 %v1688, %v1706
        %v1750 = vmul.f32 %v1656, %v1710
        %v1751 = vmul.f32 %v1689, %v1706
        %v1752 = vmul.f32 %v1657, %v1710
        %v1753 = vmul.f32 %v1690, %v1706
        %v1754 = vmul.f32 %v1658, %v1710
        %v1755 = vmul.f32 %v1691, %v1706
        %v1756 = vmul.f32 %v1659, %v1710
        %v1757 = vmul.f32 %v1692, %v1706
        %v1758 = vmul.f32 %v1660, %v1710
        %v1759 = vmul.f32 %v1693, %v1706
        %v1760 = vmul.f32 %v1661, %v1710
        %v1761 = vmul.f32 %v1694, %v1706
        %v1762 = vmul.f32 %v1662, %v1710
        %v1763 = vmul.f32 %v1695, %v1706
        %v1764 = vmul.f32 %v1663, %v1710
        %v1765 = vmul.f32 %v1696, %v1706
        %v1766 = vmul.f32 %v1664, %v1710
        %v1767 = vmul.f32 %v1697, %v1706
        %v1768 = vmul.f32 %v1665, %v1710
        %v1769 = vmul.f32 %v1698, %v1706
        %v1770 = vmul.f32 %v1666, %v1710
        %v1771 = vmul.f32 %v1699, %v1706
        %v1772 = vmul.f32 %v1667, %v1710
        %v1773 = vmul.f32 %v1700, %v1706
        %v1774 = vmul.f32 %v1668, %v1710
        %v1775 = vmul.f32 %v1701, %v1706
        %v1776 = vmul.f32 %v1669, %v1710
        %v1777 = vadd.f32 %v1441, %v1713
        %v1778 = vadd.f32 %v1442, %v1714
        %v1779 = vadd.f32 %v1443, %v1715
        %v1780 = vadd.f32 %v1444, %v1716
        %v1781 = vadd.f32 %v1445, %v1717
        %v1782 = vadd.f32 %v1446, %v1718
        %v1783 = vadd.f32 %v1447, %v1719
        %v1784 = vadd.f32 %v1448, %v1720
        %v1785 = vadd.f32 %v1449, %v1721
        %v1786 = vadd.f32 %v1450, %v1722
        %v1787 = vadd.f32 %v1451, %v1723
        %v1788 = vadd.f32 %v1452, %v1724
        %v1789 = vadd.f32 %v1453, %v1725
        %v1790 = vadd.f32 %v1454, %v1726
        %v1791 = vadd.f32 %v1455, %v1727
        %v1792 = vadd.f32 %v1456, %v1728
        %v1793 = vadd.f32 %v1457, %v1729
        %v1794 = vadd.f32 %v1458, %v1730
        %v1795 = vadd.f32 %v1459, %v1731
        %v1796 = vadd.f32 %v1460, %v1732
        %v1797 = vadd.f32 %v1461, %v1733
        %v1798 = vadd.f32 %v1462, %v1734
        %v1799 = vadd.f32 %v1463, %v1735
        %v1800 = vadd.f32 %v1464, %v1736
        %v1801 = vadd.f32 %v1465, %v1737
        %v1802 = vadd.f32 %v1466, %v1738
        %v1803 = vadd.f32 %v1467, %v1739
        %v1804 = vadd.f32 %v1468, %v1740
        %v1805 = vadd.f32 %v1469, %v1741
        %v1806 = vadd.f32 %v1470, %v1742
        %v1807 = vadd.f32 %v1471, %v1743
        %v1808 = vadd.f32 %v1472, %v1744
        %v1809 = vadd.f32 %v1473, %v1745
        %v1810 = vadd.f32 %v1474, %v1746
        %v1811 = vadd.f32 %v1475, %v1747
        %v1812 = vadd.f32 %v1476, %v1748
        %v1813 = vadd.f32 %v1477, %v1749
        %v1814 = vadd.f32 %v1478, %v1750
        %v1815 = vadd.f32 %v1479, %v1751
        %v1816 = vadd.f32 %v1480, %v1752
        %v1817 = vadd.f32 %v1481, %v1753
        %v1818 = vadd.f32 %v1482, %v1754
        %v1819 = vadd.f32 %v1483, %v1755
        %v1820 = vadd.f32 %v1484, %v1756
        %v1821 = vadd.f32 %v1485, %v1757
        %v1822 = vadd.f32 %v1486, %v1758
        %v1823 = vadd.f32 %v1487, %v1759
        %v1824 = vadd.f32 %v1488, %v1760
        %v1825 = vadd.f32 %v1489, %v1761
        %v1826 = vadd.f32 %v1490, %v1762
        %v1827 = vadd.f32 %v1491, %v1763
        %v1828 = vadd.f32 %v1492, %v1764
        %v1829 = vadd.f32 %v1493, %v1765
        %v1830 = vadd.f32 %v1494, %v1766
        %v1831 = vadd.f32 %v1495, %v1767
        %v1832 = vadd.f32 %v1496, %v1768
        %v1833 = vadd.f32 %v1497, %v1769
        %v1834 = vadd.f32 %v1498, %v1770
        %v1835 = vadd.f32 %v1499, %v1771
        %v1836 = vadd.f32 %v1500, %v1772
        %v1837 = vadd.f32 %v1501, %v1773
        %v1838 = vadd.f32 %v1502, %v1774
        %v1839 = vadd.f32 %v1503, %v1775
        %v1840 = vadd.f32 %v1504, %v1776
        %1841 = vrot.lane.b32.xlu0 %v1441, 112
        %v1842 = vpop.permute.xlu0 %1841
        %1843 = vrot.lane.b32.xlu0 %v1443, 112
        %v1844 = vpop.permute.xlu0 %1843
        %1845 = vrot.lane.b32.xlu0 %v1445, 112
        %v1846 = vpop.permute.xlu0 %1845
        %1847 = vrot.lane.b32.xlu0 %v1447, 112
        %v1848 = vpop.permute.xlu0 %1847
        %1849 = vrot.lane.b32.xlu0 %v1449, 112
        %v1850 = vpop.permute.xlu0 %1849
        %1851 = vrot.lane.b32.xlu0 %v1451, 112
        %v1852 = vpop.permute.xlu0 %1851
        %1853 = vrot.lane.b32.xlu0 %v1453, 112
        %v1854 = vpop.permute.xlu0 %1853
        %1855 = vrot.lane.b32.xlu0 %v1455, 112
        %v1856 = vpop.permute.xlu0 %1855
        %1857 = vrot.lane.b32.xlu0 %v1457, 112
        %v1858 = vpop.permute.xlu0 %1857
        %1859 = vrot.lane.b32.xlu0 %v1459, 112
        %v1860 = vpop.permute.xlu0 %1859
        %1861 = vrot.lane.b32.xlu0 %v1461, 112
        %v1862 = vpop.permute.xlu0 %1861
        %1863 = vrot.lane.b32.xlu0 %v1463, 112
        %v1864 = vpop.permute.xlu0 %1863
        %1865 = vrot.lane.b32.xlu0 %v1465, 112
        %v1866 = vpop.permute.xlu0 %1865
        %1867 = vrot.lane.b32.xlu0 %v1467, 112
        %v1868 = vpop.permute.xlu0 %1867
        %1869 = vrot.lane.b32.xlu0 %v1469, 112
        %v1870 = vpop.permute.xlu0 %1869
        %1871 = vrot.lane.b32.xlu0 %v1471, 112
        %v1872 = vpop.permute.xlu0 %1871
        %1873 = vrot.lane.b32.xlu0 %v1473, 112
        %v1874 = vpop.permute.xlu0 %1873
        %1875 = vrot.lane.b32.xlu0 %v1475, 112
        %v1876 = vpop.permute.xlu0 %1875
        %1877 = vrot.lane.b32.xlu0 %v1477, 112
        %v1878 = vpop.permute.xlu0 %1877
        %1879 = vrot.lane.b32.xlu0 %v1479, 112
        %v1880 = vpop.permute.xlu0 %1879
        %1881 = vrot.lane.b32.xlu0 %v1481, 112
        %v1882 = vpop.permute.xlu0 %1881
        %1883 = vrot.lane.b32.xlu0 %v1483, 112
        %v1884 = vpop.permute.xlu0 %1883
        %1885 = vrot.lane.b32.xlu0 %v1485, 112
        %v1886 = vpop.permute.xlu0 %1885
        %1887 = vrot.lane.b32.xlu0 %v1487, 112
        %v1888 = vpop.permute.xlu0 %1887
        %1889 = vrot.lane.b32.xlu0 %v1489, 112
        %v1890 = vpop.permute.xlu0 %1889
        %1891 = vrot.lane.b32.xlu0 %v1491, 112
        %v1892 = vpop.permute.xlu0 %1891
        %1893 = vrot.lane.b32.xlu0 %v1493, 112
        %v1894 = vpop.permute.xlu0 %1893
        %1895 = vrot.lane.b32.xlu0 %v1495, 112
        %v1896 = vpop.permute.xlu0 %1895
        %1897 = vrot.lane.b32.xlu0 %v1497, 112
        %v1898 = vpop.permute.xlu0 %1897
        %1899 = vrot.lane.b32.xlu0 %v1499, 112
        %v1900 = vpop.permute.xlu0 %1899
        %1901 = vrot.lane.b32.xlu0 %v1501, 112
        %v1902 = vpop.permute.xlu0 %1901
        %1903 = vrot.lane.b32.xlu0 %v1503, 112
        %v1904 = vpop.permute.xlu0 %1903
        %1905 = vrot.lane.b32.xlu0 %v1442, 112
        %v1906 = vpop.permute.xlu0 %1905
        %1907 = vrot.lane.b32.xlu0 %v1444, 112
        %v1908 = vpop.permute.xlu0 %1907
        %1909 = vrot.lane.b32.xlu0 %v1446, 112
        %v1910 = vpop.permute.xlu0 %1909
        %1911 = vrot.lane.b32.xlu0 %v1448, 112
        %v1912 = vpop.permute.xlu0 %1911
        %1913 = vrot.lane.b32.xlu0 %v1450, 112
        %v1914 = vpop.permute.xlu0 %1913
        %1915 = vrot.lane.b32.xlu0 %v1452, 112
        %v1916 = vpop.permute.xlu0 %1915
        %1917 = vrot.lane.b32.xlu0 %v1454, 112
        %v1918 = vpop.permute.xlu0 %1917
        %1919 = vrot.lane.b32.xlu0 %v1456, 112
        %v1920 = vpop.permute.xlu0 %1919
        %1921 = vrot.lane.b32.xlu0 %v1458, 112
        %v1922 = vpop.permute.xlu0 %1921
        %1923 = vrot.lane.b32.xlu0 %v1460, 112
        %v1924 = vpop.permute.xlu0 %1923
        %1925 = vrot.lane.b32.xlu0 %v1462, 112
        %v1926 = vpop.permute.xlu0 %1925
        %1927 = vrot.lane.b32.xlu0 %v1464, 112
        %v1928 = vpop.permute.xlu0 %1927
        %1929 = vrot.lane.b32.xlu0 %v1466, 112
        %v1930 = vpop.permute.xlu0 %1929
        %1931 = vrot.lane.b32.xlu0 %v1468, 112
        %v1932 = vpop.permute.xlu0 %1931
        %1933 = vrot.lane.b32.xlu0 %v1470, 112
        %v1934 = vpop.permute.xlu0 %1933
        %1935 = vrot.lane.b32.xlu0 %v1472, 112
        %v1936 = vpop.permute.xlu0 %1935
        %1937 = vrot.lane.b32.xlu0 %v1474, 112
        %v1938 = vpop.permute.xlu0 %1937
        %1939 = vrot.lane.b32.xlu0 %v1476, 112
        %v1940 = vpop.permute.xlu0 %1939
        %1941 = vrot.lane.b32.xlu0 %v1478, 112
        %v1942 = vpop.permute.xlu0 %1941
        %1943 = vrot.lane.b32.xlu0 %v1480, 112
        %v1944 = vpop.permute.xlu0 %1943
        %1945 = vrot.lane.b32.xlu0 %v1482, 112
        %v1946 = vpop.permute.xlu0 %1945
        %1947 = vrot.lane.b32.xlu0 %v1484, 112
        %v1948 = vpop.permute.xlu0 %1947
        %1949 = vrot.lane.b32.xlu0 %v1486, 112
        %v1950 = vpop.permute.xlu0 %1949
        %1951 = vrot.lane.b32.xlu0 %v1488, 112
        %v1952 = vpop.permute.xlu0 %1951
        %1953 = vrot.lane.b32.xlu0 %v1490, 112
        %v1954 = vpop.permute.xlu0 %1953
        %1955 = vrot.lane.b32.xlu0 %v1492, 112
        %v1956 = vpop.permute.xlu0 %1955
        %1957 = vrot.lane.b32.xlu0 %v1494, 112
        %v1958 = vpop.permute.xlu0 %1957
        %1959 = vrot.lane.b32.xlu0 %v1496, 112
        %v1960 = vpop.permute.xlu0 %1959
        %1961 = vrot.lane.b32.xlu0 %v1498, 112
        %v1962 = vpop.permute.xlu0 %1961
        %1963 = vrot.lane.b32.xlu0 %v1500, 112
        %v1964 = vpop.permute.xlu0 %1963
        %1965 = vrot.lane.b32.xlu0 %v1502, 112
        %v1966 = vpop.permute.xlu0 %1965
        %1967 = vrot.lane.b32.xlu0 %v1504, 112
        %v1968 = vpop.permute.xlu0 %1967
        %vm1969 = vcmp.lt.s32.totalorder %v968, 112
        %v1970 = vsel %vm1969, %v1842, %v1906
        %v1971 = vsel %vm1969, %v1844, %v1908
        %v1972 = vsel %vm1969, %v1846, %v1910
        %v1973 = vsel %vm1969, %v1848, %v1912
        %v1974 = vsel %vm1969, %v1850, %v1914
        %v1975 = vsel %vm1969, %v1852, %v1916
        %v1976 = vsel %vm1969, %v1854, %v1918
        %v1977 = vsel %vm1969, %v1856, %v1920
        %v1978 = vsel %vm1969, %v1858, %v1922
        %v1979 = vsel %vm1969, %v1860, %v1924
        %v1980 = vsel %vm1969, %v1862, %v1926
        %v1981 = vsel %vm1969, %v1864, %v1928
        %v1982 = vsel %vm1969, %v1866, %v1930
        %v1983 = vsel %vm1969, %v1868, %v1932
        %v1984 = vsel %vm1969, %v1870, %v1934
        %v1985 = vsel %vm1969, %v1872, %v1936
        %v1986 = vsel %vm1969, %v1874, %v1938
        %v1987 = vsel %vm1969, %v1876, %v1940
        %v1988 = vsel %vm1969, %v1878, %v1942
        %v1989 = vsel %vm1969, %v1880, %v1944
        %v1990 = vsel %vm1969, %v1882, %v1946
        %v1991 = vsel %vm1969, %v1884, %v1948
        %v1992 = vsel %vm1969, %v1886, %v1950
        %v1993 = vsel %vm1969, %v1888, %v1952
        %v1994 = vsel %vm1969, %v1890, %v1954
        %v1995 = vsel %vm1969, %v1892, %v1956
        %v1996 = vsel %vm1969, %v1894, %v1958
        %v1997 = vsel %vm1969, %v1896, %v1960
        %v1998 = vsel %vm1969, %v1898, %v1962
        %v1999 = vsel %vm1969, %v1900, %v1964
        %v2000 = vsel %vm1969, %v1902, %v1966
        %v2001 = vsel %vm1969, %v1904, %v1968
        %v2002 = vsel %vm1969, %v1906, %v1842
        %v2003 = vsel %vm1969, %v1908, %v1844
        %v2004 = vsel %vm1969, %v1910, %v1846
        %v2005 = vsel %vm1969, %v1912, %v1848
        %v2006 = vsel %vm1969, %v1914, %v1850
        %v2007 = vsel %vm1969, %v1916, %v1852
        %v2008 = vsel %vm1969, %v1918, %v1854
        %v2009 = vsel %vm1969, %v1920, %v1856
        %v2010 = vsel %vm1969, %v1922, %v1858
        %v2011 = vsel %vm1969, %v1924, %v1860
        %v2012 = vsel %vm1969, %v1926, %v1862
        %v2013 = vsel %vm1969, %v1928, %v1864
        %v2014 = vsel %vm1969, %v1930, %v1866
        %v2015 = vsel %vm1969, %v1932, %v1868
        %v2016 = vsel %vm1969, %v1934, %v1870
        %v2017 = vsel %vm1969, %v1936, %v1872
        %v2018 = vsel %vm1969, %v1938, %v1874
        %v2019 = vsel %vm1969, %v1940, %v1876
        %v2020 = vsel %vm1969, %v1942, %v1878
        %v2021 = vsel %vm1969, %v1944, %v1880
        %v2022 = vsel %vm1969, %v1946, %v1882
        %v2023 = vsel %vm1969, %v1948, %v1884
        %v2024 = vsel %vm1969, %v1950, %v1886
        %v2025 = vsel %vm1969, %v1952, %v1888
        %v2026 = vsel %vm1969, %v1954, %v1890
        %v2027 = vsel %vm1969, %v1956, %v1892
        %v2028 = vsel %vm1969, %v1958, %v1894
        %v2029 = vsel %vm1969, %v1960, %v1896
        %v2030 = vsel %vm1969, %v1962, %v1898
        %v2031 = vsel %vm1969, %v1964, %v1900
        %v2032 = vsel %vm1969, %v1966, %v1902
        %v2033 = vsel %vm1969, %v1968, %v1904
        %v2035 = vlaneseq
        %v2036 = vshrl.u32 %v2035, 7
        %v2037 = vsub.s32 0, %v2036
        %v2038 = vrot.slane %v1508, %v2037
        %v2039 = vlaneseq
        %v2040 = vshrl.u32 %v2039, 7
        %v2041 = vsub.s32 1, %v2040
        %v2042 = vrot.slane %v1508, %v2041
        %v2045 = vmul.f32 %v1970, %v2038
        %v2046 = vmul.f32 %v2002, %v2042
        %v2047 = vmul.f32 %v1971, %v2038
        %v2048 = vmul.f32 %v2003, %v2042
        %v2049 = vmul.f32 %v1972, %v2038
        %v2050 = vmul.f32 %v2004, %v2042
        %v2051 = vmul.f32 %v1973, %v2038
        %v2052 = vmul.f32 %v2005, %v2042
        %v2053 = vmul.f32 %v1974, %v2038
        %v2054 = vmul.f32 %v2006, %v2042
        %v2055 = vmul.f32 %v1975, %v2038
        %v2056 = vmul.f32 %v2007, %v2042
        %v2057 = vmul.f32 %v1976, %v2038
        %v2058 = vmul.f32 %v2008, %v2042
        %v2059 = vmul.f32 %v1977, %v2038
        %v2060 = vmul.f32 %v2009, %v2042
        %v2061 = vmul.f32 %v1978, %v2038
        %v2062 = vmul.f32 %v2010, %v2042
        %v2063 = vmul.f32 %v1979, %v2038
        %v2064 = vmul.f32 %v2011, %v2042
        %v2065 = vmul.f32 %v1980, %v2038
        %v2066 = vmul.f32 %v2012, %v2042
        %v2067 = vmul.f32 %v1981, %v2038
        %v2068 = vmul.f32 %v2013, %v2042
        %v2069 = vmul.f32 %v1982, %v2038
        %v2070 = vmul.f32 %v2014, %v2042
        %v2071 = vmul.f32 %v1983, %v2038
        %v2072 = vmul.f32 %v2015, %v2042
        %v2073 = vmul.f32 %v1984, %v2038
        %v2074 = vmul.f32 %v2016, %v2042
        %v2075 = vmul.f32 %v1985, %v2038
        %v2076 = vmul.f32 %v2017, %v2042
        %v2077 = vmul.f32 %v1986, %v2038
        %v2078 = vmul.f32 %v2018, %v2042
        %v2079 = vmul.f32 %v1987, %v2038
        %v2080 = vmul.f32 %v2019, %v2042
        %v2081 = vmul.f32 %v1988, %v2038
        %v2082 = vmul.f32 %v2020, %v2042
        %v2083 = vmul.f32 %v1989, %v2038
        %v2084 = vmul.f32 %v2021, %v2042
        %v2085 = vmul.f32 %v1990, %v2038
        %v2086 = vmul.f32 %v2022, %v2042
        %v2087 = vmul.f32 %v1991, %v2038
        %v2088 = vmul.f32 %v2023, %v2042
        %v2089 = vmul.f32 %v1992, %v2038
        %v2090 = vmul.f32 %v2024, %v2042
        %v2091 = vmul.f32 %v1993, %v2038
        %v2092 = vmul.f32 %v2025, %v2042
        %v2093 = vmul.f32 %v1994, %v2038
        %v2094 = vmul.f32 %v2026, %v2042
        %v2095 = vmul.f32 %v1995, %v2038
        %v2096 = vmul.f32 %v2027, %v2042
        %v2097 = vmul.f32 %v1996, %v2038
        %v2098 = vmul.f32 %v2028, %v2042
        %v2099 = vmul.f32 %v1997, %v2038
        %v2100 = vmul.f32 %v2029, %v2042
        %v2101 = vmul.f32 %v1998, %v2038
        %v2102 = vmul.f32 %v2030, %v2042
        %v2103 = vmul.f32 %v1999, %v2038
        %v2104 = vmul.f32 %v2031, %v2042
        %v2105 = vmul.f32 %v2000, %v2038
        %v2106 = vmul.f32 %v2032, %v2042
        %v2107 = vmul.f32 %v2001, %v2038
        %v2108 = vmul.f32 %v2033, %v2042
        %v2109 = vadd.f32 %v1777, %v2045
        %v2110 = vadd.f32 %v1778, %v2046
        %v2111 = vadd.f32 %v1779, %v2047
        %v2112 = vadd.f32 %v1780, %v2048
        %v2113 = vadd.f32 %v1781, %v2049
        %v2114 = vadd.f32 %v1782, %v2050
        %v2115 = vadd.f32 %v1783, %v2051
        %v2116 = vadd.f32 %v1784, %v2052
        %v2117 = vadd.f32 %v1785, %v2053
        %v2118 = vadd.f32 %v1786, %v2054
        %v2119 = vadd.f32 %v1787, %v2055
        %v2120 = vadd.f32 %v1788, %v2056
        %v2121 = vadd.f32 %v1789, %v2057
        %v2122 = vadd.f32 %v1790, %v2058
        %v2123 = vadd.f32 %v1791, %v2059
        %v2124 = vadd.f32 %v1792, %v2060
        %v2125 = vadd.f32 %v1793, %v2061
        %v2126 = vadd.f32 %v1794, %v2062
        %v2127 = vadd.f32 %v1795, %v2063
        %v2128 = vadd.f32 %v1796, %v2064
        %v2129 = vadd.f32 %v1797, %v2065
        %v2130 = vadd.f32 %v1798, %v2066
        %v2131 = vadd.f32 %v1799, %v2067
        %v2132 = vadd.f32 %v1800, %v2068
        %v2133 = vadd.f32 %v1801, %v2069
        %v2134 = vadd.f32 %v1802, %v2070
        %v2135 = vadd.f32 %v1803, %v2071
        %v2136 = vadd.f32 %v1804, %v2072
        %v2137 = vadd.f32 %v1805, %v2073
        %v2138 = vadd.f32 %v1806, %v2074
        %v2139 = vadd.f32 %v1807, %v2075
        %v2140 = vadd.f32 %v1808, %v2076
        %v2141 = vadd.f32 %v1809, %v2077
        %v2142 = vadd.f32 %v1810, %v2078
        %v2143 = vadd.f32 %v1811, %v2079
        %v2144 = vadd.f32 %v1812, %v2080
        %v2145 = vadd.f32 %v1813, %v2081
        %v2146 = vadd.f32 %v1814, %v2082
        %v2147 = vadd.f32 %v1815, %v2083
        %v2148 = vadd.f32 %v1816, %v2084
        %v2149 = vadd.f32 %v1817, %v2085
        %v2150 = vadd.f32 %v1818, %v2086
        %v2151 = vadd.f32 %v1819, %v2087
        %v2152 = vadd.f32 %v1820, %v2088
        %v2153 = vadd.f32 %v1821, %v2089
        %v2154 = vadd.f32 %v1822, %v2090
        %v2155 = vadd.f32 %v1823, %v2091
        %v2156 = vadd.f32 %v1824, %v2092
        %v2157 = vadd.f32 %v1825, %v2093
        %v2158 = vadd.f32 %v1826, %v2094
        %v2159 = vadd.f32 %v1827, %v2095
        %v2160 = vadd.f32 %v1828, %v2096
        %v2161 = vadd.f32 %v1829, %v2097
        %v2162 = vadd.f32 %v1830, %v2098
        %v2163 = vadd.f32 %v1831, %v2099
        %v2164 = vadd.f32 %v1832, %v2100
        %v2165 = vadd.f32 %v1833, %v2101
        %v2166 = vadd.f32 %v1834, %v2102
        %v2167 = vadd.f32 %v1835, %v2103
        %v2168 = vadd.f32 %v1836, %v2104
        %v2169 = vadd.f32 %v1837, %v2105
        %v2170 = vadd.f32 %v1838, %v2106
        %v2171 = vadd.f32 %v1839, %v2107
        %v2172 = vadd.f32 %v1840, %v2108
        %v2173 = vld [vmem:[#allocation2] sm:$0x3]
        %v2174 = vmax.f32 %v2109, %v2113
        %v2175 = vmax.f32 %v2111, %v2115
        %v2176 = vmax.f32 %v2174, %v2117
        %v2177 = vmax.f32 %v2175, %v2119
        %v2178 = vmax.f32 %v2176, %v2121
        %v2179 = vmax.f32 %v2177, %v2123
        %v2180 = vmax.f32 %v2178, %v2125
        %v2181 = vmax.f32 %v2179, %v2127
        %v2182 = vmax.f32 %v2180, %v2129
        %v2183 = vmax.f32 %v2181, %v2131
        %v2184 = vmax.f32 %v2182, %v2133
        %v2185 = vmax.f32 %v2183, %v2135
        %v2186 = vmax.f32 %v2184, %v2137
        %v2187 = vmax.f32 %v2185, %v2139
        %v2188 = vmax.f32 %v2186, %v2141
        %v2189 = vmax.f32 %v2187, %v2143
        %v2190 = vmax.f32 %v2188, %v2145
        %v2191 = vmax.f32 %v2189, %v2147
        %v2192 = vmax.f32 %v2190, %v2149
        %v2193 = vmax.f32 %v2191, %v2151
        %v2194 = vmax.f32 %v2192, %v2153
        %v2195 = vmax.f32 %v2193, %v2155
        %v2196 = vmax.f32 %v2194, %v2157
        %v2197 = vmax.f32 %v2195, %v2159
        %v2198 = vmax.f32 %v2196, %v2161
        %v2199 = vmax.f32 %v2197, %v2163
        %v2200 = vmax.f32 %v2198, %v2165
        %v2201 = vmax.f32 %v2199, %v2167
        %v2202 = vmax.f32 %v2200, %v2169
        %v2203 = vmax.f32 %v2201, %v2171
        %v2204 = vmax.f32 %v2202, %v2203
        %v2205 = vrot.slane %v2204, 4
        %v2206 = vmax.f32 %v2204, %v2205
        %v2207 = vrot.slane %v2206, 2
        %v2208 = vmax.f32 %v2206, %v2207
        %v2209 = vrot.slane %v2208, 1
        %v2210 = vmax.f32 %v2208, %v2209
        %v2211 = vmax.f32 %v2110, %v2114
        %v2212 = vmax.f32 %v2112, %v2116
        %v2213 = vmax.f32 %v2211, %v2118
        %v2214 = vmax.f32 %v2212, %v2120
        %v2215 = vmax.f32 %v2213, %v2122
        %v2216 = vmax.f32 %v2214, %v2124
        %v2217 = vmax.f32 %v2215, %v2126
        %v2218 = vmax.f32 %v2216, %v2128
        %v2219 = vmax.f32 %v2217, %v2130
        %v2220 = vmax.f32 %v2218, %v2132
        %v2221 = vmax.f32 %v2219, %v2134
        %v2222 = vmax.f32 %v2220, %v2136
        %v2223 = vmax.f32 %v2221, %v2138
        %v2224 = vmax.f32 %v2222, %v2140
        %v2225 = vmax.f32 %v2223, %v2142
        %v2226 = vmax.f32 %v2224, %v2144
        %v2227 = vmax.f32 %v2225, %v2146
        %v2228 = vmax.f32 %v2226, %v2148
        %v2229 = vmax.f32 %v2227, %v2150
        %v2230 = vmax.f32 %v2228, %v2152
        %v2231 = vmax.f32 %v2229, %v2154
        %v2232 = vmax.f32 %v2230, %v2156
        %v2233 = vmax.f32 %v2231, %v2158
        %v2234 = vmax.f32 %v2232, %v2160
        %v2235 = vmax.f32 %v2233, %v2162
        %v2236 = vmax.f32 %v2234, %v2164
        %v2237 = vmax.f32 %v2235, %v2166
        %v2238 = vmax.f32 %v2236, %v2168
        %v2239 = vmax.f32 %v2237, %v2170
        %v2240 = vmax.f32 %v2238, %v2172
        %v2241 = vmax.f32 %v2239, %v2240
        %v2242 = vrot.slane %v2241, 4
        %v2243 = vmax.f32 %v2241, %v2242
        %v2244 = vrot.slane %v2243, 2
        %v2245 = vmax.f32 %v2243, %v2244
        %v2246 = vrot.slane %v2245, 1
        %v2247 = vmax.f32 %v2245, %v2246
        %v2250 = vcombine.low %v2210, %v2247
        %v2252 = vunpack.c.l.s4 1966171168
        %v2253 = vunpack.c.0.s8 %v2252
        %v2254 = vlaneseq
        %v2255 = vshrl.u32 %v2254, 7
        %v2256 = vsub.s32 %v2253, %v2255
        %v2257 = vrot.slane %v2250, %v2256
        %v2259 = vunpack.c.l.s4 1966171168
        %v2260 = vunpack.c.0.s8 %v2259
        %v2261 = vlaneseq
        %v2262 = vshrl.u32 %v2261, 7
        %v2263 = vsub.s32 %v2260, %v2262
        %v2264 = vrot.slane %v2257, %v2263
        %v2266 = vmax.f32 %v2173, %v2264
        %v2267 = vsub.f32 %v2173, %v2266
        %v2268 = vmul.f32 %v2267, 1.442695
        %v2269 = vpow.pop %v2268
        %v2271 = vlaneseq
        %v2272 = vshrl.u32 %v2271, 7
        %v2273 = vsub.s32 0, %v2272
        %v2274 = vrot.slane %v2266, %v2273
        %v2275 = vlaneseq
        %v2276 = vshrl.u32 %v2275, 7
        %v2277 = vsub.s32 1, %v2276
        %v2278 = vrot.slane %v2266, %v2277
        %v2281 = vsub.f32 %v2109, %v2274
        %v2282 = vsub.f32 %v2110, %v2278
        %v2283 = vsub.f32 %v2111, %v2274
        %v2284 = vsub.f32 %v2112, %v2278
        %v2285 = vsub.f32 %v2113, %v2274
        %v2286 = vsub.f32 %v2114, %v2278
        %v2287 = vsub.f32 %v2115, %v2274
        %v2288 = vsub.f32 %v2116, %v2278
        %v2289 = vsub.f32 %v2117, %v2274
        %v2290 = vsub.f32 %v2118, %v2278
        %v2291 = vsub.f32 %v2119, %v2274
        %v2292 = vsub.f32 %v2120, %v2278
        %v2293 = vsub.f32 %v2121, %v2274
        %v2294 = vsub.f32 %v2122, %v2278
        %v2295 = vsub.f32 %v2123, %v2274
        %v2296 = vsub.f32 %v2124, %v2278
        %v2297 = vsub.f32 %v2125, %v2274
        %v2298 = vsub.f32 %v2126, %v2278
        %v2299 = vsub.f32 %v2127, %v2274
        %v2300 = vsub.f32 %v2128, %v2278
        %v2301 = vsub.f32 %v2129, %v2274
        %v2302 = vsub.f32 %v2130, %v2278
        %v2303 = vsub.f32 %v2131, %v2274
        %v2304 = vsub.f32 %v2132, %v2278
        %v2305 = vsub.f32 %v2133, %v2274
        %v2306 = vsub.f32 %v2134, %v2278
        %v2307 = vsub.f32 %v2135, %v2274
        %v2308 = vsub.f32 %v2136, %v2278
        %v2309 = vsub.f32 %v2137, %v2274
        %v2310 = vsub.f32 %v2138, %v2278
        %v2311 = vsub.f32 %v2139, %v2274
        %v2312 = vsub.f32 %v2140, %v2278
        %v2313 = vsub.f32 %v2141, %v2274
        %v2314 = vsub.f32 %v2142, %v2278
        %v2315 = vsub.f32 %v2143, %v2274
        %v2316 = vsub.f32 %v2144, %v2278
        %v2317 = vsub.f32 %v2145, %v2274
        %v2318 = vsub.f32 %v2146, %v2278
        %v2319 = vsub.f32 %v2147, %v2274
        %v2320 = vsub.f32 %v2148, %v2278
        %v2321 = vsub.f32 %v2149, %v2274
        %v2322 = vsub.f32 %v2150, %v2278
        %v2323 = vsub.f32 %v2151, %v2274
        %v2324 = vsub.f32 %v2152, %v2278
        %v2325 = vsub.f32 %v2153, %v2274
        %v2326 = vsub.f32 %v2154, %v2278
        %v2327 = vsub.f32 %v2155, %v2274
        %v2328 = vsub.f32 %v2156, %v2278
        %v2329 = vsub.f32 %v2157, %v2274
        %v2330 = vsub.f32 %v2158, %v2278
        %v2331 = vsub.f32 %v2159, %v2274
        %v2332 = vsub.f32 %v2160, %v2278
        %v2333 = vsub.f32 %v2161, %v2274
        %v2334 = vsub.f32 %v2162, %v2278
        %v2335 = vsub.f32 %v2163, %v2274
        %v2336 = vsub.f32 %v2164, %v2278
        %v2337 = vsub.f32 %v2165, %v2274
        %v2338 = vsub.f32 %v2166, %v2278
        %v2339 = vsub.f32 %v2167, %v2274
        %v2340 = vsub.f32 %v2168, %v2278
        %v2341 = vsub.f32 %v2169, %v2274
        %v2342 = vsub.f32 %v2170, %v2278
        %v2343 = vsub.f32 %v2171, %v2274
        %v2344 = vsub.f32 %v2172, %v2278
        %v2345 = vmul.f32 %v2281, 1.442695
        %v2346 = vpow.pop %v2345
        %v2347 = vmul.f32 %v2282, 1.442695
        %v2348 = vpow.pop %v2347
        %v2349 = vmul.f32 %v2283, 1.442695
        %v2350 = vpow.pop %v2349
        %v2351 = vmul.f32 %v2284, 1.442695
        %v2352 = vpow.pop %v2351
        %v2353 = vmul.f32 %v2285, 1.442695
        %v2354 = vpow.pop %v2353
        %v2355 = vmul.f32 %v2286, 1.442695
        %v2356 = vpow.pop %v2355
        %v2357 = vmul.f32 %v2287, 1.442695
        %v2358 = vpow.pop %v2357
        %v2359 = vmul.f32 %v2288, 1.442695
        %v2360 = vpow.pop %v2359
        %v2361 = vmul.f32 %v2289, 1.442695
        %v2362 = vpow.pop %v2361
        %v2363 = vmul.f32 %v2290, 1.442695
        %v2364 = vpow.pop %v2363
        %v2365 = vmul.f32 %v2291, 1.442695
        %v2366 = vpow.pop %v2365
        %v2367 = vmul.f32 %v2292, 1.442695
        %v2368 = vpow.pop %v2367
        %v2369 = vmul.f32 %v2293, 1.442695
        %v2370 = vpow.pop %v2369
        %v2371 = vmul.f32 %v2294, 1.442695
        %v2372 = vpow.pop %v2371
        %v2373 = vmul.f32 %v2295, 1.442695
        %v2374 = vpow.pop %v2373
        %v2375 = vmul.f32 %v2296, 1.442695
        %v2376 = vpow.pop %v2375
        %v2377 = vmul.f32 %v2297, 1.442695
        %v2378 = vpow.pop %v2377
        %v2379 = vmul.f32 %v2298, 1.442695
        %v2380 = vpow.pop %v2379
        %v2381 = vmul.f32 %v2299, 1.442695
        %v2382 = vpow.pop %v2381
        %v2383 = vmul.f32 %v2300, 1.442695
        %v2384 = vpow.pop %v2383
        %v2385 = vmul.f32 %v2301, 1.442695
        %v2386 = vpow.pop %v2385
        %v2387 = vmul.f32 %v2302, 1.442695
        %v2388 = vpow.pop %v2387
        %v2389 = vmul.f32 %v2303, 1.442695
        %v2390 = vpow.pop %v2389
        %v2391 = vmul.f32 %v2304, 1.442695
        %v2392 = vpow.pop %v2391
        %v2393 = vmul.f32 %v2305, 1.442695
        %v2394 = vpow.pop %v2393
        %v2395 = vmul.f32 %v2306, 1.442695
        %v2396 = vpow.pop %v2395
        %v2397 = vmul.f32 %v2307, 1.442695
        %v2398 = vpow.pop %v2397
        %v2399 = vmul.f32 %v2308, 1.442695
        %v2400 = vpow.pop %v2399
        %v2401 = vmul.f32 %v2309, 1.442695
        %v2402 = vpow.pop %v2401
        %v2403 = vmul.f32 %v2310, 1.442695
        %v2404 = vpow.pop %v2403
        %v2405 = vmul.f32 %v2311, 1.442695
        %v2406 = vpow.pop %v2405
        %v2407 = vmul.f32 %v2312, 1.442695
        %v2408 = vpow.pop %v2407
        %v2409 = vmul.f32 %v2313, 1.442695
        %v2410 = vpow.pop %v2409
        %v2411 = vmul.f32 %v2314, 1.442695
        %v2412 = vpow.pop %v2411
        %v2413 = vmul.f32 %v2315, 1.442695
        %v2414 = vpow.pop %v2413
        %v2415 = vmul.f32 %v2316, 1.442695
        %v2416 = vpow.pop %v2415
        %v2417 = vmul.f32 %v2317, 1.442695
        %v2418 = vpow.pop %v2417
        %v2419 = vmul.f32 %v2318, 1.442695
        %v2420 = vpow.pop %v2419
        %v2421 = vmul.f32 %v2319, 1.442695
        %v2422 = vpow.pop %v2421
        %v2423 = vmul.f32 %v2320, 1.442695
        %v2424 = vpow.pop %v2423
        %v2425 = vmul.f32 %v2321, 1.442695
        %v2426 = vpow.pop %v2425
        %v2427 = vmul.f32 %v2322, 1.442695
        %v2428 = vpow.pop %v2427
        %v2429 = vmul.f32 %v2323, 1.442695
        %v2430 = vpow.pop %v2429
        %v2431 = vmul.f32 %v2324, 1.442695
        %v2432 = vpow.pop %v2431
        %v2433 = vmul.f32 %v2325, 1.442695
        %v2434 = vpow.pop %v2433
        %v2435 = vmul.f32 %v2326, 1.442695
        %v2436 = vpow.pop %v2435
        %v2437 = vmul.f32 %v2327, 1.442695
        %v2438 = vpow.pop %v2437
        %v2439 = vmul.f32 %v2328, 1.442695
        %v2440 = vpow.pop %v2439
        %v2441 = vmul.f32 %v2329, 1.442695
        %v2442 = vpow.pop %v2441
        %v2443 = vmul.f32 %v2330, 1.442695
        %v2444 = vpow.pop %v2443
        %v2445 = vmul.f32 %v2331, 1.442695
        %v2446 = vpow.pop %v2445
        %v2447 = vmul.f32 %v2332, 1.442695
        %v2448 = vpow.pop %v2447
        %v2449 = vmul.f32 %v2333, 1.442695
        %v2450 = vpow.pop %v2449
        %v2451 = vmul.f32 %v2334, 1.442695
        %v2452 = vpow.pop %v2451
        %v2453 = vmul.f32 %v2335, 1.442695
        %v2454 = vpow.pop %v2453
        %v2455 = vmul.f32 %v2336, 1.442695
        %v2456 = vpow.pop %v2455
        %v2457 = vmul.f32 %v2337, 1.442695
        %v2458 = vpow.pop %v2457
        %v2459 = vmul.f32 %v2338, 1.442695
        %v2460 = vpow.pop %v2459
        %v2461 = vmul.f32 %v2339, 1.442695
        %v2462 = vpow.pop %v2461
        %v2463 = vmul.f32 %v2340, 1.442695
        %v2464 = vpow.pop %v2463
        %v2465 = vmul.f32 %v2341, 1.442695
        %v2466 = vpow.pop %v2465
        %v2467 = vmul.f32 %v2342, 1.442695
        %v2468 = vpow.pop %v2467
        %v2469 = vmul.f32 %v2343, 1.442695
        %v2470 = vpow.pop %v2469
        %v2471 = vmul.f32 %v2344, 1.442695
        %v2472 = vpow.pop %v2471
        %v2473 = vld [vmem:[#allocation3] sm:$0x3]
        %v2474 = vmul.f32 %v2473, %v2269
        %v2475 = vadd.f32 %v2346, %v2350
        %v2476 = vadd.f32 %v2475, %v2354
        %v2477 = vadd.f32 %v2476, %v2358
        %v2478 = vadd.f32 %v2477, %v2362
        %v2479 = vadd.f32 %v2478, %v2366
        %v2480 = vadd.f32 %v2479, %v2370
        %v2481 = vadd.f32 %v2480, %v2374
        %v2482 = vadd.f32 %v2481, %v2378
        %v2483 = vadd.f32 %v2482, %v2382
        %v2484 = vadd.f32 %v2483, %v2386
        %v2485 = vadd.f32 %v2484, %v2390
        %v2486 = vadd.f32 %v2485, %v2394
        %v2487 = vadd.f32 %v2486, %v2398
        %v2488 = vadd.f32 %v2487, %v2402
        %v2489 = vadd.f32 %v2488, %v2406
        %v2490 = vadd.f32 %v2489, %v2410
        %v2491 = vadd.f32 %v2490, %v2414
        %v2492 = vadd.f32 %v2491, %v2418
        %v2493 = vadd.f32 %v2492, %v2422
        %v2494 = vadd.f32 %v2493, %v2426
        %v2495 = vadd.f32 %v2494, %v2430
        %v2496 = vadd.f32 %v2495, %v2434
        %v2497 = vadd.f32 %v2496, %v2438
        %v2498 = vadd.f32 %v2497, %v2442
        %v2499 = vadd.f32 %v2498, %v2446
        %v2500 = vadd.f32 %v2499, %v2450
        %v2501 = vadd.f32 %v2500, %v2454
        %v2502 = vadd.f32 %v2501, %v2458
        %v2503 = vadd.f32 %v2502, %v2462
        %v2504 = vadd.f32 %v2503, %v2466
        %v2505 = vadd.f32 %v2504, %v2470
        %v2506 = vrot.slane %v2505, 4
        %v2507 = vadd.f32 %v2505, %v2506
        %v2508 = vrot.slane %v2507, 2
        %v2509 = vadd.f32 %v2507, %v2508
        %v2510 = vrot.slane %v2509, 1
        %v2511 = vadd.f32 %v2509, %v2510
        %v2512 = vadd.f32 %v2348, %v2352
        %v2513 = vadd.f32 %v2512, %v2356
        %v2514 = vadd.f32 %v2513, %v2360
        %v2515 = vadd.f32 %v2514, %v2364
        %v2516 = vadd.f32 %v2515, %v2368
        %v2517 = vadd.f32 %v2516, %v2372
        %v2518 = vadd.f32 %v2517, %v2376
        %v2519 = vadd.f32 %v2518, %v2380
        %v2520 = vadd.f32 %v2519, %v2384
        %v2521 = vadd.f32 %v2520, %v2388
        %v2522 = vadd.f32 %v2521, %v2392
        %v2523 = vadd.f32 %v2522, %v2396
        %v2524 = vadd.f32 %v2523, %v2400
        %v2525 = vadd.f32 %v2524, %v2404
        %v2526 = vadd.f32 %v2525, %v2408
        %v2527 = vadd.f32 %v2526, %v2412
        %v2528 = vadd.f32 %v2527, %v2416
        %v2529 = vadd.f32 %v2528, %v2420
        %v2530 = vadd.f32 %v2529, %v2424
        %v2531 = vadd.f32 %v2530, %v2428
        %v2532 = vadd.f32 %v2531, %v2432
        %v2533 = vadd.f32 %v2532, %v2436
        %v2534 = vadd.f32 %v2533, %v2440
        %v2535 = vadd.f32 %v2534, %v2444
        %v2536 = vadd.f32 %v2535, %v2448
        %v2537 = vadd.f32 %v2536, %v2452
        %v2538 = vadd.f32 %v2537, %v2456
        %v2539 = vadd.f32 %v2538, %v2460
        %v2540 = vadd.f32 %v2539, %v2464
        %v2541 = vadd.f32 %v2540, %v2468
        %v2542 = vadd.f32 %v2541, %v2472
        %v2543 = vrot.slane %v2542, 4
        %v2544 = vadd.f32 %v2542, %v2543
        %v2545 = vrot.slane %v2544, 2
        %v2546 = vadd.f32 %v2544, %v2545
        %v2547 = vrot.slane %v2546, 1
        %v2548 = vadd.f32 %v2546, %v2547
        %v2551 = vcombine.low %v2511, %v2548
        %v2553 = vunpack.c.l.s4 1966171168
        %v2554 = vunpack.c.0.s8 %v2553
        %v2555 = vlaneseq
        %v2556 = vshrl.u32 %v2555, 7
        %v2557 = vsub.s32 %v2554, %v2556
        %v2558 = vrot.slane %v2551, %v2557
        %v2560 = vunpack.c.l.s4 1966171168
        %v2561 = vunpack.c.0.s8 %v2560
        %v2562 = vlaneseq
        %v2563 = vshrl.u32 %v2562, 7
        %v2564 = vsub.s32 %v2561, %v2563
        %v2565 = vrot.slane %v2558, %v2564
        %v2567 = vadd.f32 %v2474, %v2565
        %v2568 = vlaneseq
        %vm2569 = vcmp.ge.s32.totalorder %v2568, 0
        %vm2570 = vcmp.lt.s32.totalorder %v2568, 256
        %vm2571 = vmand %vm2569, %vm2570
        %2572 = vst.msk [vmem:[#allocation3] sm:$0x3] %vm2571, %v2567
        %v2573 = vld [vmem:[#allocation4] sm:$0xff]
        %v2574 = vld [vmem:[#allocation4 + $0x8] sm:$0xff]
        %v2575 = vld [vmem:[#allocation4 + $0x10] sm:$0xff]
        %v2576 = vld [vmem:[#allocation4 + $0x18] sm:$0xff]
        %v2577 = vld [vmem:[#allocation4 + $0x20] sm:$0xff]
        %v2578 = vld [vmem:[#allocation4 + $0x28] sm:$0xff]
        %v2579 = vld [vmem:[#allocation4 + $0x30] sm:$0xff]
        %v2580 = vld [vmem:[#allocation4 + $0x38] sm:$0xff]
        %v2581 = vld [vmem:[#allocation4 + $0x40] sm:$0xff]
        %v2582 = vld [vmem:[#allocation4 + $0x48] sm:$0xff]
        %v2583 = vld [vmem:[#allocation4 + $0x50] sm:$0xff]
        %v2584 = vld [vmem:[#allocation4 + $0x58] sm:$0xff]
        %v2585 = vld [vmem:[#allocation4 + $0x60] sm:$0xff]
        %v2586 = vld [vmem:[#allocation4 + $0x68] sm:$0xff]
        %v2587 = vld [vmem:[#allocation4 + $0x70] sm:$0xff]
        %v2588 = vld [vmem:[#allocation4 + $0x78] sm:$0xff]
        %v2589 = vld [vmem:[#allocation4 + $0x80] sm:$0xff]
        %v2590 = vld [vmem:[#allocation4 + $0x88] sm:$0xff]
        %v2592 = vlaneseq
        %v2593 = vshrl.u32 %v2592, 7
        %v2594 = vsub.s32 0, %v2593
        %v2595 = vrot.slane %v2269, %v2594
        %v2596 = vlaneseq
        %v2597 = vshrl.u32 %v2596, 7
        %v2598 = vsub.s32 1, %v2597
        %v2599 = vrot.slane %v2269, %v2598
        %v2602 = vmul.f32 %v2573, %v2595
        %v2603 = vmul.f32 %v2574, %v2599
        %v2604 = vmul.f32 %v2575, %v2595
        %v2605 = vmul.f32 %v2576, %v2599
        %v2606 = vmul.f32 %v2577, %v2595
        %v2607 = vmul.f32 %v2578, %v2599
        %v2608 = vmul.f32 %v2579, %v2595
        %v2609 = vmul.f32 %v2580, %v2599
        %v2610 = vmul.f32 %v2581, %v2595
        %v2611 = vmul.f32 %v2582, %v2599
        %v2612 = vmul.f32 %v2583, %v2595
        %v2613 = vmul.f32 %v2584, %v2599
        %v2614 = vmul.f32 %v2585, %v2595
        %v2615 = vmul.f32 %v2586, %v2599
        %v2616 = vmul.f32 %v2587, %v2595
        %v2617 = vmul.f32 %v2588, %v2599
        %v2618 = vmul.f32 %v2589, %v2595
        %v2619 = vmul.f32 %v2590, %v2599
        %v2620 = vpack.c.bf16 %v2350, %v2346
        %v2621 = vpack.c.bf16 %v2352, %v2348
        %v2622 = vpack.c.bf16 %v2358, %v2354
        %v2623 = vpack.c.bf16 %v2360, %v2356
        %v2624 = vpack.c.bf16 %v2366, %v2362
        %v2625 = vpack.c.bf16 %v2368, %v2364
        %v2626 = vpack.c.bf16 %v2374, %v2370
        %v2627 = vpack.c.bf16 %v2376, %v2372
        %v2628 = vpack.c.bf16 %v2382, %v2378
        %v2629 = vpack.c.bf16 %v2384, %v2380
        %v2630 = vpack.c.bf16 %v2390, %v2386
        %v2631 = vpack.c.bf16 %v2392, %v2388
        %v2632 = vpack.c.bf16 %v2398, %v2394
        %v2633 = vpack.c.bf16 %v2400, %v2396
        %v2634 = vpack.c.bf16 %v2406, %v2402
        %v2635 = vpack.c.bf16 %v2408, %v2404
        %v2636 = vpack.c.bf16 %v2414, %v2410
        %v2637 = vpack.c.bf16 %v2416, %v2412
        %v2638 = vpack.c.bf16 %v2422, %v2418
        %v2639 = vpack.c.bf16 %v2424, %v2420
        %v2640 = vpack.c.bf16 %v2430, %v2426
        %v2641 = vpack.c.bf16 %v2432, %v2428
        %v2642 = vpack.c.bf16 %v2438, %v2434
        %v2643 = vpack.c.bf16 %v2440, %v2436
        %v2644 = vpack.c.bf16 %v2446, %v2442
        %v2645 = vpack.c.bf16 %v2448, %v2444
        %v2646 = vpack.c.bf16 %v2454, %v2450
        %v2647 = vpack.c.bf16 %v2456, %v2452
        %v2648 = vpack.c.bf16 %v2462, %v2458
        %v2649 = vpack.c.bf16 %v2464, %v2460
        %v2650 = vpack.c.bf16 %v2470, %v2466
        %v2651 = vpack.c.bf16 %v2472, %v2468
        %2652 = vmatprep.subr.bf16.mxu0 %v2621
        %2653 = vmatpush1.bf16.msra.mxu0 %v2620
        %2654 = vmatprep.subr.bf16.mxu0 %v2623
        %2655 = vmatpush1.bf16.msra.mxu0 %v2622
        %2656 = vmatprep.subr.bf16.mxu0 %v2625
        %2657 = vmatpush1.bf16.msra.mxu0 %v2624
        %2658 = vmatprep.subr.bf16.mxu0 %v2627
        %2659 = vmatpush1.bf16.msra.mxu0 %v2626
        %2660 = vmatprep.subr.bf16.mxu0 %v2629
        %2661 = vmatpush1.bf16.msra.mxu0 %v2628
        %2662 = vmatprep.subr.bf16.mxu0 %v2631
        %2663 = vmatpush1.bf16.msra.mxu0 %v2630
        %2664 = vmatprep.subr.bf16.mxu0 %v2633
        %2665 = vmatpush1.bf16.msra.mxu0 %v2632
        %2666 = vmatprep.subr.bf16.mxu0 %v2635
        %2667 = vmatpush1.bf16.msra.mxu0 %v2634
        %2668 = vmatprep.subr.bf16.mxu0 %v2637
        %2669 = vmatpush1.bf16.msra.mxu0 %v2636
        %2670 = vmatprep.subr.bf16.mxu0 %v2639
        %2671 = vmatpush1.bf16.msra.mxu0 %v2638
        %2672 = vmatprep.subr.bf16.mxu0 %v2641
        %2673 = vmatpush1.bf16.msra.mxu0 %v2640
        %2674 = vmatprep.subr.bf16.mxu0 %v2643
        %2675 = vmatpush1.bf16.msra.mxu0 %v2642
        %2676 = vmatprep.subr.bf16.mxu0 %v2645
        %2677 = vmatpush1.bf16.msra.mxu0 %v2644
        %2678 = vmatprep.subr.bf16.mxu0 %v2647
        %2679 = vmatpush1.bf16.msra.mxu0 %v2646
        %2680 = vmatprep.subr.bf16.mxu0 %v2649
        %2681 = vmatpush1.bf16.msra.mxu0 %v2648
        %2682 = vmatprep.subr.bf16.mxu0 %v2651
        %2683 = vmatpush1.bf16.msra.mxu0 %v2650
        %2684 = vmatprep.mubr.bf16.mxu0 %v501
        %2685 = vmatmul.mubr.bf16.gmra.mrb[0].mxu0 %v500
        %v2686 = vpop.f32.mrb[0].mxu0
        %v2687 = vadd.f32 0.0, %v2686
        %v2688 = vpop.f32.mrb[0].mxu0
        %v2689 = vadd.f32 0.0, %v2688
        %v2690 = vpop.f32.mrb[0].mxu0
        %v2691 = vadd.f32 0.0, %v2690
        %v2692 = vpop.f32.mrb[0].mxu0
        %v2693 = vadd.f32 0.0, %v2692
        %2694 = vmatprep.mubr.bf16.mxu0 %v503
        %2695 = vmatmul.mubr.bf16.gmra.mrb[0].mxu0 %v502
        %v2696 = vpop.f32.mrb[0].mxu0
        %v2697 = vadd.f32 0.0, %v2696
        %v2698 = vpop.f32.mrb[0].mxu0
        %v2699 = vadd.f32 0.0, %v2698
        %v2700 = vpop.f32.mrb[0].mxu0
        %v2701 = vadd.f32 0.0, %v2700
        %v2702 = vpop.f32.mrb[0].mxu0
        %v2703 = vadd.f32 0.0, %v2702
        %2704 = vmatprep.mubr.bf16.mxu0 %v505
        %2705 = vmatmul.mubr.bf16.gmra.mrb[0].mxu0 %v504
        %v2706 = vpop.f32.mrb[0].mxu0
        %v2707 = vadd.f32 0.0, %v2706
        %v2708 = vpop.f32.mrb[0].mxu0
        %v2709 = vadd.f32 0.0, %v2708
        %v2710 = vpop.f32.mrb[0].mxu0
        %v2711 = vadd.f32 0.0, %v2710
        %v2712 = vpop.f32.mrb[0].mxu0
        %v2713 = vadd.f32 0.0, %v2712
        %2714 = vmatprep.mubr.bf16.mxu0 %v507
        %2715 = vmatmul.mubr.bf16.gmra.mrb[0].mxu0 %v506
        %v2716 = vpop.f32.mrb[0].mxu0
        %v2717 = vadd.f32 0.0, %v2716
        %v2718 = vpop.f32.mrb[0].mxu0
        %v2719 = vadd.f32 0.0, %v2718
        %v2720 = vpop.f32.mrb[0].mxu0
        %v2721 = vadd.f32 0.0, %v2720
        %v2722 = vpop.f32.mrb[0].mxu0
        %v2723 = vadd.f32 0.0, %v2722
        %2724 = vmatprep.mubr.bf16.mxu0 %v509
        %2725 = vmatmul.mubr.bf16.gmra.mrb[0].mxu0 %v508
        %v2726 = vpop.f32.mrb[0].mxu0
        %v2727 = vadd.f32 0.0, %v2726
        %v2728 = vpop.f32.mrb[0].mxu0
        %v2729 = vadd.f32 0.0, %v2728
        %v2730 = vpop.f32.mrb[0].mxu0
        %v2731 = vpop.f32.mrb[0].mxu0
        %2732 = vdwg.mxu0
        %v2733 = vadd.f32 %v2602, %v2687
        %v2734 = vadd.f32 %v2603, %v2689
        %v2735 = vadd.f32 %v2604, %v2691
        %v2736 = vadd.f32 %v2605, %v2693
        %v2737 = vadd.f32 %v2606, %v2697
        %v2738 = vadd.f32 %v2607, %v2699
        %v2739 = vadd.f32 %v2608, %v2701
        %v2740 = vadd.f32 %v2609, %v2703
        %v2741 = vadd.f32 %v2610, %v2707
        %v2742 = vadd.f32 %v2611, %v2709
        %v2743 = vadd.f32 %v2612, %v2711
        %v2744 = vadd.f32 %v2613, %v2713
        %v2745 = vadd.f32 %v2614, %v2717
        %v2746 = vadd.f32 %v2615, %v2719
        %v2747 = vadd.f32 %v2616, %v2721
        %v2748 = vadd.f32 %v2617, %v2723
        %v2749 = vadd.f32 %v2618, %v2727
        %v2750 = vadd.f32 %v2619, %v2729
        %2751 = vst [vmem:[#allocation4] sm:$0xff] %v2733
        %2752 = vst [vmem:[#allocation4 + $0x8] sm:$0xff] %v2734
        %2753 = vst [vmem:[#allocation4 + $0x10] sm:$0xff] %v2735
        %2754 = vst [vmem:[#allocation4 + $0x18] sm:$0xff] %v2736
        %2755 = vst [vmem:[#allocation4 + $0x20] sm:$0xff] %v2737
        %2756 = vst [vmem:[#allocation4 + $0x28] sm:$0xff] %v2738
        %2757 = vst [vmem:[#allocation4 + $0x30] sm:$0xff] %v2739
        %2758 = vst [vmem:[#allocation4 + $0x38] sm:$0xff] %v2740
        %2759 = vst [vmem:[#allocation4 + $0x40] sm:$0xff] %v2741
        %2760 = vst [vmem:[#allocation4 + $0x48] sm:$0xff] %v2742
        %2761 = vst [vmem:[#allocation4 + $0x50] sm:$0xff] %v2743
        %2762 = vst [vmem:[#allocation4 + $0x58] sm:$0xff] %v2744
        %2763 = vst [vmem:[#allocation4 + $0x60] sm:$0xff] %v2745
        %2764 = vst [vmem:[#allocation4 + $0x68] sm:$0xff] %v2746
        %2765 = vst [vmem:[#allocation4 + $0x70] sm:$0xff] %v2747
        %2766 = vst [vmem:[#allocation4 + $0x78] sm:$0xff] %v2748
        %2767 = vst [vmem:[#allocation4 + $0x80] sm:$0xff] %v2749
        %2768 = vst [vmem:[#allocation4 + $0x88] sm:$0xff] %v2750
        %2769 = vst.msk [vmem:[#allocation2] sm:$0x3] %vm2571, %v2266
        // Predicated region
        $region61: #{tpu_custom_call.1} parent=39 // pred_check
          %p2770 = pneg %p370
        $region62: #{tpu_custom_call.1} parent=39 // pred_check_branch
          %2772 = sbr.rel (%p2770) target = $region64
        $region63: #{tpu_custom_call.1} parent=39 // pred_region
          %v2773 = vld [vmem:[#allocation3] sm:$0x3]
          %v2774 = vrcp.pop %v2773
          %v2775 = vmul.f32 %v2774, 0.11111111
          %v2776 = vld [vmem:[#allocation4] sm:$0xff]
          %v2777 = vld [vmem:[#allocation4 + $0x8] sm:$0xff]
          %v2778 = vld [vmem:[#allocation4 + $0x10] sm:$0xff]
          %v2779 = vld [vmem:[#allocation4 + $0x18] sm:$0xff]
          %v2780 = vld [vmem:[#allocation4 + $0x20] sm:$0xff]
          %v2781 = vld [vmem:[#allocation4 + $0x28] sm:$0xff]
          %v2782 = vld [vmem:[#allocation4 + $0x30] sm:$0xff]
          %v2783 = vld [vmem:[#allocation4 + $0x38] sm:$0xff]
          %v2784 = vld [vmem:[#allocation4 + $0x40] sm:$0xff]
          %v2785 = vld [vmem:[#allocation4 + $0x48] sm:$0xff]
          %v2786 = vld [vmem:[#allocation4 + $0x50] sm:$0xff]
          %v2787 = vld [vmem:[#allocation4 + $0x58] sm:$0xff]
          %v2788 = vld [vmem:[#allocation4 + $0x60] sm:$0xff]
          %v2789 = vld [vmem:[#allocation4 + $0x68] sm:$0xff]
          %v2790 = vld [vmem:[#allocation4 + $0x70] sm:$0xff]
          %v2791 = vld [vmem:[#allocation4 + $0x78] sm:$0xff]
          %v2792 = vld [vmem:[#allocation4 + $0x80] sm:$0xff]
          %v2793 = vld [vmem:[#allocation4 + $0x88] sm:$0xff]
          %v2795 = vlaneseq
          %v2796 = vshrl.u32 %v2795, 7
          %v2797 = vsub.s32 0, %v2796
          %v2798 = vrot.slane %v2775, %v2797
          %v2799 = vlaneseq
          %v2800 = vshrl.u32 %v2799, 7
          %v2801 = vsub.s32 1, %v2800
          %v2802 = vrot.slane %v2775, %v2801
          %v2805 = vmul.f32 %v2776, %v2798
          %v2806 = vmul.f32 %v2777, %v2802
          %v2807 = vmul.f32 %v2778, %v2798
          %v2808 = vmul.f32 %v2779, %v2802
          %v2809 = vmul.f32 %v2780, %v2798
          %v2810 = vmul.f32 %v2781, %v2802
          %v2811 = vmul.f32 %v2782, %v2798
          %v2812 = vmul.f32 %v2783, %v2802
          %v2813 = vmul.f32 %v2784, %v2798
          %v2814 = vmul.f32 %v2785, %v2802
          %v2815 = vmul.f32 %v2786, %v2798
          %v2816 = vmul.f32 %v2787, %v2802
          %v2817 = vmul.f32 %v2788, %v2798
          %v2818 = vmul.f32 %v2789, %v2802
          %v2819 = vmul.f32 %v2790, %v2798
          %v2820 = vmul.f32 %v2791, %v2802
          %v2821 = vmul.f32 %v2792, %v2798
          %v2822 = vmul.f32 %v2793, %v2802
          %2823 = vrot.lane.b32.xlu0 %v2805, 111
          %v2824 = vpop.permute.xlu0 %2823
          %2825 = vrot.lane.b32.xlu0 %v2806, 111
          %v2826 = vpop.permute.xlu0 %2825
          %vm2827 = vcmp.lt.s32.totalorder %v968, 111
          %v2828 = vsel %vm2827, %v2824, %v2826
          %v2829 = vsel %vm2827, %v2826, %v2824
          %s2830 = scalar_lea.vmem [#allocation10], 4
          %v2831 = vld [vmem:[%s2830] ss:$8 sm:$0x3]
          %v2833 = vlaneseq
          %v2834 = vshrl.u32 %v2833, 7
          %v2835 = vsub.s32 0, %v2834
          %v2836 = vrot.slane %v2831, %v2835
          %v2837 = vlaneseq
          %v2838 = vshrl.u32 %v2837, 7
          %v2839 = vsub.s32 1, %v2838
          %v2840 = vrot.slane %v2831, %v2839
          %v2843 = vmul.f32 %v2828, %v2836
          %v2844 = vmul.f32 %v2829, %v2840
          %v2845 = vadd.f32 %v2843, 0.0
          %v2846 = vadd.f32 %v2844, 0.0
          %2847 = vrot.lane.b32.xlu0 %v2807, 112
          %v2848 = vpop.permute.xlu0 %2847
          %2849 = vrot.lane.b32.xlu0 %v2808, 112
          %v2850 = vpop.permute.xlu0 %2849
          %v2851 = vsel %vm1969, %v2848, %v2850
          %v2852 = vsel %vm1969, %v2850, %v2848
          %s2853 = scalar_lea.vmem [#allocation10], 5
          %v2854 = vld [vmem:[%s2853] ss:$8 sm:$0x3]
          %v2856 = vlaneseq
          %v2857 = vshrl.u32 %v2856, 7
          %v2858 = vsub.s32 0, %v2857
          %v2859 = vrot.slane %v2854, %v2858
          %v2860 = vlaneseq
          %v2861 = vshrl.u32 %v2860, 7
          %v2862 = vsub.s32 1, %v2861
          %v2863 = vrot.slane %v2854, %v2862
          %v2866 = vmul.f32 %v2851, %v2859
          %v2867 = vmul.f32 %v2852, %v2863
          %v2868 = vadd.f32 %v2845, %v2866
          %v2869 = vadd.f32 %v2846, %v2867
          %2870 = vrot.lane.b32.xlu0 %v2809, 113
          %v2871 = vpop.permute.xlu0 %2870
          %2872 = vrot.lane.b32.xlu0 %v2810, 113
          %v2873 = vpop.permute.xlu0 %2872
          %vm2874 = vcmp.lt.s32.totalorder %v968, 113
          %v2875 = vsel %vm2874, %v2871, %v2873
          %v2876 = vsel %vm2874, %v2873, %v2871
          %s2877 = scalar_lea.vmem [#allocation10], 6
          %v2878 = vld [vmem:[%s2877] ss:$8 sm:$0x3]
          %v2880 = vlaneseq
          %v2881 = vshrl.u32 %v2880, 7
          %v2882 = vsub.s32 0, %v2881
          %v2883 = vrot.slane %v2878, %v2882
          %v2884 = vlaneseq
          %v2885 = vshrl.u32 %v2884, 7
          %v2886 = vsub.s32 1, %v2885
          %v2887 = vrot.slane %v2878, %v2886
          %v2890 = vmul.f32 %v2875, %v2883
          %v2891 = vmul.f32 %v2876, %v2887
          %v2892 = vadd.f32 %v2868, %v2890
          %v2893 = vadd.f32 %v2869, %v2891
          %2894 = vrot.lane.b32.xlu0 %v2811, 127
          %v2895 = vpop.permute.xlu0 %2894
          %2896 = vrot.lane.b32.xlu0 %v2812, 127
          %v2897 = vpop.permute.xlu0 %2896
          %v2898 = vsel %vm1301, %v2895, %v2897
          %v2899 = vsel %vm1301, %v2897, %v2895
          %s2900 = scalar_lea.vmem [#allocation10], 7
          %v2901 = vld [vmem:[%s2900] ss:$8 sm:$0x3]
          %v2903 = vlaneseq
          %v2904 = vshrl.u32 %v2903, 7
          %v2905 = vsub.s32 0, %v2904
          %v2906 = vrot.slane %v2901, %v2905
          %v2907 = vlaneseq
          %v2908 = vshrl.u32 %v2907, 7
          %v2909 = vsub.s32 1, %v2908
          %v2910 = vrot.slane %v2901, %v2909
          %v2913 = vmul.f32 %v2898, %v2906
          %v2914 = vmul.f32 %v2899, %v2910
          %v2915 = vadd.f32 %v2892, %v2913
          %v2916 = vadd.f32 %v2893, %v2914
          %s2917 = scalar_lea.vmem [#allocation10], 16
          %v2918 = vld [vmem:[%s2917] ss:$8 sm:$0x3]
          %v2920 = vlaneseq
          %v2921 = vshrl.u32 %v2920, 7
          %v2922 = vsub.s32 0, %v2921
          %v2923 = vrot.slane %v2918, %v2922
          %v2924 = vlaneseq
          %v2925 = vshrl.u32 %v2924, 7
          %v2926 = vsub.s32 1, %v2925
          %v2927 = vrot.slane %v2918, %v2926
          %v2930 = vmul.f32 %v2813, %v2923
          %v2931 = vmul.f32 %v2814, %v2927
          %v2932 = vadd.f32 %v2915, %v2930
          %v2933 = vadd.f32 %v2916, %v2931
          %2934 = vrot.lane.b32.xlu0 %v2815, 1
          %v2935 = vpop.permute.xlu0 %2934
          %2936 = vrot.lane.b32.xlu0 %v2816, 1
          %v2937 = vpop.permute.xlu0 %2936
          %v2938 = vsel %vm969, %v2935, %v2937
          %v2939 = vsel %vm969, %v2937, %v2935
          %s2940 = scalar_lea.vmem [#allocation10], 17
          %v2941 = vld [vmem:[%s2940] ss:$8 sm:$0x3]
          %v2943 = vlaneseq
          %v2944 = vshrl.u32 %v2943, 7
          %v2945 = vsub.s32 0, %v2944
          %v2946 = vrot.slane %v2941, %v2945
          %v2947 = vlaneseq
          %v2948 = vshrl.u32 %v2947, 7
          %v2949 = vsub.s32 1, %v2948
          %v2950 = vrot.slane %v2941, %v2949
          %v2953 = vmul.f32 %v2939, %v2946
          %v2954 = vmul.f32 %v2938, %v2950
          %v2955 = vadd.f32 %v2932, %v2953
          %v2956 = vadd.f32 %v2933, %v2954
          %2957 = vrot.lane.b32.xlu0 %v2817, 15
          %v2958 = vpop.permute.xlu0 %2957
          %2959 = vrot.lane.b32.xlu0 %v2818, 15
          %v2960 = vpop.permute.xlu0 %2959
          %vm2961 = vcmp.lt.s32.totalorder %v968, 15
          %v2962 = vsel %vm2961, %v2958, %v2960
          %v2963 = vsel %vm2961, %v2960, %v2958
          %s2964 = scalar_lea.vmem [#allocation10], 18
          %v2965 = vld [vmem:[%s2964] ss:$8 sm:$0x3]
          %v2967 = vlaneseq
          %v2968 = vshrl.u32 %v2967, 7
          %v2969 = vsub.s32 0, %v2968
          %v2970 = vrot.slane %v2965, %v2969
          %v2971 = vlaneseq
          %v2972 = vshrl.u32 %v2971, 7
          %v2973 = vsub.s32 1, %v2972
          %v2974 = vrot.slane %v2965, %v2973
          %v2977 = vmul.f32 %v2963, %v2970
          %v2978 = vmul.f32 %v2962, %v2974
          %v2979 = vadd.f32 %v2955, %v2977
          %v2980 = vadd.f32 %v2956, %v2978
          %2981 = vrot.lane.b32.xlu0 %v2819, 16
          %v2982 = vpop.permute.xlu0 %2981
          %2983 = vrot.lane.b32.xlu0 %v2820, 16
          %v2984 = vpop.permute.xlu0 %2983
          %v2985 = vsel %vm1637, %v2982, %v2984
          %v2986 = vsel %vm1637, %v2984, %v2982
          %s2987 = scalar_lea.vmem [#allocation10], 19
          %v2988 = vld [vmem:[%s2987] ss:$8 sm:$0x3]
          %v2990 = vlaneseq
          %v2991 = vshrl.u32 %v2990, 7
          %v2992 = vsub.s32 0, %v2991
          %v2993 = vrot.slane %v2988, %v2992
          %v2994 = vlaneseq
          %v2995 = vshrl.u32 %v2994, 7
          %v2996 = vsub.s32 1, %v2995
          %v2997 = vrot.slane %v2988, %v2996
          %v3000 = vmul.f32 %v2986, %v2993
          %v3001 = vmul.f32 %v2985, %v2997
          %v3002 = vadd.f32 %v2979, %v3000
          %v3003 = vadd.f32 %v2980, %v3001
          %3004 = vrot.lane.b32.xlu0 %v2821, 17
          %v3005 = vpop.permute.xlu0 %3004
          %3006 = vrot.lane.b32.xlu0 %v2822, 17
          %v3007 = vpop.permute.xlu0 %3006
          %vm3008 = vcmp.lt.s32.totalorder %v968, 17
          %v3009 = vsel %vm3008, %v3005, %v3007
          %v3010 = vsel %vm3008, %v3007, %v3005
          %s3011 = scalar_lea.vmem [#allocation10], 20
          %v3012 = vld [vmem:[%s3011] ss:$8 sm:$0x3]
          %v3014 = vlaneseq
          %v3015 = vshrl.u32 %v3014, 7
          %v3016 = vsub.s32 0, %v3015
          %v3017 = vrot.slane %v3012, %v3016
          %v3018 = vlaneseq
          %v3019 = vshrl.u32 %v3018, 7
          %v3020 = vsub.s32 1, %v3019
          %v3021 = vrot.slane %v3012, %v3020
          %v3024 = vmul.f32 %v3010, %v3017
          %v3025 = vmul.f32 %v3009, %v3021
          %v3026 = vadd.f32 %v3002, %v3024
          %v3027 = vadd.f32 %v3003, %v3025
          %v3028 = vld [vmem:[%s368] sm:$0x3]
          %v3029 = vld [vmem:[%s323] sm:$0xff]
          %v3030 = vsub.f32 1.0, %v3028
          %v3032 = vlaneseq
          %v3033 = vshrl.u32 %v3032, 7
          %v3034 = vsub.s32 0, %v3033
          %v3035 = vrot.slane %v3030, %v3034
          %v3036 = vlaneseq
          %v3037 = vshrl.u32 %v3036, 7
          %v3038 = vsub.s32 1, %v3037
          %v3039 = vrot.slane %v3030, %v3038
          %v3042 = vmul.f32 %v3026, %v3035
          %v3043 = vmul.f32 %v3027, %v3039
          %v3045 = vlaneseq
          %v3046 = vshrl.u32 %v3045, 7
          %v3047 = vsub.s32 0, %v3046
          %v3048 = vrot.slane %v3028, %v3047
          %v3049 = vlaneseq
          %v3050 = vshrl.u32 %v3049, 7
          %v3051 = vsub.s32 1, %v3050
          %v3052 = vrot.slane %v3028, %v3051
          %v3053 = vcombine.low %v3048, %v3052
          %v3055 = vmul.f32 %v3029, %v3053
          %v3057 = vcombine.high %v3055, %v3055
          %v3059 = vadd.f32 %v3042, %v3055
          %v3060 = vadd.f32 %v3043, %v3057
          %v3063 = vcombine.low %v3059, %v3060
          %3065 = vst [vmem:[%s363] sm:$0xff] %v3063
        $region64: #{tpu_custom_call.1} parent=39 // pred_fallthru
          _
        %s3066 = sand.u32 %s175, 1
        %s3067 = scalar_lea.sflag [#allocation7], %s3066
        %s3068 = sand.u32 %s175, 1
        %s3069 = smul.addr %s3068, 8
        %s3070 = scalar_lea.vmem [#allocation13], %s3069
        // Predicated region
        $region65: #{tpu_custom_call.1} parent=39 // pred_check
          %p3071 = pneg %p185
        $region66: #{tpu_custom_call.1} parent=39 // pred_check_branch
          %3073 = sbr.rel (%p3071) target = $region68
        $region67: #{tpu_custom_call.1} parent=39 // pred_region
          %s3075 = ssub.s32 128, 128
          %3076 = vsyncadd %s3067, %s3075
          %s3077 = smul.addr %s32, 2
          %s3078 = smul.addr %s3077, 64
          %s3079 = scalar_lea.hbm %s5, %s3078
          %s3081 = sshll.u32 %s3070, 4
          %s3082 = int_to_ptr.vmem [resolvable:$true] %s3081
          %3084 = dma.vmem_to_hbm [thread:$0]  %s3082, 128, %s3079, %s3067
        $region68: #{tpu_custom_call.1} parent=39 // pred_fallthru
          _
      $region40: #{tpu_custom_call.1} parent=5 // pred_fallthru
        _
      %p3085 = scmp.le.s32.totalorder 2, %s23
      // Predicated region
      $region69: #{tpu_custom_call.1} parent=5 // pred_check
        %p3086 = pneg %p3085
      $region70: #{tpu_custom_call.1} parent=5 // pred_check_branch
        %3088 = sbr.rel (%p3086) target = $region72
      $region71: #{tpu_custom_call.1} parent=5 // pred_region
        %s3089 = ssub.s32 %s23, 2
        // Predicated region
        $region73: #{tpu_custom_call.1} parent=71 // pred_check
          %p3090 = pneg %p191
        $region74: #{tpu_custom_call.1} parent=71 // pred_check_branch
          %3092 = sbr.rel (%p3090) target = $region76
        $region75: #{tpu_custom_call.1} parent=71 // pred_region
          %s3093 = sand.u32 %s176, 1
          %s3094 = scalar_lea.sflag [#allocation7], %s3093
          %s3095 = sand.u32 %s176, 1
          %s3096 = smul.addr %s3095, 8
          %s3097 = scalar_lea.vmem [#allocation13], %s3096
          %3098 = dma.done %s3094, 128
        $region76: #{tpu_custom_call.1} parent=71 // pred_fallthru
          _
      $region72: #{tpu_custom_call.1} parent=5 // pred_fallthru
        _
    $region6: #{tpu_custom_call.1} parent=1 // loop_footer
      %s27 = sadd.s32 1, %s23
    $region7: #{tpu_custom_call.1} parent=1 // loop_footer_branch
      %22 = sbr.rel target = $region3
    $region8: #{tpu_custom_call.1} parent=1 // loop_exit
      _
    %3099 = vsyncpa [#allocation6], 1
    %s3100 = scalar_lea.sflag [#allocation6], 1
    %3101 = vsyncpa %s3100, 1
    %3102 = vsyncpa [#allocation9], 1
    %s3103 = scalar_lea.sflag [#allocation9], 1
    %3104 = vsyncpa %s3103, 1
    %3105 = vsyncpa [#allocation12], 1
    %s3106 = scalar_lea.sflag [#allocation12], 1
    %3107 = vsyncpa %s3106, 1
    %3108 = vsyncpa [#allocation7], 1
    %s3109 = scalar_lea.sflag [#allocation7], 1
    %3110 = vsyncpa %s3109, 1

</llo_original>
